<compile_context>
chip_gen: v7x
topology: tpu7x:2x2x1
jax: 0.10.0
libtpu: 0.0.40
codegen_flags: <defaults>
</compile_context>

<pallas_src>
from functools import partial

import numpy as np

import jax
import jax.numpy as jnp
from jax.experimental import pallas as pl
from jax.experimental.pallas import tpu as pltpu


# Images per grid step (interleaved along the sublane axis).
_IB = 8

# Input rows h = 0..27 permuted so phase p = h % 4 occupies positions [7p, 7p+7).
_ROW_PERM = np.concatenate([np.arange(p, 28, 4) for p in range(4)])


# ------------------------------ fused kernel --------------------------------

def _lenet_fused_kernel(x_ref, w1_ref, b1_ref, w2_ref, b2_ref, wf_ref, bf_ref,
                        o_ref, *, ib):
    f32 = jnp.float32
    bf16 = jnp.bfloat16

    # x_ref: (1, 28*ib, 84); row index = permuted_row * ib + b, lanes = w*3 + c.

    # ---- conv1: 3 -> 20 (padded 32), 5x5, out 24x24, as banded GEMMs -------
    # accs[q][(s*ib+b), (w%2)*384 + (w//2)*32 + f] = conv1 out at (b, h=4s+q, w).
    accs = [jnp.zeros((6 * ib, 768), f32) for _ in range(4)]
    for dy in range(5):
        w1dy = w1_ref[dy]                                        # (84, 768) bf16
        for q in range(4):
            p = (q + dy) % 4
            r0 = 7 * p + (q + dy) // 4                           # rows h = 4s+q+dy
            slab = x_ref[0, r0 * ib:(r0 + 6) * ib, :].astype(bf16)   # (6*ib, 84)
            accs[q] = accs[q] + jnp.dot(slab, w1dy, preferred_element_type=f32)
    y1 = [acc + b1_ref[...] for acc in accs]

    # ---- maxpool 2x2 + relu (pool1) ----
    mh_e = jnp.maximum(y1[0], y1[1])            # pooled rows 0,2,...,10  (6*ib,768)
    mh_o = jnp.maximum(y1[2], y1[3])            # pooled rows 1,3,...,11  (6*ib,768)
    h1_e = jnp.maximum(jnp.maximum(mh_e[:, :384], mh_e[:, 384:]), 0.0)  # (6*ib,384)
    h1_o = jnp.maximum(jnp.maximum(mh_o[:, :384], mh_o[:, 384:]), 0.0)  # (6*ib,384)
    # h1_{e,o}[(s*ib+b), j*32 + f] = relu(pool(conv1)) at (b, row 2s / 2s+1, col j, chan f)

    # ---- conv2: 20(pad32) -> 50(pad64), 5x5, out 8x8, banded GEMMs ----------
    # TODO(synk): Dropout2d() treated as identity (eval mode).
    acc_e = jnp.zeros((4 * ib, 512), f32)       # conv2 output rows 0,2,4,6
    acc_o = jnp.zeros((4 * ib, 512), f32)       # conv2 output rows 1,3,5,7
    for dy in range(5):
        w2dy = w2_ref[dy]                                        # (384, 512) bf16
        if dy % 2 == 0:
            se = h1_e[(dy // 2) * ib:(dy // 2 + 4) * ib, :]
            so = h1_o[(dy // 2) * ib:(dy // 2 + 4) * ib, :]
        else:
            se = h1_o[(dy // 2) * ib:(dy // 2 + 4) * ib, :]
            so = h1_e[((dy + 1) // 2) * ib:((dy + 1) // 2 + 4) * ib, :]
        acc_e = acc_e + jnp.dot(se.astype(bf16), w2dy, preferred_element_type=f32)
        acc_o = acc_o + jnp.dot(so.astype(bf16), w2dy, preferred_element_type=f32)
    y2_e = acc_e + b2_ref[...]
    y2_o = acc_o + b2_ref[...]

    # ---- maxpool 2x2 + relu (pool2) ----
    m2 = jnp.maximum(y2_e, y2_o)                                        # (4*ib,512)
    h2 = jnp.maximum(jnp.maximum(m2[:, :256], m2[:, 256:]), 0.0)        # (4*ib,256)
    # h2[(K*ib+b), J*64 + g] = encoder output at (b, chan g, row K, col J)

    # ---- fc1: 800 -> 500 (padded 512), folded into the epilogue -------------
    accf = jnp.zeros((ib, 512), f32) + bf_ref[...]                      # (ib,512)
    for kk in range(4):
        rows = h2[kk * ib:(kk + 1) * ib, :].astype(bf16)                # (ib,256)
        accf = accf + jnp.dot(rows, wf_ref[kk], preferred_element_type=f32)
    o_ref[...] = accf


# --------------------- one-time host-side weight packing --------------------

def prepare_params(w1, b1, w2, b2, wf, bf):
    """Pre-transform PyTorch-layout weights into banded / permuted bf16 forms."""
    w1 = np.asarray(w1, np.float32)   # (20, 3, 5, 5)
    b1 = np.asarray(b1, np.float32)   # (20,)
    w2 = np.asarray(w2, np.float32)   # (50, 20, 5, 5)
    b2 = np.asarray(b2, np.float32)   # (50,)
    wf = np.asarray(wf, np.float32)   # (500, 800)
    bf = np.asarray(bf, np.float32)   # (500,)

    # conv1 banded weights: rows = w_in*3 + c, cols = (w%2)*384 + (w//2)*32 + f
    w1b = np.zeros((5, 84, 768), np.float32)
    b1b = np.zeros((1, 768), np.float32)
    for w_out in range(24):
        col0 = (w_out % 2) * 384 + (w_out // 2) * 32
        b1b[0, col0:col0 + 20] = b1
        for dy in range(5):
            for dx in range(5):
                w_in = w_out + dx
                w1b[dy, w_in * 3:w_in * 3 + 3, col0:col0 + 20] = w1[:, :, dy, dx].T

    # conv2 banded weights: rows = j*32 + f_in, cols = (w%2)*256 + (w//2)*64 + g
    w2b = np.zeros((5, 384, 512), np.float32)
    b2b = np.zeros((1, 512), np.float32)
    for w_out in range(8):
        col0 = (w_out % 2) * 256 + (w_out // 2) * 64
        b2b[0, col0:col0 + 50] = b2
        for dy in range(5):
            for dx in range(5):
                j = w_out + dx
                w2b[dy, j * 32:j * 32 + 20, col0:col0 + 50] = w2[:, :, dy, dx].T

    # fc1 weights permuted to the (pooled-H K, pooled-W J, chan g) layout.
    # PyTorch flatten order of (N, 50, 4, 4) is g*16 + K*4 + J.
    wfb = np.zeros((4, 256, 512), np.float32)
    for K in range(4):
        for J in range(4):
            for g in range(50):
                wfb[K, J * 64 + g, :500] = wf[:, g * 16 + K * 4 + J]
    bfb = np.zeros((1, 512), np.float32)
    bfb[0, :500] = bf

    return (jnp.asarray(w1b, jnp.bfloat16), jnp.asarray(b1b),
            jnp.asarray(w2b, jnp.bfloat16), jnp.asarray(b2b),
            jnp.asarray(wfb, jnp.bfloat16), jnp.asarray(bfb))


# --------------------------------- forward ----------------------------------

@jax.jit
def lenet_encoder_forward(x_nchw, packed):
    w1b, b1b, w2b, b2b, wfb, bfb = packed
    n = x_nchw.shape[0]
    ib = _IB
    n_pad = ((n + ib - 1) // ib) * ib
    ng = n_pad // ib

    # NCHW -> (N, 28, 84) with lanes = w*3 + c; rows permuted by h % 4 so the
    # in-kernel H-pool is an elementwise max of the phase accumulators.
    x2 = jnp.transpose(x_nchw, (0, 2, 3, 1)).reshape(n, 28, 84)
    x2p = x2[:, _ROW_PERM, :]
    if n_pad != n:
        x2p = jnp.concatenate(
            [x2p, jnp.zeros((n_pad - n, 28, 84), x2p.dtype)], axis=0)

    # Interleave IB images per group along the sublane axis:
    # (ng, ib, 28, 84) -> (ng, 28, ib, 84) -> (ng, 28*ib, 84);
    # row index within a group = permuted_row * ib + image.
    xg = x2p.reshape(ng, ib, 28, 84).transpose(0, 2, 1, 3).reshape(ng, 28 * ib, 84)

    out = pl.pallas_call(
        partial(_lenet_fused_kernel, ib=ib),
        out_shape=jax.ShapeDtypeStruct((n_pad, 512), jnp.float32),
        grid=(ng,),
        in_specs=[
            pl.BlockSpec((1, 28 * ib, 84), lambda i: (i, 0, 0)),   # image group
            pl.BlockSpec((5, 84, 768), lambda i: (0, 0, 0)),       # conv1 banded W
            pl.BlockSpec((1, 768), lambda i: (0, 0)),              # conv1 bias
            pl.BlockSpec((5, 384, 512), lambda i: (0, 0, 0)),      # conv2 banded W
            pl.BlockSpec((1, 512), lambda i: (0, 0)),              # conv2 bias
            pl.BlockSpec((4, 256, 512), lambda i: (0, 0, 0)),      # fc1 W
            pl.BlockSpec((1, 512), lambda i: (0, 0)),              # fc1 bias
        ],
        out_specs=pl.BlockSpec((ib, 512), lambda i: (i, 0)),
        compiler_params=pltpu.CompilerParams(
            dimension_semantics=("parallel",),
            vmem_limit_bytes=32 * 1024 * 1024,
        ),
    )(xg, w1b, b1b, w2b, b2b, wfb, bfb)
    return out[:n, :500]


# ---------------------------- pure-JAX reference ----------------------------

def _maxpool2_nchw(x):
    return jax.lax.reduce_window(
        x, -jnp.inf, jax.lax.max, (1, 1, 2, 2), (1, 1, 2, 2), "VALID"
    )


def reference_forward(x_nchw, params):
    w1, b1, w2, b2, wf, bf = params
    dn = ("NCHW", "OIHW", "NCHW")
    y = jax.lax.conv_general_dilated(
        x_nchw, w1, (1, 1), "VALID", dimension_numbers=dn
    ) + b1[None, :, None, None]
    y = jnp.maximum(_maxpool2_nchw(y), 0.0)
    y = jax.lax.conv_general_dilated(
        y, w2, (1, 1), "VALID", dimension_numbers=dn
    ) + b2[None, :, None, None]
    y = jnp.maximum(_maxpool2_nchw(y), 0.0)
    return y.reshape(y.shape[0], -1) @ wf.T + bf


# ------------------------------------ main -----------------------------------

if __name__ == "__main__":
    key = jax.random.PRNGKey(0)
    ks = jax.random.split(key, 7)

    # Deterministic synthetic parameters (shapes from the PyTorch module).
    w1 = jax.random.normal(ks[0], (20, 3, 5, 5), jnp.float32) * 0.1    # Conv2d(3,20,5)
    b1 = jax.random.normal(ks[1], (20,), jnp.float32) * 0.1
    w2 = jax.random.normal(ks[2], (50, 20, 5, 5), jnp.float32) * 0.05  # Conv2d(20,50,5)
    b2 = jax.random.normal(ks[3], (50,), jnp.float32) * 0.1
    wf = jax.random.normal(ks[4], (500, 50 * 4 * 4), jnp.float32) * 0.03  # Linear(800,500)
    bf = jax.random.normal(ks[5], (500,), jnp.float32) * 0.1
    params = (w1, b1, w2, b2, wf, bf)

    # LeNet needs 28x28 spatial input so that fc1 sees 50*4*4 features.
    x = jax.random.normal(ks[6], (2, 3, 28, 28), jnp.float32)

    packed = prepare_params(*params)           # one-time host-side weight prep

    feat = lenet_encoder_forward(x, packed)
    feat = jax.block_until_ready(feat)
    assert feat.shape == (2, 500), feat.shape

    ref = jax.block_until_ready(reference_forward(x, params))
    max_err = float(jnp.max(jnp.abs(feat - ref)))
    assert jnp.allclose(feat, ref, rtol=5e-2, atol=2e-1), max_err

    print("KERNEL_OK")
</pallas_src>

<mosaic_0001>
module attributes {stable_mosaic.version = 11 : i64} {
  func.func @_lenet_fused_kernel(%arg0: i32, %arg1: memref<1x224x84xf32, #tpu.memory_space<vmem>>, %arg2: memref<5x84x768xbf16, #tpu.memory_space<vmem>>, %arg3: memref<1x768xf32, #tpu.memory_space<vmem>>, %arg4: memref<5x384x512xbf16, #tpu.memory_space<vmem>>, %arg5: memref<1x512xf32, #tpu.memory_space<vmem>>, %arg6: memref<4x256x512xbf16, #tpu.memory_space<vmem>>, %arg7: memref<1x512xf32, #tpu.memory_space<vmem>>, %arg8: memref<8x512xf32, #tpu.memory_space<vmem>>) attributes {dimension_semantics = [#tpu.dimension_semantics<parallel>], iteration_bounds = array<i64: 1>, scalar_prefetch = 0 : i64, scratch_operands = 0 : i64, tpu.core_type = #tpu.core_type<tc>, window_params = [{transform_indices = @transform_0, window_bounds = array<i64: 1, 224, 84>}, {pipeline_mode = #tpu.pipeline_mode<synchronous>, transform_indices = @transform_1, window_bounds = array<i64: 5, 84, 768>}, {pipeline_mode = #tpu.pipeline_mode<synchronous>, transform_indices = @transform_2, window_bounds = array<i64: 1, 768>}, {pipeline_mode = #tpu.pipeline_mode<synchronous>, transform_indices = @transform_3, window_bounds = array<i64: 5, 384, 512>}, {pipeline_mode = #tpu.pipeline_mode<synchronous>, transform_indices = @transform_4, window_bounds = array<i64: 1, 512>}, {pipeline_mode = #tpu.pipeline_mode<synchronous>, transform_indices = @transform_5, window_bounds = array<i64: 4, 256, 512>}, {pipeline_mode = #tpu.pipeline_mode<synchronous>, transform_indices = @transform_6, window_bounds = array<i64: 1, 512>}, {transform_indices = @transform_7, window_bounds = array<i64: 8, 512>}]} {
    %cst = arith.constant 0.000000e+00 : f32
    %0 = vector.broadcast %cst : f32 to vector<48x768xf32>
    %cst_0 = arith.constant 0.000000e+00 : f32
    %1 = vector.broadcast %cst_0 : f32 to vector<48x768xf32>
    %cst_1 = arith.constant 0.000000e+00 : f32
    %2 = vector.broadcast %cst_1 : f32 to vector<48x768xf32>
    %cst_2 = arith.constant 0.000000e+00 : f32
    %3 = vector.broadcast %cst_2 : f32 to vector<48x768xf32>
    %c0 = arith.constant 0 : index
    %c0_3 = arith.constant 0 : index
    %c0_4 = arith.constant 0 : index
    %4 = vector.load %arg2[%c0, %c0_3, %c0_4] : memref<5x84x768xbf16, #tpu.memory_space<vmem>>, vector<1x84x768xbf16>
    %5 = vector.shape_cast %4 : vector<1x84x768xbf16> to vector<84x768xbf16>
    %c0_5 = arith.constant 0 : index
    %c0_6 = arith.constant 0 : index
    %c0_7 = arith.constant 0 : index
    %6 = vector.load %arg1[%c0_5, %c0_6, %c0_7] : memref<1x224x84xf32, #tpu.memory_space<vmem>>, vector<1x48x84xf32>
    %7 = vector.shape_cast %6 : vector<1x48x84xf32> to vector<48x84xf32>
    %8 = arith.truncf %7 : vector<48x84xf32> to vector<48x84xbf16>
    %cst_8 = arith.constant dense<0.000000e+00> : vector<48x768xf32>
    %9 = tpu.matmul %8, %5, %cst_8 {dimension_numbers = #tpu.dot_dimension_numbers<[1], [0], [0], [1], [0, 0, 1, 1], [], []>} : vector<48x84xbf16>, vector<84x768xbf16>, vector<48x768xf32> -> vector<48x768xf32>
    %10 = arith.addf %0, %9 : vector<48x768xf32>
    %c0_9 = arith.constant 0 : index
    %c56 = arith.constant 56 : index
    %c0_10 = arith.constant 0 : index
    %11 = vector.load %arg1[%c0_9, %c56, %c0_10] : memref<1x224x84xf32, #tpu.memory_space<vmem>>, vector<1x48x84xf32>
    %12 = vector.shape_cast %11 : vector<1x48x84xf32> to vector<48x84xf32>
    %13 = arith.truncf %12 : vector<48x84xf32> to vector<48x84xbf16>
    %cst_11 = arith.constant dense<0.000000e+00> : vector<48x768xf32>
    %14 = tpu.matmul %13, %5, %cst_11 {dimension_numbers = #tpu.dot_dimension_numbers<[1], [0], [0], [1], [0, 0, 1, 1], [], []>} : vector<48x84xbf16>, vector<84x768xbf16>, vector<48x768xf32> -> vector<48x768xf32>
    %15 = arith.addf %1, %14 : vector<48x768xf32>
    %c0_12 = arith.constant 0 : index
    %c112 = arith.constant 112 : index
    %c0_13 = arith.constant 0 : index
    %16 = vector.load %arg1[%c0_12, %c112, %c0_13] : memref<1x224x84xf32, #tpu.memory_space<vmem>>, vector<1x48x84xf32>
    %17 = vector.shape_cast %16 : vector<1x48x84xf32> to vector<48x84xf32>
    %18 = arith.truncf %17 : vector<48x84xf32> to vector<48x84xbf16>
    %cst_14 = arith.constant dense<0.000000e+00> : vector<48x768xf32>
    %19 = tpu.matmul %18, %5, %cst_14 {dimension_numbers = #tpu.dot_dimension_numbers<[1], [0], [0], [1], [0, 0, 1, 1], [], []>} : vector<48x84xbf16>, vector<84x768xbf16>, vector<48x768xf32> -> vector<48x768xf32>
    %20 = arith.addf %2, %19 : vector<48x768xf32>
    %c0_15 = arith.constant 0 : index
    %c168 = arith.constant 168 : index
    %c0_16 = arith.constant 0 : index
    %21 = vector.load %arg1[%c0_15, %c168, %c0_16] : memref<1x224x84xf32, #tpu.memory_space<vmem>>, vector<1x48x84xf32>
    %22 = vector.shape_cast %21 : vector<1x48x84xf32> to vector<48x84xf32>
    %23 = arith.truncf %22 : vector<48x84xf32> to vector<48x84xbf16>
    %cst_17 = arith.constant dense<0.000000e+00> : vector<48x768xf32>
    %24 = tpu.matmul %23, %5, %cst_17 {dimension_numbers = #tpu.dot_dimension_numbers<[1], [0], [0], [1], [0, 0, 1, 1], [], []>} : vector<48x84xbf16>, vector<84x768xbf16>, vector<48x768xf32> -> vector<48x768xf32>
    %25 = arith.addf %3, %24 : vector<48x768xf32>
    %c1 = arith.constant 1 : index
    %c0_18 = arith.constant 0 : index
    %c0_19 = arith.constant 0 : index
    %26 = vector.load %arg2[%c1, %c0_18, %c0_19] : memref<5x84x768xbf16, #tpu.memory_space<vmem>>, vector<1x84x768xbf16>
    %27 = vector.shape_cast %26 : vector<1x84x768xbf16> to vector<84x768xbf16>
    %c0_20 = arith.constant 0 : index
    %c56_21 = arith.constant 56 : index
    %c0_22 = arith.constant 0 : index
    %28 = vector.load %arg1[%c0_20, %c56_21, %c0_22] : memref<1x224x84xf32, #tpu.memory_space<vmem>>, vector<1x48x84xf32>
    %29 = vector.shape_cast %28 : vector<1x48x84xf32> to vector<48x84xf32>
    %30 = arith.truncf %29 : vector<48x84xf32> to vector<48x84xbf16>
    %cst_23 = arith.constant dense<0.000000e+00> : vector<48x768xf32>
    %31 = tpu.matmul %30, %27, %cst_23 {dimension_numbers = #tpu.dot_dimension_numbers<[1], [0], [0], [1], [0, 0, 1, 1], [], []>} : vector<48x84xbf16>, vector<84x768xbf16>, vector<48x768xf32> -> vector<48x768xf32>
    %32 = arith.addf %10, %31 : vector<48x768xf32>
    %c0_24 = arith.constant 0 : index
    %c112_25 = arith.constant 112 : index
    %c0_26 = arith.constant 0 : index
    %33 = vector.load %arg1[%c0_24, %c112_25, %c0_26] : memref<1x224x84xf32, #tpu.memory_space<vmem>>, vector<1x48x84xf32>
    %34 = vector.shape_cast %33 : vector<1x48x84xf32> to vector<48x84xf32>
    %35 = arith.truncf %34 : vector<48x84xf32> to vector<48x84xbf16>
    %cst_27 = arith.constant dense<0.000000e+00> : vector<48x768xf32>
    %36 = tpu.matmul %35, %27, %cst_27 {dimension_numbers = #tpu.dot_dimension_numbers<[1], [0], [0], [1], [0, 0, 1, 1], [], []>} : vector<48x84xbf16>, vector<84x768xbf16>, vector<48x768xf32> -> vector<48x768xf32>
    %37 = arith.addf %15, %36 : vector<48x768xf32>
    %c0_28 = arith.constant 0 : index
    %c168_29 = arith.constant 168 : index
    %c0_30 = arith.constant 0 : index
    %38 = vector.load %arg1[%c0_28, %c168_29, %c0_30] : memref<1x224x84xf32, #tpu.memory_space<vmem>>, vector<1x48x84xf32>
    %39 = vector.shape_cast %38 : vector<1x48x84xf32> to vector<48x84xf32>
    %40 = arith.truncf %39 : vector<48x84xf32> to vector<48x84xbf16>
    %cst_31 = arith.constant dense<0.000000e+00> : vector<48x768xf32>
    %41 = tpu.matmul %40, %27, %cst_31 {dimension_numbers = #tpu.dot_dimension_numbers<[1], [0], [0], [1], [0, 0, 1, 1], [], []>} : vector<48x84xbf16>, vector<84x768xbf16>, vector<48x768xf32> -> vector<48x768xf32>
    %42 = arith.addf %20, %41 : vector<48x768xf32>
    %c0_32 = arith.constant 0 : index
    %c8 = arith.constant 8 : index
    %c0_33 = arith.constant 0 : index
    %43 = vector.load %arg1[%c0_32, %c8, %c0_33] : memref<1x224x84xf32, #tpu.memory_space<vmem>>, vector<1x48x84xf32>
    %44 = vector.shape_cast %43 : vector<1x48x84xf32> to vector<48x84xf32>
    %45 = arith.truncf %44 : vector<48x84xf32> to vector<48x84xbf16>
    %cst_34 = arith.constant dense<0.000000e+00> : vector<48x768xf32>
    %46 = tpu.matmul %45, %27, %cst_34 {dimension_numbers = #tpu.dot_dimension_numbers<[1], [0], [0], [1], [0, 0, 1, 1], [], []>} : vector<48x84xbf16>, vector<84x768xbf16>, vector<48x768xf32> -> vector<48x768xf32>
    %47 = arith.addf %25, %46 : vector<48x768xf32>
    %c2 = arith.constant 2 : index
    %c0_35 = arith.constant 0 : index
    %c0_36 = arith.constant 0 : index
    %48 = vector.load %arg2[%c2, %c0_35, %c0_36] : memref<5x84x768xbf16, #tpu.memory_space<vmem>>, vector<1x84x768xbf16>
    %49 = vector.shape_cast %48 : vector<1x84x768xbf16> to vector<84x768xbf16>
    %c0_37 = arith.constant 0 : index
    %c112_38 = arith.constant 112 : index
    %c0_39 = arith.constant 0 : index
    %50 = vector.load %arg1[%c0_37, %c112_38, %c0_39] : memref<1x224x84xf32, #tpu.memory_space<vmem>>, vector<1x48x84xf32>
    %51 = vector.shape_cast %50 : vector<1x48x84xf32> to vector<48x84xf32>
    %52 = arith.truncf %51 : vector<48x84xf32> to vector<48x84xbf16>
    %cst_40 = arith.constant dense<0.000000e+00> : vector<48x768xf32>
    %53 = tpu.matmul %52, %49, %cst_40 {dimension_numbers = #tpu.dot_dimension_numbers<[1], [0], [0], [1], [0, 0, 1, 1], [], []>} : vector<48x84xbf16>, vector<84x768xbf16>, vector<48x768xf32> -> vector<48x768xf32>
    %54 = arith.addf %32, %53 : vector<48x768xf32>
    %c0_41 = arith.constant 0 : index
    %c168_42 = arith.constant 168 : index
    %c0_43 = arith.constant 0 : index
    %55 = vector.load %arg1[%c0_41, %c168_42, %c0_43] : memref<1x224x84xf32, #tpu.memory_space<vmem>>, vector<1x48x84xf32>
    %56 = vector.shape_cast %55 : vector<1x48x84xf32> to vector<48x84xf32>
    %57 = arith.truncf %56 : vector<48x84xf32> to vector<48x84xbf16>
    %cst_44 = arith.constant dense<0.000000e+00> : vector<48x768xf32>
    %58 = tpu.matmul %57, %49, %cst_44 {dimension_numbers = #tpu.dot_dimension_numbers<[1], [0], [0], [1], [0, 0, 1, 1], [], []>} : vector<48x84xbf16>, vector<84x768xbf16>, vector<48x768xf32> -> vector<48x768xf32>
    %59 = arith.addf %37, %58 : vector<48x768xf32>
    %c0_45 = arith.constant 0 : index
    %c8_46 = arith.constant 8 : index
    %c0_47 = arith.constant 0 : index
    %60 = vector.load %arg1[%c0_45, %c8_46, %c0_47] : memref<1x224x84xf32, #tpu.memory_space<vmem>>, vector<1x48x84xf32>
    %61 = vector.shape_cast %60 : vector<1x48x84xf32> to vector<48x84xf32>
    %62 = arith.truncf %61 : vector<48x84xf32> to vector<48x84xbf16>
    %cst_48 = arith.constant dense<0.000000e+00> : vector<48x768xf32>
    %63 = tpu.matmul %62, %49, %cst_48 {dimension_numbers = #tpu.dot_dimension_numbers<[1], [0], [0], [1], [0, 0, 1, 1], [], []>} : vector<48x84xbf16>, vector<84x768xbf16>, vector<48x768xf32> -> vector<48x768xf32>
    %64 = arith.addf %42, %63 : vector<48x768xf32>
    %c0_49 = arith.constant 0 : index
    %c64 = arith.constant 64 : index
    %c0_50 = arith.constant 0 : index
    %65 = vector.load %arg1[%c0_49, %c64, %c0_50] : memref<1x224x84xf32, #tpu.memory_space<vmem>>, vector<1x48x84xf32>
    %66 = vector.shape_cast %65 : vector<1x48x84xf32> to vector<48x84xf32>
    %67 = arith.truncf %66 : vector<48x84xf32> to vector<48x84xbf16>
    %cst_51 = arith.constant dense<0.000000e+00> : vector<48x768xf32>
    %68 = tpu.matmul %67, %49, %cst_51 {dimension_numbers = #tpu.dot_dimension_numbers<[1], [0], [0], [1], [0, 0, 1, 1], [], []>} : vector<48x84xbf16>, vector<84x768xbf16>, vector<48x768xf32> -> vector<48x768xf32>
    %69 = arith.addf %47, %68 : vector<48x768xf32>
    %c3 = arith.constant 3 : index
    %c0_52 = arith.constant 0 : index
    %c0_53 = arith.constant 0 : index
    %70 = vector.load %arg2[%c3, %c0_52, %c0_53] : memref<5x84x768xbf16, #tpu.memory_space<vmem>>, vector<1x84x768xbf16>
    %71 = vector.shape_cast %70 : vector<1x84x768xbf16> to vector<84x768xbf16>
    %c0_54 = arith.constant 0 : index
    %c168_55 = arith.constant 168 : index
    %c0_56 = arith.constant 0 : index
    %72 = vector.load %arg1[%c0_54, %c168_55, %c0_56] : memref<1x224x84xf32, #tpu.memory_space<vmem>>, vector<1x48x84xf32>
    %73 = vector.shape_cast %72 : vector<1x48x84xf32> to vector<48x84xf32>
    %74 = arith.truncf %73 : vector<48x84xf32> to vector<48x84xbf16>
    %cst_57 = arith.constant dense<0.000000e+00> : vector<48x768xf32>
    %75 = tpu.matmul %74, %71, %cst_57 {dimension_numbers = #tpu.dot_dimension_numbers<[1], [0], [0], [1], [0, 0, 1, 1], [], []>} : vector<48x84xbf16>, vector<84x768xbf16>, vector<48x768xf32> -> vector<48x768xf32>
    %76 = arith.addf %54, %75 : vector<48x768xf32>
    %c0_58 = arith.constant 0 : index
    %c8_59 = arith.constant 8 : index
    %c0_60 = arith.constant 0 : index
    %77 = vector.load %arg1[%c0_58, %c8_59, %c0_60] : memref<1x224x84xf32, #tpu.memory_space<vmem>>, vector<1x48x84xf32>
    %78 = vector.shape_cast %77 : vector<1x48x84xf32> to vector<48x84xf32>
    %79 = arith.truncf %78 : vector<48x84xf32> to vector<48x84xbf16>
    %cst_61 = arith.constant dense<0.000000e+00> : vector<48x768xf32>
    %80 = tpu.matmul %79, %71, %cst_61 {dimension_numbers = #tpu.dot_dimension_numbers<[1], [0], [0], [1], [0, 0, 1, 1], [], []>} : vector<48x84xbf16>, vector<84x768xbf16>, vector<48x768xf32> -> vector<48x768xf32>
    %81 = arith.addf %59, %80 : vector<48x768xf32>
    %c0_62 = arith.constant 0 : index
    %c64_63 = arith.constant 64 : index
    %c0_64 = arith.constant 0 : index
    %82 = vector.load %arg1[%c0_62, %c64_63, %c0_64] : memref<1x224x84xf32, #tpu.memory_space<vmem>>, vector<1x48x84xf32>
    %83 = vector.shape_cast %82 : vector<1x48x84xf32> to vector<48x84xf32>
    %84 = arith.truncf %83 : vector<48x84xf32> to vector<48x84xbf16>
    %cst_65 = arith.constant dense<0.000000e+00> : vector<48x768xf32>
    %85 = tpu.matmul %84, %71, %cst_65 {dimension_numbers = #tpu.dot_dimension_numbers<[1], [0], [0], [1], [0, 0, 1, 1], [], []>} : vector<48x84xbf16>, vector<84x768xbf16>, vector<48x768xf32> -> vector<48x768xf32>
    %86 = arith.addf %64, %85 : vector<48x768xf32>
    %c0_66 = arith.constant 0 : index
    %c120 = arith.constant 120 : index
    %c0_67 = arith.constant 0 : index
    %87 = vector.load %arg1[%c0_66, %c120, %c0_67] : memref<1x224x84xf32, #tpu.memory_space<vmem>>, vector<1x48x84xf32>
    %88 = vector.shape_cast %87 : vector<1x48x84xf32> to vector<48x84xf32>
    %89 = arith.truncf %88 : vector<48x84xf32> to vector<48x84xbf16>
    %cst_68 = arith.constant dense<0.000000e+00> : vector<48x768xf32>
    %90 = tpu.matmul %89, %71, %cst_68 {dimension_numbers = #tpu.dot_dimension_numbers<[1], [0], [0], [1], [0, 0, 1, 1], [], []>} : vector<48x84xbf16>, vector<84x768xbf16>, vector<48x768xf32> -> vector<48x768xf32>
    %91 = arith.addf %69, %90 : vector<48x768xf32>
    %c4 = arith.constant 4 : index
    %c0_69 = arith.constant 0 : index
    %c0_70 = arith.constant 0 : index
    %92 = vector.load %arg2[%c4, %c0_69, %c0_70] : memref<5x84x768xbf16, #tpu.memory_space<vmem>>, vector<1x84x768xbf16>
    %93 = vector.shape_cast %92 : vector<1x84x768xbf16> to vector<84x768xbf16>
    %c0_71 = arith.constant 0 : index
    %c8_72 = arith.constant 8 : index
    %c0_73 = arith.constant 0 : index
    %94 = vector.load %arg1[%c0_71, %c8_72, %c0_73] : memref<1x224x84xf32, #tpu.memory_space<vmem>>, vector<1x48x84xf32>
    %95 = vector.shape_cast %94 : vector<1x48x84xf32> to vector<48x84xf32>
    %96 = arith.truncf %95 : vector<48x84xf32> to vector<48x84xbf16>
    %cst_74 = arith.constant dense<0.000000e+00> : vector<48x768xf32>
    %97 = tpu.matmul %96, %93, %cst_74 {dimension_numbers = #tpu.dot_dimension_numbers<[1], [0], [0], [1], [0, 0, 1, 1], [], []>} : vector<48x84xbf16>, vector<84x768xbf16>, vector<48x768xf32> -> vector<48x768xf32>
    %98 = arith.addf %76, %97 : vector<48x768xf32>
    %c0_75 = arith.constant 0 : index
    %c64_76 = arith.constant 64 : index
    %c0_77 = arith.constant 0 : index
    %99 = vector.load %arg1[%c0_75, %c64_76, %c0_77] : memref<1x224x84xf32, #tpu.memory_space<vmem>>, vector<1x48x84xf32>
    %100 = vector.shape_cast %99 : vector<1x48x84xf32> to vector<48x84xf32>
    %101 = arith.truncf %100 : vector<48x84xf32> to vector<48x84xbf16>
    %cst_78 = arith.constant dense<0.000000e+00> : vector<48x768xf32>
    %102 = tpu.matmul %101, %93, %cst_78 {dimension_numbers = #tpu.dot_dimension_numbers<[1], [0], [0], [1], [0, 0, 1, 1], [], []>} : vector<48x84xbf16>, vector<84x768xbf16>, vector<48x768xf32> -> vector<48x768xf32>
    %103 = arith.addf %81, %102 : vector<48x768xf32>
    %c0_79 = arith.constant 0 : index
    %c120_80 = arith.constant 120 : index
    %c0_81 = arith.constant 0 : index
    %104 = vector.load %arg1[%c0_79, %c120_80, %c0_81] : memref<1x224x84xf32, #tpu.memory_space<vmem>>, vector<1x48x84xf32>
    %105 = vector.shape_cast %104 : vector<1x48x84xf32> to vector<48x84xf32>
    %106 = arith.truncf %105 : vector<48x84xf32> to vector<48x84xbf16>
    %cst_82 = arith.constant dense<0.000000e+00> : vector<48x768xf32>
    %107 = tpu.matmul %106, %93, %cst_82 {dimension_numbers = #tpu.dot_dimension_numbers<[1], [0], [0], [1], [0, 0, 1, 1], [], []>} : vector<48x84xbf16>, vector<84x768xbf16>, vector<48x768xf32> -> vector<48x768xf32>
    %108 = arith.addf %86, %107 : vector<48x768xf32>
    %c0_83 = arith.constant 0 : index
    %c176 = arith.constant 176 : index
    %c0_84 = arith.constant 0 : index
    %109 = vector.load %arg1[%c0_83, %c176, %c0_84] : memref<1x224x84xf32, #tpu.memory_space<vmem>>, vector<1x48x84xf32>
    %110 = vector.shape_cast %109 : vector<1x48x84xf32> to vector<48x84xf32>
    %111 = arith.truncf %110 : vector<48x84xf32> to vector<48x84xbf16>
    %cst_85 = arith.constant dense<0.000000e+00> : vector<48x768xf32>
    %112 = tpu.matmul %111, %93, %cst_85 {dimension_numbers = #tpu.dot_dimension_numbers<[1], [0], [0], [1], [0, 0, 1, 1], [], []>} : vector<48x84xbf16>, vector<84x768xbf16>, vector<48x768xf32> -> vector<48x768xf32>
    %113 = arith.addf %91, %112 : vector<48x768xf32>
    %c0_86 = arith.constant 0 : index
    %c0_87 = arith.constant 0 : index
    %114 = vector.load %arg3[%c0_86, %c0_87] : memref<1x768xf32, #tpu.memory_space<vmem>>, vector<1x768xf32>
    %115 = vector.broadcast %114 : vector<1x768xf32> to vector<48x768xf32>
    %116 = arith.addf %98, %115 : vector<48x768xf32>
    %c0_88 = arith.constant 0 : index
    %c0_89 = arith.constant 0 : index
    %117 = vector.load %arg3[%c0_88, %c0_89] : memref<1x768xf32, #tpu.memory_space<vmem>>, vector<1x768xf32>
    %118 = vector.broadcast %117 : vector<1x768xf32> to vector<48x768xf32>
    %119 = arith.addf %103, %118 : vector<48x768xf32>
    %c0_90 = arith.constant 0 : index
    %c0_91 = arith.constant 0 : index
    %120 = vector.load %arg3[%c0_90, %c0_91] : memref<1x768xf32, #tpu.memory_space<vmem>>, vector<1x768xf32>
    %121 = vector.broadcast %120 : vector<1x768xf32> to vector<48x768xf32>
    %122 = arith.addf %108, %121 : vector<48x768xf32>
    %c0_92 = arith.constant 0 : index
    %c0_93 = arith.constant 0 : index
    %123 = vector.load %arg3[%c0_92, %c0_93] : memref<1x768xf32, #tpu.memory_space<vmem>>, vector<1x768xf32>
    %124 = vector.broadcast %123 : vector<1x768xf32> to vector<48x768xf32>
    %125 = arith.addf %113, %124 : vector<48x768xf32>
    %126 = arith.maximumf %116, %119 : vector<48x768xf32>
    %127 = arith.maximumf %122, %125 : vector<48x768xf32>
    %128 = vector.extract_strided_slice %126 {offsets = [0, 0], sizes = [48, 384], strides = [1, 1]} : vector<48x768xf32> to vector<48x384xf32>
    %129 = vector.extract_strided_slice %126 {offsets = [0, 384], sizes = [48, 384], strides = [1, 1]} : vector<48x768xf32> to vector<48x384xf32>
    %130 = arith.maximumf %128, %129 : vector<48x384xf32>
    %cst_94 = arith.constant 0.000000e+00 : f32
    %131 = vector.broadcast %cst_94 : f32 to vector<48x384xf32>
    %132 = arith.maximumf %130, %131 : vector<48x384xf32>
    %133 = vector.extract_strided_slice %127 {offsets = [0, 0], sizes = [48, 384], strides = [1, 1]} : vector<48x768xf32> to vector<48x384xf32>
    %134 = vector.extract_strided_slice %127 {offsets = [0, 384], sizes = [48, 384], strides = [1, 1]} : vector<48x768xf32> to vector<48x384xf32>
    %135 = arith.maximumf %133, %134 : vector<48x384xf32>
    %cst_95 = arith.constant 0.000000e+00 : f32
    %136 = vector.broadcast %cst_95 : f32 to vector<48x384xf32>
    %137 = arith.maximumf %135, %136 : vector<48x384xf32>
    %cst_96 = arith.constant 0.000000e+00 : f32
    %138 = vector.broadcast %cst_96 : f32 to vector<32x512xf32>
    %cst_97 = arith.constant 0.000000e+00 : f32
    %139 = vector.broadcast %cst_97 : f32 to vector<32x512xf32>
    %c0_98 = arith.constant 0 : index
    %c0_99 = arith.constant 0 : index
    %c0_100 = arith.constant 0 : index
    %140 = vector.load %arg4[%c0_98, %c0_99, %c0_100] : memref<5x384x512xbf16, #tpu.memory_space<vmem>>, vector<1x384x512xbf16>
    %141 = vector.shape_cast %140 : vector<1x384x512xbf16> to vector<384x512xbf16>
    %142 = vector.extract_strided_slice %132 {offsets = [0, 0], sizes = [32, 384], strides = [1, 1]} : vector<48x384xf32> to vector<32x384xf32>
    %143 = vector.extract_strided_slice %137 {offsets = [0, 0], sizes = [32, 384], strides = [1, 1]} : vector<48x384xf32> to vector<32x384xf32>
    %144 = arith.truncf %142 : vector<32x384xf32> to vector<32x384xbf16>
    %cst_101 = arith.constant dense<0.000000e+00> : vector<32x512xf32>
    %145 = tpu.matmul %144, %141, %cst_101 {dimension_numbers = #tpu.dot_dimension_numbers<[1], [0], [0], [1], [0, 0, 1, 1], [], []>} : vector<32x384xbf16>, vector<384x512xbf16>, vector<32x512xf32> -> vector<32x512xf32>
    %146 = arith.addf %138, %145 : vector<32x512xf32>
    %147 = arith.truncf %143 : vector<32x384xf32> to vector<32x384xbf16>
    %cst_102 = arith.constant dense<0.000000e+00> : vector<32x512xf32>
    %148 = tpu.matmul %147, %141, %cst_102 {dimension_numbers = #tpu.dot_dimension_numbers<[1], [0], [0], [1], [0, 0, 1, 1], [], []>} : vector<32x384xbf16>, vector<384x512xbf16>, vector<32x512xf32> -> vector<32x512xf32>
    %149 = arith.addf %139, %148 : vector<32x512xf32>
    %c1_103 = arith.constant 1 : index
    %c0_104 = arith.constant 0 : index
    %c0_105 = arith.constant 0 : index
    %150 = vector.load %arg4[%c1_103, %c0_104, %c0_105] : memref<5x384x512xbf16, #tpu.memory_space<vmem>>, vector<1x384x512xbf16>
    %151 = vector.shape_cast %150 : vector<1x384x512xbf16> to vector<384x512xbf16>
    %152 = vector.extract_strided_slice %137 {offsets = [0, 0], sizes = [32, 384], strides = [1, 1]} : vector<48x384xf32> to vector<32x384xf32>
    %153 = vector.extract_strided_slice %132 {offsets = [8, 0], sizes = [32, 384], strides = [1, 1]} : vector<48x384xf32> to vector<32x384xf32>
    %154 = arith.truncf %152 : vector<32x384xf32> to vector<32x384xbf16>
    %cst_106 = arith.constant dense<0.000000e+00> : vector<32x512xf32>
    %155 = tpu.matmul %154, %151, %cst_106 {dimension_numbers = #tpu.dot_dimension_numbers<[1], [0], [0], [1], [0, 0, 1, 1], [], []>} : vector<32x384xbf16>, vector<384x512xbf16>, vector<32x512xf32> -> vector<32x512xf32>
    %156 = arith.addf %146, %155 : vector<32x512xf32>
    %157 = arith.truncf %153 : vector<32x384xf32> to vector<32x384xbf16>
    %cst_107 = arith.constant dense<0.000000e+00> : vector<32x512xf32>
    %158 = tpu.matmul %157, %151, %cst_107 {dimension_numbers = #tpu.dot_dimension_numbers<[1], [0], [0], [1], [0, 0, 1, 1], [], []>} : vector<32x384xbf16>, vector<384x512xbf16>, vector<32x512xf32> -> vector<32x512xf32>
    %159 = arith.addf %149, %158 : vector<32x512xf32>
    %c2_108 = arith.constant 2 : index
    %c0_109 = arith.constant 0 : index
    %c0_110 = arith.constant 0 : index
    %160 = vector.load %arg4[%c2_108, %c0_109, %c0_110] : memref<5x384x512xbf16, #tpu.memory_space<vmem>>, vector<1x384x512xbf16>
    %161 = vector.shape_cast %160 : vector<1x384x512xbf16> to vector<384x512xbf16>
    %162 = vector.extract_strided_slice %132 {offsets = [8, 0], sizes = [32, 384], strides = [1, 1]} : vector<48x384xf32> to vector<32x384xf32>
    %163 = vector.extract_strided_slice %137 {offsets = [8, 0], sizes = [32, 384], strides = [1, 1]} : vector<48x384xf32> to vector<32x384xf32>
    %164 = arith.truncf %162 : vector<32x384xf32> to vector<32x384xbf16>
    %cst_111 = arith.constant dense<0.000000e+00> : vector<32x512xf32>
    %165 = tpu.matmul %164, %161, %cst_111 {dimension_numbers = #tpu.dot_dimension_numbers<[1], [0], [0], [1], [0, 0, 1, 1], [], []>} : vector<32x384xbf16>, vector<384x512xbf16>, vector<32x512xf32> -> vector<32x512xf32>
    %166 = arith.addf %156, %165 : vector<32x512xf32>
    %167 = arith.truncf %163 : vector<32x384xf32> to vector<32x384xbf16>
    %cst_112 = arith.constant dense<0.000000e+00> : vector<32x512xf32>
    %168 = tpu.matmul %167, %161, %cst_112 {dimension_numbers = #tpu.dot_dimension_numbers<[1], [0], [0], [1], [0, 0, 1, 1], [], []>} : vector<32x384xbf16>, vector<384x512xbf16>, vector<32x512xf32> -> vector<32x512xf32>
    %169 = arith.addf %159, %168 : vector<32x512xf32>
    %c3_113 = arith.constant 3 : index
    %c0_114 = arith.constant 0 : index
    %c0_115 = arith.constant 0 : index
    %170 = vector.load %arg4[%c3_113, %c0_114, %c0_115] : memref<5x384x512xbf16, #tpu.memory_space<vmem>>, vector<1x384x512xbf16>
    %171 = vector.shape_cast %170 : vector<1x384x512xbf16> to vector<384x512xbf16>
    %172 = vector.extract_strided_slice %137 {offsets = [8, 0], sizes = [32, 384], strides = [1, 1]} : vector<48x384xf32> to vector<32x384xf32>
    %173 = vector.extract_strided_slice %132 {offsets = [16, 0], sizes = [32, 384], strides = [1, 1]} : vector<48x384xf32> to vector<32x384xf32>
    %174 = arith.truncf %172 : vector<32x384xf32> to vector<32x384xbf16>
    %cst_116 = arith.constant dense<0.000000e+00> : vector<32x512xf32>
    %175 = tpu.matmul %174, %171, %cst_116 {dimension_numbers = #tpu.dot_dimension_numbers<[1], [0], [0], [1], [0, 0, 1, 1], [], []>} : vector<32x384xbf16>, vector<384x512xbf16>, vector<32x512xf32> -> vector<32x512xf32>
    %176 = arith.addf %166, %175 : vector<32x512xf32>
    %177 = arith.truncf %173 : vector<32x384xf32> to vector<32x384xbf16>
    %cst_117 = arith.constant dense<0.000000e+00> : vector<32x512xf32>
    %178 = tpu.matmul %177, %171, %cst_117 {dimension_numbers = #tpu.dot_dimension_numbers<[1], [0], [0], [1], [0, 0, 1, 1], [], []>} : vector<32x384xbf16>, vector<384x512xbf16>, vector<32x512xf32> -> vector<32x512xf32>
    %179 = arith.addf %169, %178 : vector<32x512xf32>
    %c4_118 = arith.constant 4 : index
    %c0_119 = arith.constant 0 : index
    %c0_120 = arith.constant 0 : index
    %180 = vector.load %arg4[%c4_118, %c0_119, %c0_120] : memref<5x384x512xbf16, #tpu.memory_space<vmem>>, vector<1x384x512xbf16>
    %181 = vector.shape_cast %180 : vector<1x384x512xbf16> to vector<384x512xbf16>
    %182 = vector.extract_strided_slice %132 {offsets = [16, 0], sizes = [32, 384], strides = [1, 1]} : vector<48x384xf32> to vector<32x384xf32>
    %183 = vector.extract_strided_slice %137 {offsets = [16, 0], sizes = [32, 384], strides = [1, 1]} : vector<48x384xf32> to vector<32x384xf32>
    %184 = arith.truncf %182 : vector<32x384xf32> to vector<32x384xbf16>
    %cst_121 = arith.constant dense<0.000000e+00> : vector<32x512xf32>
    %185 = tpu.matmul %184, %181, %cst_121 {dimension_numbers = #tpu.dot_dimension_numbers<[1], [0], [0], [1], [0, 0, 1, 1], [], []>} : vector<32x384xbf16>, vector<384x512xbf16>, vector<32x512xf32> -> vector<32x512xf32>
    %186 = arith.addf %176, %185 : vector<32x512xf32>
    %187 = arith.truncf %183 : vector<32x384xf32> to vector<32x384xbf16>
    %cst_122 = arith.constant dense<0.000000e+00> : vector<32x512xf32>
    %188 = tpu.matmul %187, %181, %cst_122 {dimension_numbers = #tpu.dot_dimension_numbers<[1], [0], [0], [1], [0, 0, 1, 1], [], []>} : vector<32x384xbf16>, vector<384x512xbf16>, vector<32x512xf32> -> vector<32x512xf32>
    %189 = arith.addf %179, %188 : vector<32x512xf32>
    %c0_123 = arith.constant 0 : index
    %c0_124 = arith.constant 0 : index
    %190 = vector.load %arg5[%c0_123, %c0_124] : memref<1x512xf32, #tpu.memory_space<vmem>>, vector<1x512xf32>
    %191 = vector.broadcast %190 : vector<1x512xf32> to vector<32x512xf32>
    %192 = arith.addf %186, %191 : vector<32x512xf32>
    %c0_125 = arith.constant 0 : index
    %c0_126 = arith.constant 0 : index
    %193 = vector.load %arg5[%c0_125, %c0_126] : memref<1x512xf32, #tpu.memory_space<vmem>>, vector<1x512xf32>
    %194 = vector.broadcast %193 : vector<1x512xf32> to vector<32x512xf32>
    %195 = arith.addf %189, %194 : vector<32x512xf32>
    %196 = arith.maximumf %192, %195 : vector<32x512xf32>
    %197 = vector.extract_strided_slice %196 {offsets = [0, 0], sizes = [32, 256], strides = [1, 1]} : vector<32x512xf32> to vector<32x256xf32>
    %198 = vector.extract_strided_slice %196 {offsets = [0, 256], sizes = [32, 256], strides = [1, 1]} : vector<32x512xf32> to vector<32x256xf32>
    %199 = arith.maximumf %197, %198 : vector<32x256xf32>
    %cst_127 = arith.constant 0.000000e+00 : f32
    %200 = vector.broadcast %cst_127 : f32 to vector<32x256xf32>
    %201 = arith.maximumf %199, %200 : vector<32x256xf32>
    %cst_128 = arith.constant 0.000000e+00 : f32
    %202 = vector.broadcast %cst_128 : f32 to vector<8x512xf32>
    %c0_129 = arith.constant 0 : index
    %c0_130 = arith.constant 0 : index
    %203 = vector.load %arg7[%c0_129, %c0_130] : memref<1x512xf32, #tpu.memory_space<vmem>>, vector<1x512xf32>
    %204 = vector.broadcast %203 : vector<1x512xf32> to vector<8x512xf32>
    %205 = arith.addf %202, %204 : vector<8x512xf32>
    %206 = vector.extract_strided_slice %201 {offsets = [0, 0], sizes = [8, 256], strides = [1, 1]} : vector<32x256xf32> to vector<8x256xf32>
    %207 = arith.truncf %206 : vector<8x256xf32> to vector<8x256xbf16>
    %c0_131 = arith.constant 0 : index
    %c0_132 = arith.constant 0 : index
    %c0_133 = arith.constant 0 : index
    %208 = vector.load %arg6[%c0_131, %c0_132, %c0_133] : memref<4x256x512xbf16, #tpu.memory_space<vmem>>, vector<1x256x512xbf16>
    %209 = vector.shape_cast %208 : vector<1x256x512xbf16> to vector<256x512xbf16>
    %cst_134 = arith.constant dense<0.000000e+00> : vector<8x512xf32>
    %210 = tpu.matmul %207, %209, %cst_134 {dimension_numbers = #tpu.dot_dimension_numbers<[1], [0], [0], [1], [0, 0, 1, 1], [], []>} : vector<8x256xbf16>, vector<256x512xbf16>, vector<8x512xf32> -> vector<8x512xf32>
    %211 = arith.addf %205, %210 : vector<8x512xf32>
    %212 = vector.extract_strided_slice %201 {offsets = [8, 0], sizes = [8, 256], strides = [1, 1]} : vector<32x256xf32> to vector<8x256xf32>
    %213 = arith.truncf %212 : vector<8x256xf32> to vector<8x256xbf16>
    %c1_135 = arith.constant 1 : index
    %c0_136 = arith.constant 0 : index
    %c0_137 = arith.constant 0 : index
    %214 = vector.load %arg6[%c1_135, %c0_136, %c0_137] : memref<4x256x512xbf16, #tpu.memory_space<vmem>>, vector<1x256x512xbf16>
    %215 = vector.shape_cast %214 : vector<1x256x512xbf16> to vector<256x512xbf16>
    %cst_138 = arith.constant dense<0.000000e+00> : vector<8x512xf32>
    %216 = tpu.matmul %213, %215, %cst_138 {dimension_numbers = #tpu.dot_dimension_numbers<[1], [0], [0], [1], [0, 0, 1, 1], [], []>} : vector<8x256xbf16>, vector<256x512xbf16>, vector<8x512xf32> -> vector<8x512xf32>
    %217 = arith.addf %211, %216 : vector<8x512xf32>
    %218 = vector.extract_strided_slice %201 {offsets = [16, 0], sizes = [8, 256], strides = [1, 1]} : vector<32x256xf32> to vector<8x256xf32>
    %219 = arith.truncf %218 : vector<8x256xf32> to vector<8x256xbf16>
    %c2_139 = arith.constant 2 : index
    %c0_140 = arith.constant 0 : index
    %c0_141 = arith.constant 0 : index
    %220 = vector.load %arg6[%c2_139, %c0_140, %c0_141] : memref<4x256x512xbf16, #tpu.memory_space<vmem>>, vector<1x256x512xbf16>
    %221 = vector.shape_cast %220 : vector<1x256x512xbf16> to vector<256x512xbf16>
    %cst_142 = arith.constant dense<0.000000e+00> : vector<8x512xf32>
    %222 = tpu.matmul %219, %221, %cst_142 {dimension_numbers = #tpu.dot_dimension_numbers<[1], [0], [0], [1], [0, 0, 1, 1], [], []>} : vector<8x256xbf16>, vector<256x512xbf16>, vector<8x512xf32> -> vector<8x512xf32>
    %223 = arith.addf %217, %222 : vector<8x512xf32>
    %224 = vector.extract_strided_slice %201 {offsets = [24, 0], sizes = [8, 256], strides = [1, 1]} : vector<32x256xf32> to vector<8x256xf32>
    %225 = arith.truncf %224 : vector<8x256xf32> to vector<8x256xbf16>
    %c3_143 = arith.constant 3 : index
    %c0_144 = arith.constant 0 : index
    %c0_145 = arith.constant 0 : index
    %226 = vector.load %arg6[%c3_143, %c0_144, %c0_145] : memref<4x256x512xbf16, #tpu.memory_space<vmem>>, vector<1x256x512xbf16>
    %227 = vector.shape_cast %226 : vector<1x256x512xbf16> to vector<256x512xbf16>
    %cst_146 = arith.constant dense<0.000000e+00> : vector<8x512xf32>
    %228 = tpu.matmul %225, %227, %cst_146 {dimension_numbers = #tpu.dot_dimension_numbers<[1], [0], [0], [1], [0, 0, 1, 1], [], []>} : vector<8x256xbf16>, vector<256x512xbf16>, vector<8x512xf32> -> vector<8x512xf32>
    %229 = arith.addf %223, %228 : vector<8x512xf32>
    %c0_147 = arith.constant 0 : index
    %c0_148 = arith.constant 0 : index
    %230 = vector.load %arg8[%c0_147, %c0_148] : memref<8x512xf32, #tpu.memory_space<vmem>>, vector<8x512xf32>
    tpu.vector_store %arg8[%c0_147, %c0_148], %229 {strides = array<i32>} : memref<8x512xf32, #tpu.memory_space<vmem>>, vector<8x512xf32>,
    return
  }
  func.func @transform_0(%arg0: i32) -> (i32, i32, i32) {
    %c0_i32 = arith.constant 0 : i32
    %c0_i32_0 = arith.constant 0 : i32
    %c0_i32_1 = arith.constant 0 : i32
    return %arg0, %c0_i32, %c0_i32_0 : i32, i32, i32
  }
  func.func @transform_1(%arg0: i32) -> (i32, i32, i32) {
    %c0_i32 = arith.constant 0 : i32
    %c0_i32_0 = arith.constant 0 : i32
    %c0_i32_1 = arith.constant 0 : i32
    %c0_i32_2 = arith.constant 0 : i32
    return %c0_i32, %c0_i32_0, %c0_i32_1 : i32, i32, i32
  }
  func.func @transform_2(%arg0: i32) -> (i32, i32) {
    %c0_i32 = arith.constant 0 : i32
    %c0_i32_0 = arith.constant 0 : i32
    %c0_i32_1 = arith.constant 0 : i32
    return %c0_i32, %c0_i32_0 : i32, i32
  }
  func.func @transform_3(%arg0: i32) -> (i32, i32, i32) {
    %c0_i32 = arith.constant 0 : i32
    %c0_i32_0 = arith.constant 0 : i32
    %c0_i32_1 = arith.constant 0 : i32
    %c0_i32_2 = arith.constant 0 : i32
    return %c0_i32, %c0_i32_0, %c0_i32_1 : i32, i32, i32
  }
  func.func @transform_4(%arg0: i32) -> (i32, i32) {
    %c0_i32 = arith.constant 0 : i32
    %c0_i32_0 = arith.constant 0 : i32
    %c0_i32_1 = arith.constant 0 : i32
    return %c0_i32, %c0_i32_0 : i32, i32
  }
  func.func @transform_5(%arg0: i32) -> (i32, i32, i32) {
    %c0_i32 = arith.constant 0 : i32
    %c0_i32_0 = arith.constant 0 : i32
    %c0_i32_1 = arith.constant 0 : i32
    %c0_i32_2 = arith.constant 0 : i32
    return %c0_i32, %c0_i32_0, %c0_i32_1 : i32, i32, i32
  }
  func.func @transform_6(%arg0: i32) -> (i32, i32) {
    %c0_i32 = arith.constant 0 : i32
    %c0_i32_0 = arith.constant 0 : i32
    %c0_i32_1 = arith.constant 0 : i32
    return %c0_i32, %c0_i32_0 : i32, i32
  }
  func.func @transform_7(%arg0: i32) -> (i32, i32) {
    %c0_i32 = arith.constant 0 : i32
    %c0_i32_0 = arith.constant 0 : i32
    return %arg0, %c0_i32 : i32, i32
  }
}

</mosaic_0001>

<llo_original>
// kernel: lenet_encoder_forward.1
$region0: #{lenet_encoder_forward.1}
  #allocation0 [shape = 'u32[]', space=smem, size = 0x4, offset = 0x4, fixed_abs, tag = 'smem constant byte address 0x4 - core index']
  #allocation1 [shape = 'u32[144,128]{1,0:T(1,128)}', space=vmem, size = 0x12000, scoped, tag = 'internal scratch']
  %s0 = inlined_call_operand.vmem [shape: f32[1,224,84], index: 0, kind: input, shape index: {}]
  %s1 = inlined_call_operand.hbm [shape: bf16[5,84,768], index: 1, kind: input, shape index: {}]
  %s2 = inlined_call_operand.hbm [shape: f32[1,768], index: 2, kind: input, shape index: {}]
  %s3 = inlined_call_operand.hbm [shape: bf16[5,384,512], index: 3, kind: input, shape index: {}]
  %s4 = inlined_call_operand.hbm [shape: f32[1,512], index: 4, kind: input, shape index: {}]
  %s5 = inlined_call_operand.hbm [shape: bf16[4,256,512], index: 5, kind: input, shape index: {}]
  %s6 = inlined_call_operand.hbm [shape: f32[1,512], index: 6, kind: input, shape index: {}]
  %s7 = inlined_call_operand.vmem [shape: f32[8,512], index: 7, kind: output, shape index: {}]
  %s8 = sld [smem:[#allocation0]]
  $region62: #{lenet_encoder_forward.1} parent=0
    _
  %s10 = ssub.s32 1, %s8
  %s11 = scalar_select 0, %s10, %s8
  $region1: #{lenet_encoder_forward.1} parent=0
    #allocation2 [shape = 'u8[675840]{0}', space=vmem, size = 0xa5000, scoped, tag = 'input window, operand 1, single buffered']
    #allocation3 [shape = 's32[1]{0}', space=sflag, size = 0x4, scoped, tag = 'scoped memory for lenet_encoder_forward.1']
    #allocation4 [shape = 'u8[3072]{0}', space=vmem, size = 0xc00, scoped, tag = 'input window, operand 2, single buffered']
    #allocation5 [shape = 's32[1]{0}', space=sflag, size = 0x4, scoped, tag = 'scoped memory for lenet_encoder_forward.1']
    #allocation6 [shape = 'u8[1966080]{0}', space=vmem, size = 0x1e0000, scoped, tag = 'input window, operand 3, single buffered']
    #allocation7 [shape = 'u8[2048]{0}', space=vmem, size = 0x800, scoped, tag = 'input window, operand 4, single buffered']
    #allocation8 [shape = 's32[1]{0}', space=sflag, size = 0x4, scoped, tag = 'scoped memory for lenet_encoder_forward.1']
    #allocation9 [shape = 'u8[1048576]{0}', space=vmem, size = 0x100000, scoped, tag = 'input window, operand 5, single buffered']
    #allocation10 [shape = 'u8[2048]{0}', space=vmem, size = 0x800, scoped, tag = 'input window, operand 6, single buffered']
    #allocation11 [shape = 's32[1]{0}', space=sflag, size = 0x4, scoped, tag = 'scoped memory for lenet_encoder_forward.1']
    %12 = vsyncpa [#allocation3], 0
    %13 = vsyncpa [#allocation5], 0
    %14 = vsyncpa [#allocation8], 0
    %15 = vsyncpa [#allocation11], 0
    // Predicated region
    $region2: #{lenet_encoder_forward.1} parent=1 // pred_check
      _
    $region3: #{lenet_encoder_forward.1} parent=1 // pred_check_branch
      %17 = sbr.rel (0) target = $region5
    $region4: #{lenet_encoder_forward.1} parent=1 // pred_region
      _
    $region5: #{lenet_encoder_forward.1} parent=1 // pred_fallthru
      _
    // Predicated region
    $region6: #{lenet_encoder_forward.1} parent=1 // pred_check
      _
    $region7: #{lenet_encoder_forward.1} parent=1 // pred_check_branch
      %19 = sbr.rel (0) target = $region9
    $region8: #{lenet_encoder_forward.1} parent=1 // pred_region
      %s21 = ssub.s32 21120, 21120
      %22 = vsyncadd [#allocation3], %s21
      %s23 = sshll.u32 [#allocation2], 4
      %s24 = int_to_ptr.vmem [resolvable:$true] %s23
      %29 = dma.hbm_to_vmem [thread:$0]  %s1, 21120, %s24, [#allocation3], 384, 384, 24
    $region9: #{lenet_encoder_forward.1} parent=1 // pred_fallthru
      _
    // Predicated region
    $region10: #{lenet_encoder_forward.1} parent=1 // pred_check
      _
    $region11: #{lenet_encoder_forward.1} parent=1 // pred_check_branch
      %31 = sbr.rel (0) target = $region13
    $region12: #{lenet_encoder_forward.1} parent=1 // pred_region
      %s33 = ssub.s32 96, 96
      %34 = vsyncadd [#allocation5], %s33
      %s36 = sshll.u32 [#allocation4], 4
      %s37 = int_to_ptr.vmem [resolvable:$true] %s36
      %39 = dma.hbm_to_vmem [thread:$0]  %s2, 96, %s37, [#allocation5]
    $region13: #{lenet_encoder_forward.1} parent=1 // pred_fallthru
      _
    // Predicated region
    $region14: #{lenet_encoder_forward.1} parent=1 // pred_check
      _
    $region15: #{lenet_encoder_forward.1} parent=1 // pred_check_branch
      %41 = sbr.rel (0) target = $region17
    $region16: #{lenet_encoder_forward.1} parent=1 // pred_region
      %s43 = ssub.s32 61440, 61440
      %44 = vsyncadd [#allocation5], %s43
      %s45 = sshll.u32 [#allocation6], 4
      %s46 = int_to_ptr.vmem [resolvable:$true] %s45
      %51 = dma.hbm_to_vmem [thread:$0]  %s3, 61440, %s46, [#allocation5], 256, 256, 16
    $region17: #{lenet_encoder_forward.1} parent=1 // pred_fallthru
      _
    // Predicated region
    $region18: #{lenet_encoder_forward.1} parent=1 // pred_check
      _
    $region19: #{lenet_encoder_forward.1} parent=1 // pred_check_branch
      %53 = sbr.rel (0) target = $region21
    $region20: #{lenet_encoder_forward.1} parent=1 // pred_region
      %s55 = ssub.s32 64, 64
      %56 = vsyncadd [#allocation8], %s55
      %s58 = sshll.u32 [#allocation7], 4
      %s59 = int_to_ptr.vmem [resolvable:$true] %s58
      %61 = dma.hbm_to_vmem [thread:$0]  %s4, 64, %s59, [#allocation8]
    $region21: #{lenet_encoder_forward.1} parent=1 // pred_fallthru
      _
    // Predicated region
    $region22: #{lenet_encoder_forward.1} parent=1 // pred_check
      _
    $region23: #{lenet_encoder_forward.1} parent=1 // pred_check_branch
      %63 = sbr.rel (0) target = $region25
    $region24: #{lenet_encoder_forward.1} parent=1 // pred_region
      %s65 = ssub.s32 32768, 32768
      %66 = vsyncadd [#allocation8], %s65
      %s67 = sshll.u32 [#allocation9], 4
      %s68 = int_to_ptr.vmem [resolvable:$true] %s67
      %73 = dma.hbm_to_vmem [thread:$0]  %s5, 32768, %s68, [#allocation8], 256, 256, 16
    $region25: #{lenet_encoder_forward.1} parent=1 // pred_fallthru
      _
    // Predicated region
    $region26: #{lenet_encoder_forward.1} parent=1 // pred_check
      _
    $region27: #{lenet_encoder_forward.1} parent=1 // pred_check_branch
      %75 = sbr.rel (0) target = $region29
    $region28: #{lenet_encoder_forward.1} parent=1 // pred_region
      %s77 = ssub.s32 64, 64
      %78 = vsyncadd [#allocation11], %s77
      %s80 = sshll.u32 [#allocation10], 4
      %s81 = int_to_ptr.vmem [resolvable:$true] %s80
      %83 = dma.hbm_to_vmem [thread:$0]  %s6, 64, %s81, [#allocation11]
    $region29: #{lenet_encoder_forward.1} parent=1 // pred_fallthru
      _
    // Predicated region
    $region30: #{lenet_encoder_forward.1} parent=1 // pred_check
      _
    $region31: #{lenet_encoder_forward.1} parent=1 // pred_check_branch
      %85 = sbr.rel (0) target = $region33
    $region32: #{lenet_encoder_forward.1} parent=1 // pred_region
      %86 = dma.done [#allocation3], 21120
    $region33: #{lenet_encoder_forward.1} parent=1 // pred_fallthru
      _
    // Predicated region
    $region34: #{lenet_encoder_forward.1} parent=1 // pred_check
      _
    $region35: #{lenet_encoder_forward.1} parent=1 // pred_check_branch
      %88 = sbr.rel (0) target = $region37
    $region36: #{lenet_encoder_forward.1} parent=1 // pred_region
      %89 = dma.done [#allocation5], 96
    $region37: #{lenet_encoder_forward.1} parent=1 // pred_fallthru
      _
    // Predicated region
    $region38: #{lenet_encoder_forward.1} parent=1 // pred_check
      _
    $region39: #{lenet_encoder_forward.1} parent=1 // pred_check_branch
      %91 = sbr.rel (0) target = $region41
    $region40: #{lenet_encoder_forward.1} parent=1 // pred_region
      %92 = dma.done [#allocation5], 61440
    $region41: #{lenet_encoder_forward.1} parent=1 // pred_fallthru
      _
    // Predicated region
    $region42: #{lenet_encoder_forward.1} parent=1 // pred_check
      _
    $region43: #{lenet_encoder_forward.1} parent=1 // pred_check_branch
      %94 = sbr.rel (0) target = $region45
    $region44: #{lenet_encoder_forward.1} parent=1 // pred_region
      %95 = dma.done [#allocation8], 64
    $region45: #{lenet_encoder_forward.1} parent=1 // pred_fallthru
      _
    // Predicated region
    $region46: #{lenet_encoder_forward.1} parent=1 // pred_check
      _
    $region47: #{lenet_encoder_forward.1} parent=1 // pred_check_branch
      %97 = sbr.rel (0) target = $region49
    $region48: #{lenet_encoder_forward.1} parent=1 // pred_region
      %98 = dma.done [#allocation8], 32768
    $region49: #{lenet_encoder_forward.1} parent=1 // pred_fallthru
      _
    // Predicated region
    $region50: #{lenet_encoder_forward.1} parent=1 // pred_check
      _
    $region51: #{lenet_encoder_forward.1} parent=1 // pred_check_branch
      %100 = sbr.rel (0) target = $region53
    $region52: #{lenet_encoder_forward.1} parent=1 // pred_region
      %101 = dma.done [#allocation11], 64
    $region53: #{lenet_encoder_forward.1} parent=1 // pred_fallthru
      _
    %v103 = vld [vmem:[#allocation2] sm:$0xff]
    %v104 = vld [vmem:[#allocation2 + $0x8] sm:$0xff]
    %v105 = vld [vmem:[#allocation2 + $0x10] sm:$0xff]
    %v106 = vld [vmem:[#allocation2 + $0x18] sm:$0xff]
    %v107 = vld [vmem:[#allocation2 + $0x20] sm:$0xff]
    %v108 = vld [vmem:[#allocation2 + $0x28] sm:$0xff]
    %v109 = vld [vmem:[#allocation2 + $0x30] sm:$0xff]
    %v110 = vld [vmem:[#allocation2 + $0x38] sm:$0xff]
    %v111 = vld [vmem:[#allocation2 + $0x40] sm:$0xff]
    %v112 = vld [vmem:[#allocation2 + $0x48] sm:$0xff]
    %v113 = vld [vmem:[#allocation2 + $0x50] sm:$0xff]
    %v114 = vld [vmem:[#allocation2 + $0x58] sm:$0xff]
    %v115 = vld [vmem:[#allocation2 + $0x60] sm:$0xff]
    %v116 = vld [vmem:[#allocation2 + $0x68] sm:$0xff]
    %v117 = vld [vmem:[#allocation2 + $0x70] sm:$0xff]
    %v118 = vld [vmem:[#allocation2 + $0x78] sm:$0xff]
    %v119 = vld [vmem:[#allocation2 + $0x80] sm:$0xff]
    %v120 = vld [vmem:[#allocation2 + $0x88] sm:$0xff]
    %v121 = vld [vmem:[#allocation2 + $0x90] sm:$0xff]
    %v122 = vld [vmem:[#allocation2 + $0x98] sm:$0xff]
    %v123 = vld [vmem:[#allocation2 + $0xa0] sm:$0xff]
    %v124 = vld [vmem:[#allocation2 + $0xa8] sm:$0xff]
    %v125 = vld [vmem:[#allocation2 + $0xb0] sm:$0xff]
    %v126 = vld [vmem:[#allocation2 + $0xb8] sm:$0xff]
    %v127 = vld [vmem:[#allocation2 + $0xc0] sm:$0xff]
    %v128 = vld [vmem:[#allocation2 + $0xc8] sm:$0xff]
    %v129 = vld [vmem:[#allocation2 + $0xd0] sm:$0xff]
    %v130 = vld [vmem:[#allocation2 + $0xd8] sm:$0xff]
    %v131 = vld [vmem:[#allocation2 + $0xe0] sm:$0xff]
    %v132 = vld [vmem:[#allocation2 + $0xe8] sm:$0xff]
    %v133 = vld [vmem:[#allocation2 + $0xf0] sm:$0x33]
    %v134 = vld [vmem:[#allocation2 + $0xf8] sm:$0x33]
    %v135 = vld [vmem:[#allocation2 + $0x100] sm:$0x33]
    %v136 = vld [vmem:[%s0] sm:$0xff]
    %v137 = vld [vmem:[%s0 + $0x8] sm:$0xff]
    %v138 = vld [vmem:[%s0 + $0x10] sm:$0xff]
    %v139 = vld [vmem:[%s0 + $0x18] sm:$0xff]
    %v140 = vld [vmem:[%s0 + $0x20] sm:$0xff]
    %v141 = vld [vmem:[%s0 + $0x28] sm:$0xff]
    %v142 = vpack.c.bf16 %v137, %v136
    %v143 = vpack.c.bf16 %v139, %v138
    %v144 = vpack.c.bf16 %v141, %v140
    %v145 = vld [vmem:[%s0 + $0x38] sm:$0xff]
    %v146 = vld [vmem:[%s0 + $0x40] sm:$0xff]
    %v147 = vld [vmem:[%s0 + $0x48] sm:$0xff]
    %v148 = vld [vmem:[%s0 + $0x50] sm:$0xff]
    %v149 = vld [vmem:[%s0 + $0x58] sm:$0xff]
    %v150 = vld [vmem:[%s0 + $0x60] sm:$0xff]
    %v151 = vpack.c.bf16 %v146, %v145
    %v152 = vpack.c.bf16 %v148, %v147
    %v153 = vpack.c.bf16 %v150, %v149
    %v154 = vld [vmem:[%s0 + $0x70] sm:$0xff]
    %v155 = vld [vmem:[%s0 + $0x78] sm:$0xff]
    %v156 = vld [vmem:[%s0 + $0x80] sm:$0xff]
    %v157 = vld [vmem:[%s0 + $0x88] sm:$0xff]
    %v158 = vld [vmem:[%s0 + $0x90] sm:$0xff]
    %v159 = vld [vmem:[%s0 + $0x98] sm:$0xff]
    %v160 = vpack.c.bf16 %v155, %v154
    %v161 = vpack.c.bf16 %v157, %v156
    %v162 = vpack.c.bf16 %v159, %v158
    %v163 = vld [vmem:[%s0 + $0xa8] sm:$0xff]
    %v164 = vld [vmem:[%s0 + $0xb0] sm:$0xff]
    %v165 = vld [vmem:[%s0 + $0xb8] sm:$0xff]
    %v166 = vld [vmem:[%s0 + $0xc0] sm:$0xff]
    %v167 = vld [vmem:[%s0 + $0xc8] sm:$0xff]
    %v168 = vld [vmem:[%s0 + $0xd0] sm:$0xff]
    %v169 = vpack.c.bf16 %v164, %v163
    %v170 = vpack.c.bf16 %v166, %v165
    %v171 = vpack.c.bf16 %v168, %v167
    %s172 = scalar_lea.vmem [#allocation2], 264
    %v173 = vld [vmem:[%s172] sm:$0xff]
    %v174 = vld [vmem:[%s172 + $0x8] sm:$0xff]
    %v175 = vld [vmem:[%s172 + $0x10] sm:$0xff]
    %v176 = vld [vmem:[%s172 + $0x18] sm:$0xff]
    %v177 = vld [vmem:[%s172 + $0x20] sm:$0xff]
    %v178 = vld [vmem:[%s172 + $0x28] sm:$0xff]
    %v179 = vld [vmem:[%s172 + $0x30] sm:$0xff]
    %v180 = vld [vmem:[%s172 + $0x38] sm:$0xff]
    %v181 = vld [vmem:[%s172 + $0x40] sm:$0xff]
    %v182 = vld [vmem:[%s172 + $0x48] sm:$0xff]
    %v183 = vld [vmem:[%s172 + $0x50] sm:$0xff]
    %v184 = vld [vmem:[%s172 + $0x58] sm:$0xff]
    %v185 = vld [vmem:[%s172 + $0x60] sm:$0xff]
    %v186 = vld [vmem:[%s172 + $0x68] sm:$0xff]
    %v187 = vld [vmem:[%s172 + $0x70] sm:$0xff]
    %v188 = vld [vmem:[%s172 + $0x78] sm:$0xff]
    %v189 = vld [vmem:[%s172 + $0x80] sm:$0xff]
    %v190 = vld [vmem:[%s172 + $0x88] sm:$0xff]
    %v191 = vld [vmem:[%s172 + $0x90] sm:$0xff]
    %v192 = vld [vmem:[%s172 + $0x98] sm:$0xff]
    %v193 = vld [vmem:[%s172 + $0xa0] sm:$0xff]
    %v194 = vld [vmem:[%s172 + $0xa8] sm:$0xff]
    %v195 = vld [vmem:[%s172 + $0xb0] sm:$0xff]
    %v196 = vld [vmem:[%s172 + $0xb8] sm:$0xff]
    %v197 = vld [vmem:[%s172 + $0xc0] sm:$0xff]
    %v198 = vld [vmem:[%s172 + $0xc8] sm:$0xff]
    %v199 = vld [vmem:[%s172 + $0xd0] sm:$0xff]
    %v200 = vld [vmem:[%s172 + $0xd8] sm:$0xff]
    %v201 = vld [vmem:[%s172 + $0xe0] sm:$0xff]
    %v202 = vld [vmem:[%s172 + $0xe8] sm:$0xff]
    %v203 = vld [vmem:[%s172 + $0xf0] sm:$0x33]
    %v204 = vld [vmem:[%s172 + $0xf8] sm:$0x33]
    %v205 = vld [vmem:[%s172 + $0x100] sm:$0x33]
    %v239 = vunpack.c.l.b16 %v173
    %v240 = vunpack.c.h.b16 %v173
    %v241 = vunpack.c.l.b16 %v174
    %v242 = vunpack.c.h.b16 %v174
    %v243 = vunpack.c.l.b16 %v175
    %v244 = vunpack.c.h.b16 %v175
    %v245 = vunpack.c.l.b16 %v176
    %v246 = vunpack.c.h.b16 %v176
    %v247 = vunpack.c.l.b16 %v177
    %v248 = vunpack.c.h.b16 %v177
    %v249 = vunpack.c.l.b16 %v178
    %v250 = vunpack.c.h.b16 %v178
    %v251 = vunpack.c.l.b16 %v179
    %v252 = vunpack.c.h.b16 %v179
    %v253 = vunpack.c.l.b16 %v180
    %v254 = vunpack.c.h.b16 %v180
    %v255 = vunpack.c.l.b16 %v181
    %v256 = vunpack.c.h.b16 %v181
    %v257 = vunpack.c.l.b16 %v182
    %v258 = vunpack.c.h.b16 %v182
    %v259 = vunpack.c.l.b16 %v183
    %v260 = vunpack.c.h.b16 %v183
    %v261 = vunpack.c.l.b16 %v184
    %v262 = vunpack.c.h.b16 %v184
    %v263 = vunpack.c.l.b16 %v185
    %v264 = vunpack.c.h.b16 %v185
    %v265 = vunpack.c.l.b16 %v186
    %v266 = vunpack.c.h.b16 %v186
    %v267 = vunpack.c.l.b16 %v187
    %v268 = vunpack.c.h.b16 %v187
    %v269 = vunpack.c.l.b16 %v188
    %v270 = vunpack.c.h.b16 %v188
    %v271 = vunpack.c.l.b16 %v189
    %v272 = vunpack.c.h.b16 %v189
    %v273 = vunpack.c.l.b16 %v190
    %v274 = vunpack.c.h.b16 %v190
    %v275 = vunpack.c.l.b16 %v191
    %v276 = vunpack.c.h.b16 %v191
    %v277 = vunpack.c.l.b16 %v192
    %v278 = vunpack.c.h.b16 %v192
    %v279 = vunpack.c.l.b16 %v193
    %v280 = vunpack.c.h.b16 %v193
    %v281 = vunpack.c.l.b16 %v194
    %v282 = vunpack.c.h.b16 %v194
    %v283 = vunpack.c.l.b16 %v195
    %v284 = vunpack.c.h.b16 %v195
    %v285 = vunpack.c.l.b16 %v196
    %v286 = vunpack.c.h.b16 %v196
    %v287 = vunpack.c.l.b16 %v197
    %v288 = vunpack.c.h.b16 %v197
    %v289 = vunpack.c.l.b16 %v198
    %v290 = vunpack.c.h.b16 %v198
    %v291 = vunpack.c.l.b16 %v199
    %v292 = vunpack.c.h.b16 %v199
    %v293 = vunpack.c.l.b16 %v200
    %v294 = vunpack.c.h.b16 %v200
    %v295 = vunpack.c.l.b16 %v201
    %v296 = vunpack.c.h.b16 %v201
    %v297 = vunpack.c.l.b16 %v202
    %v298 = vunpack.c.h.b16 %v202
    %v299 = vunpack.c.l.b16 %v203
    %v300 = vunpack.c.h.b16 %v203
    %v301 = vunpack.c.l.b16 %v204
    %v302 = vunpack.c.h.b16 %v204
    %v303 = vunpack.c.l.b16 %v205
    %v304 = vunpack.c.h.b16 %v205
    %v305 = vpack.c.b16 %v245, %v239
    %v306 = vpack.c.b16 %v246, %v240
    %v307 = vpack.c.b16 %v247, %v241
    %v308 = vpack.c.b16 %v248, %v242
    %v309 = vpack.c.b16 %v249, %v243
    %v310 = vpack.c.b16 %v250, %v244
    %v311 = vpack.c.b16 %v257, %v251
    %v312 = vpack.c.b16 %v258, %v252
    %v313 = vpack.c.b16 %v259, %v253
    %v314 = vpack.c.b16 %v260, %v254
    %v315 = vpack.c.b16 %v261, %v255
    %v316 = vpack.c.b16 %v262, %v256
    %v317 = vpack.c.b16 %v269, %v263
    %v318 = vpack.c.b16 %v270, %v264
    %v319 = vpack.c.b16 %v271, %v265
    %v320 = vpack.c.b16 %v272, %v266
    %v321 = vpack.c.b16 %v273, %v267
    %v322 = vpack.c.b16 %v274, %v268
    %v323 = vpack.c.b16 %v281, %v275
    %v324 = vpack.c.b16 %v282, %v276
    %v325 = vpack.c.b16 %v283, %v277
    %v326 = vpack.c.b16 %v284, %v278
    %v327 = vpack.c.b16 %v285, %v279
    %v328 = vpack.c.b16 %v286, %v280
    %v329 = vpack.c.b16 %v293, %v287
    %v330 = vpack.c.b16 %v294, %v288
    %v331 = vpack.c.b16 %v295, %v289
    %v332 = vpack.c.b16 %v296, %v290
    %v333 = vpack.c.b16 %v297, %v291
    %v334 = vpack.c.b16 %v298, %v292
    %v335 = vpack.c.b16 %v299, %v299
    %v336 = vpack.c.b16 %v300, %v300
    %v337 = vpack.c.b16 %v301, %v301
    %v338 = vpack.c.b16 %v302, %v302
    %v339 = vpack.c.b16 %v303, %v303
    %v340 = vpack.c.b16 %v304, %v304
    %vm371 = vcmask 687104
    %v373 = vsel %vm371, %v151, 0
    %v376 = vsel %vm371, %v152, 0
    %v379 = vsel %vm371, %v153, 0
    %vm381 = vcmask 1041408
    %v383 = vsel %vm381, %v335, 0
    %v386 = vsel %vm381, %v336, 0
    %v389 = vsel %vm381, %v337, 0
    %v392 = vsel %vm381, %v338, 0
    %v395 = vsel %vm381, %v339, 0
    %v398 = vsel %vm381, %v340, 0
    %400 = vmatprep.subr.bf16.mxu0 %v306
    %401 = vmatpush1.bf16.msra.mxu0 %v305
    %402 = vmatprep.subr.bf16.mxu0 %v312
    %403 = vmatpush1.bf16.msra.mxu0 %v311
    %404 = vmatprep.subr.bf16.mxu0 %v318
    %405 = vmatpush1.bf16.msra.mxu0 %v317
    %406 = vmatprep.subr.bf16.mxu0 %v324
    %407 = vmatpush1.bf16.msra.mxu0 %v323
    %408 = vmatprep.subr.bf16.mxu0 %v330
    %409 = vmatpush1.bf16.msra.mxu0 %v329
    %410 = vmatprep.subr.bf16.mxu0 %v386
    %411 = vmatpush1.bf16.msra.mxu0 %v383
    %412 = vmatprep.subr.bf16.mxu0 0
    %413 = vmatpush1.bf16.msra.mxu0 0
    %414 = vmatprep.subr.bf16.mxu0 0
    %415 = vmatpush1.bf16.msra.mxu0 0
    %416 = vmatprep.subr.bf16.mxu0 0
    %417 = vmatpush1.bf16.msra.mxu0 0
    %418 = vmatprep.subr.bf16.mxu0 0
    %419 = vmatpush1.bf16.msra.mxu0 0
    %420 = vmatprep.subr.bf16.mxu0 0
    %421 = vmatpush1.bf16.msra.mxu0 0
    %422 = vmatprep.subr.bf16.mxu0 0
    %423 = vmatpush1.bf16.msra.mxu0 0
    %424 = vmatprep.subr.bf16.mxu0 0
    %425 = vmatpush1.bf16.msra.mxu0 0
    %426 = vmatprep.subr.bf16.mxu0 0
    %427 = vmatpush1.bf16.msra.mxu0 0
    %428 = vmatprep.subr.bf16.mxu0 0
    %429 = vmatpush1.bf16.msra.mxu0 0
    %430 = vmatprep.subr.bf16.mxu0 0
    %431 = vmatpush1.bf16.msra.mxu0 0
    %432 = vmatprep.mubr.bf16.mxu0 0
    %433 = vmatmul.mubr.bf16.gmra.mrb[0].mxu0 %v373
    %v434 = vpop.f32.mrb[0].mxu0
    %v435 = vadd.f32 0.0, %v434
    %v436 = vpop.f32.mrb[0].mxu0
    %v437 = vadd.f32 0.0, %v436
    %v438 = vpop.f32.mrb[0].mxu0
    %v439 = vadd.f32 0.0, %v438
    %v440 = vpop.f32.mrb[0].mxu0
    %v441 = vadd.f32 0.0, %v440
    %442 = vmatprep.mubr.bf16.mxu0 0
    %443 = vmatmul.mubr.bf16.gmra.mrb[0].mxu0 %v376
    %v444 = vpop.f32.mrb[0].mxu0
    %v445 = vadd.f32 0.0, %v444
    %v446 = vpop.f32.mrb[0].mxu0
    %v447 = vadd.f32 0.0, %v446
    %v448 = vpop.f32.mrb[0].mxu0
    %v449 = vadd.f32 0.0, %v448
    %v450 = vpop.f32.mrb[0].mxu0
    %v451 = vadd.f32 0.0, %v450
    %452 = vmatprep.mubr.bf16.mxu0 0
    %453 = vmatmul.mubr.bf16.gmra.mrb[0].mxu0 %v379
    %v454 = vpop.f32.mrb[0].mxu0
    %v455 = vadd.f32 0.0, %v454
    %v456 = vpop.f32.mrb[0].mxu0
    %v457 = vadd.f32 0.0, %v456
    %v458 = vpop.f32.mrb[0].mxu0
    %v459 = vadd.f32 0.0, %v458
    %v460 = vpop.f32.mrb[0].mxu0
    %v461 = vadd.f32 0.0, %v460
    %462 = vdwg.mxu0
    %463 = vmatprep.subr.bf16.mxu0 %v308
    %464 = vmatpush1.bf16.msra.mxu0 %v307
    %465 = vmatprep.subr.bf16.mxu0 %v314
    %466 = vmatpush1.bf16.msra.mxu0 %v313
    %467 = vmatprep.subr.bf16.mxu0 %v320
    %468 = vmatpush1.bf16.msra.mxu0 %v319
    %469 = vmatprep.subr.bf16.mxu0 %v326
    %470 = vmatpush1.bf16.msra.mxu0 %v325
    %471 = vmatprep.subr.bf16.mxu0 %v332
    %472 = vmatpush1.bf16.msra.mxu0 %v331
    %473 = vmatprep.subr.bf16.mxu0 %v392
    %474 = vmatpush1.bf16.msra.mxu0 %v389
    %475 = vmatprep.subr.bf16.mxu0 0
    %476 = vmatpush1.bf16.msra.mxu0 0
    %477 = vmatprep.subr.bf16.mxu0 0
    %478 = vmatpush1.bf16.msra.mxu0 0
    %479 = vmatprep.subr.bf16.mxu0 0
    %480 = vmatpush1.bf16.msra.mxu0 0
    %481 = vmatprep.subr.bf16.mxu0 0
    %482 = vmatpush1.bf16.msra.mxu0 0
    %483 = vmatprep.subr.bf16.mxu0 0
    %484 = vmatpush1.bf16.msra.mxu0 0
    %485 = vmatprep.subr.bf16.mxu0 0
    %486 = vmatpush1.bf16.msra.mxu0 0
    %487 = vmatprep.subr.bf16.mxu0 0
    %488 = vmatpush1.bf16.msra.mxu0 0
    %489 = vmatprep.subr.bf16.mxu0 0
    %490 = vmatpush1.bf16.msra.mxu0 0
    %491 = vmatprep.subr.bf16.mxu0 0
    %492 = vmatpush1.bf16.msra.mxu0 0
    %493 = vmatprep.subr.bf16.mxu0 0
    %494 = vmatpush1.bf16.msra.mxu0 0
    %495 = vmatprep.mubr.bf16.mxu0 0
    %496 = vmatmul.mubr.bf16.gmra.mrb[0].mxu0 %v373
    %v497 = vpop.f32.mrb[0].mxu0
    %v498 = vadd.f32 0.0, %v497
    %v499 = vpop.f32.mrb[0].mxu0
    %v500 = vadd.f32 0.0, %v499
    %v501 = vpop.f32.mrb[0].mxu0
    %v502 = vadd.f32 0.0, %v501
    %v503 = vpop.f32.mrb[0].mxu0
    %v504 = vadd.f32 0.0, %v503
    %505 = vmatprep.mubr.bf16.mxu0 0
    %506 = vmatmul.mubr.bf16.gmra.mrb[0].mxu0 %v376
    %v507 = vpop.f32.mrb[0].mxu0
    %v508 = vadd.f32 0.0, %v507
    %v509 = vpop.f32.mrb[0].mxu0
    %v510 = vadd.f32 0.0, %v509
    %v511 = vpop.f32.mrb[0].mxu0
    %v512 = vadd.f32 0.0, %v511
    %v513 = vpop.f32.mrb[0].mxu0
    %v514 = vadd.f32 0.0, %v513
    %515 = vmatprep.mubr.bf16.mxu0 0
    %516 = vmatmul.mubr.bf16.gmra.mrb[0].mxu0 %v379
    %v517 = vpop.f32.mrb[0].mxu0
    %v518 = vadd.f32 0.0, %v517
    %v519 = vpop.f32.mrb[0].mxu0
    %v520 = vadd.f32 0.0, %v519
    %v521 = vpop.f32.mrb[0].mxu0
    %v522 = vadd.f32 0.0, %v521
    %v523 = vpop.f32.mrb[0].mxu0
    %v524 = vadd.f32 0.0, %v523
    %525 = vdwg.mxu0
    %526 = vmatprep.subr.bf16.mxu0 %v310
    %527 = vmatpush1.bf16.msra.mxu0 %v309
    %528 = vmatprep.subr.bf16.mxu0 %v316
    %529 = vmatpush1.bf16.msra.mxu0 %v315
    %530 = vmatprep.subr.bf16.mxu0 %v322
    %531 = vmatpush1.bf16.msra.mxu0 %v321
    %532 = vmatprep.subr.bf16.mxu0 %v328
    %533 = vmatpush1.bf16.msra.mxu0 %v327
    %534 = vmatprep.subr.bf16.mxu0 %v334
    %535 = vmatpush1.bf16.msra.mxu0 %v333
    %536 = vmatprep.subr.bf16.mxu0 %v398
    %537 = vmatpush1.bf16.msra.mxu0 %v395
    %538 = vmatprep.subr.bf16.mxu0 0
    %539 = vmatpush1.bf16.msra.mxu0 0
    %540 = vmatprep.subr.bf16.mxu0 0
    %541 = vmatpush1.bf16.msra.mxu0 0
    %542 = vmatprep.subr.bf16.mxu0 0
    %543 = vmatpush1.bf16.msra.mxu0 0
    %544 = vmatprep.subr.bf16.mxu0 0
    %545 = vmatpush1.bf16.msra.mxu0 0
    %546 = vmatprep.subr.bf16.mxu0 0
    %547 = vmatpush1.bf16.msra.mxu0 0
    %548 = vmatprep.subr.bf16.mxu0 0
    %549 = vmatpush1.bf16.msra.mxu0 0
    %550 = vmatprep.subr.bf16.mxu0 0
    %551 = vmatpush1.bf16.msra.mxu0 0
    %552 = vmatprep.subr.bf16.mxu0 0
    %553 = vmatpush1.bf16.msra.mxu0 0
    %554 = vmatprep.subr.bf16.mxu0 0
    %555 = vmatpush1.bf16.msra.mxu0 0
    %556 = vmatprep.subr.bf16.mxu0 0
    %557 = vmatpush1.bf16.msra.mxu0 0
    %558 = vmatprep.mubr.bf16.mxu0 0
    %559 = vmatmul.mubr.bf16.gmra.mrb[0].mxu0 %v373
    %v560 = vpop.f32.mrb[0].mxu0
    %v561 = vadd.f32 0.0, %v560
    %v562 = vpop.f32.mrb[0].mxu0
    %v563 = vadd.f32 0.0, %v562
    %v564 = vpop.f32.mrb[0].mxu0
    %v565 = vadd.f32 0.0, %v564
    %v566 = vpop.f32.mrb[0].mxu0
    %v567 = vadd.f32 0.0, %v566
    %568 = vmatprep.mubr.bf16.mxu0 0
    %569 = vmatmul.mubr.bf16.gmra.mrb[0].mxu0 %v376
    %v570 = vpop.f32.mrb[0].mxu0
    %v571 = vadd.f32 0.0, %v570
    %v572 = vpop.f32.mrb[0].mxu0
    %v573 = vadd.f32 0.0, %v572
    %v574 = vpop.f32.mrb[0].mxu0
    %v575 = vadd.f32 0.0, %v574
    %v576 = vpop.f32.mrb[0].mxu0
    %v577 = vadd.f32 0.0, %v576
    %578 = vmatprep.mubr.bf16.mxu0 0
    %579 = vmatmul.mubr.bf16.gmra.mrb[0].mxu0 %v379
    %v580 = vpop.f32.mrb[0].mxu0
    %v581 = vadd.f32 0.0, %v580
    %v582 = vpop.f32.mrb[0].mxu0
    %v583 = vadd.f32 0.0, %v582
    %v584 = vpop.f32.mrb[0].mxu0
    %v585 = vadd.f32 0.0, %v584
    %v586 = vpop.f32.mrb[0].mxu0
    %v587 = vadd.f32 0.0, %v586
    %588 = vdwg.mxu0
    %v622 = vunpack.c.l.b16 %v103
    %v623 = vunpack.c.h.b16 %v103
    %v624 = vunpack.c.l.b16 %v104
    %v625 = vunpack.c.h.b16 %v104
    %v626 = vunpack.c.l.b16 %v105
    %v627 = vunpack.c.h.b16 %v105
    %v628 = vunpack.c.l.b16 %v106
    %v629 = vunpack.c.h.b16 %v106
    %v630 = vunpack.c.l.b16 %v107
    %v631 = vunpack.c.h.b16 %v107
    %v632 = vunpack.c.l.b16 %v108
    %v633 = vunpack.c.h.b16 %v108
    %v634 = vunpack.c.l.b16 %v109
    %v635 = vunpack.c.h.b16 %v109
    %v636 = vunpack.c.l.b16 %v110
    %v637 = vunpack.c.h.b16 %v110
    %v638 = vunpack.c.l.b16 %v111
    %v639 = vunpack.c.h.b16 %v111
    %v640 = vunpack.c.l.b16 %v112
    %v641 = vunpack.c.h.b16 %v112
    %v642 = vunpack.c.l.b16 %v113
    %v643 = vunpack.c.h.b16 %v113
    %v644 = vunpack.c.l.b16 %v114
    %v645 = vunpack.c.h.b16 %v114
    %v646 = vunpack.c.l.b16 %v115
    %v647 = vunpack.c.h.b16 %v115
    %v648 = vunpack.c.l.b16 %v116
    %v649 = vunpack.c.h.b16 %v116
    %v650 = vunpack.c.l.b16 %v117
    %v651 = vunpack.c.h.b16 %v117
    %v652 = vunpack.c.l.b16 %v118
    %v653 = vunpack.c.h.b16 %v118
    %v654 = vunpack.c.l.b16 %v119
    %v655 = vunpack.c.h.b16 %v119
    %v656 = vunpack.c.l.b16 %v120
    %v657 = vunpack.c.h.b16 %v120
    %v658 = vunpack.c.l.b16 %v121
    %v659 = vunpack.c.h.b16 %v121
    %v660 = vunpack.c.l.b16 %v122
    %v661 = vunpack.c.h.b16 %v122
    %v662 = vunpack.c.l.b16 %v123
    %v663 = vunpack.c.h.b16 %v123
    %v664 = vunpack.c.l.b16 %v124
    %v665 = vunpack.c.h.b16 %v124
    %v666 = vunpack.c.l.b16 %v125
    %v667 = vunpack.c.h.b16 %v125
    %v668 = vunpack.c.l.b16 %v126
    %v669 = vunpack.c.h.b16 %v126
    %v670 = vunpack.c.l.b16 %v127
    %v671 = vunpack.c.h.b16 %v127
    %v672 = vunpack.c.l.b16 %v128
    %v673 = vunpack.c.h.b16 %v128
    %v674 = vunpack.c.l.b16 %v129
    %v675 = vunpack.c.h.b16 %v129
    %v676 = vunpack.c.l.b16 %v130
    %v677 = vunpack.c.h.b16 %v130
    %v678 = vunpack.c.l.b16 %v131
    %v679 = vunpack.c.h.b16 %v131
    %v680 = vunpack.c.l.b16 %v132
    %v681 = vunpack.c.h.b16 %v132
    %v682 = vunpack.c.l.b16 %v133
    %v683 = vunpack.c.h.b16 %v133
    %v684 = vunpack.c.l.b16 %v134
    %v685 = vunpack.c.h.b16 %v134
    %v686 = vunpack.c.l.b16 %v135
    %v687 = vunpack.c.h.b16 %v135
    %v688 = vpack.c.b16 %v628, %v622
    %v689 = vpack.c.b16 %v629, %v623
    %v690 = vpack.c.b16 %v630, %v624
    %v691 = vpack.c.b16 %v631, %v625
    %v692 = vpack.c.b16 %v632, %v626
    %v693 = vpack.c.b16 %v633, %v627
    %v694 = vpack.c.b16 %v640, %v634
    %v695 = vpack.c.b16 %v641, %v635
    %v696 = vpack.c.b16 %v642, %v636
    %v697 = vpack.c.b16 %v643, %v637
    %v698 = vpack.c.b16 %v644, %v638
    %v699 = vpack.c.b16 %v645, %v639
    %v700 = vpack.c.b16 %v652, %v646
    %v701 = vpack.c.b16 %v653, %v647
    %v702 = vpack.c.b16 %v654, %v648
    %v703 = vpack.c.b16 %v655, %v649
    %v704 = vpack.c.b16 %v656, %v650
    %v705 = vpack.c.b16 %v657, %v651
    %v706 = vpack.c.b16 %v664, %v658
    %v707 = vpack.c.b16 %v665, %v659
    %v708 = vpack.c.b16 %v666, %v660
    %v709 = vpack.c.b16 %v667, %v661
    %v710 = vpack.c.b16 %v668, %v662
    %v711 = vpack.c.b16 %v669, %v663
    %v712 = vpack.c.b16 %v676, %v670
    %v713 = vpack.c.b16 %v677, %v671
    %v714 = vpack.c.b16 %v678, %v672
    %v715 = vpack.c.b16 %v679, %v673
    %v716 = vpack.c.b16 %v680, %v674
    %v717 = vpack.c.b16 %v681, %v675
    %v718 = vpack.c.b16 %v682, %v682
    %v719 = vpack.c.b16 %v683, %v683
    %v720 = vpack.c.b16 %v684, %v684
    %v721 = vpack.c.b16 %v685, %v685
    %v722 = vpack.c.b16 %v686, %v686
    %v723 = vpack.c.b16 %v687, %v687
    %v755 = vsel %vm371, %v142, 0
    %v758 = vsel %vm371, %v143, 0
    %v761 = vsel %vm371, %v144, 0
    %v764 = vsel %vm381, %v718, 0
    %v767 = vsel %vm381, %v719, 0
    %v770 = vsel %vm381, %v720, 0
    %v773 = vsel %vm381, %v721, 0
    %v776 = vsel %vm381, %v722, 0
    %v779 = vsel %vm381, %v723, 0
    %781 = vmatprep.subr.bf16.mxu0 %v689
    %782 = vmatpush1.bf16.msra.mxu0 %v688
    %783 = vmatprep.subr.bf16.mxu0 %v695
    %784 = vmatpush1.bf16.msra.mxu0 %v694
    %785 = vmatprep.subr.bf16.mxu0 %v701
    %786 = vmatpush1.bf16.msra.mxu0 %v700
    %787 = vmatprep.subr.bf16.mxu0 %v707
    %788 = vmatpush1.bf16.msra.mxu0 %v706
    %789 = vmatprep.subr.bf16.mxu0 %v713
    %790 = vmatpush1.bf16.msra.mxu0 %v712
    %791 = vmatprep.subr.bf16.mxu0 %v767
    %792 = vmatpush1.bf16.msra.mxu0 %v764
    %793 = vmatprep.subr.bf16.mxu0 0
    %794 = vmatpush1.bf16.msra.mxu0 0
    %795 = vmatprep.subr.bf16.mxu0 0
    %796 = vmatpush1.bf16.msra.mxu0 0
    %797 = vmatprep.subr.bf16.mxu0 0
    %798 = vmatpush1.bf16.msra.mxu0 0
    %799 = vmatprep.subr.bf16.mxu0 0
    %800 = vmatpush1.bf16.msra.mxu0 0
    %801 = vmatprep.subr.bf16.mxu0 0
    %802 = vmatpush1.bf16.msra.mxu0 0
    %803 = vmatprep.subr.bf16.mxu0 0
    %804 = vmatpush1.bf16.msra.mxu0 0
    %805 = vmatprep.subr.bf16.mxu0 0
    %806 = vmatpush1.bf16.msra.mxu0 0
    %807 = vmatprep.subr.bf16.mxu0 0
    %808 = vmatpush1.bf16.msra.mxu0 0
    %809 = vmatprep.subr.bf16.mxu0 0
    %810 = vmatpush1.bf16.msra.mxu0 0
    %811 = vmatprep.subr.bf16.mxu0 0
    %812 = vmatpush1.bf16.msra.mxu0 0
    %813 = vmatprep.mubr.bf16.mxu0 0
    %814 = vmatmul.mubr.bf16.gmra.mrb[0].mxu0 %v755
    %v815 = vpop.f32.mrb[0].mxu0
    %v816 = vadd.f32 %v435, %v815
    %v817 = vpop.f32.mrb[0].mxu0
    %v818 = vadd.f32 %v437, %v817
    %v819 = vpop.f32.mrb[0].mxu0
    %v820 = vadd.f32 %v439, %v819
    %v821 = vpop.f32.mrb[0].mxu0
    %v822 = vadd.f32 %v441, %v821
    %823 = vmatprep.mubr.bf16.mxu0 0
    %824 = vmatmul.mubr.bf16.gmra.mrb[0].mxu0 %v758
    %v825 = vpop.f32.mrb[0].mxu0
    %v826 = vadd.f32 %v445, %v825
    %v827 = vpop.f32.mrb[0].mxu0
    %v828 = vadd.f32 %v447, %v827
    %v829 = vpop.f32.mrb[0].mxu0
    %v830 = vadd.f32 %v449, %v829
    %v831 = vpop.f32.mrb[0].mxu0
    %v832 = vadd.f32 %v451, %v831
    %833 = vmatprep.mubr.bf16.mxu0 0
    %834 = vmatmul.mubr.bf16.gmra.mrb[0].mxu0 %v761
    %v835 = vpop.f32.mrb[0].mxu0
    %v836 = vadd.f32 %v455, %v835
    %v837 = vpop.f32.mrb[0].mxu0
    %v838 = vadd.f32 %v457, %v837
    %v839 = vpop.f32.mrb[0].mxu0
    %v840 = vadd.f32 %v459, %v839
    %v841 = vpop.f32.mrb[0].mxu0
    %v842 = vadd.f32 %v461, %v841
    %843 = vdwg.mxu0
    %844 = vmatprep.subr.bf16.mxu0 %v691
    %845 = vmatpush1.bf16.msra.mxu0 %v690
    %846 = vmatprep.subr.bf16.mxu0 %v697
    %847 = vmatpush1.bf16.msra.mxu0 %v696
    %848 = vmatprep.subr.bf16.mxu0 %v703
    %849 = vmatpush1.bf16.msra.mxu0 %v702
    %850 = vmatprep.subr.bf16.mxu0 %v709
    %851 = vmatpush1.bf16.msra.mxu0 %v708
    %852 = vmatprep.subr.bf16.mxu0 %v715
    %853 = vmatpush1.bf16.msra.mxu0 %v714
    %854 = vmatprep.subr.bf16.mxu0 %v773
    %855 = vmatpush1.bf16.msra.mxu0 %v770
    %856 = vmatprep.subr.bf16.mxu0 0
    %857 = vmatpush1.bf16.msra.mxu0 0
    %858 = vmatprep.subr.bf16.mxu0 0
    %859 = vmatpush1.bf16.msra.mxu0 0
    %860 = vmatprep.subr.bf16.mxu0 0
    %861 = vmatpush1.bf16.msra.mxu0 0
    %862 = vmatprep.subr.bf16.mxu0 0
    %863 = vmatpush1.bf16.msra.mxu0 0
    %864 = vmatprep.subr.bf16.mxu0 0
    %865 = vmatpush1.bf16.msra.mxu0 0
    %866 = vmatprep.subr.bf16.mxu0 0
    %867 = vmatpush1.bf16.msra.mxu0 0
    %868 = vmatprep.subr.bf16.mxu0 0
    %869 = vmatpush1.bf16.msra.mxu0 0
    %870 = vmatprep.subr.bf16.mxu0 0
    %871 = vmatpush1.bf16.msra.mxu0 0
    %872 = vmatprep.subr.bf16.mxu0 0
    %873 = vmatpush1.bf16.msra.mxu0 0
    %874 = vmatprep.subr.bf16.mxu0 0
    %875 = vmatpush1.bf16.msra.mxu0 0
    %876 = vmatprep.mubr.bf16.mxu0 0
    %877 = vmatmul.mubr.bf16.gmra.mrb[0].mxu0 %v755
    %v878 = vpop.f32.mrb[0].mxu0
    %v879 = vadd.f32 %v498, %v878
    %v880 = vpop.f32.mrb[0].mxu0
    %v881 = vadd.f32 %v500, %v880
    %v882 = vpop.f32.mrb[0].mxu0
    %v883 = vadd.f32 %v502, %v882
    %v884 = vpop.f32.mrb[0].mxu0
    %v885 = vadd.f32 %v504, %v884
    %886 = vmatprep.mubr.bf16.mxu0 0
    %887 = vmatmul.mubr.bf16.gmra.mrb[0].mxu0 %v758
    %v888 = vpop.f32.mrb[0].mxu0
    %v889 = vadd.f32 %v508, %v888
    %v890 = vpop.f32.mrb[0].mxu0
    %v891 = vadd.f32 %v510, %v890
    %v892 = vpop.f32.mrb[0].mxu0
    %v893 = vadd.f32 %v512, %v892
    %v894 = vpop.f32.mrb[0].mxu0
    %v895 = vadd.f32 %v514, %v894
    %896 = vmatprep.mubr.bf16.mxu0 0
    %897 = vmatmul.mubr.bf16.gmra.mrb[0].mxu0 %v761
    %v898 = vpop.f32.mrb[0].mxu0
    %v899 = vadd.f32 %v518, %v898
    %v900 = vpop.f32.mrb[0].mxu0
    %v901 = vadd.f32 %v520, %v900
    %v902 = vpop.f32.mrb[0].mxu0
    %v903 = vadd.f32 %v522, %v902
    %v904 = vpop.f32.mrb[0].mxu0
    %v905 = vadd.f32 %v524, %v904
    %906 = vdwg.mxu0
    %907 = vmatprep.subr.bf16.mxu0 %v693
    %908 = vmatpush1.bf16.msra.mxu0 %v692
    %909 = vmatprep.subr.bf16.mxu0 %v699
    %910 = vmatpush1.bf16.msra.mxu0 %v698
    %911 = vmatprep.subr.bf16.mxu0 %v705
    %912 = vmatpush1.bf16.msra.mxu0 %v704
    %913 = vmatprep.subr.bf16.mxu0 %v711
    %914 = vmatpush1.bf16.msra.mxu0 %v710
    %915 = vmatprep.subr.bf16.mxu0 %v717
    %916 = vmatpush1.bf16.msra.mxu0 %v716
    %917 = vmatprep.subr.bf16.mxu0 %v779
    %918 = vmatpush1.bf16.msra.mxu0 %v776
    %919 = vmatprep.subr.bf16.mxu0 0
    %920 = vmatpush1.bf16.msra.mxu0 0
    %921 = vmatprep.subr.bf16.mxu0 0
    %922 = vmatpush1.bf16.msra.mxu0 0
    %923 = vmatprep.subr.bf16.mxu0 0
    %924 = vmatpush1.bf16.msra.mxu0 0
    %925 = vmatprep.subr.bf16.mxu0 0
    %926 = vmatpush1.bf16.msra.mxu0 0
    %927 = vmatprep.subr.bf16.mxu0 0
    %928 = vmatpush1.bf16.msra.mxu0 0
    %929 = vmatprep.subr.bf16.mxu0 0
    %930 = vmatpush1.bf16.msra.mxu0 0
    %931 = vmatprep.subr.bf16.mxu0 0
    %932 = vmatpush1.bf16.msra.mxu0 0
    %933 = vmatprep.subr.bf16.mxu0 0
    %934 = vmatpush1.bf16.msra.mxu0 0
    %935 = vmatprep.subr.bf16.mxu0 0
    %936 = vmatpush1.bf16.msra.mxu0 0
    %937 = vmatprep.subr.bf16.mxu0 0
    %938 = vmatpush1.bf16.msra.mxu0 0
    %939 = vmatprep.mubr.bf16.mxu0 0
    %940 = vmatmul.mubr.bf16.gmra.mrb[0].mxu0 %v755
    %v941 = vpop.f32.mrb[0].mxu0
    %v942 = vadd.f32 %v561, %v941
    %v943 = vpop.f32.mrb[0].mxu0
    %v944 = vadd.f32 %v563, %v943
    %v945 = vpop.f32.mrb[0].mxu0
    %v946 = vadd.f32 %v565, %v945
    %v947 = vpop.f32.mrb[0].mxu0
    %v948 = vadd.f32 %v567, %v947
    %949 = vmatprep.mubr.bf16.mxu0 0
    %950 = vmatmul.mubr.bf16.gmra.mrb[0].mxu0 %v758
    %v951 = vpop.f32.mrb[0].mxu0
    %v952 = vadd.f32 %v571, %v951
    %v953 = vpop.f32.mrb[0].mxu0
    %v954 = vadd.f32 %v573, %v953
    %v955 = vpop.f32.mrb[0].mxu0
    %v956 = vadd.f32 %v575, %v955
    %v957 = vpop.f32.mrb[0].mxu0
    %v958 = vadd.f32 %v577, %v957
    %959 = vmatprep.mubr.bf16.mxu0 0
    %960 = vmatmul.mubr.bf16.gmra.mrb[0].mxu0 %v761
    %v961 = vpop.f32.mrb[0].mxu0
    %v962 = vadd.f32 %v581, %v961
    %v963 = vpop.f32.mrb[0].mxu0
    %v964 = vadd.f32 %v583, %v963
    %v965 = vpop.f32.mrb[0].mxu0
    %v966 = vadd.f32 %v585, %v965
    %v967 = vpop.f32.mrb[0].mxu0
    %v968 = vadd.f32 %v587, %v967
    %969 = vdwg.mxu0
    %v971 = vsel %vm371, %v160, 0
    %v974 = vsel %vm371, %v161, 0
    %v977 = vsel %vm371, %v162, 0
    %979 = vmatprep.subr.bf16.mxu0 %v306
    %980 = vmatpush1.bf16.msra.mxu0 %v305
    %981 = vmatprep.subr.bf16.mxu0 %v312
    %982 = vmatpush1.bf16.msra.mxu0 %v311
    %983 = vmatprep.subr.bf16.mxu0 %v318
    %984 = vmatpush1.bf16.msra.mxu0 %v317
    %985 = vmatprep.subr.bf16.mxu0 %v324
    %986 = vmatpush1.bf16.msra.mxu0 %v323
    %987 = vmatprep.subr.bf16.mxu0 %v330
    %988 = vmatpush1.bf16.msra.mxu0 %v329
    %989 = vmatprep.subr.bf16.mxu0 %v386
    %990 = vmatpush1.bf16.msra.mxu0 %v383
    %991 = vmatprep.subr.bf16.mxu0 0
    %992 = vmatpush1.bf16.msra.mxu0 0
    %993 = vmatprep.subr.bf16.mxu0 0
    %994 = vmatpush1.bf16.msra.mxu0 0
    %995 = vmatprep.subr.bf16.mxu0 0
    %996 = vmatpush1.bf16.msra.mxu0 0
    %997 = vmatprep.subr.bf16.mxu0 0
    %998 = vmatpush1.bf16.msra.mxu0 0
    %999 = vmatprep.subr.bf16.mxu0 0
    %1000 = vmatpush1.bf16.msra.mxu0 0
    %1001 = vmatprep.subr.bf16.mxu0 0
    %1002 = vmatpush1.bf16.msra.mxu0 0
    %1003 = vmatprep.subr.bf16.mxu0 0
    %1004 = vmatpush1.bf16.msra.mxu0 0
    %1005 = vmatprep.subr.bf16.mxu0 0
    %1006 = vmatpush1.bf16.msra.mxu0 0
    %1007 = vmatprep.subr.bf16.mxu0 0
    %1008 = vmatpush1.bf16.msra.mxu0 0
    %1009 = vmatprep.subr.bf16.mxu0 0
    %1010 = vmatpush1.bf16.msra.mxu0 0
    %1011 = vmatprep.mubr.bf16.mxu0 0
    %1012 = vmatmul.mubr.bf16.gmra.mrb[0].mxu0 %v971
    %v1013 = vpop.f32.mrb[0].mxu0
    %v1014 = vadd.f32 0.0, %v1013
    %v1015 = vpop.f32.mrb[0].mxu0
    %v1016 = vadd.f32 0.0, %v1015
    %v1017 = vpop.f32.mrb[0].mxu0
    %v1018 = vadd.f32 0.0, %v1017
    %v1019 = vpop.f32.mrb[0].mxu0
    %v1020 = vadd.f32 0.0, %v1019
    %1021 = vmatprep.mubr.bf16.mxu0 0
    %1022 = vmatmul.mubr.bf16.gmra.mrb[0].mxu0 %v974
    %v1023 = vpop.f32.mrb[0].mxu0
    %v1024 = vadd.f32 0.0, %v1023
    %v1025 = vpop.f32.mrb[0].mxu0
    %v1026 = vadd.f32 0.0, %v1025
    %v1027 = vpop.f32.mrb[0].mxu0
    %v1028 = vadd.f32 0.0, %v1027
    %v1029 = vpop.f32.mrb[0].mxu0
    %v1030 = vadd.f32 0.0, %v1029
    %1031 = vmatprep.mubr.bf16.mxu0 0
    %1032 = vmatmul.mubr.bf16.gmra.mrb[0].mxu0 %v977
    %v1033 = vpop.f32.mrb[0].mxu0
    %v1034 = vadd.f32 0.0, %v1033
    %v1035 = vpop.f32.mrb[0].mxu0
    %v1036 = vadd.f32 0.0, %v1035
    %v1037 = vpop.f32.mrb[0].mxu0
    %v1038 = vadd.f32 0.0, %v1037
    %v1039 = vpop.f32.mrb[0].mxu0
    %v1040 = vadd.f32 0.0, %v1039
    %1041 = vdwg.mxu0
    %1042 = vmatprep.subr.bf16.mxu0 %v308
    %1043 = vmatpush1.bf16.msra.mxu0 %v307
    %1044 = vmatprep.subr.bf16.mxu0 %v314
    %1045 = vmatpush1.bf16.msra.mxu0 %v313
    %1046 = vmatprep.subr.bf16.mxu0 %v320
    %1047 = vmatpush1.bf16.msra.mxu0 %v319
    %1048 = vmatprep.subr.bf16.mxu0 %v326
    %1049 = vmatpush1.bf16.msra.mxu0 %v325
    %1050 = vmatprep.subr.bf16.mxu0 %v332
    %1051 = vmatpush1.bf16.msra.mxu0 %v331
    %1052 = vmatprep.subr.bf16.mxu0 %v392
    %1053 = vmatpush1.bf16.msra.mxu0 %v389
    %1054 = vmatprep.subr.bf16.mxu0 0
    %1055 = vmatpush1.bf16.msra.mxu0 0
    %1056 = vmatprep.subr.bf16.mxu0 0
    %1057 = vmatpush1.bf16.msra.mxu0 0
    %1058 = vmatprep.subr.bf16.mxu0 0
    %1059 = vmatpush1.bf16.msra.mxu0 0
    %1060 = vmatprep.subr.bf16.mxu0 0
    %1061 = vmatpush1.bf16.msra.mxu0 0
    %1062 = vmatprep.subr.bf16.mxu0 0
    %1063 = vmatpush1.bf16.msra.mxu0 0
    %1064 = vmatprep.subr.bf16.mxu0 0
    %1065 = vmatpush1.bf16.msra.mxu0 0
    %1066 = vmatprep.subr.bf16.mxu0 0
    %1067 = vmatpush1.bf16.msra.mxu0 0
    %1068 = vmatprep.subr.bf16.mxu0 0
    %1069 = vmatpush1.bf16.msra.mxu0 0
    %1070 = vmatprep.subr.bf16.mxu0 0
    %1071 = vmatpush1.bf16.msra.mxu0 0
    %1072 = vmatprep.subr.bf16.mxu0 0
    %1073 = vmatpush1.bf16.msra.mxu0 0
    %1074 = vmatprep.mubr.bf16.mxu0 0
    %1075 = vmatmul.mubr.bf16.gmra.mrb[0].mxu0 %v971
    %v1076 = vpop.f32.mrb[0].mxu0
    %v1077 = vadd.f32 0.0, %v1076
    %v1078 = vpop.f32.mrb[0].mxu0
    %v1079 = vadd.f32 0.0, %v1078
    %v1080 = vpop.f32.mrb[0].mxu0
    %v1081 = vadd.f32 0.0, %v1080
    %v1082 = vpop.f32.mrb[0].mxu0
    %v1083 = vadd.f32 0.0, %v1082
    %1084 = vmatprep.mubr.bf16.mxu0 0
    %1085 = vmatmul.mubr.bf16.gmra.mrb[0].mxu0 %v974
    %v1086 = vpop.f32.mrb[0].mxu0
    %v1087 = vadd.f32 0.0, %v1086
    %v1088 = vpop.f32.mrb[0].mxu0
    %v1089 = vadd.f32 0.0, %v1088
    %v1090 = vpop.f32.mrb[0].mxu0
    %v1091 = vadd.f32 0.0, %v1090
    %v1092 = vpop.f32.mrb[0].mxu0
    %v1093 = vadd.f32 0.0, %v1092
    %1094 = vmatprep.mubr.bf16.mxu0 0
    %1095 = vmatmul.mubr.bf16.gmra.mrb[0].mxu0 %v977
    %v1096 = vpop.f32.mrb[0].mxu0
    %v1097 = vadd.f32 0.0, %v1096
    %v1098 = vpop.f32.mrb[0].mxu0
    %v1099 = vadd.f32 0.0, %v1098
    %v1100 = vpop.f32.mrb[0].mxu0
    %v1101 = vadd.f32 0.0, %v1100
    %v1102 = vpop.f32.mrb[0].mxu0
    %v1103 = vadd.f32 0.0, %v1102
    %1104 = vdwg.mxu0
    %1105 = vmatprep.subr.bf16.mxu0 %v310
    %1106 = vmatpush1.bf16.msra.mxu0 %v309
    %1107 = vmatprep.subr.bf16.mxu0 %v316
    %1108 = vmatpush1.bf16.msra.mxu0 %v315
    %1109 = vmatprep.subr.bf16.mxu0 %v322
    %1110 = vmatpush1.bf16.msra.mxu0 %v321
    %1111 = vmatprep.subr.bf16.mxu0 %v328
    %1112 = vmatpush1.bf16.msra.mxu0 %v327
    %1113 = vmatprep.subr.bf16.mxu0 %v334
    %1114 = vmatpush1.bf16.msra.mxu0 %v333
    %1115 = vmatprep.subr.bf16.mxu0 %v398
    %1116 = vmatpush1.bf16.msra.mxu0 %v395
    %1117 = vmatprep.subr.bf16.mxu0 0
    %1118 = vmatpush1.bf16.msra.mxu0 0
    %1119 = vmatprep.subr.bf16.mxu0 0
    %1120 = vmatpush1.bf16.msra.mxu0 0
    %1121 = vmatprep.subr.bf16.mxu0 0
    %1122 = vmatpush1.bf16.msra.mxu0 0
    %1123 = vmatprep.subr.bf16.mxu0 0
    %1124 = vmatpush1.bf16.msra.mxu0 0
    %1125 = vmatprep.subr.bf16.mxu0 0
    %1126 = vmatpush1.bf16.msra.mxu0 0
    %1127 = vmatprep.subr.bf16.mxu0 0
    %1128 = vmatpush1.bf16.msra.mxu0 0
    %1129 = vmatprep.subr.bf16.mxu0 0
    %1130 = vmatpush1.bf16.msra.mxu0 0
    %1131 = vmatprep.subr.bf16.mxu0 0
    %1132 = vmatpush1.bf16.msra.mxu0 0
    %1133 = vmatprep.subr.bf16.mxu0 0
    %1134 = vmatpush1.bf16.msra.mxu0 0
    %1135 = vmatprep.subr.bf16.mxu0 0
    %1136 = vmatpush1.bf16.msra.mxu0 0
    %1137 = vmatprep.mubr.bf16.mxu0 0
    %1138 = vmatmul.mubr.bf16.gmra.mrb[0].mxu0 %v971
    %v1139 = vpop.f32.mrb[0].mxu0
    %v1140 = vadd.f32 0.0, %v1139
    %v1141 = vpop.f32.mrb[0].mxu0
    %v1142 = vadd.f32 0.0, %v1141
    %v1143 = vpop.f32.mrb[0].mxu0
    %v1144 = vadd.f32 0.0, %v1143
    %v1145 = vpop.f32.mrb[0].mxu0
    %v1146 = vadd.f32 0.0, %v1145
    %1147 = vmatprep.mubr.bf16.mxu0 0
    %1148 = vmatmul.mubr.bf16.gmra.mrb[0].mxu0 %v974
    %v1149 = vpop.f32.mrb[0].mxu0
    %v1150 = vadd.f32 0.0, %v1149
    %v1151 = vpop.f32.mrb[0].mxu0
    %v1152 = vadd.f32 0.0, %v1151
    %v1153 = vpop.f32.mrb[0].mxu0
    %v1154 = vadd.f32 0.0, %v1153
    %v1155 = vpop.f32.mrb[0].mxu0
    %v1156 = vadd.f32 0.0, %v1155
    %1157 = vmatprep.mubr.bf16.mxu0 0
    %1158 = vmatmul.mubr.bf16.gmra.mrb[0].mxu0 %v977
    %v1159 = vpop.f32.mrb[0].mxu0
    %v1160 = vadd.f32 0.0, %v1159
    %v1161 = vpop.f32.mrb[0].mxu0
    %v1162 = vadd.f32 0.0, %v1161
    %v1163 = vpop.f32.mrb[0].mxu0
    %v1164 = vadd.f32 0.0, %v1163
    %v1165 = vpop.f32.mrb[0].mxu0
    %v1166 = vadd.f32 0.0, %v1165
    %1167 = vdwg.mxu0
    %1168 = vmatprep.subr.bf16.mxu0 %v689
    %1169 = vmatpush1.bf16.msra.mxu0 %v688
    %1170 = vmatprep.subr.bf16.mxu0 %v695
    %1171 = vmatpush1.bf16.msra.mxu0 %v694
    %1172 = vmatprep.subr.bf16.mxu0 %v701
    %1173 = vmatpush1.bf16.msra.mxu0 %v700
    %1174 = vmatprep.subr.bf16.mxu0 %v707
    %1175 = vmatpush1.bf16.msra.mxu0 %v706
    %1176 = vmatprep.subr.bf16.mxu0 %v713
    %1177 = vmatpush1.bf16.msra.mxu0 %v712
    %1178 = vmatprep.subr.bf16.mxu0 %v767
    %1179 = vmatpush1.bf16.msra.mxu0 %v764
    %1180 = vmatprep.subr.bf16.mxu0 0
    %1181 = vmatpush1.bf16.msra.mxu0 0
    %1182 = vmatprep.subr.bf16.mxu0 0
    %1183 = vmatpush1.bf16.msra.mxu0 0
    %1184 = vmatprep.subr.bf16.mxu0 0
    %1185 = vmatpush1.bf16.msra.mxu0 0
    %1186 = vmatprep.subr.bf16.mxu0 0
    %1187 = vmatpush1.bf16.msra.mxu0 0
    %1188 = vmatprep.subr.bf16.mxu0 0
    %1189 = vmatpush1.bf16.msra.mxu0 0
    %1190 = vmatprep.subr.bf16.mxu0 0
    %1191 = vmatpush1.bf16.msra.mxu0 0
    %1192 = vmatprep.subr.bf16.mxu0 0
    %1193 = vmatpush1.bf16.msra.mxu0 0
    %1194 = vmatprep.subr.bf16.mxu0 0
    %1195 = vmatpush1.bf16.msra.mxu0 0
    %1196 = vmatprep.subr.bf16.mxu0 0
    %1197 = vmatpush1.bf16.msra.mxu0 0
    %1198 = vmatprep.subr.bf16.mxu0 0
    %1199 = vmatpush1.bf16.msra.mxu0 0
    %1200 = vmatprep.mubr.bf16.mxu0 0
    %1201 = vmatmul.mubr.bf16.gmra.mrb[0].mxu0 %v373
    %v1202 = vpop.f32.mrb[0].mxu0
    %v1203 = vadd.f32 %v1014, %v1202
    %v1204 = vpop.f32.mrb[0].mxu0
    %v1205 = vadd.f32 %v1016, %v1204
    %v1206 = vpop.f32.mrb[0].mxu0
    %v1207 = vadd.f32 %v1018, %v1206
    %v1208 = vpop.f32.mrb[0].mxu0
    %v1209 = vadd.f32 %v1020, %v1208
    %1210 = vmatprep.mubr.bf16.mxu0 0
    %1211 = vmatmul.mubr.bf16.gmra.mrb[0].mxu0 %v376
    %v1212 = vpop.f32.mrb[0].mxu0
    %v1213 = vadd.f32 %v1024, %v1212
    %v1214 = vpop.f32.mrb[0].mxu0
    %v1215 = vadd.f32 %v1026, %v1214
    %v1216 = vpop.f32.mrb[0].mxu0
    %v1217 = vadd.f32 %v1028, %v1216
    %v1218 = vpop.f32.mrb[0].mxu0
    %v1219 = vadd.f32 %v1030, %v1218
    %1220 = vmatprep.mubr.bf16.mxu0 0
    %1221 = vmatmul.mubr.bf16.gmra.mrb[0].mxu0 %v379
    %v1222 = vpop.f32.mrb[0].mxu0
    %v1223 = vadd.f32 %v1034, %v1222
    %v1224 = vpop.f32.mrb[0].mxu0
    %v1225 = vadd.f32 %v1036, %v1224
    %v1226 = vpop.f32.mrb[0].mxu0
    %v1227 = vadd.f32 %v1038, %v1226
    %v1228 = vpop.f32.mrb[0].mxu0
    %v1229 = vadd.f32 %v1040, %v1228
    %1230 = vdwg.mxu0
    %1231 = vmatprep.subr.bf16.mxu0 %v691
    %1232 = vmatpush1.bf16.msra.mxu0 %v690
    %1233 = vmatprep.subr.bf16.mxu0 %v697
    %1234 = vmatpush1.bf16.msra.mxu0 %v696
    %1235 = vmatprep.subr.bf16.mxu0 %v703
    %1236 = vmatpush1.bf16.msra.mxu0 %v702
    %1237 = vmatprep.subr.bf16.mxu0 %v709
    %1238 = vmatpush1.bf16.msra.mxu0 %v708
    %1239 = vmatprep.subr.bf16.mxu0 %v715
    %1240 = vmatpush1.bf16.msra.mxu0 %v714
    %1241 = vmatprep.subr.bf16.mxu0 %v773
    %1242 = vmatpush1.bf16.msra.mxu0 %v770
    %1243 = vmatprep.subr.bf16.mxu0 0
    %1244 = vmatpush1.bf16.msra.mxu0 0
    %1245 = vmatprep.subr.bf16.mxu0 0
    %1246 = vmatpush1.bf16.msra.mxu0 0
    %1247 = vmatprep.subr.bf16.mxu0 0
    %1248 = vmatpush1.bf16.msra.mxu0 0
    %1249 = vmatprep.subr.bf16.mxu0 0
    %1250 = vmatpush1.bf16.msra.mxu0 0
    %1251 = vmatprep.subr.bf16.mxu0 0
    %1252 = vmatpush1.bf16.msra.mxu0 0
    %1253 = vmatprep.subr.bf16.mxu0 0
    %1254 = vmatpush1.bf16.msra.mxu0 0
    %1255 = vmatprep.subr.bf16.mxu0 0
    %1256 = vmatpush1.bf16.msra.mxu0 0
    %1257 = vmatprep.subr.bf16.mxu0 0
    %1258 = vmatpush1.bf16.msra.mxu0 0
    %1259 = vmatprep.subr.bf16.mxu0 0
    %1260 = vmatpush1.bf16.msra.mxu0 0
    %1261 = vmatprep.subr.bf16.mxu0 0
    %1262 = vmatpush1.bf16.msra.mxu0 0
    %1263 = vmatprep.mubr.bf16.mxu0 0
    %1264 = vmatmul.mubr.bf16.gmra.mrb[0].mxu0 %v373
    %v1265 = vpop.f32.mrb[0].mxu0
    %v1266 = vadd.f32 %v1077, %v1265
    %v1267 = vpop.f32.mrb[0].mxu0
    %v1268 = vadd.f32 %v1079, %v1267
    %v1269 = vpop.f32.mrb[0].mxu0
    %v1270 = vadd.f32 %v1081, %v1269
    %v1271 = vpop.f32.mrb[0].mxu0
    %v1272 = vadd.f32 %v1083, %v1271
    %1273 = vmatprep.mubr.bf16.mxu0 0
    %1274 = vmatmul.mubr.bf16.gmra.mrb[0].mxu0 %v376
    %v1275 = vpop.f32.mrb[0].mxu0
    %v1276 = vadd.f32 %v1087, %v1275
    %v1277 = vpop.f32.mrb[0].mxu0
    %v1278 = vadd.f32 %v1089, %v1277
    %v1279 = vpop.f32.mrb[0].mxu0
    %v1280 = vadd.f32 %v1091, %v1279
    %v1281 = vpop.f32.mrb[0].mxu0
    %v1282 = vadd.f32 %v1093, %v1281
    %1283 = vmatprep.mubr.bf16.mxu0 0
    %1284 = vmatmul.mubr.bf16.gmra.mrb[0].mxu0 %v379
    %v1285 = vpop.f32.mrb[0].mxu0
    %v1286 = vadd.f32 %v1097, %v1285
    %v1287 = vpop.f32.mrb[0].mxu0
    %v1288 = vadd.f32 %v1099, %v1287
    %v1289 = vpop.f32.mrb[0].mxu0
    %v1290 = vadd.f32 %v1101, %v1289
    %v1291 = vpop.f32.mrb[0].mxu0
    %v1292 = vadd.f32 %v1103, %v1291
    %1293 = vdwg.mxu0
    %1294 = vmatprep.subr.bf16.mxu0 %v693
    %1295 = vmatpush1.bf16.msra.mxu0 %v692
    %1296 = vmatprep.subr.bf16.mxu0 %v699
    %1297 = vmatpush1.bf16.msra.mxu0 %v698
    %1298 = vmatprep.subr.bf16.mxu0 %v705
    %1299 = vmatpush1.bf16.msra.mxu0 %v704
    %1300 = vmatprep.subr.bf16.mxu0 %v711
    %1301 = vmatpush1.bf16.msra.mxu0 %v710
    %1302 = vmatprep.subr.bf16.mxu0 %v717
    %1303 = vmatpush1.bf16.msra.mxu0 %v716
    %1304 = vmatprep.subr.bf16.mxu0 %v779
    %1305 = vmatpush1.bf16.msra.mxu0 %v776
    %1306 = vmatprep.subr.bf16.mxu0 0
    %1307 = vmatpush1.bf16.msra.mxu0 0
    %1308 = vmatprep.subr.bf16.mxu0 0
    %1309 = vmatpush1.bf16.msra.mxu0 0
    %1310 = vmatprep.subr.bf16.mxu0 0
    %1311 = vmatpush1.bf16.msra.mxu0 0
    %1312 = vmatprep.subr.bf16.mxu0 0
    %1313 = vmatpush1.bf16.msra.mxu0 0
    %1314 = vmatprep.subr.bf16.mxu0 0
    %1315 = vmatpush1.bf16.msra.mxu0 0
    %1316 = vmatprep.subr.bf16.mxu0 0
    %1317 = vmatpush1.bf16.msra.mxu0 0
    %1318 = vmatprep.subr.bf16.mxu0 0
    %1319 = vmatpush1.bf16.msra.mxu0 0
    %1320 = vmatprep.subr.bf16.mxu0 0
    %1321 = vmatpush1.bf16.msra.mxu0 0
    %1322 = vmatprep.subr.bf16.mxu0 0
    %1323 = vmatpush1.bf16.msra.mxu0 0
    %1324 = vmatprep.subr.bf16.mxu0 0
    %1325 = vmatpush1.bf16.msra.mxu0 0
    %1326 = vmatprep.mubr.bf16.mxu0 0
    %1327 = vmatmul.mubr.bf16.gmra.mrb[0].mxu0 %v373
    %v1328 = vpop.f32.mrb[0].mxu0
    %v1329 = vadd.f32 %v1140, %v1328
    %v1330 = vpop.f32.mrb[0].mxu0
    %v1331 = vadd.f32 %v1142, %v1330
    %v1332 = vpop.f32.mrb[0].mxu0
    %v1333 = vadd.f32 %v1144, %v1332
    %v1334 = vpop.f32.mrb[0].mxu0
    %v1335 = vadd.f32 %v1146, %v1334
    %1336 = vmatprep.mubr.bf16.mxu0 0
    %1337 = vmatmul.mubr.bf16.gmra.mrb[0].mxu0 %v376
    %v1338 = vpop.f32.mrb[0].mxu0
    %v1339 = vadd.f32 %v1150, %v1338
    %v1340 = vpop.f32.mrb[0].mxu0
    %v1341 = vadd.f32 %v1152, %v1340
    %v1342 = vpop.f32.mrb[0].mxu0
    %v1343 = vadd.f32 %v1154, %v1342
    %v1344 = vpop.f32.mrb[0].mxu0
    %v1345 = vadd.f32 %v1156, %v1344
    %1346 = vmatprep.mubr.bf16.mxu0 0
    %1347 = vmatmul.mubr.bf16.gmra.mrb[0].mxu0 %v379
    %v1348 = vpop.f32.mrb[0].mxu0
    %v1349 = vadd.f32 %v1160, %v1348
    %v1350 = vpop.f32.mrb[0].mxu0
    %v1351 = vadd.f32 %v1162, %v1350
    %v1352 = vpop.f32.mrb[0].mxu0
    %v1353 = vadd.f32 %v1164, %v1352
    %v1354 = vpop.f32.mrb[0].mxu0
    %v1355 = vadd.f32 %v1166, %v1354
    %1356 = vdwg.mxu0
    %v1358 = vsel %vm371, %v169, 0
    %v1361 = vsel %vm371, %v170, 0
    %v1364 = vsel %vm371, %v171, 0
    %1366 = vmatprep.subr.bf16.mxu0 %v306
    %1367 = vmatpush1.bf16.msra.mxu0 %v305
    %1368 = vmatprep.subr.bf16.mxu0 %v312
    %1369 = vmatpush1.bf16.msra.mxu0 %v311
    %1370 = vmatprep.subr.bf16.mxu0 %v318
    %1371 = vmatpush1.bf16.msra.mxu0 %v317
    %1372 = vmatprep.subr.bf16.mxu0 %v324
    %1373 = vmatpush1.bf16.msra.mxu0 %v323
    %1374 = vmatprep.subr.bf16.mxu0 %v330
    %1375 = vmatpush1.bf16.msra.mxu0 %v329
    %1376 = vmatprep.subr.bf16.mxu0 %v386
    %1377 = vmatpush1.bf16.msra.mxu0 %v383
    %1378 = vmatprep.subr.bf16.mxu0 0
    %1379 = vmatpush1.bf16.msra.mxu0 0
    %1380 = vmatprep.subr.bf16.mxu0 0
    %1381 = vmatpush1.bf16.msra.mxu0 0
    %1382 = vmatprep.subr.bf16.mxu0 0
    %1383 = vmatpush1.bf16.msra.mxu0 0
    %1384 = vmatprep.subr.bf16.mxu0 0
    %1385 = vmatpush1.bf16.msra.mxu0 0
    %1386 = vmatprep.subr.bf16.mxu0 0
    %1387 = vmatpush1.bf16.msra.mxu0 0
    %1388 = vmatprep.subr.bf16.mxu0 0
    %1389 = vmatpush1.bf16.msra.mxu0 0
    %1390 = vmatprep.subr.bf16.mxu0 0
    %1391 = vmatpush1.bf16.msra.mxu0 0
    %1392 = vmatprep.subr.bf16.mxu0 0
    %1393 = vmatpush1.bf16.msra.mxu0 0
    %1394 = vmatprep.subr.bf16.mxu0 0
    %1395 = vmatpush1.bf16.msra.mxu0 0
    %1396 = vmatprep.subr.bf16.mxu0 0
    %1397 = vmatpush1.bf16.msra.mxu0 0
    %1398 = vmatprep.mubr.bf16.mxu0 0
    %1399 = vmatmul.mubr.bf16.gmra.mrb[0].mxu0 %v1358
    %v1400 = vpop.f32.mrb[0].mxu0
    %v1401 = vadd.f32 0.0, %v1400
    %v1402 = vpop.f32.mrb[0].mxu0
    %v1403 = vadd.f32 0.0, %v1402
    %v1404 = vpop.f32.mrb[0].mxu0
    %v1405 = vadd.f32 0.0, %v1404
    %v1406 = vpop.f32.mrb[0].mxu0
    %v1407 = vadd.f32 0.0, %v1406
    %1408 = vmatprep.mubr.bf16.mxu0 0
    %1409 = vmatmul.mubr.bf16.gmra.mrb[0].mxu0 %v1361
    %v1410 = vpop.f32.mrb[0].mxu0
    %v1411 = vadd.f32 0.0, %v1410
    %v1412 = vpop.f32.mrb[0].mxu0
    %v1413 = vadd.f32 0.0, %v1412
    %v1414 = vpop.f32.mrb[0].mxu0
    %v1415 = vadd.f32 0.0, %v1414
    %v1416 = vpop.f32.mrb[0].mxu0
    %v1417 = vadd.f32 0.0, %v1416
    %1418 = vmatprep.mubr.bf16.mxu0 0
    %1419 = vmatmul.mubr.bf16.gmra.mrb[0].mxu0 %v1364
    %v1420 = vpop.f32.mrb[0].mxu0
    %v1421 = vadd.f32 0.0, %v1420
    %v1422 = vpop.f32.mrb[0].mxu0
    %v1423 = vadd.f32 0.0, %v1422
    %v1424 = vpop.f32.mrb[0].mxu0
    %v1425 = vadd.f32 0.0, %v1424
    %v1426 = vpop.f32.mrb[0].mxu0
    %v1427 = vadd.f32 0.0, %v1426
    %1428 = vdwg.mxu0
    %1429 = vmatprep.subr.bf16.mxu0 %v308
    %1430 = vmatpush1.bf16.msra.mxu0 %v307
    %1431 = vmatprep.subr.bf16.mxu0 %v314
    %1432 = vmatpush1.bf16.msra.mxu0 %v313
    %1433 = vmatprep.subr.bf16.mxu0 %v320
    %1434 = vmatpush1.bf16.msra.mxu0 %v319
    %1435 = vmatprep.subr.bf16.mxu0 %v326
    %1436 = vmatpush1.bf16.msra.mxu0 %v325
    %1437 = vmatprep.subr.bf16.mxu0 %v332
    %1438 = vmatpush1.bf16.msra.mxu0 %v331
    %1439 = vmatprep.subr.bf16.mxu0 %v392
    %1440 = vmatpush1.bf16.msra.mxu0 %v389
    %1441 = vmatprep.subr.bf16.mxu0 0
    %1442 = vmatpush1.bf16.msra.mxu0 0
    %1443 = vmatprep.subr.bf16.mxu0 0
    %1444 = vmatpush1.bf16.msra.mxu0 0
    %1445 = vmatprep.subr.bf16.mxu0 0
    %1446 = vmatpush1.bf16.msra.mxu0 0
    %1447 = vmatprep.subr.bf16.mxu0 0
    %1448 = vmatpush1.bf16.msra.mxu0 0
    %1449 = vmatprep.subr.bf16.mxu0 0
    %1450 = vmatpush1.bf16.msra.mxu0 0
    %1451 = vmatprep.subr.bf16.mxu0 0
    %1452 = vmatpush1.bf16.msra.mxu0 0
    %1453 = vmatprep.subr.bf16.mxu0 0
    %1454 = vmatpush1.bf16.msra.mxu0 0
    %1455 = vmatprep.subr.bf16.mxu0 0
    %1456 = vmatpush1.bf16.msra.mxu0 0
    %1457 = vmatprep.subr.bf16.mxu0 0
    %1458 = vmatpush1.bf16.msra.mxu0 0
    %1459 = vmatprep.subr.bf16.mxu0 0
    %1460 = vmatpush1.bf16.msra.mxu0 0
    %1461 = vmatprep.mubr.bf16.mxu0 0
    %1462 = vmatmul.mubr.bf16.gmra.mrb[0].mxu0 %v1358
    %v1463 = vpop.f32.mrb[0].mxu0
    %v1464 = vadd.f32 0.0, %v1463
    %v1465 = vpop.f32.mrb[0].mxu0
    %v1466 = vadd.f32 0.0, %v1465
    %v1467 = vpop.f32.mrb[0].mxu0
    %v1468 = vadd.f32 0.0, %v1467
    %v1469 = vpop.f32.mrb[0].mxu0
    %v1470 = vadd.f32 0.0, %v1469
    %1471 = vmatprep.mubr.bf16.mxu0 0
    %1472 = vmatmul.mubr.bf16.gmra.mrb[0].mxu0 %v1361
    %v1473 = vpop.f32.mrb[0].mxu0
    %v1474 = vadd.f32 0.0, %v1473
    %v1475 = vpop.f32.mrb[0].mxu0
    %v1476 = vadd.f32 0.0, %v1475
    %v1477 = vpop.f32.mrb[0].mxu0
    %v1478 = vadd.f32 0.0, %v1477
    %v1479 = vpop.f32.mrb[0].mxu0
    %v1480 = vadd.f32 0.0, %v1479
    %1481 = vmatprep.mubr.bf16.mxu0 0
    %1482 = vmatmul.mubr.bf16.gmra.mrb[0].mxu0 %v1364
    %v1483 = vpop.f32.mrb[0].mxu0
    %v1484 = vadd.f32 0.0, %v1483
    %v1485 = vpop.f32.mrb[0].mxu0
    %v1486 = vadd.f32 0.0, %v1485
    %v1487 = vpop.f32.mrb[0].mxu0
    %v1488 = vadd.f32 0.0, %v1487
    %v1489 = vpop.f32.mrb[0].mxu0
    %v1490 = vadd.f32 0.0, %v1489
    %1491 = vdwg.mxu0
    %1492 = vmatprep.subr.bf16.mxu0 %v310
    %1493 = vmatpush1.bf16.msra.mxu0 %v309
    %1494 = vmatprep.subr.bf16.mxu0 %v316
    %1495 = vmatpush1.bf16.msra.mxu0 %v315
    %1496 = vmatprep.subr.bf16.mxu0 %v322
    %1497 = vmatpush1.bf16.msra.mxu0 %v321
    %1498 = vmatprep.subr.bf16.mxu0 %v328
    %1499 = vmatpush1.bf16.msra.mxu0 %v327
    %1500 = vmatprep.subr.bf16.mxu0 %v334
    %1501 = vmatpush1.bf16.msra.mxu0 %v333
    %1502 = vmatprep.subr.bf16.mxu0 %v398
    %1503 = vmatpush1.bf16.msra.mxu0 %v395
    %1504 = vmatprep.subr.bf16.mxu0 0
    %1505 = vmatpush1.bf16.msra.mxu0 0
    %1506 = vmatprep.subr.bf16.mxu0 0
    %1507 = vmatpush1.bf16.msra.mxu0 0
    %1508 = vmatprep.subr.bf16.mxu0 0
    %1509 = vmatpush1.bf16.msra.mxu0 0
    %1510 = vmatprep.subr.bf16.mxu0 0
    %1511 = vmatpush1.bf16.msra.mxu0 0
    %1512 = vmatprep.subr.bf16.mxu0 0
    %1513 = vmatpush1.bf16.msra.mxu0 0
    %1514 = vmatprep.subr.bf16.mxu0 0
    %1515 = vmatpush1.bf16.msra.mxu0 0
    %1516 = vmatprep.subr.bf16.mxu0 0
    %1517 = vmatpush1.bf16.msra.mxu0 0
    %1518 = vmatprep.subr.bf16.mxu0 0
    %1519 = vmatpush1.bf16.msra.mxu0 0
    %1520 = vmatprep.subr.bf16.mxu0 0
    %1521 = vmatpush1.bf16.msra.mxu0 0
    %1522 = vmatprep.subr.bf16.mxu0 0
    %1523 = vmatpush1.bf16.msra.mxu0 0
    %1524 = vmatprep.mubr.bf16.mxu0 0
    %1525 = vmatmul.mubr.bf16.gmra.mrb[0].mxu0 %v1358
    %v1526 = vpop.f32.mrb[0].mxu0
    %v1527 = vadd.f32 0.0, %v1526
    %v1528 = vpop.f32.mrb[0].mxu0
    %v1529 = vadd.f32 0.0, %v1528
    %v1530 = vpop.f32.mrb[0].mxu0
    %v1531 = vadd.f32 0.0, %v1530
    %v1532 = vpop.f32.mrb[0].mxu0
    %v1533 = vadd.f32 0.0, %v1532
    %1534 = vmatprep.mubr.bf16.mxu0 0
    %1535 = vmatmul.mubr.bf16.gmra.mrb[0].mxu0 %v1361
    %v1536 = vpop.f32.mrb[0].mxu0
    %v1537 = vadd.f32 0.0, %v1536
    %v1538 = vpop.f32.mrb[0].mxu0
    %v1539 = vadd.f32 0.0, %v1538
    %v1540 = vpop.f32.mrb[0].mxu0
    %v1541 = vadd.f32 0.0, %v1540
    %v1542 = vpop.f32.mrb[0].mxu0
    %v1543 = vadd.f32 0.0, %v1542
    %1544 = vmatprep.mubr.bf16.mxu0 0
    %1545 = vmatmul.mubr.bf16.gmra.mrb[0].mxu0 %v1364
    %v1546 = vpop.f32.mrb[0].mxu0
    %v1547 = vadd.f32 0.0, %v1546
    %v1548 = vpop.f32.mrb[0].mxu0
    %v1549 = vadd.f32 0.0, %v1548
    %v1550 = vpop.f32.mrb[0].mxu0
    %v1551 = vadd.f32 0.0, %v1550
    %v1552 = vpop.f32.mrb[0].mxu0
    %v1553 = vadd.f32 0.0, %v1552
    %1554 = vdwg.mxu0
    %1555 = vmatprep.subr.bf16.mxu0 %v689
    %1556 = vmatpush1.bf16.msra.mxu0 %v688
    %1557 = vmatprep.subr.bf16.mxu0 %v695
    %1558 = vmatpush1.bf16.msra.mxu0 %v694
    %1559 = vmatprep.subr.bf16.mxu0 %v701
    %1560 = vmatpush1.bf16.msra.mxu0 %v700
    %1561 = vmatprep.subr.bf16.mxu0 %v707
    %1562 = vmatpush1.bf16.msra.mxu0 %v706
    %1563 = vmatprep.subr.bf16.mxu0 %v713
    %1564 = vmatpush1.bf16.msra.mxu0 %v712
    %1565 = vmatprep.subr.bf16.mxu0 %v767
    %1566 = vmatpush1.bf16.msra.mxu0 %v764
    %1567 = vmatprep.subr.bf16.mxu0 0
    %1568 = vmatpush1.bf16.msra.mxu0 0
    %1569 = vmatprep.subr.bf16.mxu0 0
    %1570 = vmatpush1.bf16.msra.mxu0 0
    %1571 = vmatprep.subr.bf16.mxu0 0
    %1572 = vmatpush1.bf16.msra.mxu0 0
    %1573 = vmatprep.subr.bf16.mxu0 0
    %1574 = vmatpush1.bf16.msra.mxu0 0
    %1575 = vmatprep.subr.bf16.mxu0 0
    %1576 = vmatpush1.bf16.msra.mxu0 0
    %1577 = vmatprep.subr.bf16.mxu0 0
    %1578 = vmatpush1.bf16.msra.mxu0 0
    %1579 = vmatprep.subr.bf16.mxu0 0
    %1580 = vmatpush1.bf16.msra.mxu0 0
    %1581 = vmatprep.subr.bf16.mxu0 0
    %1582 = vmatpush1.bf16.msra.mxu0 0
    %1583 = vmatprep.subr.bf16.mxu0 0
    %1584 = vmatpush1.bf16.msra.mxu0 0
    %1585 = vmatprep.subr.bf16.mxu0 0
    %1586 = vmatpush1.bf16.msra.mxu0 0
    %1587 = vmatprep.mubr.bf16.mxu0 0
    %1588 = vmatmul.mubr.bf16.gmra.mrb[0].mxu0 %v971
    %v1589 = vpop.f32.mrb[0].mxu0
    %v1590 = vadd.f32 %v1401, %v1589
    %v1591 = vpop.f32.mrb[0].mxu0
    %v1592 = vadd.f32 %v1403, %v1591
    %v1593 = vpop.f32.mrb[0].mxu0
    %v1594 = vadd.f32 %v1405, %v1593
    %v1595 = vpop.f32.mrb[0].mxu0
    %v1596 = vadd.f32 %v1407, %v1595
    %1597 = vmatprep.mubr.bf16.mxu0 0
    %1598 = vmatmul.mubr.bf16.gmra.mrb[0].mxu0 %v974
    %v1599 = vpop.f32.mrb[0].mxu0
    %v1600 = vadd.f32 %v1411, %v1599
    %v1601 = vpop.f32.mrb[0].mxu0
    %v1602 = vadd.f32 %v1413, %v1601
    %v1603 = vpop.f32.mrb[0].mxu0
    %v1604 = vadd.f32 %v1415, %v1603
    %v1605 = vpop.f32.mrb[0].mxu0
    %v1606 = vadd.f32 %v1417, %v1605
    %1607 = vmatprep.mubr.bf16.mxu0 0
    %1608 = vmatmul.mubr.bf16.gmra.mrb[0].mxu0 %v977
    %v1609 = vpop.f32.mrb[0].mxu0
    %v1610 = vadd.f32 %v1421, %v1609
    %v1611 = vpop.f32.mrb[0].mxu0
    %v1612 = vadd.f32 %v1423, %v1611
    %v1613 = vpop.f32.mrb[0].mxu0
    %v1614 = vadd.f32 %v1425, %v1613
    %v1615 = vpop.f32.mrb[0].mxu0
    %v1616 = vadd.f32 %v1427, %v1615
    %1617 = vdwg.mxu0
    %1618 = vmatprep.subr.bf16.mxu0 %v691
    %1619 = vmatpush1.bf16.msra.mxu0 %v690
    %1620 = vmatprep.subr.bf16.mxu0 %v697
    %1621 = vmatpush1.bf16.msra.mxu0 %v696
    %1622 = vmatprep.subr.bf16.mxu0 %v703
    %1623 = vmatpush1.bf16.msra.mxu0 %v702
    %1624 = vmatprep.subr.bf16.mxu0 %v709
    %1625 = vmatpush1.bf16.msra.mxu0 %v708
    %1626 = vmatprep.subr.bf16.mxu0 %v715
    %1627 = vmatpush1.bf16.msra.mxu0 %v714
    %1628 = vmatprep.subr.bf16.mxu0 %v773
    %1629 = vmatpush1.bf16.msra.mxu0 %v770
    %1630 = vmatprep.subr.bf16.mxu0 0
    %1631 = vmatpush1.bf16.msra.mxu0 0
    %1632 = vmatprep.subr.bf16.mxu0 0
    %1633 = vmatpush1.bf16.msra.mxu0 0
    %1634 = vmatprep.subr.bf16.mxu0 0
    %1635 = vmatpush1.bf16.msra.mxu0 0
    %1636 = vmatprep.subr.bf16.mxu0 0
    %1637 = vmatpush1.bf16.msra.mxu0 0
    %1638 = vmatprep.subr.bf16.mxu0 0
    %1639 = vmatpush1.bf16.msra.mxu0 0
    %1640 = vmatprep.subr.bf16.mxu0 0
    %1641 = vmatpush1.bf16.msra.mxu0 0
    %1642 = vmatprep.subr.bf16.mxu0 0
    %1643 = vmatpush1.bf16.msra.mxu0 0
    %1644 = vmatprep.subr.bf16.mxu0 0
    %1645 = vmatpush1.bf16.msra.mxu0 0
    %1646 = vmatprep.subr.bf16.mxu0 0
    %1647 = vmatpush1.bf16.msra.mxu0 0
    %1648 = vmatprep.subr.bf16.mxu0 0
    %1649 = vmatpush1.bf16.msra.mxu0 0
    %1650 = vmatprep.mubr.bf16.mxu0 0
    %1651 = vmatmul.mubr.bf16.gmra.mrb[0].mxu0 %v971
    %v1652 = vpop.f32.mrb[0].mxu0
    %v1653 = vadd.f32 %v1464, %v1652
    %v1654 = vpop.f32.mrb[0].mxu0
    %v1655 = vadd.f32 %v1466, %v1654
    %v1656 = vpop.f32.mrb[0].mxu0
    %v1657 = vadd.f32 %v1468, %v1656
    %v1658 = vpop.f32.mrb[0].mxu0
    %v1659 = vadd.f32 %v1470, %v1658
    %1660 = vmatprep.mubr.bf16.mxu0 0
    %1661 = vmatmul.mubr.bf16.gmra.mrb[0].mxu0 %v974
    %v1662 = vpop.f32.mrb[0].mxu0
    %v1663 = vadd.f32 %v1474, %v1662
    %v1664 = vpop.f32.mrb[0].mxu0
    %v1665 = vadd.f32 %v1476, %v1664
    %v1666 = vpop.f32.mrb[0].mxu0
    %v1667 = vadd.f32 %v1478, %v1666
    %v1668 = vpop.f32.mrb[0].mxu0
    %v1669 = vadd.f32 %v1480, %v1668
    %1670 = vmatprep.mubr.bf16.mxu0 0
    %1671 = vmatmul.mubr.bf16.gmra.mrb[0].mxu0 %v977
    %v1672 = vpop.f32.mrb[0].mxu0
    %v1673 = vadd.f32 %v1484, %v1672
    %v1674 = vpop.f32.mrb[0].mxu0
    %v1675 = vadd.f32 %v1486, %v1674
    %v1676 = vpop.f32.mrb[0].mxu0
    %v1677 = vadd.f32 %v1488, %v1676
    %v1678 = vpop.f32.mrb[0].mxu0
    %v1679 = vadd.f32 %v1490, %v1678
    %1680 = vdwg.mxu0
    %1681 = vmatprep.subr.bf16.mxu0 %v693
    %1682 = vmatpush1.bf16.msra.mxu0 %v692
    %1683 = vmatprep.subr.bf16.mxu0 %v699
    %1684 = vmatpush1.bf16.msra.mxu0 %v698
    %1685 = vmatprep.subr.bf16.mxu0 %v705
    %1686 = vmatpush1.bf16.msra.mxu0 %v704
    %1687 = vmatprep.subr.bf16.mxu0 %v711
    %1688 = vmatpush1.bf16.msra.mxu0 %v710
    %1689 = vmatprep.subr.bf16.mxu0 %v717
    %1690 = vmatpush1.bf16.msra.mxu0 %v716
    %1691 = vmatprep.subr.bf16.mxu0 %v779
    %1692 = vmatpush1.bf16.msra.mxu0 %v776
    %1693 = vmatprep.subr.bf16.mxu0 0
    %1694 = vmatpush1.bf16.msra.mxu0 0
    %1695 = vmatprep.subr.bf16.mxu0 0
    %1696 = vmatpush1.bf16.msra.mxu0 0
    %1697 = vmatprep.subr.bf16.mxu0 0
    %1698 = vmatpush1.bf16.msra.mxu0 0
    %1699 = vmatprep.subr.bf16.mxu0 0
    %1700 = vmatpush1.bf16.msra.mxu0 0
    %1701 = vmatprep.subr.bf16.mxu0 0
    %1702 = vmatpush1.bf16.msra.mxu0 0
    %1703 = vmatprep.subr.bf16.mxu0 0
    %1704 = vmatpush1.bf16.msra.mxu0 0
    %1705 = vmatprep.subr.bf16.mxu0 0
    %1706 = vmatpush1.bf16.msra.mxu0 0
    %1707 = vmatprep.subr.bf16.mxu0 0
    %1708 = vmatpush1.bf16.msra.mxu0 0
    %1709 = vmatprep.subr.bf16.mxu0 0
    %1710 = vmatpush1.bf16.msra.mxu0 0
    %1711 = vmatprep.subr.bf16.mxu0 0
    %1712 = vmatpush1.bf16.msra.mxu0 0
    %1713 = vmatprep.mubr.bf16.mxu0 0
    %1714 = vmatmul.mubr.bf16.gmra.mrb[0].mxu0 %v971
    %v1715 = vpop.f32.mrb[0].mxu0
    %v1716 = vadd.f32 %v1527, %v1715
    %v1717 = vpop.f32.mrb[0].mxu0
    %v1718 = vadd.f32 %v1529, %v1717
    %v1719 = vpop.f32.mrb[0].mxu0
    %v1720 = vadd.f32 %v1531, %v1719
    %v1721 = vpop.f32.mrb[0].mxu0
    %v1722 = vadd.f32 %v1533, %v1721
    %1723 = vmatprep.mubr.bf16.mxu0 0
    %1724 = vmatmul.mubr.bf16.gmra.mrb[0].mxu0 %v974
    %v1725 = vpop.f32.mrb[0].mxu0
    %v1726 = vadd.f32 %v1537, %v1725
    %v1727 = vpop.f32.mrb[0].mxu0
    %v1728 = vadd.f32 %v1539, %v1727
    %v1729 = vpop.f32.mrb[0].mxu0
    %v1730 = vadd.f32 %v1541, %v1729
    %v1731 = vpop.f32.mrb[0].mxu0
    %v1732 = vadd.f32 %v1543, %v1731
    %1733 = vmatprep.mubr.bf16.mxu0 0
    %1734 = vmatmul.mubr.bf16.gmra.mrb[0].mxu0 %v977
    %v1735 = vpop.f32.mrb[0].mxu0
    %v1736 = vadd.f32 %v1547, %v1735
    %v1737 = vpop.f32.mrb[0].mxu0
    %v1738 = vadd.f32 %v1549, %v1737
    %v1739 = vpop.f32.mrb[0].mxu0
    %v1740 = vadd.f32 %v1551, %v1739
    %v1741 = vpop.f32.mrb[0].mxu0
    %v1742 = vadd.f32 %v1553, %v1741
    %1743 = vdwg.mxu0
    %v1744 = vld [vmem:[%s0 + $0x8] sm:$0xff]
    %v1745 = vld [vmem:[%s0 + $0x10] sm:$0xff]
    %v1746 = vld [vmem:[%s0 + $0x18] sm:$0xff]
    %v1747 = vld [vmem:[%s0 + $0x20] sm:$0xff]
    %v1748 = vld [vmem:[%s0 + $0x28] sm:$0xff]
    %v1749 = vld [vmem:[%s0 + $0x30] sm:$0xff]
    %v1750 = vpack.c.bf16 %v1745, %v1744
    %v1751 = vpack.c.bf16 %v1747, %v1746
    %v1752 = vpack.c.bf16 %v1749, %v1748
    %v1754 = vsel %vm371, %v1750, 0
    %v1757 = vsel %vm371, %v1751, 0
    %v1760 = vsel %vm371, %v1752, 0
    %1762 = vmatprep.subr.bf16.mxu0 %v306
    %1763 = vmatpush1.bf16.msra.mxu0 %v305
    %1764 = vmatprep.subr.bf16.mxu0 %v312
    %1765 = vmatpush1.bf16.msra.mxu0 %v311
    %1766 = vmatprep.subr.bf16.mxu0 %v318
    %1767 = vmatpush1.bf16.msra.mxu0 %v317
    %1768 = vmatprep.subr.bf16.mxu0 %v324
    %1769 = vmatpush1.bf16.msra.mxu0 %v323
    %1770 = vmatprep.subr.bf16.mxu0 %v330
    %1771 = vmatpush1.bf16.msra.mxu0 %v329
    %1772 = vmatprep.subr.bf16.mxu0 %v386
    %1773 = vmatpush1.bf16.msra.mxu0 %v383
    %1774 = vmatprep.subr.bf16.mxu0 0
    %1775 = vmatpush1.bf16.msra.mxu0 0
    %1776 = vmatprep.subr.bf16.mxu0 0
    %1777 = vmatpush1.bf16.msra.mxu0 0
    %1778 = vmatprep.subr.bf16.mxu0 0
    %1779 = vmatpush1.bf16.msra.mxu0 0
    %1780 = vmatprep.subr.bf16.mxu0 0
    %1781 = vmatpush1.bf16.msra.mxu0 0
    %1782 = vmatprep.subr.bf16.mxu0 0
    %1783 = vmatpush1.bf16.msra.mxu0 0
    %1784 = vmatprep.subr.bf16.mxu0 0
    %1785 = vmatpush1.bf16.msra.mxu0 0
    %1786 = vmatprep.subr.bf16.mxu0 0
    %1787 = vmatpush1.bf16.msra.mxu0 0
    %1788 = vmatprep.subr.bf16.mxu0 0
    %1789 = vmatpush1.bf16.msra.mxu0 0
    %1790 = vmatprep.subr.bf16.mxu0 0
    %1791 = vmatpush1.bf16.msra.mxu0 0
    %1792 = vmatprep.subr.bf16.mxu0 0
    %1793 = vmatpush1.bf16.msra.mxu0 0
    %1794 = vmatprep.mubr.bf16.mxu0 0
    %1795 = vmatmul.mubr.bf16.gmra.mrb[0].mxu0 %v1754
    %v1796 = vpop.f32.mrb[0].mxu0
    %v1797 = vadd.f32 0.0, %v1796
    %v1798 = vpop.f32.mrb[0].mxu0
    %v1799 = vadd.f32 0.0, %v1798
    %v1800 = vpop.f32.mrb[0].mxu0
    %v1801 = vadd.f32 0.0, %v1800
    %v1802 = vpop.f32.mrb[0].mxu0
    %v1803 = vadd.f32 0.0, %v1802
    %1804 = vmatprep.mubr.bf16.mxu0 0
    %1805 = vmatmul.mubr.bf16.gmra.mrb[0].mxu0 %v1757
    %v1806 = vpop.f32.mrb[0].mxu0
    %v1807 = vadd.f32 0.0, %v1806
    %v1808 = vpop.f32.mrb[0].mxu0
    %v1809 = vadd.f32 0.0, %v1808
    %v1810 = vpop.f32.mrb[0].mxu0
    %v1811 = vadd.f32 0.0, %v1810
    %v1812 = vpop.f32.mrb[0].mxu0
    %v1813 = vadd.f32 0.0, %v1812
    %1814 = vmatprep.mubr.bf16.mxu0 0
    %1815 = vmatmul.mubr.bf16.gmra.mrb[0].mxu0 %v1760
    %v1816 = vpop.f32.mrb[0].mxu0
    %v1817 = vadd.f32 0.0, %v1816
    %v1818 = vpop.f32.mrb[0].mxu0
    %v1819 = vadd.f32 0.0, %v1818
    %v1820 = vpop.f32.mrb[0].mxu0
    %v1821 = vadd.f32 0.0, %v1820
    %v1822 = vpop.f32.mrb[0].mxu0
    %v1823 = vadd.f32 0.0, %v1822
    %1824 = vdwg.mxu0
    %1825 = vmatprep.subr.bf16.mxu0 %v308
    %1826 = vmatpush1.bf16.msra.mxu0 %v307
    %1827 = vmatprep.subr.bf16.mxu0 %v314
    %1828 = vmatpush1.bf16.msra.mxu0 %v313
    %1829 = vmatprep.subr.bf16.mxu0 %v320
    %1830 = vmatpush1.bf16.msra.mxu0 %v319
    %1831 = vmatprep.subr.bf16.mxu0 %v326
    %1832 = vmatpush1.bf16.msra.mxu0 %v325
    %1833 = vmatprep.subr.bf16.mxu0 %v332
    %1834 = vmatpush1.bf16.msra.mxu0 %v331
    %1835 = vmatprep.subr.bf16.mxu0 %v392
    %1836 = vmatpush1.bf16.msra.mxu0 %v389
    %1837 = vmatprep.subr.bf16.mxu0 0
    %1838 = vmatpush1.bf16.msra.mxu0 0
    %1839 = vmatprep.subr.bf16.mxu0 0
    %1840 = vmatpush1.bf16.msra.mxu0 0
    %1841 = vmatprep.subr.bf16.mxu0 0
    %1842 = vmatpush1.bf16.msra.mxu0 0
    %1843 = vmatprep.subr.bf16.mxu0 0
    %1844 = vmatpush1.bf16.msra.mxu0 0
    %1845 = vmatprep.subr.bf16.mxu0 0
    %1846 = vmatpush1.bf16.msra.mxu0 0
    %1847 = vmatprep.subr.bf16.mxu0 0
    %1848 = vmatpush1.bf16.msra.mxu0 0
    %1849 = vmatprep.subr.bf16.mxu0 0
    %1850 = vmatpush1.bf16.msra.mxu0 0
    %1851 = vmatprep.subr.bf16.mxu0 0
    %1852 = vmatpush1.bf16.msra.mxu0 0
    %1853 = vmatprep.subr.bf16.mxu0 0
    %1854 = vmatpush1.bf16.msra.mxu0 0
    %1855 = vmatprep.subr.bf16.mxu0 0
    %1856 = vmatpush1.bf16.msra.mxu0 0
    %1857 = vmatprep.mubr.bf16.mxu0 0
    %1858 = vmatmul.mubr.bf16.gmra.mrb[0].mxu0 %v1754
    %v1859 = vpop.f32.mrb[0].mxu0
    %v1860 = vadd.f32 0.0, %v1859
    %v1861 = vpop.f32.mrb[0].mxu0
    %v1862 = vadd.f32 0.0, %v1861
    %v1863 = vpop.f32.mrb[0].mxu0
    %v1864 = vadd.f32 0.0, %v1863
    %v1865 = vpop.f32.mrb[0].mxu0
    %v1866 = vadd.f32 0.0, %v1865
    %1867 = vmatprep.mubr.bf16.mxu0 0
    %1868 = vmatmul.mubr.bf16.gmra.mrb[0].mxu0 %v1757
    %v1869 = vpop.f32.mrb[0].mxu0
    %v1870 = vadd.f32 0.0, %v1869
    %v1871 = vpop.f32.mrb[0].mxu0
    %v1872 = vadd.f32 0.0, %v1871
    %v1873 = vpop.f32.mrb[0].mxu0
    %v1874 = vadd.f32 0.0, %v1873
    %v1875 = vpop.f32.mrb[0].mxu0
    %v1876 = vadd.f32 0.0, %v1875
    %1877 = vmatprep.mubr.bf16.mxu0 0
    %1878 = vmatmul.mubr.bf16.gmra.mrb[0].mxu0 %v1760
    %v1879 = vpop.f32.mrb[0].mxu0
    %v1880 = vadd.f32 0.0, %v1879
    %v1881 = vpop.f32.mrb[0].mxu0
    %v1882 = vadd.f32 0.0, %v1881
    %v1883 = vpop.f32.mrb[0].mxu0
    %v1884 = vadd.f32 0.0, %v1883
    %v1885 = vpop.f32.mrb[0].mxu0
    %v1886 = vadd.f32 0.0, %v1885
    %1887 = vdwg.mxu0
    %1888 = vmatprep.subr.bf16.mxu0 %v310
    %1889 = vmatpush1.bf16.msra.mxu0 %v309
    %1890 = vmatprep.subr.bf16.mxu0 %v316
    %1891 = vmatpush1.bf16.msra.mxu0 %v315
    %1892 = vmatprep.subr.bf16.mxu0 %v322
    %1893 = vmatpush1.bf16.msra.mxu0 %v321
    %1894 = vmatprep.subr.bf16.mxu0 %v328
    %1895 = vmatpush1.bf16.msra.mxu0 %v327
    %1896 = vmatprep.subr.bf16.mxu0 %v334
    %1897 = vmatpush1.bf16.msra.mxu0 %v333
    %1898 = vmatprep.subr.bf16.mxu0 %v398
    %1899 = vmatpush1.bf16.msra.mxu0 %v395
    %1900 = vmatprep.subr.bf16.mxu0 0
    %1901 = vmatpush1.bf16.msra.mxu0 0
    %1902 = vmatprep.subr.bf16.mxu0 0
    %1903 = vmatpush1.bf16.msra.mxu0 0
    %1904 = vmatprep.subr.bf16.mxu0 0
    %1905 = vmatpush1.bf16.msra.mxu0 0
    %1906 = vmatprep.subr.bf16.mxu0 0
    %1907 = vmatpush1.bf16.msra.mxu0 0
    %1908 = vmatprep.subr.bf16.mxu0 0
    %1909 = vmatpush1.bf16.msra.mxu0 0
    %1910 = vmatprep.subr.bf16.mxu0 0
    %1911 = vmatpush1.bf16.msra.mxu0 0
    %1912 = vmatprep.subr.bf16.mxu0 0
    %1913 = vmatpush1.bf16.msra.mxu0 0
    %1914 = vmatprep.subr.bf16.mxu0 0
    %1915 = vmatpush1.bf16.msra.mxu0 0
    %1916 = vmatprep.subr.bf16.mxu0 0
    %1917 = vmatpush1.bf16.msra.mxu0 0
    %1918 = vmatprep.subr.bf16.mxu0 0
    %1919 = vmatpush1.bf16.msra.mxu0 0
    %1920 = vmatprep.mubr.bf16.mxu0 0
    %1921 = vmatmul.mubr.bf16.gmra.mrb[0].mxu0 %v1754
    %v1922 = vpop.f32.mrb[0].mxu0
    %v1923 = vadd.f32 0.0, %v1922
    %v1924 = vpop.f32.mrb[0].mxu0
    %v1925 = vadd.f32 0.0, %v1924
    %v1926 = vpop.f32.mrb[0].mxu0
    %v1927 = vadd.f32 0.0, %v1926
    %v1928 = vpop.f32.mrb[0].mxu0
    %v1929 = vadd.f32 0.0, %v1928
    %1930 = vmatprep.mubr.bf16.mxu0 0
    %1931 = vmatmul.mubr.bf16.gmra.mrb[0].mxu0 %v1757
    %v1932 = vpop.f32.mrb[0].mxu0
    %v1933 = vadd.f32 0.0, %v1932
    %v1934 = vpop.f32.mrb[0].mxu0
    %v1935 = vadd.f32 0.0, %v1934
    %v1936 = vpop.f32.mrb[0].mxu0
    %v1937 = vadd.f32 0.0, %v1936
    %v1938 = vpop.f32.mrb[0].mxu0
    %v1939 = vadd.f32 0.0, %v1938
    %1940 = vmatprep.mubr.bf16.mxu0 0
    %1941 = vmatmul.mubr.bf16.gmra.mrb[0].mxu0 %v1760
    %v1942 = vpop.f32.mrb[0].mxu0
    %v1943 = vadd.f32 0.0, %v1942
    %v1944 = vpop.f32.mrb[0].mxu0
    %v1945 = vadd.f32 0.0, %v1944
    %v1946 = vpop.f32.mrb[0].mxu0
    %v1947 = vadd.f32 0.0, %v1946
    %v1948 = vpop.f32.mrb[0].mxu0
    %v1949 = vadd.f32 0.0, %v1948
    %1950 = vdwg.mxu0
    %1951 = vmatprep.subr.bf16.mxu0 %v689
    %1952 = vmatpush1.bf16.msra.mxu0 %v688
    %1953 = vmatprep.subr.bf16.mxu0 %v695
    %1954 = vmatpush1.bf16.msra.mxu0 %v694
    %1955 = vmatprep.subr.bf16.mxu0 %v701
    %1956 = vmatpush1.bf16.msra.mxu0 %v700
    %1957 = vmatprep.subr.bf16.mxu0 %v707
    %1958 = vmatpush1.bf16.msra.mxu0 %v706
    %1959 = vmatprep.subr.bf16.mxu0 %v713
    %1960 = vmatpush1.bf16.msra.mxu0 %v712
    %1961 = vmatprep.subr.bf16.mxu0 %v767
    %1962 = vmatpush1.bf16.msra.mxu0 %v764
    %1963 = vmatprep.subr.bf16.mxu0 0
    %1964 = vmatpush1.bf16.msra.mxu0 0
    %1965 = vmatprep.subr.bf16.mxu0 0
    %1966 = vmatpush1.bf16.msra.mxu0 0
    %1967 = vmatprep.subr.bf16.mxu0 0
    %1968 = vmatpush1.bf16.msra.mxu0 0
    %1969 = vmatprep.subr.bf16.mxu0 0
    %1970 = vmatpush1.bf16.msra.mxu0 0
    %1971 = vmatprep.subr.bf16.mxu0 0
    %1972 = vmatpush1.bf16.msra.mxu0 0
    %1973 = vmatprep.subr.bf16.mxu0 0
    %1974 = vmatpush1.bf16.msra.mxu0 0
    %1975 = vmatprep.subr.bf16.mxu0 0
    %1976 = vmatpush1.bf16.msra.mxu0 0
    %1977 = vmatprep.subr.bf16.mxu0 0
    %1978 = vmatpush1.bf16.msra.mxu0 0
    %1979 = vmatprep.subr.bf16.mxu0 0
    %1980 = vmatpush1.bf16.msra.mxu0 0
    %1981 = vmatprep.subr.bf16.mxu0 0
    %1982 = vmatpush1.bf16.msra.mxu0 0
    %1983 = vmatprep.mubr.bf16.mxu0 0
    %1984 = vmatmul.mubr.bf16.gmra.mrb[0].mxu0 %v1358
    %v1985 = vpop.f32.mrb[0].mxu0
    %v1986 = vadd.f32 %v1797, %v1985
    %v1987 = vpop.f32.mrb[0].mxu0
    %v1988 = vadd.f32 %v1799, %v1987
    %v1989 = vpop.f32.mrb[0].mxu0
    %v1990 = vadd.f32 %v1801, %v1989
    %v1991 = vpop.f32.mrb[0].mxu0
    %v1992 = vadd.f32 %v1803, %v1991
    %1993 = vmatprep.mubr.bf16.mxu0 0
    %1994 = vmatmul.mubr.bf16.gmra.mrb[0].mxu0 %v1361
    %v1995 = vpop.f32.mrb[0].mxu0
    %v1996 = vadd.f32 %v1807, %v1995
    %v1997 = vpop.f32.mrb[0].mxu0
    %v1998 = vadd.f32 %v1809, %v1997
    %v1999 = vpop.f32.mrb[0].mxu0
    %v2000 = vadd.f32 %v1811, %v1999
    %v2001 = vpop.f32.mrb[0].mxu0
    %v2002 = vadd.f32 %v1813, %v2001
    %2003 = vmatprep.mubr.bf16.mxu0 0
    %2004 = vmatmul.mubr.bf16.gmra.mrb[0].mxu0 %v1364
    %v2005 = vpop.f32.mrb[0].mxu0
    %v2006 = vadd.f32 %v1817, %v2005
    %v2007 = vpop.f32.mrb[0].mxu0
    %v2008 = vadd.f32 %v1819, %v2007
    %v2009 = vpop.f32.mrb[0].mxu0
    %v2010 = vadd.f32 %v1821, %v2009
    %v2011 = vpop.f32.mrb[0].mxu0
    %v2012 = vadd.f32 %v1823, %v2011
    %2013 = vdwg.mxu0
    %2014 = vmatprep.subr.bf16.mxu0 %v691
    %2015 = vmatpush1.bf16.msra.mxu0 %v690
    %2016 = vmatprep.subr.bf16.mxu0 %v697
    %2017 = vmatpush1.bf16.msra.mxu0 %v696
    %2018 = vmatprep.subr.bf16.mxu0 %v703
    %2019 = vmatpush1.bf16.msra.mxu0 %v702
    %2020 = vmatprep.subr.bf16.mxu0 %v709
    %2021 = vmatpush1.bf16.msra.mxu0 %v708
    %2022 = vmatprep.subr.bf16.mxu0 %v715
    %2023 = vmatpush1.bf16.msra.mxu0 %v714
    %2024 = vmatprep.subr.bf16.mxu0 %v773
    %2025 = vmatpush1.bf16.msra.mxu0 %v770
    %2026 = vmatprep.subr.bf16.mxu0 0
    %2027 = vmatpush1.bf16.msra.mxu0 0
    %2028 = vmatprep.subr.bf16.mxu0 0
    %2029 = vmatpush1.bf16.msra.mxu0 0
    %2030 = vmatprep.subr.bf16.mxu0 0
    %2031 = vmatpush1.bf16.msra.mxu0 0
    %2032 = vmatprep.subr.bf16.mxu0 0
    %2033 = vmatpush1.bf16.msra.mxu0 0
    %2034 = vmatprep.subr.bf16.mxu0 0
    %2035 = vmatpush1.bf16.msra.mxu0 0
    %2036 = vmatprep.subr.bf16.mxu0 0
    %2037 = vmatpush1.bf16.msra.mxu0 0
    %2038 = vmatprep.subr.bf16.mxu0 0
    %2039 = vmatpush1.bf16.msra.mxu0 0
    %2040 = vmatprep.subr.bf16.mxu0 0
    %2041 = vmatpush1.bf16.msra.mxu0 0
    %2042 = vmatprep.subr.bf16.mxu0 0
    %2043 = vmatpush1.bf16.msra.mxu0 0
    %2044 = vmatprep.subr.bf16.mxu0 0
    %2045 = vmatpush1.bf16.msra.mxu0 0
    %2046 = vmatprep.mubr.bf16.mxu0 0
    %2047 = vmatmul.mubr.bf16.gmra.mrb[0].mxu0 %v1358
    %v2048 = vpop.f32.mrb[0].mxu0
    %v2049 = vadd.f32 %v1860, %v2048
    %v2050 = vpop.f32.mrb[0].mxu0
    %v2051 = vadd.f32 %v1862, %v2050
    %v2052 = vpop.f32.mrb[0].mxu0
    %v2053 = vadd.f32 %v1864, %v2052
    %v2054 = vpop.f32.mrb[0].mxu0
    %v2055 = vadd.f32 %v1866, %v2054
    %2056 = vmatprep.mubr.bf16.mxu0 0
    %2057 = vmatmul.mubr.bf16.gmra.mrb[0].mxu0 %v1361
    %v2058 = vpop.f32.mrb[0].mxu0
    %v2059 = vadd.f32 %v1870, %v2058
    %v2060 = vpop.f32.mrb[0].mxu0
    %v2061 = vadd.f32 %v1872, %v2060
    %v2062 = vpop.f32.mrb[0].mxu0
    %v2063 = vadd.f32 %v1874, %v2062
    %v2064 = vpop.f32.mrb[0].mxu0
    %v2065 = vadd.f32 %v1876, %v2064
    %2066 = vmatprep.mubr.bf16.mxu0 0
    %2067 = vmatmul.mubr.bf16.gmra.mrb[0].mxu0 %v1364
    %v2068 = vpop.f32.mrb[0].mxu0
    %v2069 = vadd.f32 %v1880, %v2068
    %v2070 = vpop.f32.mrb[0].mxu0
    %v2071 = vadd.f32 %v1882, %v2070
    %v2072 = vpop.f32.mrb[0].mxu0
    %v2073 = vadd.f32 %v1884, %v2072
    %v2074 = vpop.f32.mrb[0].mxu0
    %v2075 = vadd.f32 %v1886, %v2074
    %2076 = vdwg.mxu0
    %2077 = vmatprep.subr.bf16.mxu0 %v693
    %2078 = vmatpush1.bf16.msra.mxu0 %v692
    %2079 = vmatprep.subr.bf16.mxu0 %v699
    %2080 = vmatpush1.bf16.msra.mxu0 %v698
    %2081 = vmatprep.subr.bf16.mxu0 %v705
    %2082 = vmatpush1.bf16.msra.mxu0 %v704
    %2083 = vmatprep.subr.bf16.mxu0 %v711
    %2084 = vmatpush1.bf16.msra.mxu0 %v710
    %2085 = vmatprep.subr.bf16.mxu0 %v717
    %2086 = vmatpush1.bf16.msra.mxu0 %v716
    %2087 = vmatprep.subr.bf16.mxu0 %v779
    %2088 = vmatpush1.bf16.msra.mxu0 %v776
    %2089 = vmatprep.subr.bf16.mxu0 0
    %2090 = vmatpush1.bf16.msra.mxu0 0
    %2091 = vmatprep.subr.bf16.mxu0 0
    %2092 = vmatpush1.bf16.msra.mxu0 0
    %2093 = vmatprep.subr.bf16.mxu0 0
    %2094 = vmatpush1.bf16.msra.mxu0 0
    %2095 = vmatprep.subr.bf16.mxu0 0
    %2096 = vmatpush1.bf16.msra.mxu0 0
    %2097 = vmatprep.subr.bf16.mxu0 0
    %2098 = vmatpush1.bf16.msra.mxu0 0
    %2099 = vmatprep.subr.bf16.mxu0 0
    %2100 = vmatpush1.bf16.msra.mxu0 0
    %2101 = vmatprep.subr.bf16.mxu0 0
    %2102 = vmatpush1.bf16.msra.mxu0 0
    %2103 = vmatprep.subr.bf16.mxu0 0
    %2104 = vmatpush1.bf16.msra.mxu0 0
    %2105 = vmatprep.subr.bf16.mxu0 0
    %2106 = vmatpush1.bf16.msra.mxu0 0
    %2107 = vmatprep.subr.bf16.mxu0 0
    %2108 = vmatpush1.bf16.msra.mxu0 0
    %2109 = vmatprep.mubr.bf16.mxu0 0
    %2110 = vmatmul.mubr.bf16.gmra.mrb[0].mxu0 %v1358
    %v2111 = vpop.f32.mrb[0].mxu0
    %v2112 = vadd.f32 %v1923, %v2111
    %v2113 = vpop.f32.mrb[0].mxu0
    %v2114 = vadd.f32 %v1925, %v2113
    %v2115 = vpop.f32.mrb[0].mxu0
    %v2116 = vadd.f32 %v1927, %v2115
    %v2117 = vpop.f32.mrb[0].mxu0
    %v2118 = vadd.f32 %v1929, %v2117
    %2119 = vmatprep.mubr.bf16.mxu0 0
    %2120 = vmatmul.mubr.bf16.gmra.mrb[0].mxu0 %v1361
    %v2121 = vpop.f32.mrb[0].mxu0
    %v2122 = vadd.f32 %v1933, %v2121
    %v2123 = vpop.f32.mrb[0].mxu0
    %v2124 = vadd.f32 %v1935, %v2123
    %v2125 = vpop.f32.mrb[0].mxu0
    %v2126 = vadd.f32 %v1937, %v2125
    %v2127 = vpop.f32.mrb[0].mxu0
    %v2128 = vadd.f32 %v1939, %v2127
    %2129 = vmatprep.mubr.bf16.mxu0 0
    %2130 = vmatmul.mubr.bf16.gmra.mrb[0].mxu0 %v1364
    %v2131 = vpop.f32.mrb[0].mxu0
    %v2132 = vadd.f32 %v1943, %v2131
    %v2133 = vpop.f32.mrb[0].mxu0
    %v2134 = vadd.f32 %v1945, %v2133
    %v2135 = vpop.f32.mrb[0].mxu0
    %v2136 = vadd.f32 %v1947, %v2135
    %v2137 = vpop.f32.mrb[0].mxu0
    %v2138 = vadd.f32 %v1949, %v2137
    %2139 = vdwg.mxu0
    %s2140 = scalar_lea.vmem [#allocation2], 528
    %v2141 = vld [vmem:[%s2140] sm:$0xff]
    %v2142 = vld [vmem:[%s2140 + $0x8] sm:$0xff]
    %v2143 = vld [vmem:[%s2140 + $0x10] sm:$0xff]
    %v2144 = vld [vmem:[%s2140 + $0x18] sm:$0xff]
    %v2145 = vld [vmem:[%s2140 + $0x20] sm:$0xff]
    %v2146 = vld [vmem:[%s2140 + $0x28] sm:$0xff]
    %v2147 = vld [vmem:[%s2140 + $0x30] sm:$0xff]
    %v2148 = vld [vmem:[%s2140 + $0x38] sm:$0xff]
    %v2149 = vld [vmem:[%s2140 + $0x40] sm:$0xff]
    %v2150 = vld [vmem:[%s2140 + $0x48] sm:$0xff]
    %v2151 = vld [vmem:[%s2140 + $0x50] sm:$0xff]
    %v2152 = vld [vmem:[%s2140 + $0x58] sm:$0xff]
    %v2153 = vld [vmem:[%s2140 + $0x60] sm:$0xff]
    %v2154 = vld [vmem:[%s2140 + $0x68] sm:$0xff]
    %v2155 = vld [vmem:[%s2140 + $0x70] sm:$0xff]
    %v2156 = vld [vmem:[%s2140 + $0x78] sm:$0xff]
    %v2157 = vld [vmem:[%s2140 + $0x80] sm:$0xff]
    %v2158 = vld [vmem:[%s2140 + $0x88] sm:$0xff]
    %v2159 = vld [vmem:[%s2140 + $0x90] sm:$0xff]
    %v2160 = vld [vmem:[%s2140 + $0x98] sm:$0xff]
    %v2161 = vld [vmem:[%s2140 + $0xa0] sm:$0xff]
    %v2162 = vld [vmem:[%s2140 + $0xa8] sm:$0xff]
    %v2163 = vld [vmem:[%s2140 + $0xb0] sm:$0xff]
    %v2164 = vld [vmem:[%s2140 + $0xb8] sm:$0xff]
    %v2165 = vld [vmem:[%s2140 + $0xc0] sm:$0xff]
    %v2166 = vld [vmem:[%s2140 + $0xc8] sm:$0xff]
    %v2167 = vld [vmem:[%s2140 + $0xd0] sm:$0xff]
    %v2168 = vld [vmem:[%s2140 + $0xd8] sm:$0xff]
    %v2169 = vld [vmem:[%s2140 + $0xe0] sm:$0xff]
    %v2170 = vld [vmem:[%s2140 + $0xe8] sm:$0xff]
    %v2171 = vld [vmem:[%s2140 + $0xf0] sm:$0x33]
    %v2172 = vld [vmem:[%s2140 + $0xf8] sm:$0x33]
    %v2173 = vld [vmem:[%s2140 + $0x100] sm:$0x33]
    %v2207 = vunpack.c.l.b16 %v2141
    %v2208 = vunpack.c.h.b16 %v2141
    %v2209 = vunpack.c.l.b16 %v2142
    %v2210 = vunpack.c.h.b16 %v2142
    %v2211 = vunpack.c.l.b16 %v2143
    %v2212 = vunpack.c.h.b16 %v2143
    %v2213 = vunpack.c.l.b16 %v2144
    %v2214 = vunpack.c.h.b16 %v2144
    %v2215 = vunpack.c.l.b16 %v2145
    %v2216 = vunpack.c.h.b16 %v2145
    %v2217 = vunpack.c.l.b16 %v2146
    %v2218 = vunpack.c.h.b16 %v2146
    %v2219 = vunpack.c.l.b16 %v2147
    %v2220 = vunpack.c.h.b16 %v2147
    %v2221 = vunpack.c.l.b16 %v2148
    %v2222 = vunpack.c.h.b16 %v2148
    %v2223 = vunpack.c.l.b16 %v2149
    %v2224 = vunpack.c.h.b16 %v2149
    %v2225 = vunpack.c.l.b16 %v2150
    %v2226 = vunpack.c.h.b16 %v2150
    %v2227 = vunpack.c.l.b16 %v2151
    %v2228 = vunpack.c.h.b16 %v2151
    %v2229 = vunpack.c.l.b16 %v2152
    %v2230 = vunpack.c.h.b16 %v2152
    %v2231 = vunpack.c.l.b16 %v2153
    %v2232 = vunpack.c.h.b16 %v2153
    %v2233 = vunpack.c.l.b16 %v2154
    %v2234 = vunpack.c.h.b16 %v2154
    %v2235 = vunpack.c.l.b16 %v2155
    %v2236 = vunpack.c.h.b16 %v2155
    %v2237 = vunpack.c.l.b16 %v2156
    %v2238 = vunpack.c.h.b16 %v2156
    %v2239 = vunpack.c.l.b16 %v2157
    %v2240 = vunpack.c.h.b16 %v2157
    %v2241 = vunpack.c.l.b16 %v2158
    %v2242 = vunpack.c.h.b16 %v2158
    %v2243 = vunpack.c.l.b16 %v2159
    %v2244 = vunpack.c.h.b16 %v2159
    %v2245 = vunpack.c.l.b16 %v2160
    %v2246 = vunpack.c.h.b16 %v2160
    %v2247 = vunpack.c.l.b16 %v2161
    %v2248 = vunpack.c.h.b16 %v2161
    %v2249 = vunpack.c.l.b16 %v2162
    %v2250 = vunpack.c.h.b16 %v2162
    %v2251 = vunpack.c.l.b16 %v2163
    %v2252 = vunpack.c.h.b16 %v2163
    %v2253 = vunpack.c.l.b16 %v2164
    %v2254 = vunpack.c.h.b16 %v2164
    %v2255 = vunpack.c.l.b16 %v2165
    %v2256 = vunpack.c.h.b16 %v2165
    %v2257 = vunpack.c.l.b16 %v2166
    %v2258 = vunpack.c.h.b16 %v2166
    %v2259 = vunpack.c.l.b16 %v2167
    %v2260 = vunpack.c.h.b16 %v2167
    %v2261 = vunpack.c.l.b16 %v2168
    %v2262 = vunpack.c.h.b16 %v2168
    %v2263 = vunpack.c.l.b16 %v2169
    %v2264 = vunpack.c.h.b16 %v2169
    %v2265 = vunpack.c.l.b16 %v2170
    %v2266 = vunpack.c.h.b16 %v2170
    %v2267 = vunpack.c.l.b16 %v2171
    %v2268 = vunpack.c.h.b16 %v2171
    %v2269 = vunpack.c.l.b16 %v2172
    %v2270 = vunpack.c.h.b16 %v2172
    %v2271 = vunpack.c.l.b16 %v2173
    %v2272 = vunpack.c.h.b16 %v2173
    %v2273 = vpack.c.b16 %v2213, %v2207
    %v2274 = vpack.c.b16 %v2214, %v2208
    %v2275 = vpack.c.b16 %v2215, %v2209
    %v2276 = vpack.c.b16 %v2216, %v2210
    %v2277 = vpack.c.b16 %v2217, %v2211
    %v2278 = vpack.c.b16 %v2218, %v2212
    %v2279 = vpack.c.b16 %v2225, %v2219
    %v2280 = vpack.c.b16 %v2226, %v2220
    %v2281 = vpack.c.b16 %v2227, %v2221
    %v2282 = vpack.c.b16 %v2228, %v2222
    %v2283 = vpack.c.b16 %v2229, %v2223
    %v2284 = vpack.c.b16 %v2230, %v2224
    %v2285 = vpack.c.b16 %v2237, %v2231
    %v2286 = vpack.c.b16 %v2238, %v2232
    %v2287 = vpack.c.b16 %v2239, %v2233
    %v2288 = vpack.c.b16 %v2240, %v2234
    %v2289 = vpack.c.b16 %v2241, %v2235
    %v2290 = vpack.c.b16 %v2242, %v2236
    %v2291 = vpack.c.b16 %v2249, %v2243
    %v2292 = vpack.c.b16 %v2250, %v2244
    %v2293 = vpack.c.b16 %v2251, %v2245
    %v2294 = vpack.c.b16 %v2252, %v2246
    %v2295 = vpack.c.b16 %v2253, %v2247
    %v2296 = vpack.c.b16 %v2254, %v2248
    %v2297 = vpack.c.b16 %v2261, %v2255
    %v2298 = vpack.c.b16 %v2262, %v2256
    %v2299 = vpack.c.b16 %v2263, %v2257
    %v2300 = vpack.c.b16 %v2264, %v2258
    %v2301 = vpack.c.b16 %v2265, %v2259
    %v2302 = vpack.c.b16 %v2266, %v2260
    %v2303 = vpack.c.b16 %v2267, %v2267
    %v2304 = vpack.c.b16 %v2268, %v2268
    %v2305 = vpack.c.b16 %v2269, %v2269
    %v2306 = vpack.c.b16 %v2270, %v2270
    %v2307 = vpack.c.b16 %v2271, %v2271
    %v2308 = vpack.c.b16 %v2272, %v2272
    %v2340 = vsel %vm381, %v2303, 0
    %v2343 = vsel %vm381, %v2304, 0
    %v2346 = vsel %vm381, %v2305, 0
    %v2349 = vsel %vm381, %v2306, 0
    %v2352 = vsel %vm381, %v2307, 0
    %v2355 = vsel %vm381, %v2308, 0
    %2357 = vmatprep.subr.bf16.mxu0 %v2274
    %2358 = vmatpush1.bf16.msra.mxu0 %v2273
    %2359 = vmatprep.subr.bf16.mxu0 %v2280
    %2360 = vmatpush1.bf16.msra.mxu0 %v2279
    %2361 = vmatprep.subr.bf16.mxu0 %v2286
    %2362 = vmatpush1.bf16.msra.mxu0 %v2285
    %2363 = vmatprep.subr.bf16.mxu0 %v2292
    %2364 = vmatpush1.bf16.msra.mxu0 %v2291
    %2365 = vmatprep.subr.bf16.mxu0 %v2298
    %2366 = vmatpush1.bf16.msra.mxu0 %v2297
    %2367 = vmatprep.subr.bf16.mxu0 %v2343
    %2368 = vmatpush1.bf16.msra.mxu0 %v2340
    %2369 = vmatprep.subr.bf16.mxu0 0
    %2370 = vmatpush1.bf16.msra.mxu0 0
    %2371 = vmatprep.subr.bf16.mxu0 0
    %2372 = vmatpush1.bf16.msra.mxu0 0
    %2373 = vmatprep.subr.bf16.mxu0 0
    %2374 = vmatpush1.bf16.msra.mxu0 0
    %2375 = vmatprep.subr.bf16.mxu0 0
    %2376 = vmatpush1.bf16.msra.mxu0 0
    %2377 = vmatprep.subr.bf16.mxu0 0
    %2378 = vmatpush1.bf16.msra.mxu0 0
    %2379 = vmatprep.subr.bf16.mxu0 0
    %2380 = vmatpush1.bf16.msra.mxu0 0
    %2381 = vmatprep.subr.bf16.mxu0 0
    %2382 = vmatpush1.bf16.msra.mxu0 0
    %2383 = vmatprep.subr.bf16.mxu0 0
    %2384 = vmatpush1.bf16.msra.mxu0 0
    %2385 = vmatprep.subr.bf16.mxu0 0
    %2386 = vmatpush1.bf16.msra.mxu0 0
    %2387 = vmatprep.subr.bf16.mxu0 0
    %2388 = vmatpush1.bf16.msra.mxu0 0
    %2389 = vmatprep.mubr.bf16.mxu0 0
    %2390 = vmatmul.mubr.bf16.gmra.mrb[0].mxu0 %v971
    %v2391 = vpop.f32.mrb[0].mxu0
    %v2392 = vadd.f32 0.0, %v2391
    %v2393 = vpop.f32.mrb[0].mxu0
    %v2394 = vadd.f32 0.0, %v2393
    %v2395 = vpop.f32.mrb[0].mxu0
    %v2396 = vadd.f32 0.0, %v2395
    %v2397 = vpop.f32.mrb[0].mxu0
    %v2398 = vadd.f32 0.0, %v2397
    %2399 = vmatprep.mubr.bf16.mxu0 0
    %2400 = vmatmul.mubr.bf16.gmra.mrb[0].mxu0 %v974
    %v2401 = vpop.f32.mrb[0].mxu0
    %v2402 = vadd.f32 0.0, %v2401
    %v2403 = vpop.f32.mrb[0].mxu0
    %v2404 = vadd.f32 0.0, %v2403
    %v2405 = vpop.f32.mrb[0].mxu0
    %v2406 = vadd.f32 0.0, %v2405
    %v2407 = vpop.f32.mrb[0].mxu0
    %v2408 = vadd.f32 0.0, %v2407
    %2409 = vmatprep.mubr.bf16.mxu0 0
    %2410 = vmatmul.mubr.bf16.gmra.mrb[0].mxu0 %v977
    %v2411 = vpop.f32.mrb[0].mxu0
    %v2412 = vadd.f32 0.0, %v2411
    %v2413 = vpop.f32.mrb[0].mxu0
    %v2414 = vadd.f32 0.0, %v2413
    %v2415 = vpop.f32.mrb[0].mxu0
    %v2416 = vadd.f32 0.0, %v2415
    %v2417 = vpop.f32.mrb[0].mxu0
    %v2418 = vadd.f32 0.0, %v2417
    %2419 = vdwg.mxu0
    %2420 = vmatprep.subr.bf16.mxu0 %v2276
    %2421 = vmatpush1.bf16.msra.mxu0 %v2275
    %2422 = vmatprep.subr.bf16.mxu0 %v2282
    %2423 = vmatpush1.bf16.msra.mxu0 %v2281
    %2424 = vmatprep.subr.bf16.mxu0 %v2288
    %2425 = vmatpush1.bf16.msra.mxu0 %v2287
    %2426 = vmatprep.subr.bf16.mxu0 %v2294
    %2427 = vmatpush1.bf16.msra.mxu0 %v2293
    %2428 = vmatprep.subr.bf16.mxu0 %v2300
    %2429 = vmatpush1.bf16.msra.mxu0 %v2299
    %2430 = vmatprep.subr.bf16.mxu0 %v2349
    %2431 = vmatpush1.bf16.msra.mxu0 %v2346
    %2432 = vmatprep.subr.bf16.mxu0 0
    %2433 = vmatpush1.bf16.msra.mxu0 0
    %2434 = vmatprep.subr.bf16.mxu0 0
    %2435 = vmatpush1.bf16.msra.mxu0 0
    %2436 = vmatprep.subr.bf16.mxu0 0
    %2437 = vmatpush1.bf16.msra.mxu0 0
    %2438 = vmatprep.subr.bf16.mxu0 0
    %2439 = vmatpush1.bf16.msra.mxu0 0
    %2440 = vmatprep.subr.bf16.mxu0 0
    %2441 = vmatpush1.bf16.msra.mxu0 0
    %2442 = vmatprep.subr.bf16.mxu0 0
    %2443 = vmatpush1.bf16.msra.mxu0 0
    %2444 = vmatprep.subr.bf16.mxu0 0
    %2445 = vmatpush1.bf16.msra.mxu0 0
    %2446 = vmatprep.subr.bf16.mxu0 0
    %2447 = vmatpush1.bf16.msra.mxu0 0
    %2448 = vmatprep.subr.bf16.mxu0 0
    %2449 = vmatpush1.bf16.msra.mxu0 0
    %2450 = vmatprep.subr.bf16.mxu0 0
    %2451 = vmatpush1.bf16.msra.mxu0 0
    %2452 = vmatprep.mubr.bf16.mxu0 0
    %2453 = vmatmul.mubr.bf16.gmra.mrb[0].mxu0 %v971
    %v2454 = vpop.f32.mrb[0].mxu0
    %v2455 = vadd.f32 0.0, %v2454
    %v2456 = vpop.f32.mrb[0].mxu0
    %v2457 = vadd.f32 0.0, %v2456
    %v2458 = vpop.f32.mrb[0].mxu0
    %v2459 = vadd.f32 0.0, %v2458
    %v2460 = vpop.f32.mrb[0].mxu0
    %v2461 = vadd.f32 0.0, %v2460
    %2462 = vmatprep.mubr.bf16.mxu0 0
    %2463 = vmatmul.mubr.bf16.gmra.mrb[0].mxu0 %v974
    %v2464 = vpop.f32.mrb[0].mxu0
    %v2465 = vadd.f32 0.0, %v2464
    %v2466 = vpop.f32.mrb[0].mxu0
    %v2467 = vadd.f32 0.0, %v2466
    %v2468 = vpop.f32.mrb[0].mxu0
    %v2469 = vadd.f32 0.0, %v2468
    %v2470 = vpop.f32.mrb[0].mxu0
    %v2471 = vadd.f32 0.0, %v2470
    %2472 = vmatprep.mubr.bf16.mxu0 0
    %2473 = vmatmul.mubr.bf16.gmra.mrb[0].mxu0 %v977
    %v2474 = vpop.f32.mrb[0].mxu0
    %v2475 = vadd.f32 0.0, %v2474
    %v2476 = vpop.f32.mrb[0].mxu0
    %v2477 = vadd.f32 0.0, %v2476
    %v2478 = vpop.f32.mrb[0].mxu0
    %v2479 = vadd.f32 0.0, %v2478
    %v2480 = vpop.f32.mrb[0].mxu0
    %v2481 = vadd.f32 0.0, %v2480
    %2482 = vdwg.mxu0
    %2483 = vmatprep.subr.bf16.mxu0 %v2278
    %2484 = vmatpush1.bf16.msra.mxu0 %v2277
    %2485 = vmatprep.subr.bf16.mxu0 %v2284
    %2486 = vmatpush1.bf16.msra.mxu0 %v2283
    %2487 = vmatprep.subr.bf16.mxu0 %v2290
    %2488 = vmatpush1.bf16.msra.mxu0 %v2289
    %2489 = vmatprep.subr.bf16.mxu0 %v2296
    %2490 = vmatpush1.bf16.msra.mxu0 %v2295
    %2491 = vmatprep.subr.bf16.mxu0 %v2302
    %2492 = vmatpush1.bf16.msra.mxu0 %v2301
    %2493 = vmatprep.subr.bf16.mxu0 %v2355
    %2494 = vmatpush1.bf16.msra.mxu0 %v2352
    %2495 = vmatprep.subr.bf16.mxu0 0
    %2496 = vmatpush1.bf16.msra.mxu0 0
    %2497 = vmatprep.subr.bf16.mxu0 0
    %2498 = vmatpush1.bf16.msra.mxu0 0
    %2499 = vmatprep.subr.bf16.mxu0 0
    %2500 = vmatpush1.bf16.msra.mxu0 0
    %2501 = vmatprep.subr.bf16.mxu0 0
    %2502 = vmatpush1.bf16.msra.mxu0 0
    %2503 = vmatprep.subr.bf16.mxu0 0
    %2504 = vmatpush1.bf16.msra.mxu0 0
    %2505 = vmatprep.subr.bf16.mxu0 0
    %2506 = vmatpush1.bf16.msra.mxu0 0
    %2507 = vmatprep.subr.bf16.mxu0 0
    %2508 = vmatpush1.bf16.msra.mxu0 0
    %2509 = vmatprep.subr.bf16.mxu0 0
    %2510 = vmatpush1.bf16.msra.mxu0 0
    %2511 = vmatprep.subr.bf16.mxu0 0
    %2512 = vmatpush1.bf16.msra.mxu0 0
    %2513 = vmatprep.subr.bf16.mxu0 0
    %2514 = vmatpush1.bf16.msra.mxu0 0
    %2515 = vmatprep.mubr.bf16.mxu0 0
    %2516 = vmatmul.mubr.bf16.gmra.mrb[0].mxu0 %v971
    %v2517 = vpop.f32.mrb[0].mxu0
    %v2518 = vadd.f32 0.0, %v2517
    %v2519 = vpop.f32.mrb[0].mxu0
    %v2520 = vadd.f32 0.0, %v2519
    %v2521 = vpop.f32.mrb[0].mxu0
    %v2522 = vadd.f32 0.0, %v2521
    %v2523 = vpop.f32.mrb[0].mxu0
    %v2524 = vadd.f32 0.0, %v2523
    %2525 = vmatprep.mubr.bf16.mxu0 0
    %2526 = vmatmul.mubr.bf16.gmra.mrb[0].mxu0 %v974
    %v2527 = vpop.f32.mrb[0].mxu0
    %v2528 = vadd.f32 0.0, %v2527
    %v2529 = vpop.f32.mrb[0].mxu0
    %v2530 = vadd.f32 0.0, %v2529
    %v2531 = vpop.f32.mrb[0].mxu0
    %v2532 = vadd.f32 0.0, %v2531
    %v2533 = vpop.f32.mrb[0].mxu0
    %v2534 = vadd.f32 0.0, %v2533
    %2535 = vmatprep.mubr.bf16.mxu0 0
    %2536 = vmatmul.mubr.bf16.gmra.mrb[0].mxu0 %v977
    %v2537 = vpop.f32.mrb[0].mxu0
    %v2538 = vadd.f32 0.0, %v2537
    %v2539 = vpop.f32.mrb[0].mxu0
    %v2540 = vadd.f32 0.0, %v2539
    %v2541 = vpop.f32.mrb[0].mxu0
    %v2542 = vadd.f32 0.0, %v2541
    %v2543 = vpop.f32.mrb[0].mxu0
    %v2544 = vadd.f32 0.0, %v2543
    %2545 = vdwg.mxu0
    %v2546 = vadd.f32 %v816, %v2392
    %v2547 = vadd.f32 %v818, %v2394
    %v2548 = vadd.f32 %v879, %v2455
    %v2549 = vadd.f32 %v881, %v2457
    %v2550 = vadd.f32 %v942, %v2518
    %v2551 = vadd.f32 %v944, %v2520
    %v2552 = vadd.f32 %v820, %v2396
    %v2553 = vadd.f32 %v822, %v2398
    %v2554 = vadd.f32 %v883, %v2459
    %v2555 = vadd.f32 %v885, %v2461
    %v2556 = vadd.f32 %v946, %v2522
    %v2557 = vadd.f32 %v948, %v2524
    %v2558 = vadd.f32 %v826, %v2402
    %v2559 = vadd.f32 %v828, %v2404
    %v2560 = vadd.f32 %v889, %v2465
    %v2561 = vadd.f32 %v891, %v2467
    %v2562 = vadd.f32 %v952, %v2528
    %v2563 = vadd.f32 %v954, %v2530
    %v2564 = vadd.f32 %v830, %v2406
    %v2565 = vadd.f32 %v832, %v2408
    %v2566 = vadd.f32 %v893, %v2469
    %v2567 = vadd.f32 %v895, %v2471
    %v2568 = vadd.f32 %v956, %v2532
    %v2569 = vadd.f32 %v958, %v2534
    %v2570 = vadd.f32 %v836, %v2412
    %v2571 = vadd.f32 %v838, %v2414
    %v2572 = vadd.f32 %v899, %v2475
    %v2573 = vadd.f32 %v901, %v2477
    %v2574 = vadd.f32 %v962, %v2538
    %v2575 = vadd.f32 %v964, %v2540
    %v2576 = vadd.f32 %v840, %v2416
    %v2577 = vadd.f32 %v842, %v2418
    %v2578 = vadd.f32 %v903, %v2479
    %v2579 = vadd.f32 %v905, %v2481
    %v2580 = vadd.f32 %v966, %v2542
    %v2581 = vadd.f32 %v968, %v2544
    %2582 = vmatprep.subr.bf16.mxu0 %v2274
    %2583 = vmatpush1.bf16.msra.mxu0 %v2273
    %2584 = vmatprep.subr.bf16.mxu0 %v2280
    %2585 = vmatpush1.bf16.msra.mxu0 %v2279
    %2586 = vmatprep.subr.bf16.mxu0 %v2286
    %2587 = vmatpush1.bf16.msra.mxu0 %v2285
    %2588 = vmatprep.subr.bf16.mxu0 %v2292
    %2589 = vmatpush1.bf16.msra.mxu0 %v2291
    %2590 = vmatprep.subr.bf16.mxu0 %v2298
    %2591 = vmatpush1.bf16.msra.mxu0 %v2297
    %2592 = vmatprep.subr.bf16.mxu0 %v2343
    %2593 = vmatpush1.bf16.msra.mxu0 %v2340
    %2594 = vmatprep.subr.bf16.mxu0 0
    %2595 = vmatpush1.bf16.msra.mxu0 0
    %2596 = vmatprep.subr.bf16.mxu0 0
    %2597 = vmatpush1.bf16.msra.mxu0 0
    %2598 = vmatprep.subr.bf16.mxu0 0
    %2599 = vmatpush1.bf16.msra.mxu0 0
    %2600 = vmatprep.subr.bf16.mxu0 0
    %2601 = vmatpush1.bf16.msra.mxu0 0
    %2602 = vmatprep.subr.bf16.mxu0 0
    %2603 = vmatpush1.bf16.msra.mxu0 0
    %2604 = vmatprep.subr.bf16.mxu0 0
    %2605 = vmatpush1.bf16.msra.mxu0 0
    %2606 = vmatprep.subr.bf16.mxu0 0
    %2607 = vmatpush1.bf16.msra.mxu0 0
    %2608 = vmatprep.subr.bf16.mxu0 0
    %2609 = vmatpush1.bf16.msra.mxu0 0
    %2610 = vmatprep.subr.bf16.mxu0 0
    %2611 = vmatpush1.bf16.msra.mxu0 0
    %2612 = vmatprep.subr.bf16.mxu0 0
    %2613 = vmatpush1.bf16.msra.mxu0 0
    %2614 = vmatprep.mubr.bf16.mxu0 0
    %2615 = vmatmul.mubr.bf16.gmra.mrb[0].mxu0 %v1358
    %v2616 = vpop.f32.mrb[0].mxu0
    %v2617 = vadd.f32 0.0, %v2616
    %v2618 = vpop.f32.mrb[0].mxu0
    %v2619 = vadd.f32 0.0, %v2618
    %v2620 = vpop.f32.mrb[0].mxu0
    %v2621 = vadd.f32 0.0, %v2620
    %v2622 = vpop.f32.mrb[0].mxu0
    %v2623 = vadd.f32 0.0, %v2622
    %2624 = vmatprep.mubr.bf16.mxu0 0
    %2625 = vmatmul.mubr.bf16.gmra.mrb[0].mxu0 %v1361
    %v2626 = vpop.f32.mrb[0].mxu0
    %v2627 = vadd.f32 0.0, %v2626
    %v2628 = vpop.f32.mrb[0].mxu0
    %v2629 = vadd.f32 0.0, %v2628
    %v2630 = vpop.f32.mrb[0].mxu0
    %v2631 = vadd.f32 0.0, %v2630
    %v2632 = vpop.f32.mrb[0].mxu0
    %v2633 = vadd.f32 0.0, %v2632
    %2634 = vmatprep.mubr.bf16.mxu0 0
    %2635 = vmatmul.mubr.bf16.gmra.mrb[0].mxu0 %v1364
    %v2636 = vpop.f32.mrb[0].mxu0
    %v2637 = vadd.f32 0.0, %v2636
    %v2638 = vpop.f32.mrb[0].mxu0
    %v2639 = vadd.f32 0.0, %v2638
    %v2640 = vpop.f32.mrb[0].mxu0
    %v2641 = vadd.f32 0.0, %v2640
    %v2642 = vpop.f32.mrb[0].mxu0
    %v2643 = vadd.f32 0.0, %v2642
    %2644 = vdwg.mxu0
    %2645 = vmatprep.subr.bf16.mxu0 %v2276
    %2646 = vmatpush1.bf16.msra.mxu0 %v2275
    %2647 = vmatprep.subr.bf16.mxu0 %v2282
    %2648 = vmatpush1.bf16.msra.mxu0 %v2281
    %2649 = vmatprep.subr.bf16.mxu0 %v2288
    %2650 = vmatpush1.bf16.msra.mxu0 %v2287
    %2651 = vmatprep.subr.bf16.mxu0 %v2294
    %2652 = vmatpush1.bf16.msra.mxu0 %v2293
    %2653 = vmatprep.subr.bf16.mxu0 %v2300
    %2654 = vmatpush1.bf16.msra.mxu0 %v2299
    %2655 = vmatprep.subr.bf16.mxu0 %v2349
    %2656 = vmatpush1.bf16.msra.mxu0 %v2346
    %2657 = vmatprep.subr.bf16.mxu0 0
    %2658 = vmatpush1.bf16.msra.mxu0 0
    %2659 = vmatprep.subr.bf16.mxu0 0
    %2660 = vmatpush1.bf16.msra.mxu0 0
    %2661 = vmatprep.subr.bf16.mxu0 0
    %2662 = vmatpush1.bf16.msra.mxu0 0
    %2663 = vmatprep.subr.bf16.mxu0 0
    %2664 = vmatpush1.bf16.msra.mxu0 0
    %2665 = vmatprep.subr.bf16.mxu0 0
    %2666 = vmatpush1.bf16.msra.mxu0 0
    %2667 = vmatprep.subr.bf16.mxu0 0
    %2668 = vmatpush1.bf16.msra.mxu0 0
    %2669 = vmatprep.subr.bf16.mxu0 0
    %2670 = vmatpush1.bf16.msra.mxu0 0
    %2671 = vmatprep.subr.bf16.mxu0 0
    %2672 = vmatpush1.bf16.msra.mxu0 0
    %2673 = vmatprep.subr.bf16.mxu0 0
    %2674 = vmatpush1.bf16.msra.mxu0 0
    %2675 = vmatprep.subr.bf16.mxu0 0
    %2676 = vmatpush1.bf16.msra.mxu0 0
    %2677 = vmatprep.mubr.bf16.mxu0 0
    %2678 = vmatmul.mubr.bf16.gmra.mrb[0].mxu0 %v1358
    %v2679 = vpop.f32.mrb[0].mxu0
    %v2680 = vadd.f32 0.0, %v2679
    %v2681 = vpop.f32.mrb[0].mxu0
    %v2682 = vadd.f32 0.0, %v2681
    %v2683 = vpop.f32.mrb[0].mxu0
    %v2684 = vadd.f32 0.0, %v2683
    %v2685 = vpop.f32.mrb[0].mxu0
    %v2686 = vadd.f32 0.0, %v2685
    %2687 = vmatprep.mubr.bf16.mxu0 0
    %2688 = vmatmul.mubr.bf16.gmra.mrb[0].mxu0 %v1361
    %v2689 = vpop.f32.mrb[0].mxu0
    %v2690 = vadd.f32 0.0, %v2689
    %v2691 = vpop.f32.mrb[0].mxu0
    %v2692 = vadd.f32 0.0, %v2691
    %v2693 = vpop.f32.mrb[0].mxu0
    %v2694 = vadd.f32 0.0, %v2693
    %v2695 = vpop.f32.mrb[0].mxu0
    %v2696 = vadd.f32 0.0, %v2695
    %2697 = vmatprep.mubr.bf16.mxu0 0
    %2698 = vmatmul.mubr.bf16.gmra.mrb[0].mxu0 %v1364
    %v2699 = vpop.f32.mrb[0].mxu0
    %v2700 = vadd.f32 0.0, %v2699
    %v2701 = vpop.f32.mrb[0].mxu0
    %v2702 = vadd.f32 0.0, %v2701
    %v2703 = vpop.f32.mrb[0].mxu0
    %v2704 = vadd.f32 0.0, %v2703
    %v2705 = vpop.f32.mrb[0].mxu0
    %v2706 = vadd.f32 0.0, %v2705
    %2707 = vdwg.mxu0
    %2708 = vmatprep.subr.bf16.mxu0 %v2278
    %2709 = vmatpush1.bf16.msra.mxu0 %v2277
    %2710 = vmatprep.subr.bf16.mxu0 %v2284
    %2711 = vmatpush1.bf16.msra.mxu0 %v2283
    %2712 = vmatprep.subr.bf16.mxu0 %v2290
    %2713 = vmatpush1.bf16.msra.mxu0 %v2289
    %2714 = vmatprep.subr.bf16.mxu0 %v2296
    %2715 = vmatpush1.bf16.msra.mxu0 %v2295
    %2716 = vmatprep.subr.bf16.mxu0 %v2302
    %2717 = vmatpush1.bf16.msra.mxu0 %v2301
    %2718 = vmatprep.subr.bf16.mxu0 %v2355
    %2719 = vmatpush1.bf16.msra.mxu0 %v2352
    %2720 = vmatprep.subr.bf16.mxu0 0
    %2721 = vmatpush1.bf16.msra.mxu0 0
    %2722 = vmatprep.subr.bf16.mxu0 0
    %2723 = vmatpush1.bf16.msra.mxu0 0
    %2724 = vmatprep.subr.bf16.mxu0 0
    %2725 = vmatpush1.bf16.msra.mxu0 0
    %2726 = vmatprep.subr.bf16.mxu0 0
    %2727 = vmatpush1.bf16.msra.mxu0 0
    %2728 = vmatprep.subr.bf16.mxu0 0
    %2729 = vmatpush1.bf16.msra.mxu0 0
    %2730 = vmatprep.subr.bf16.mxu0 0
    %2731 = vmatpush1.bf16.msra.mxu0 0
    %2732 = vmatprep.subr.bf16.mxu0 0
    %2733 = vmatpush1.bf16.msra.mxu0 0
    %2734 = vmatprep.subr.bf16.mxu0 0
    %2735 = vmatpush1.bf16.msra.mxu0 0
    %2736 = vmatprep.subr.bf16.mxu0 0
    %2737 = vmatpush1.bf16.msra.mxu0 0
    %2738 = vmatprep.subr.bf16.mxu0 0
    %2739 = vmatpush1.bf16.msra.mxu0 0
    %2740 = vmatprep.mubr.bf16.mxu0 0
    %2741 = vmatmul.mubr.bf16.gmra.mrb[0].mxu0 %v1358
    %v2742 = vpop.f32.mrb[0].mxu0
    %v2743 = vadd.f32 0.0, %v2742
    %v2744 = vpop.f32.mrb[0].mxu0
    %v2745 = vadd.f32 0.0, %v2744
    %v2746 = vpop.f32.mrb[0].mxu0
    %v2747 = vadd.f32 0.0, %v2746
    %v2748 = vpop.f32.mrb[0].mxu0
    %v2749 = vadd.f32 0.0, %v2748
    %2750 = vmatprep.mubr.bf16.mxu0 0
    %2751 = vmatmul.mubr.bf16.gmra.mrb[0].mxu0 %v1361
    %v2752 = vpop.f32.mrb[0].mxu0
    %v2753 = vadd.f32 0.0, %v2752
    %v2754 = vpop.f32.mrb[0].mxu0
    %v2755 = vadd.f32 0.0, %v2754
    %v2756 = vpop.f32.mrb[0].mxu0
    %v2757 = vadd.f32 0.0, %v2756
    %v2758 = vpop.f32.mrb[0].mxu0
    %v2759 = vadd.f32 0.0, %v2758
    %2760 = vmatprep.mubr.bf16.mxu0 0
    %2761 = vmatmul.mubr.bf16.gmra.mrb[0].mxu0 %v1364
    %v2762 = vpop.f32.mrb[0].mxu0
    %v2763 = vadd.f32 0.0, %v2762
    %v2764 = vpop.f32.mrb[0].mxu0
    %v2765 = vadd.f32 0.0, %v2764
    %v2766 = vpop.f32.mrb[0].mxu0
    %v2767 = vadd.f32 0.0, %v2766
    %v2768 = vpop.f32.mrb[0].mxu0
    %v2769 = vadd.f32 0.0, %v2768
    %2770 = vdwg.mxu0
    %v2771 = vadd.f32 %v1203, %v2617
    %v2772 = vadd.f32 %v1205, %v2619
    %v2773 = vadd.f32 %v1266, %v2680
    %v2774 = vadd.f32 %v1268, %v2682
    %v2775 = vadd.f32 %v1329, %v2743
    %v2776 = vadd.f32 %v1331, %v2745
    %v2777 = vadd.f32 %v1207, %v2621
    %v2778 = vadd.f32 %v1209, %v2623
    %v2779 = vadd.f32 %v1270, %v2684
    %v2780 = vadd.f32 %v1272, %v2686
    %v2781 = vadd.f32 %v1333, %v2747
    %v2782 = vadd.f32 %v1335, %v2749
    %v2783 = vadd.f32 %v1213, %v2627
    %v2784 = vadd.f32 %v1215, %v2629
    %v2785 = vadd.f32 %v1276, %v2690
    %v2786 = vadd.f32 %v1278, %v2692
    %v2787 = vadd.f32 %v1339, %v2753
    %v2788 = vadd.f32 %v1341, %v2755
    %v2789 = vadd.f32 %v1217, %v2631
    %v2790 = vadd.f32 %v1219, %v2633
    %v2791 = vadd.f32 %v1280, %v2694
    %v2792 = vadd.f32 %v1282, %v2696
    %v2793 = vadd.f32 %v1343, %v2757
    %v2794 = vadd.f32 %v1345, %v2759
    %v2795 = vadd.f32 %v1223, %v2637
    %v2796 = vadd.f32 %v1225, %v2639
    %v2797 = vadd.f32 %v1286, %v2700
    %v2798 = vadd.f32 %v1288, %v2702
    %v2799 = vadd.f32 %v1349, %v2763
    %v2800 = vadd.f32 %v1351, %v2765
    %v2801 = vadd.f32 %v1227, %v2641
    %v2802 = vadd.f32 %v1229, %v2643
    %v2803 = vadd.f32 %v1290, %v2704
    %v2804 = vadd.f32 %v1292, %v2706
    %v2805 = vadd.f32 %v1353, %v2767
    %v2806 = vadd.f32 %v1355, %v2769
    %2807 = vmatprep.subr.bf16.mxu0 %v2274
    %2808 = vmatpush1.bf16.msra.mxu0 %v2273
    %2809 = vmatprep.subr.bf16.mxu0 %v2280
    %2810 = vmatpush1.bf16.msra.mxu0 %v2279
    %2811 = vmatprep.subr.bf16.mxu0 %v2286
    %2812 = vmatpush1.bf16.msra.mxu0 %v2285
    %2813 = vmatprep.subr.bf16.mxu0 %v2292
    %2814 = vmatpush1.bf16.msra.mxu0 %v2291
    %2815 = vmatprep.subr.bf16.mxu0 %v2298
    %2816 = vmatpush1.bf16.msra.mxu0 %v2297
    %2817 = vmatprep.subr.bf16.mxu0 %v2343
    %2818 = vmatpush1.bf16.msra.mxu0 %v2340
    %2819 = vmatprep.subr.bf16.mxu0 0
    %2820 = vmatpush1.bf16.msra.mxu0 0
    %2821 = vmatprep.subr.bf16.mxu0 0
    %2822 = vmatpush1.bf16.msra.mxu0 0
    %2823 = vmatprep.subr.bf16.mxu0 0
    %2824 = vmatpush1.bf16.msra.mxu0 0
    %2825 = vmatprep.subr.bf16.mxu0 0
    %2826 = vmatpush1.bf16.msra.mxu0 0
    %2827 = vmatprep.subr.bf16.mxu0 0
    %2828 = vmatpush1.bf16.msra.mxu0 0
    %2829 = vmatprep.subr.bf16.mxu0 0
    %2830 = vmatpush1.bf16.msra.mxu0 0
    %2831 = vmatprep.subr.bf16.mxu0 0
    %2832 = vmatpush1.bf16.msra.mxu0 0
    %2833 = vmatprep.subr.bf16.mxu0 0
    %2834 = vmatpush1.bf16.msra.mxu0 0
    %2835 = vmatprep.subr.bf16.mxu0 0
    %2836 = vmatpush1.bf16.msra.mxu0 0
    %2837 = vmatprep.subr.bf16.mxu0 0
    %2838 = vmatpush1.bf16.msra.mxu0 0
    %2839 = vmatprep.mubr.bf16.mxu0 0
    %2840 = vmatmul.mubr.bf16.gmra.mrb[0].mxu0 %v1754
    %v2841 = vpop.f32.mrb[0].mxu0
    %v2842 = vadd.f32 0.0, %v2841
    %v2843 = vpop.f32.mrb[0].mxu0
    %v2844 = vadd.f32 0.0, %v2843
    %v2845 = vpop.f32.mrb[0].mxu0
    %v2846 = vadd.f32 0.0, %v2845
    %v2847 = vpop.f32.mrb[0].mxu0
    %v2848 = vadd.f32 0.0, %v2847
    %2849 = vmatprep.mubr.bf16.mxu0 0
    %2850 = vmatmul.mubr.bf16.gmra.mrb[0].mxu0 %v1757
    %v2851 = vpop.f32.mrb[0].mxu0
    %v2852 = vadd.f32 0.0, %v2851
    %v2853 = vpop.f32.mrb[0].mxu0
    %v2854 = vadd.f32 0.0, %v2853
    %v2855 = vpop.f32.mrb[0].mxu0
    %v2856 = vadd.f32 0.0, %v2855
    %v2857 = vpop.f32.mrb[0].mxu0
    %v2858 = vadd.f32 0.0, %v2857
    %2859 = vmatprep.mubr.bf16.mxu0 0
    %2860 = vmatmul.mubr.bf16.gmra.mrb[0].mxu0 %v1760
    %v2861 = vpop.f32.mrb[0].mxu0
    %v2862 = vadd.f32 0.0, %v2861
    %v2863 = vpop.f32.mrb[0].mxu0
    %v2864 = vadd.f32 0.0, %v2863
    %v2865 = vpop.f32.mrb[0].mxu0
    %v2866 = vadd.f32 0.0, %v2865
    %v2867 = vpop.f32.mrb[0].mxu0
    %v2868 = vadd.f32 0.0, %v2867
    %2869 = vdwg.mxu0
    %2870 = vmatprep.subr.bf16.mxu0 %v2276
    %2871 = vmatpush1.bf16.msra.mxu0 %v2275
    %2872 = vmatprep.subr.bf16.mxu0 %v2282
    %2873 = vmatpush1.bf16.msra.mxu0 %v2281
    %2874 = vmatprep.subr.bf16.mxu0 %v2288
    %2875 = vmatpush1.bf16.msra.mxu0 %v2287
    %2876 = vmatprep.subr.bf16.mxu0 %v2294
    %2877 = vmatpush1.bf16.msra.mxu0 %v2293
    %2878 = vmatprep.subr.bf16.mxu0 %v2300
    %2879 = vmatpush1.bf16.msra.mxu0 %v2299
    %2880 = vmatprep.subr.bf16.mxu0 %v2349
    %2881 = vmatpush1.bf16.msra.mxu0 %v2346
    %2882 = vmatprep.subr.bf16.mxu0 0
    %2883 = vmatpush1.bf16.msra.mxu0 0
    %2884 = vmatprep.subr.bf16.mxu0 0
    %2885 = vmatpush1.bf16.msra.mxu0 0
    %2886 = vmatprep.subr.bf16.mxu0 0
    %2887 = vmatpush1.bf16.msra.mxu0 0
    %2888 = vmatprep.subr.bf16.mxu0 0
    %2889 = vmatpush1.bf16.msra.mxu0 0
    %2890 = vmatprep.subr.bf16.mxu0 0
    %2891 = vmatpush1.bf16.msra.mxu0 0
    %2892 = vmatprep.subr.bf16.mxu0 0
    %2893 = vmatpush1.bf16.msra.mxu0 0
    %2894 = vmatprep.subr.bf16.mxu0 0
    %2895 = vmatpush1.bf16.msra.mxu0 0
    %2896 = vmatprep.subr.bf16.mxu0 0
    %2897 = vmatpush1.bf16.msra.mxu0 0
    %2898 = vmatprep.subr.bf16.mxu0 0
    %2899 = vmatpush1.bf16.msra.mxu0 0
    %2900 = vmatprep.subr.bf16.mxu0 0
    %2901 = vmatpush1.bf16.msra.mxu0 0
    %2902 = vmatprep.mubr.bf16.mxu0 0
    %2903 = vmatmul.mubr.bf16.gmra.mrb[0].mxu0 %v1754
    %v2904 = vpop.f32.mrb[0].mxu0
    %v2905 = vadd.f32 0.0, %v2904
    %v2906 = vpop.f32.mrb[0].mxu0
    %v2907 = vadd.f32 0.0, %v2906
    %v2908 = vpop.f32.mrb[0].mxu0
    %v2909 = vadd.f32 0.0, %v2908
    %v2910 = vpop.f32.mrb[0].mxu0
    %v2911 = vadd.f32 0.0, %v2910
    %2912 = vmatprep.mubr.bf16.mxu0 0
    %2913 = vmatmul.mubr.bf16.gmra.mrb[0].mxu0 %v1757
    %v2914 = vpop.f32.mrb[0].mxu0
    %v2915 = vadd.f32 0.0, %v2914
    %v2916 = vpop.f32.mrb[0].mxu0
    %v2917 = vadd.f32 0.0, %v2916
    %v2918 = vpop.f32.mrb[0].mxu0
    %v2919 = vadd.f32 0.0, %v2918
    %v2920 = vpop.f32.mrb[0].mxu0
    %v2921 = vadd.f32 0.0, %v2920
    %2922 = vmatprep.mubr.bf16.mxu0 0
    %2923 = vmatmul.mubr.bf16.gmra.mrb[0].mxu0 %v1760
    %v2924 = vpop.f32.mrb[0].mxu0
    %v2925 = vadd.f32 0.0, %v2924
    %v2926 = vpop.f32.mrb[0].mxu0
    %v2927 = vadd.f32 0.0, %v2926
    %v2928 = vpop.f32.mrb[0].mxu0
    %v2929 = vadd.f32 0.0, %v2928
    %v2930 = vpop.f32.mrb[0].mxu0
    %v2931 = vadd.f32 0.0, %v2930
    %2932 = vdwg.mxu0
    %2933 = vmatprep.subr.bf16.mxu0 %v2278
    %2934 = vmatpush1.bf16.msra.mxu0 %v2277
    %2935 = vmatprep.subr.bf16.mxu0 %v2284
    %2936 = vmatpush1.bf16.msra.mxu0 %v2283
    %2937 = vmatprep.subr.bf16.mxu0 %v2290
    %2938 = vmatpush1.bf16.msra.mxu0 %v2289
    %2939 = vmatprep.subr.bf16.mxu0 %v2296
    %2940 = vmatpush1.bf16.msra.mxu0 %v2295
    %2941 = vmatprep.subr.bf16.mxu0 %v2302
    %2942 = vmatpush1.bf16.msra.mxu0 %v2301
    %2943 = vmatprep.subr.bf16.mxu0 %v2355
    %2944 = vmatpush1.bf16.msra.mxu0 %v2352
    %2945 = vmatprep.subr.bf16.mxu0 0
    %2946 = vmatpush1.bf16.msra.mxu0 0
    %2947 = vmatprep.subr.bf16.mxu0 0
    %2948 = vmatpush1.bf16.msra.mxu0 0
    %2949 = vmatprep.subr.bf16.mxu0 0
    %2950 = vmatpush1.bf16.msra.mxu0 0
    %2951 = vmatprep.subr.bf16.mxu0 0
    %2952 = vmatpush1.bf16.msra.mxu0 0
    %2953 = vmatprep.subr.bf16.mxu0 0
    %2954 = vmatpush1.bf16.msra.mxu0 0
    %2955 = vmatprep.subr.bf16.mxu0 0
    %2956 = vmatpush1.bf16.msra.mxu0 0
    %2957 = vmatprep.subr.bf16.mxu0 0
    %2958 = vmatpush1.bf16.msra.mxu0 0
    %2959 = vmatprep.subr.bf16.mxu0 0
    %2960 = vmatpush1.bf16.msra.mxu0 0
    %2961 = vmatprep.subr.bf16.mxu0 0
    %2962 = vmatpush1.bf16.msra.mxu0 0
    %2963 = vmatprep.subr.bf16.mxu0 0
    %2964 = vmatpush1.bf16.msra.mxu0 0
    %2965 = vmatprep.mubr.bf16.mxu0 0
    %2966 = vmatmul.mubr.bf16.gmra.mrb[0].mxu0 %v1754
    %v2967 = vpop.f32.mrb[0].mxu0
    %v2968 = vadd.f32 0.0, %v2967
    %v2969 = vpop.f32.mrb[0].mxu0
    %v2970 = vadd.f32 0.0, %v2969
    %v2971 = vpop.f32.mrb[0].mxu0
    %v2972 = vadd.f32 0.0, %v2971
    %v2973 = vpop.f32.mrb[0].mxu0
    %v2974 = vadd.f32 0.0, %v2973
    %2975 = vmatprep.mubr.bf16.mxu0 0
    %2976 = vmatmul.mubr.bf16.gmra.mrb[0].mxu0 %v1757
    %v2977 = vpop.f32.mrb[0].mxu0
    %v2978 = vadd.f32 0.0, %v2977
    %v2979 = vpop.f32.mrb[0].mxu0
    %v2980 = vadd.f32 0.0, %v2979
    %v2981 = vpop.f32.mrb[0].mxu0
    %v2982 = vadd.f32 0.0, %v2981
    %v2983 = vpop.f32.mrb[0].mxu0
    %v2984 = vadd.f32 0.0, %v2983
    %2985 = vmatprep.mubr.bf16.mxu0 0
    %2986 = vmatmul.mubr.bf16.gmra.mrb[0].mxu0 %v1760
    %v2987 = vpop.f32.mrb[0].mxu0
    %v2988 = vadd.f32 0.0, %v2987
    %v2989 = vpop.f32.mrb[0].mxu0
    %v2990 = vadd.f32 0.0, %v2989
    %v2991 = vpop.f32.mrb[0].mxu0
    %v2992 = vadd.f32 0.0, %v2991
    %v2993 = vpop.f32.mrb[0].mxu0
    %v2994 = vadd.f32 0.0, %v2993
    %2995 = vdwg.mxu0
    %v2996 = vadd.f32 %v1590, %v2842
    %v2997 = vadd.f32 %v1592, %v2844
    %v2998 = vadd.f32 %v1653, %v2905
    %v2999 = vadd.f32 %v1655, %v2907
    %v3000 = vadd.f32 %v1716, %v2968
    %v3001 = vadd.f32 %v1718, %v2970
    %v3002 = vadd.f32 %v1594, %v2846
    %v3003 = vadd.f32 %v1596, %v2848
    %v3004 = vadd.f32 %v1657, %v2909
    %v3005 = vadd.f32 %v1659, %v2911
    %v3006 = vadd.f32 %v1720, %v2972
    %v3007 = vadd.f32 %v1722, %v2974
    %v3008 = vadd.f32 %v1600, %v2852
    %v3009 = vadd.f32 %v1602, %v2854
    %v3010 = vadd.f32 %v1663, %v2915
    %v3011 = vadd.f32 %v1665, %v2917
    %v3012 = vadd.f32 %v1726, %v2978
    %v3013 = vadd.f32 %v1728, %v2980
    %v3014 = vadd.f32 %v1604, %v2856
    %v3015 = vadd.f32 %v1606, %v2858
    %v3016 = vadd.f32 %v1667, %v2919
    %v3017 = vadd.f32 %v1669, %v2921
    %v3018 = vadd.f32 %v1730, %v2982
    %v3019 = vadd.f32 %v1732, %v2984
    %v3020 = vadd.f32 %v1610, %v2862
    %v3021 = vadd.f32 %v1612, %v2864
    %v3022 = vadd.f32 %v1673, %v2925
    %v3023 = vadd.f32 %v1675, %v2927
    %v3024 = vadd.f32 %v1736, %v2988
    %v3025 = vadd.f32 %v1738, %v2990
    %v3026 = vadd.f32 %v1614, %v2866
    %v3027 = vadd.f32 %v1616, %v2868
    %v3028 = vadd.f32 %v1677, %v2929
    %v3029 = vadd.f32 %v1679, %v2931
    %v3030 = vadd.f32 %v1740, %v2992
    %v3031 = vadd.f32 %v1742, %v2994
    %v3032 = vld [vmem:[%s0 + $0x40] sm:$0xff]
    %v3033 = vld [vmem:[%s0 + $0x48] sm:$0xff]
    %v3034 = vld [vmem:[%s0 + $0x50] sm:$0xff]
    %v3035 = vld [vmem:[%s0 + $0x58] sm:$0xff]
    %v3036 = vld [vmem:[%s0 + $0x60] sm:$0xff]
    %v3037 = vld [vmem:[%s0 + $0x68] sm:$0xff]
    %v3038 = vpack.c.bf16 %v3033, %v3032
    %v3039 = vpack.c.bf16 %v3035, %v3034
    %v3040 = vpack.c.bf16 %v3037, %v3036
    %v3042 = vsel %vm371, %v3038, 0
    %v3045 = vsel %vm371, %v3039, 0
    %v3048 = vsel %vm371, %v3040, 0
    %3050 = vmatprep.subr.bf16.mxu0 %v2274
    %3051 = vmatpush1.bf16.msra.mxu0 %v2273
    %3052 = vmatprep.subr.bf16.mxu0 %v2280
    %3053 = vmatpush1.bf16.msra.mxu0 %v2279
    %3054 = vmatprep.subr.bf16.mxu0 %v2286
    %3055 = vmatpush1.bf16.msra.mxu0 %v2285
    %3056 = vmatprep.subr.bf16.mxu0 %v2292
    %3057 = vmatpush1.bf16.msra.mxu0 %v2291
    %3058 = vmatprep.subr.bf16.mxu0 %v2298
    %3059 = vmatpush1.bf16.msra.mxu0 %v2297
    %3060 = vmatprep.subr.bf16.mxu0 %v2343
    %3061 = vmatpush1.bf16.msra.mxu0 %v2340
    %3062 = vmatprep.subr.bf16.mxu0 0
    %3063 = vmatpush1.bf16.msra.mxu0 0
    %3064 = vmatprep.subr.bf16.mxu0 0
    %3065 = vmatpush1.bf16.msra.mxu0 0
    %3066 = vmatprep.subr.bf16.mxu0 0
    %3067 = vmatpush1.bf16.msra.mxu0 0
    %3068 = vmatprep.subr.bf16.mxu0 0
    %3069 = vmatpush1.bf16.msra.mxu0 0
    %3070 = vmatprep.subr.bf16.mxu0 0
    %3071 = vmatpush1.bf16.msra.mxu0 0
    %3072 = vmatprep.subr.bf16.mxu0 0
    %3073 = vmatpush1.bf16.msra.mxu0 0
    %3074 = vmatprep.subr.bf16.mxu0 0
    %3075 = vmatpush1.bf16.msra.mxu0 0
    %3076 = vmatprep.subr.bf16.mxu0 0
    %3077 = vmatpush1.bf16.msra.mxu0 0
    %3078 = vmatprep.subr.bf16.mxu0 0
    %3079 = vmatpush1.bf16.msra.mxu0 0
    %3080 = vmatprep.subr.bf16.mxu0 0
    %3081 = vmatpush1.bf16.msra.mxu0 0
    %3082 = vmatprep.mubr.bf16.mxu0 0
    %3083 = vmatmul.mubr.bf16.gmra.mrb[0].mxu0 %v3042
    %v3084 = vpop.f32.mrb[0].mxu0
    %v3085 = vadd.f32 0.0, %v3084
    %v3086 = vpop.f32.mrb[0].mxu0
    %v3087 = vadd.f32 0.0, %v3086
    %v3088 = vpop.f32.mrb[0].mxu0
    %v3089 = vadd.f32 0.0, %v3088
    %v3090 = vpop.f32.mrb[0].mxu0
    %v3091 = vadd.f32 0.0, %v3090
    %3092 = vmatprep.mubr.bf16.mxu0 0
    %3093 = vmatmul.mubr.bf16.gmra.mrb[0].mxu0 %v3045
    %v3094 = vpop.f32.mrb[0].mxu0
    %v3095 = vadd.f32 0.0, %v3094
    %v3096 = vpop.f32.mrb[0].mxu0
    %v3097 = vadd.f32 0.0, %v3096
    %v3098 = vpop.f32.mrb[0].mxu0
    %v3099 = vadd.f32 0.0, %v3098
    %v3100 = vpop.f32.mrb[0].mxu0
    %v3101 = vadd.f32 0.0, %v3100
    %3102 = vmatprep.mubr.bf16.mxu0 0
    %3103 = vmatmul.mubr.bf16.gmra.mrb[0].mxu0 %v3048
    %v3104 = vpop.f32.mrb[0].mxu0
    %v3105 = vadd.f32 0.0, %v3104
    %v3106 = vpop.f32.mrb[0].mxu0
    %v3107 = vadd.f32 0.0, %v3106
    %v3108 = vpop.f32.mrb[0].mxu0
    %v3109 = vadd.f32 0.0, %v3108
    %v3110 = vpop.f32.mrb[0].mxu0
    %v3111 = vadd.f32 0.0, %v3110
    %3112 = vdwg.mxu0
    %3113 = vmatprep.subr.bf16.mxu0 %v2276
    %3114 = vmatpush1.bf16.msra.mxu0 %v2275
    %3115 = vmatprep.subr.bf16.mxu0 %v2282
    %3116 = vmatpush1.bf16.msra.mxu0 %v2281
    %3117 = vmatprep.subr.bf16.mxu0 %v2288
    %3118 = vmatpush1.bf16.msra.mxu0 %v2287
    %3119 = vmatprep.subr.bf16.mxu0 %v2294
    %3120 = vmatpush1.bf16.msra.mxu0 %v2293
    %3121 = vmatprep.subr.bf16.mxu0 %v2300
    %3122 = vmatpush1.bf16.msra.mxu0 %v2299
    %3123 = vmatprep.subr.bf16.mxu0 %v2349
    %3124 = vmatpush1.bf16.msra.mxu0 %v2346
    %3125 = vmatprep.subr.bf16.mxu0 0
    %3126 = vmatpush1.bf16.msra.mxu0 0
    %3127 = vmatprep.subr.bf16.mxu0 0
    %3128 = vmatpush1.bf16.msra.mxu0 0
    %3129 = vmatprep.subr.bf16.mxu0 0
    %3130 = vmatpush1.bf16.msra.mxu0 0
    %3131 = vmatprep.subr.bf16.mxu0 0
    %3132 = vmatpush1.bf16.msra.mxu0 0
    %3133 = vmatprep.subr.bf16.mxu0 0
    %3134 = vmatpush1.bf16.msra.mxu0 0
    %3135 = vmatprep.subr.bf16.mxu0 0
    %3136 = vmatpush1.bf16.msra.mxu0 0
    %3137 = vmatprep.subr.bf16.mxu0 0
    %3138 = vmatpush1.bf16.msra.mxu0 0
    %3139 = vmatprep.subr.bf16.mxu0 0
    %3140 = vmatpush1.bf16.msra.mxu0 0
    %3141 = vmatprep.subr.bf16.mxu0 0
    %3142 = vmatpush1.bf16.msra.mxu0 0
    %3143 = vmatprep.subr.bf16.mxu0 0
    %3144 = vmatpush1.bf16.msra.mxu0 0
    %3145 = vmatprep.mubr.bf16.mxu0 0
    %3146 = vmatmul.mubr.bf16.gmra.mrb[0].mxu0 %v3042
    %v3147 = vpop.f32.mrb[0].mxu0
    %v3148 = vadd.f32 0.0, %v3147
    %v3149 = vpop.f32.mrb[0].mxu0
    %v3150 = vadd.f32 0.0, %v3149
    %v3151 = vpop.f32.mrb[0].mxu0
    %v3152 = vadd.f32 0.0, %v3151
    %v3153 = vpop.f32.mrb[0].mxu0
    %v3154 = vadd.f32 0.0, %v3153
    %3155 = vmatprep.mubr.bf16.mxu0 0
    %3156 = vmatmul.mubr.bf16.gmra.mrb[0].mxu0 %v3045
    %v3157 = vpop.f32.mrb[0].mxu0
    %v3158 = vadd.f32 0.0, %v3157
    %v3159 = vpop.f32.mrb[0].mxu0
    %v3160 = vadd.f32 0.0, %v3159
    %v3161 = vpop.f32.mrb[0].mxu0
    %v3162 = vadd.f32 0.0, %v3161
    %v3163 = vpop.f32.mrb[0].mxu0
    %v3164 = vadd.f32 0.0, %v3163
    %3165 = vmatprep.mubr.bf16.mxu0 0
    %3166 = vmatmul.mubr.bf16.gmra.mrb[0].mxu0 %v3048
    %v3167 = vpop.f32.mrb[0].mxu0
    %v3168 = vadd.f32 0.0, %v3167
    %v3169 = vpop.f32.mrb[0].mxu0
    %v3170 = vadd.f32 0.0, %v3169
    %v3171 = vpop.f32.mrb[0].mxu0
    %v3172 = vadd.f32 0.0, %v3171
    %v3173 = vpop.f32.mrb[0].mxu0
    %v3174 = vadd.f32 0.0, %v3173
    %3175 = vdwg.mxu0
    %3176 = vmatprep.subr.bf16.mxu0 %v2278
    %3177 = vmatpush1.bf16.msra.mxu0 %v2277
    %3178 = vmatprep.subr.bf16.mxu0 %v2284
    %3179 = vmatpush1.bf16.msra.mxu0 %v2283
    %3180 = vmatprep.subr.bf16.mxu0 %v2290
    %3181 = vmatpush1.bf16.msra.mxu0 %v2289
    %3182 = vmatprep.subr.bf16.mxu0 %v2296
    %3183 = vmatpush1.bf16.msra.mxu0 %v2295
    %3184 = vmatprep.subr.bf16.mxu0 %v2302
    %3185 = vmatpush1.bf16.msra.mxu0 %v2301
    %3186 = vmatprep.subr.bf16.mxu0 %v2355
    %3187 = vmatpush1.bf16.msra.mxu0 %v2352
    %3188 = vmatprep.subr.bf16.mxu0 0
    %3189 = vmatpush1.bf16.msra.mxu0 0
    %3190 = vmatprep.subr.bf16.mxu0 0
    %3191 = vmatpush1.bf16.msra.mxu0 0
    %3192 = vmatprep.subr.bf16.mxu0 0
    %3193 = vmatpush1.bf16.msra.mxu0 0
    %3194 = vmatprep.subr.bf16.mxu0 0
    %3195 = vmatpush1.bf16.msra.mxu0 0
    %3196 = vmatprep.subr.bf16.mxu0 0
    %3197 = vmatpush1.bf16.msra.mxu0 0
    %3198 = vmatprep.subr.bf16.mxu0 0
    %3199 = vmatpush1.bf16.msra.mxu0 0
    %3200 = vmatprep.subr.bf16.mxu0 0
    %3201 = vmatpush1.bf16.msra.mxu0 0
    %3202 = vmatprep.subr.bf16.mxu0 0
    %3203 = vmatpush1.bf16.msra.mxu0 0
    %3204 = vmatprep.subr.bf16.mxu0 0
    %3205 = vmatpush1.bf16.msra.mxu0 0
    %3206 = vmatprep.subr.bf16.mxu0 0
    %3207 = vmatpush1.bf16.msra.mxu0 0
    %3208 = vmatprep.mubr.bf16.mxu0 0
    %3209 = vmatmul.mubr.bf16.gmra.mrb[0].mxu0 %v3042
    %v3210 = vpop.f32.mrb[0].mxu0
    %v3211 = vadd.f32 0.0, %v3210
    %v3212 = vpop.f32.mrb[0].mxu0
    %v3213 = vadd.f32 0.0, %v3212
    %v3214 = vpop.f32.mrb[0].mxu0
    %v3215 = vadd.f32 0.0, %v3214
    %v3216 = vpop.f32.mrb[0].mxu0
    %v3217 = vadd.f32 0.0, %v3216
    %3218 = vmatprep.mubr.bf16.mxu0 0
    %3219 = vmatmul.mubr.bf16.gmra.mrb[0].mxu0 %v3045
    %v3220 = vpop.f32.mrb[0].mxu0
    %v3221 = vadd.f32 0.0, %v3220
    %v3222 = vpop.f32.mrb[0].mxu0
    %v3223 = vadd.f32 0.0, %v3222
    %v3224 = vpop.f32.mrb[0].mxu0
    %v3225 = vadd.f32 0.0, %v3224
    %v3226 = vpop.f32.mrb[0].mxu0
    %v3227 = vadd.f32 0.0, %v3226
    %3228 = vmatprep.mubr.bf16.mxu0 0
    %3229 = vmatmul.mubr.bf16.gmra.mrb[0].mxu0 %v3048
    %v3230 = vpop.f32.mrb[0].mxu0
    %v3231 = vadd.f32 0.0, %v3230
    %v3232 = vpop.f32.mrb[0].mxu0
    %v3233 = vadd.f32 0.0, %v3232
    %v3234 = vpop.f32.mrb[0].mxu0
    %v3235 = vadd.f32 0.0, %v3234
    %v3236 = vpop.f32.mrb[0].mxu0
    %v3237 = vadd.f32 0.0, %v3236
    %3238 = vdwg.mxu0
    %v3239 = vadd.f32 %v1986, %v3085
    %v3240 = vadd.f32 %v1988, %v3087
    %v3241 = vadd.f32 %v2049, %v3148
    %v3242 = vadd.f32 %v2051, %v3150
    %v3243 = vadd.f32 %v2112, %v3211
    %v3244 = vadd.f32 %v2114, %v3213
    %v3245 = vadd.f32 %v1990, %v3089
    %v3246 = vadd.f32 %v1992, %v3091
    %v3247 = vadd.f32 %v2053, %v3152
    %v3248 = vadd.f32 %v2055, %v3154
    %v3249 = vadd.f32 %v2116, %v3215
    %v3250 = vadd.f32 %v2118, %v3217
    %v3251 = vadd.f32 %v1996, %v3095
    %v3252 = vadd.f32 %v1998, %v3097
    %v3253 = vadd.f32 %v2059, %v3158
    %v3254 = vadd.f32 %v2061, %v3160
    %v3255 = vadd.f32 %v2122, %v3221
    %v3256 = vadd.f32 %v2124, %v3223
    %v3257 = vadd.f32 %v2000, %v3099
    %v3258 = vadd.f32 %v2002, %v3101
    %v3259 = vadd.f32 %v2063, %v3162
    %v3260 = vadd.f32 %v2065, %v3164
    %v3261 = vadd.f32 %v2126, %v3225
    %v3262 = vadd.f32 %v2128, %v3227
    %v3263 = vadd.f32 %v2006, %v3105
    %v3264 = vadd.f32 %v2008, %v3107
    %v3265 = vadd.f32 %v2069, %v3168
    %v3266 = vadd.f32 %v2071, %v3170
    %v3267 = vadd.f32 %v2132, %v3231
    %v3268 = vadd.f32 %v2134, %v3233
    %v3269 = vadd.f32 %v2010, %v3109
    %v3270 = vadd.f32 %v2012, %v3111
    %v3271 = vadd.f32 %v2073, %v3172
    %v3272 = vadd.f32 %v2075, %v3174
    %v3273 = vadd.f32 %v2136, %v3235
    %v3274 = vadd.f32 %v2138, %v3237
    %s3275 = scalar_lea.vmem [#allocation2], 792
    %v3276 = vld [vmem:[%s3275] sm:$0xff]
    %v3277 = vld [vmem:[%s3275 + $0x8] sm:$0xff]
    %v3278 = vld [vmem:[%s3275 + $0x10] sm:$0xff]
    %v3279 = vld [vmem:[%s3275 + $0x18] sm:$0xff]
    %v3280 = vld [vmem:[%s3275 + $0x20] sm:$0xff]
    %v3281 = vld [vmem:[%s3275 + $0x28] sm:$0xff]
    %v3282 = vld [vmem:[%s3275 + $0x30] sm:$0xff]
    %v3283 = vld [vmem:[%s3275 + $0x38] sm:$0xff]
    %v3284 = vld [vmem:[%s3275 + $0x40] sm:$0xff]
    %v3285 = vld [vmem:[%s3275 + $0x48] sm:$0xff]
    %v3286 = vld [vmem:[%s3275 + $0x50] sm:$0xff]
    %v3287 = vld [vmem:[%s3275 + $0x58] sm:$0xff]
    %v3288 = vld [vmem:[%s3275 + $0x60] sm:$0xff]
    %v3289 = vld [vmem:[%s3275 + $0x68] sm:$0xff]
    %v3290 = vld [vmem:[%s3275 + $0x70] sm:$0xff]
    %v3291 = vld [vmem:[%s3275 + $0x78] sm:$0xff]
    %v3292 = vld [vmem:[%s3275 + $0x80] sm:$0xff]
    %v3293 = vld [vmem:[%s3275 + $0x88] sm:$0xff]
    %v3294 = vld [vmem:[%s3275 + $0x90] sm:$0xff]
    %v3295 = vld [vmem:[%s3275 + $0x98] sm:$0xff]
    %v3296 = vld [vmem:[%s3275 + $0xa0] sm:$0xff]
    %v3297 = vld [vmem:[%s3275 + $0xa8] sm:$0xff]
    %v3298 = vld [vmem:[%s3275 + $0xb0] sm:$0xff]
    %v3299 = vld [vmem:[%s3275 + $0xb8] sm:$0xff]
    %v3300 = vld [vmem:[%s3275 + $0xc0] sm:$0xff]
    %v3301 = vld [vmem:[%s3275 + $0xc8] sm:$0xff]
    %v3302 = vld [vmem:[%s3275 + $0xd0] sm:$0xff]
    %v3303 = vld [vmem:[%s3275 + $0xd8] sm:$0xff]
    %v3304 = vld [vmem:[%s3275 + $0xe0] sm:$0xff]
    %v3305 = vld [vmem:[%s3275 + $0xe8] sm:$0xff]
    %v3306 = vld [vmem:[%s3275 + $0xf0] sm:$0x33]
    %v3307 = vld [vmem:[%s3275 + $0xf8] sm:$0x33]
    %v3308 = vld [vmem:[%s3275 + $0x100] sm:$0x33]
    %v3342 = vunpack.c.l.b16 %v3276
    %v3343 = vunpack.c.h.b16 %v3276
    %v3344 = vunpack.c.l.b16 %v3277
    %v3345 = vunpack.c.h.b16 %v3277
    %v3346 = vunpack.c.l.b16 %v3278
    %v3347 = vunpack.c.h.b16 %v3278
    %v3348 = vunpack.c.l.b16 %v3279
    %v3349 = vunpack.c.h.b16 %v3279
    %v3350 = vunpack.c.l.b16 %v3280
    %v3351 = vunpack.c.h.b16 %v3280
    %v3352 = vunpack.c.l.b16 %v3281
    %v3353 = vunpack.c.h.b16 %v3281
    %v3354 = vunpack.c.l.b16 %v3282
    %v3355 = vunpack.c.h.b16 %v3282
    %v3356 = vunpack.c.l.b16 %v3283
    %v3357 = vunpack.c.h.b16 %v3283
    %v3358 = vunpack.c.l.b16 %v3284
    %v3359 = vunpack.c.h.b16 %v3284
    %v3360 = vunpack.c.l.b16 %v3285
    %v3361 = vunpack.c.h.b16 %v3285
    %v3362 = vunpack.c.l.b16 %v3286
    %v3363 = vunpack.c.h.b16 %v3286
    %v3364 = vunpack.c.l.b16 %v3287
    %v3365 = vunpack.c.h.b16 %v3287
    %v3366 = vunpack.c.l.b16 %v3288
    %v3367 = vunpack.c.h.b16 %v3288
    %v3368 = vunpack.c.l.b16 %v3289
    %v3369 = vunpack.c.h.b16 %v3289
    %v3370 = vunpack.c.l.b16 %v3290
    %v3371 = vunpack.c.h.b16 %v3290
    %v3372 = vunpack.c.l.b16 %v3291
    %v3373 = vunpack.c.h.b16 %v3291
    %v3374 = vunpack.c.l.b16 %v3292
    %v3375 = vunpack.c.h.b16 %v3292
    %v3376 = vunpack.c.l.b16 %v3293
    %v3377 = vunpack.c.h.b16 %v3293
    %v3378 = vunpack.c.l.b16 %v3294
    %v3379 = vunpack.c.h.b16 %v3294
    %v3380 = vunpack.c.l.b16 %v3295
    %v3381 = vunpack.c.h.b16 %v3295
    %v3382 = vunpack.c.l.b16 %v3296
    %v3383 = vunpack.c.h.b16 %v3296
    %v3384 = vunpack.c.l.b16 %v3297
    %v3385 = vunpack.c.h.b16 %v3297
    %v3386 = vunpack.c.l.b16 %v3298
    %v3387 = vunpack.c.h.b16 %v3298
    %v3388 = vunpack.c.l.b16 %v3299
    %v3389 = vunpack.c.h.b16 %v3299
    %v3390 = vunpack.c.l.b16 %v3300
    %v3391 = vunpack.c.h.b16 %v3300
    %v3392 = vunpack.c.l.b16 %v3301
    %v3393 = vunpack.c.h.b16 %v3301
    %v3394 = vunpack.c.l.b16 %v3302
    %v3395 = vunpack.c.h.b16 %v3302
    %v3396 = vunpack.c.l.b16 %v3303
    %v3397 = vunpack.c.h.b16 %v3303
    %v3398 = vunpack.c.l.b16 %v3304
    %v3399 = vunpack.c.h.b16 %v3304
    %v3400 = vunpack.c.l.b16 %v3305
    %v3401 = vunpack.c.h.b16 %v3305
    %v3402 = vunpack.c.l.b16 %v3306
    %v3403 = vunpack.c.h.b16 %v3306
    %v3404 = vunpack.c.l.b16 %v3307
    %v3405 = vunpack.c.h.b16 %v3307
    %v3406 = vunpack.c.l.b16 %v3308
    %v3407 = vunpack.c.h.b16 %v3308
    %v3408 = vpack.c.b16 %v3348, %v3342
    %v3409 = vpack.c.b16 %v3349, %v3343
    %v3410 = vpack.c.b16 %v3350, %v3344
    %v3411 = vpack.c.b16 %v3351, %v3345
    %v3412 = vpack.c.b16 %v3352, %v3346
    %v3413 = vpack.c.b16 %v3353, %v3347
    %v3414 = vpack.c.b16 %v3360, %v3354
    %v3415 = vpack.c.b16 %v3361, %v3355
    %v3416 = vpack.c.b16 %v3362, %v3356
    %v3417 = vpack.c.b16 %v3363, %v3357
    %v3418 = vpack.c.b16 %v3364, %v3358
    %v3419 = vpack.c.b16 %v3365, %v3359
    %v3420 = vpack.c.b16 %v3372, %v3366
    %v3421 = vpack.c.b16 %v3373, %v3367
    %v3422 = vpack.c.b16 %v3374, %v3368
    %v3423 = vpack.c.b16 %v3375, %v3369
    %v3424 = vpack.c.b16 %v3376, %v3370
    %v3425 = vpack.c.b16 %v3377, %v3371
    %v3426 = vpack.c.b16 %v3384, %v3378
    %v3427 = vpack.c.b16 %v3385, %v3379
    %v3428 = vpack.c.b16 %v3386, %v3380
    %v3429 = vpack.c.b16 %v3387, %v3381
    %v3430 = vpack.c.b16 %v3388, %v3382
    %v3431 = vpack.c.b16 %v3389, %v3383
    %v3432 = vpack.c.b16 %v3396, %v3390
    %v3433 = vpack.c.b16 %v3397, %v3391
    %v3434 = vpack.c.b16 %v3398, %v3392
    %v3435 = vpack.c.b16 %v3399, %v3393
    %v3436 = vpack.c.b16 %v3400, %v3394
    %v3437 = vpack.c.b16 %v3401, %v3395
    %v3438 = vpack.c.b16 %v3402, %v3402
    %v3439 = vpack.c.b16 %v3403, %v3403
    %v3440 = vpack.c.b16 %v3404, %v3404
    %v3441 = vpack.c.b16 %v3405, %v3405
    %v3442 = vpack.c.b16 %v3406, %v3406
    %v3443 = vpack.c.b16 %v3407, %v3407
    %v3475 = vsel %vm381, %v3438, 0
    %v3478 = vsel %vm381, %v3439, 0
    %v3481 = vsel %vm381, %v3440, 0
    %v3484 = vsel %vm381, %v3441, 0
    %v3487 = vsel %vm381, %v3442, 0
    %v3490 = vsel %vm381, %v3443, 0
    %3492 = vmatprep.subr.bf16.mxu0 %v3409
    %3493 = vmatpush1.bf16.msra.mxu0 %v3408
    %3494 = vmatprep.subr.bf16.mxu0 %v3415
    %3495 = vmatpush1.bf16.msra.mxu0 %v3414
    %3496 = vmatprep.subr.bf16.mxu0 %v3421
    %3497 = vmatpush1.bf16.msra.mxu0 %v3420
    %3498 = vmatprep.subr.bf16.mxu0 %v3427
    %3499 = vmatpush1.bf16.msra.mxu0 %v3426
    %3500 = vmatprep.subr.bf16.mxu0 %v3433
    %3501 = vmatpush1.bf16.msra.mxu0 %v3432
    %3502 = vmatprep.subr.bf16.mxu0 %v3478
    %3503 = vmatpush1.bf16.msra.mxu0 %v3475
    %3504 = vmatprep.subr.bf16.mxu0 0
    %3505 = vmatpush1.bf16.msra.mxu0 0
    %3506 = vmatprep.subr.bf16.mxu0 0
    %3507 = vmatpush1.bf16.msra.mxu0 0
    %3508 = vmatprep.subr.bf16.mxu0 0
    %3509 = vmatpush1.bf16.msra.mxu0 0
    %3510 = vmatprep.subr.bf16.mxu0 0
    %3511 = vmatpush1.bf16.msra.mxu0 0
    %3512 = vmatprep.subr.bf16.mxu0 0
    %3513 = vmatpush1.bf16.msra.mxu0 0
    %3514 = vmatprep.subr.bf16.mxu0 0
    %3515 = vmatpush1.bf16.msra.mxu0 0
    %3516 = vmatprep.subr.bf16.mxu0 0
    %3517 = vmatpush1.bf16.msra.mxu0 0
    %3518 = vmatprep.subr.bf16.mxu0 0
    %3519 = vmatpush1.bf16.msra.mxu0 0
    %3520 = vmatprep.subr.bf16.mxu0 0
    %3521 = vmatpush1.bf16.msra.mxu0 0
    %3522 = vmatprep.subr.bf16.mxu0 0
    %3523 = vmatpush1.bf16.msra.mxu0 0
    %3524 = vmatprep.mubr.bf16.mxu0 0
    %3525 = vmatmul.mubr.bf16.gmra.mrb[0].mxu0 %v1358
    %v3526 = vpop.f32.mrb[0].mxu0
    %v3527 = vadd.f32 0.0, %v3526
    %v3528 = vpop.f32.mrb[0].mxu0
    %v3529 = vadd.f32 0.0, %v3528
    %v3530 = vpop.f32.mrb[0].mxu0
    %v3531 = vadd.f32 0.0, %v3530
    %v3532 = vpop.f32.mrb[0].mxu0
    %v3533 = vadd.f32 0.0, %v3532
    %3534 = vmatprep.mubr.bf16.mxu0 0
    %3535 = vmatmul.mubr.bf16.gmra.mrb[0].mxu0 %v1361
    %v3536 = vpop.f32.mrb[0].mxu0
    %v3537 = vadd.f32 0.0, %v3536
    %v3538 = vpop.f32.mrb[0].mxu0
    %v3539 = vadd.f32 0.0, %v3538
    %v3540 = vpop.f32.mrb[0].mxu0
    %v3541 = vadd.f32 0.0, %v3540
    %v3542 = vpop.f32.mrb[0].mxu0
    %v3543 = vadd.f32 0.0, %v3542
    %3544 = vmatprep.mubr.bf16.mxu0 0
    %3545 = vmatmul.mubr.bf16.gmra.mrb[0].mxu0 %v1364
    %v3546 = vpop.f32.mrb[0].mxu0
    %v3547 = vadd.f32 0.0, %v3546
    %v3548 = vpop.f32.mrb[0].mxu0
    %v3549 = vadd.f32 0.0, %v3548
    %v3550 = vpop.f32.mrb[0].mxu0
    %v3551 = vadd.f32 0.0, %v3550
    %v3552 = vpop.f32.mrb[0].mxu0
    %v3553 = vadd.f32 0.0, %v3552
    %3554 = vdwg.mxu0
    %3555 = vmatprep.subr.bf16.mxu0 %v3411
    %3556 = vmatpush1.bf16.msra.mxu0 %v3410
    %3557 = vmatprep.subr.bf16.mxu0 %v3417
    %3558 = vmatpush1.bf16.msra.mxu0 %v3416
    %3559 = vmatprep.subr.bf16.mxu0 %v3423
    %3560 = vmatpush1.bf16.msra.mxu0 %v3422
    %3561 = vmatprep.subr.bf16.mxu0 %v3429
    %3562 = vmatpush1.bf16.msra.mxu0 %v3428
    %3563 = vmatprep.subr.bf16.mxu0 %v3435
    %3564 = vmatpush1.bf16.msra.mxu0 %v3434
    %3565 = vmatprep.subr.bf16.mxu0 %v3484
    %3566 = vmatpush1.bf16.msra.mxu0 %v3481
    %3567 = vmatprep.subr.bf16.mxu0 0
    %3568 = vmatpush1.bf16.msra.mxu0 0
    %3569 = vmatprep.subr.bf16.mxu0 0
    %3570 = vmatpush1.bf16.msra.mxu0 0
    %3571 = vmatprep.subr.bf16.mxu0 0
    %3572 = vmatpush1.bf16.msra.mxu0 0
    %3573 = vmatprep.subr.bf16.mxu0 0
    %3574 = vmatpush1.bf16.msra.mxu0 0
    %3575 = vmatprep.subr.bf16.mxu0 0
    %3576 = vmatpush1.bf16.msra.mxu0 0
    %3577 = vmatprep.subr.bf16.mxu0 0
    %3578 = vmatpush1.bf16.msra.mxu0 0
    %3579 = vmatprep.subr.bf16.mxu0 0
    %3580 = vmatpush1.bf16.msra.mxu0 0
    %3581 = vmatprep.subr.bf16.mxu0 0
    %3582 = vmatpush1.bf16.msra.mxu0 0
    %3583 = vmatprep.subr.bf16.mxu0 0
    %3584 = vmatpush1.bf16.msra.mxu0 0
    %3585 = vmatprep.subr.bf16.mxu0 0
    %3586 = vmatpush1.bf16.msra.mxu0 0
    %3587 = vmatprep.mubr.bf16.mxu0 0
    %3588 = vmatmul.mubr.bf16.gmra.mrb[0].mxu0 %v1358
    %v3589 = vpop.f32.mrb[0].mxu0
    %v3590 = vadd.f32 0.0, %v3589
    %v3591 = vpop.f32.mrb[0].mxu0
    %v3592 = vadd.f32 0.0, %v3591
    %v3593 = vpop.f32.mrb[0].mxu0
    %v3594 = vadd.f32 0.0, %v3593
    %v3595 = vpop.f32.mrb[0].mxu0
    %v3596 = vadd.f32 0.0, %v3595
    %3597 = vmatprep.mubr.bf16.mxu0 0
    %3598 = vmatmul.mubr.bf16.gmra.mrb[0].mxu0 %v1361
    %v3599 = vpop.f32.mrb[0].mxu0
    %v3600 = vadd.f32 0.0, %v3599
    %v3601 = vpop.f32.mrb[0].mxu0
    %v3602 = vadd.f32 0.0, %v3601
    %v3603 = vpop.f32.mrb[0].mxu0
    %v3604 = vadd.f32 0.0, %v3603
    %v3605 = vpop.f32.mrb[0].mxu0
    %v3606 = vadd.f32 0.0, %v3605
    %3607 = vmatprep.mubr.bf16.mxu0 0
    %3608 = vmatmul.mubr.bf16.gmra.mrb[0].mxu0 %v1364
    %v3609 = vpop.f32.mrb[0].mxu0
    %v3610 = vadd.f32 0.0, %v3609
    %v3611 = vpop.f32.mrb[0].mxu0
    %v3612 = vadd.f32 0.0, %v3611
    %v3613 = vpop.f32.mrb[0].mxu0
    %v3614 = vadd.f32 0.0, %v3613
    %v3615 = vpop.f32.mrb[0].mxu0
    %v3616 = vadd.f32 0.0, %v3615
    %3617 = vdwg.mxu0
    %3618 = vmatprep.subr.bf16.mxu0 %v3413
    %3619 = vmatpush1.bf16.msra.mxu0 %v3412
    %3620 = vmatprep.subr.bf16.mxu0 %v3419
    %3621 = vmatpush1.bf16.msra.mxu0 %v3418
    %3622 = vmatprep.subr.bf16.mxu0 %v3425
    %3623 = vmatpush1.bf16.msra.mxu0 %v3424
    %3624 = vmatprep.subr.bf16.mxu0 %v3431
    %3625 = vmatpush1.bf16.msra.mxu0 %v3430
    %3626 = vmatprep.subr.bf16.mxu0 %v3437
    %3627 = vmatpush1.bf16.msra.mxu0 %v3436
    %3628 = vmatprep.subr.bf16.mxu0 %v3490
    %3629 = vmatpush1.bf16.msra.mxu0 %v3487
    %3630 = vmatprep.subr.bf16.mxu0 0
    %3631 = vmatpush1.bf16.msra.mxu0 0
    %3632 = vmatprep.subr.bf16.mxu0 0
    %3633 = vmatpush1.bf16.msra.mxu0 0
    %3634 = vmatprep.subr.bf16.mxu0 0
    %3635 = vmatpush1.bf16.msra.mxu0 0
    %3636 = vmatprep.subr.bf16.mxu0 0
    %3637 = vmatpush1.bf16.msra.mxu0 0
    %3638 = vmatprep.subr.bf16.mxu0 0
    %3639 = vmatpush1.bf16.msra.mxu0 0
    %3640 = vmatprep.subr.bf16.mxu0 0
    %3641 = vmatpush1.bf16.msra.mxu0 0
    %3642 = vmatprep.subr.bf16.mxu0 0
    %3643 = vmatpush1.bf16.msra.mxu0 0
    %3644 = vmatprep.subr.bf16.mxu0 0
    %3645 = vmatpush1.bf16.msra.mxu0 0
    %3646 = vmatprep.subr.bf16.mxu0 0
    %3647 = vmatpush1.bf16.msra.mxu0 0
    %3648 = vmatprep.subr.bf16.mxu0 0
    %3649 = vmatpush1.bf16.msra.mxu0 0
    %3650 = vmatprep.mubr.bf16.mxu0 0
    %3651 = vmatmul.mubr.bf16.gmra.mrb[0].mxu0 %v1358
    %v3652 = vpop.f32.mrb[0].mxu0
    %v3653 = vadd.f32 0.0, %v3652
    %v3654 = vpop.f32.mrb[0].mxu0
    %v3655 = vadd.f32 0.0, %v3654
    %v3656 = vpop.f32.mrb[0].mxu0
    %v3657 = vadd.f32 0.0, %v3656
    %v3658 = vpop.f32.mrb[0].mxu0
    %v3659 = vadd.f32 0.0, %v3658
    %3660 = vmatprep.mubr.bf16.mxu0 0
    %3661 = vmatmul.mubr.bf16.gmra.mrb[0].mxu0 %v1361
    %v3662 = vpop.f32.mrb[0].mxu0
    %v3663 = vadd.f32 0.0, %v3662
    %v3664 = vpop.f32.mrb[0].mxu0
    %v3665 = vadd.f32 0.0, %v3664
    %v3666 = vpop.f32.mrb[0].mxu0
    %v3667 = vadd.f32 0.0, %v3666
    %v3668 = vpop.f32.mrb[0].mxu0
    %v3669 = vadd.f32 0.0, %v3668
    %3670 = vmatprep.mubr.bf16.mxu0 0
    %3671 = vmatmul.mubr.bf16.gmra.mrb[0].mxu0 %v1364
    %v3672 = vpop.f32.mrb[0].mxu0
    %v3673 = vadd.f32 0.0, %v3672
    %v3674 = vpop.f32.mrb[0].mxu0
    %v3675 = vadd.f32 0.0, %v3674
    %v3676 = vpop.f32.mrb[0].mxu0
    %v3677 = vadd.f32 0.0, %v3676
    %v3678 = vpop.f32.mrb[0].mxu0
    %v3679 = vadd.f32 0.0, %v3678
    %3680 = vdwg.mxu0
    %v3681 = vadd.f32 %v2546, %v3527
    %v3682 = vadd.f32 %v2547, %v3529
    %v3683 = vadd.f32 %v2548, %v3590
    %v3684 = vadd.f32 %v2549, %v3592
    %v3685 = vadd.f32 %v2550, %v3653
    %v3686 = vadd.f32 %v2551, %v3655
    %v3687 = vadd.f32 %v2552, %v3531
    %v3688 = vadd.f32 %v2553, %v3533
    %v3689 = vadd.f32 %v2554, %v3594
    %v3690 = vadd.f32 %v2555, %v3596
    %v3691 = vadd.f32 %v2556, %v3657
    %v3692 = vadd.f32 %v2557, %v3659
    %v3693 = vadd.f32 %v2558, %v3537
    %v3694 = vadd.f32 %v2559, %v3539
    %v3695 = vadd.f32 %v2560, %v3600
    %v3696 = vadd.f32 %v2561, %v3602
    %v3697 = vadd.f32 %v2562, %v3663
    %v3698 = vadd.f32 %v2563, %v3665
    %v3699 = vadd.f32 %v2564, %v3541
    %v3700 = vadd.f32 %v2565, %v3543
    %v3701 = vadd.f32 %v2566, %v3604
    %v3702 = vadd.f32 %v2567, %v3606
    %v3703 = vadd.f32 %v2568, %v3667
    %v3704 = vadd.f32 %v2569, %v3669
    %v3705 = vadd.f32 %v2570, %v3547
    %v3706 = vadd.f32 %v2571, %v3549
    %v3707 = vadd.f32 %v2572, %v3610
    %v3708 = vadd.f32 %v2573, %v3612
    %v3709 = vadd.f32 %v2574, %v3673
    %v3710 = vadd.f32 %v2575, %v3675
    %v3711 = vadd.f32 %v2576, %v3551
    %v3712 = vadd.f32 %v2577, %v3553
    %v3713 = vadd.f32 %v2578, %v3614
    %v3714 = vadd.f32 %v2579, %v3616
    %v3715 = vadd.f32 %v2580, %v3677
    %v3716 = vadd.f32 %v2581, %v3679
    %3717 = vmatprep.subr.bf16.mxu0 %v3409
    %3718 = vmatpush1.bf16.msra.mxu0 %v3408
    %3719 = vmatprep.subr.bf16.mxu0 %v3415
    %3720 = vmatpush1.bf16.msra.mxu0 %v3414
    %3721 = vmatprep.subr.bf16.mxu0 %v3421
    %3722 = vmatpush1.bf16.msra.mxu0 %v3420
    %3723 = vmatprep.subr.bf16.mxu0 %v3427
    %3724 = vmatpush1.bf16.msra.mxu0 %v3426
    %3725 = vmatprep.subr.bf16.mxu0 %v3433
    %3726 = vmatpush1.bf16.msra.mxu0 %v3432
    %3727 = vmatprep.subr.bf16.mxu0 %v3478
    %3728 = vmatpush1.bf16.msra.mxu0 %v3475
    %3729 = vmatprep.subr.bf16.mxu0 0
    %3730 = vmatpush1.bf16.msra.mxu0 0
    %3731 = vmatprep.subr.bf16.mxu0 0
    %3732 = vmatpush1.bf16.msra.mxu0 0
    %3733 = vmatprep.subr.bf16.mxu0 0
    %3734 = vmatpush1.bf16.msra.mxu0 0
    %3735 = vmatprep.subr.bf16.mxu0 0
    %3736 = vmatpush1.bf16.msra.mxu0 0
    %3737 = vmatprep.subr.bf16.mxu0 0
    %3738 = vmatpush1.bf16.msra.mxu0 0
    %3739 = vmatprep.subr.bf16.mxu0 0
    %3740 = vmatpush1.bf16.msra.mxu0 0
    %3741 = vmatprep.subr.bf16.mxu0 0
    %3742 = vmatpush1.bf16.msra.mxu0 0
    %3743 = vmatprep.subr.bf16.mxu0 0
    %3744 = vmatpush1.bf16.msra.mxu0 0
    %3745 = vmatprep.subr.bf16.mxu0 0
    %3746 = vmatpush1.bf16.msra.mxu0 0
    %3747 = vmatprep.subr.bf16.mxu0 0
    %3748 = vmatpush1.bf16.msra.mxu0 0
    %3749 = vmatprep.mubr.bf16.mxu0 0
    %3750 = vmatmul.mubr.bf16.gmra.mrb[0].mxu0 %v1754
    %v3751 = vpop.f32.mrb[0].mxu0
    %v3752 = vadd.f32 0.0, %v3751
    %v3753 = vpop.f32.mrb[0].mxu0
    %v3754 = vadd.f32 0.0, %v3753
    %v3755 = vpop.f32.mrb[0].mxu0
    %v3756 = vadd.f32 0.0, %v3755
    %v3757 = vpop.f32.mrb[0].mxu0
    %v3758 = vadd.f32 0.0, %v3757
    %3759 = vmatprep.mubr.bf16.mxu0 0
    %3760 = vmatmul.mubr.bf16.gmra.mrb[0].mxu0 %v1757
    %v3761 = vpop.f32.mrb[0].mxu0
    %v3762 = vadd.f32 0.0, %v3761
    %v3763 = vpop.f32.mrb[0].mxu0
    %v3764 = vadd.f32 0.0, %v3763
    %v3765 = vpop.f32.mrb[0].mxu0
    %v3766 = vadd.f32 0.0, %v3765
    %v3767 = vpop.f32.mrb[0].mxu0
    %v3768 = vadd.f32 0.0, %v3767
    %3769 = vmatprep.mubr.bf16.mxu0 0
    %3770 = vmatmul.mubr.bf16.gmra.mrb[0].mxu0 %v1760
    %v3771 = vpop.f32.mrb[0].mxu0
    %v3772 = vadd.f32 0.0, %v3771
    %v3773 = vpop.f32.mrb[0].mxu0
    %v3774 = vadd.f32 0.0, %v3773
    %v3775 = vpop.f32.mrb[0].mxu0
    %v3776 = vadd.f32 0.0, %v3775
    %v3777 = vpop.f32.mrb[0].mxu0
    %v3778 = vadd.f32 0.0, %v3777
    %3779 = vdwg.mxu0
    %3780 = vmatprep.subr.bf16.mxu0 %v3411
    %3781 = vmatpush1.bf16.msra.mxu0 %v3410
    %3782 = vmatprep.subr.bf16.mxu0 %v3417
    %3783 = vmatpush1.bf16.msra.mxu0 %v3416
    %3784 = vmatprep.subr.bf16.mxu0 %v3423
    %3785 = vmatpush1.bf16.msra.mxu0 %v3422
    %3786 = vmatprep.subr.bf16.mxu0 %v3429
    %3787 = vmatpush1.bf16.msra.mxu0 %v3428
    %3788 = vmatprep.subr.bf16.mxu0 %v3435
    %3789 = vmatpush1.bf16.msra.mxu0 %v3434
    %3790 = vmatprep.subr.bf16.mxu0 %v3484
    %3791 = vmatpush1.bf16.msra.mxu0 %v3481
    %3792 = vmatprep.subr.bf16.mxu0 0
    %3793 = vmatpush1.bf16.msra.mxu0 0
    %3794 = vmatprep.subr.bf16.mxu0 0
    %3795 = vmatpush1.bf16.msra.mxu0 0
    %3796 = vmatprep.subr.bf16.mxu0 0
    %3797 = vmatpush1.bf16.msra.mxu0 0
    %3798 = vmatprep.subr.bf16.mxu0 0
    %3799 = vmatpush1.bf16.msra.mxu0 0
    %3800 = vmatprep.subr.bf16.mxu0 0
    %3801 = vmatpush1.bf16.msra.mxu0 0
    %3802 = vmatprep.subr.bf16.mxu0 0
    %3803 = vmatpush1.bf16.msra.mxu0 0
    %3804 = vmatprep.subr.bf16.mxu0 0
    %3805 = vmatpush1.bf16.msra.mxu0 0
    %3806 = vmatprep.subr.bf16.mxu0 0
    %3807 = vmatpush1.bf16.msra.mxu0 0
    %3808 = vmatprep.subr.bf16.mxu0 0
    %3809 = vmatpush1.bf16.msra.mxu0 0
    %3810 = vmatprep.subr.bf16.mxu0 0
    %3811 = vmatpush1.bf16.msra.mxu0 0
    %3812 = vmatprep.mubr.bf16.mxu0 0
    %3813 = vmatmul.mubr.bf16.gmra.mrb[0].mxu0 %v1754
    %v3814 = vpop.f32.mrb[0].mxu0
    %v3815 = vadd.f32 0.0, %v3814
    %v3816 = vpop.f32.mrb[0].mxu0
    %v3817 = vadd.f32 0.0, %v3816
    %v3818 = vpop.f32.mrb[0].mxu0
    %v3819 = vadd.f32 0.0, %v3818
    %v3820 = vpop.f32.mrb[0].mxu0
    %v3821 = vadd.f32 0.0, %v3820
    %3822 = vmatprep.mubr.bf16.mxu0 0
    %3823 = vmatmul.mubr.bf16.gmra.mrb[0].mxu0 %v1757
    %v3824 = vpop.f32.mrb[0].mxu0
    %v3825 = vadd.f32 0.0, %v3824
    %v3826 = vpop.f32.mrb[0].mxu0
    %v3827 = vadd.f32 0.0, %v3826
    %v3828 = vpop.f32.mrb[0].mxu0
    %v3829 = vadd.f32 0.0, %v3828
    %v3830 = vpop.f32.mrb[0].mxu0
    %v3831 = vadd.f32 0.0, %v3830
    %3832 = vmatprep.mubr.bf16.mxu0 0
    %3833 = vmatmul.mubr.bf16.gmra.mrb[0].mxu0 %v1760
    %v3834 = vpop.f32.mrb[0].mxu0
    %v3835 = vadd.f32 0.0, %v3834
    %v3836 = vpop.f32.mrb[0].mxu0
    %v3837 = vadd.f32 0.0, %v3836
    %v3838 = vpop.f32.mrb[0].mxu0
    %v3839 = vadd.f32 0.0, %v3838
    %v3840 = vpop.f32.mrb[0].mxu0
    %v3841 = vadd.f32 0.0, %v3840
    %3842 = vdwg.mxu0
    %3843 = vmatprep.subr.bf16.mxu0 %v3413
    %3844 = vmatpush1.bf16.msra.mxu0 %v3412
    %3845 = vmatprep.subr.bf16.mxu0 %v3419
    %3846 = vmatpush1.bf16.msra.mxu0 %v3418
    %3847 = vmatprep.subr.bf16.mxu0 %v3425
    %3848 = vmatpush1.bf16.msra.mxu0 %v3424
    %3849 = vmatprep.subr.bf16.mxu0 %v3431
    %3850 = vmatpush1.bf16.msra.mxu0 %v3430
    %3851 = vmatprep.subr.bf16.mxu0 %v3437
    %3852 = vmatpush1.bf16.msra.mxu0 %v3436
    %3853 = vmatprep.subr.bf16.mxu0 %v3490
    %3854 = vmatpush1.bf16.msra.mxu0 %v3487
    %3855 = vmatprep.subr.bf16.mxu0 0
    %3856 = vmatpush1.bf16.msra.mxu0 0
    %3857 = vmatprep.subr.bf16.mxu0 0
    %3858 = vmatpush1.bf16.msra.mxu0 0
    %3859 = vmatprep.subr.bf16.mxu0 0
    %3860 = vmatpush1.bf16.msra.mxu0 0
    %3861 = vmatprep.subr.bf16.mxu0 0
    %3862 = vmatpush1.bf16.msra.mxu0 0
    %3863 = vmatprep.subr.bf16.mxu0 0
    %3864 = vmatpush1.bf16.msra.mxu0 0
    %3865 = vmatprep.subr.bf16.mxu0 0
    %3866 = vmatpush1.bf16.msra.mxu0 0
    %3867 = vmatprep.subr.bf16.mxu0 0
    %3868 = vmatpush1.bf16.msra.mxu0 0
    %3869 = vmatprep.subr.bf16.mxu0 0
    %3870 = vmatpush1.bf16.msra.mxu0 0
    %3871 = vmatprep.subr.bf16.mxu0 0
    %3872 = vmatpush1.bf16.msra.mxu0 0
    %3873 = vmatprep.subr.bf16.mxu0 0
    %3874 = vmatpush1.bf16.msra.mxu0 0
    %3875 = vmatprep.mubr.bf16.mxu0 0
    %3876 = vmatmul.mubr.bf16.gmra.mrb[0].mxu0 %v1754
    %v3877 = vpop.f32.mrb[0].mxu0
    %v3878 = vadd.f32 0.0, %v3877
    %v3879 = vpop.f32.mrb[0].mxu0
    %v3880 = vadd.f32 0.0, %v3879
    %v3881 = vpop.f32.mrb[0].mxu0
    %v3882 = vadd.f32 0.0, %v3881
    %v3883 = vpop.f32.mrb[0].mxu0
    %v3884 = vadd.f32 0.0, %v3883
    %3885 = vmatprep.mubr.bf16.mxu0 0
    %3886 = vmatmul.mubr.bf16.gmra.mrb[0].mxu0 %v1757
    %v3887 = vpop.f32.mrb[0].mxu0
    %v3888 = vadd.f32 0.0, %v3887
    %v3889 = vpop.f32.mrb[0].mxu0
    %v3890 = vadd.f32 0.0, %v3889
    %v3891 = vpop.f32.mrb[0].mxu0
    %v3892 = vadd.f32 0.0, %v3891
    %v3893 = vpop.f32.mrb[0].mxu0
    %v3894 = vadd.f32 0.0, %v3893
    %3895 = vmatprep.mubr.bf16.mxu0 0
    %3896 = vmatmul.mubr.bf16.gmra.mrb[0].mxu0 %v1760
    %v3897 = vpop.f32.mrb[0].mxu0
    %v3898 = vadd.f32 0.0, %v3897
    %v3899 = vpop.f32.mrb[0].mxu0
    %v3900 = vadd.f32 0.0, %v3899
    %v3901 = vpop.f32.mrb[0].mxu0
    %v3902 = vadd.f32 0.0, %v3901
    %v3903 = vpop.f32.mrb[0].mxu0
    %v3904 = vadd.f32 0.0, %v3903
    %3905 = vdwg.mxu0
    %v3906 = vadd.f32 %v2771, %v3752
    %v3907 = vadd.f32 %v2772, %v3754
    %v3908 = vadd.f32 %v2773, %v3815
    %v3909 = vadd.f32 %v2774, %v3817
    %v3910 = vadd.f32 %v2775, %v3878
    %v3911 = vadd.f32 %v2776, %v3880
    %v3912 = vadd.f32 %v2777, %v3756
    %v3913 = vadd.f32 %v2778, %v3758
    %v3914 = vadd.f32 %v2779, %v3819
    %v3915 = vadd.f32 %v2780, %v3821
    %v3916 = vadd.f32 %v2781, %v3882
    %v3917 = vadd.f32 %v2782, %v3884
    %v3918 = vadd.f32 %v2783, %v3762
    %v3919 = vadd.f32 %v2784, %v3764
    %v3920 = vadd.f32 %v2785, %v3825
    %v3921 = vadd.f32 %v2786, %v3827
    %v3922 = vadd.f32 %v2787, %v3888
    %v3923 = vadd.f32 %v2788, %v3890
    %v3924 = vadd.f32 %v2789, %v3766
    %v3925 = vadd.f32 %v2790, %v3768
    %v3926 = vadd.f32 %v2791, %v3829
    %v3927 = vadd.f32 %v2792, %v3831
    %v3928 = vadd.f32 %v2793, %v3892
    %v3929 = vadd.f32 %v2794, %v3894
    %v3930 = vadd.f32 %v2795, %v3772
    %v3931 = vadd.f32 %v2796, %v3774
    %v3932 = vadd.f32 %v2797, %v3835
    %v3933 = vadd.f32 %v2798, %v3837
    %v3934 = vadd.f32 %v2799, %v3898
    %v3935 = vadd.f32 %v2800, %v3900
    %v3936 = vadd.f32 %v2801, %v3776
    %v3937 = vadd.f32 %v2802, %v3778
    %v3938 = vadd.f32 %v2803, %v3839
    %v3939 = vadd.f32 %v2804, %v3841
    %v3940 = vadd.f32 %v2805, %v3902
    %v3941 = vadd.f32 %v2806, %v3904
    %3942 = vmatprep.subr.bf16.mxu0 %v3409
    %3943 = vmatpush1.bf16.msra.mxu0 %v3408
    %3944 = vmatprep.subr.bf16.mxu0 %v3415
    %3945 = vmatpush1.bf16.msra.mxu0 %v3414
    %3946 = vmatprep.subr.bf16.mxu0 %v3421
    %3947 = vmatpush1.bf16.msra.mxu0 %v3420
    %3948 = vmatprep.subr.bf16.mxu0 %v3427
    %3949 = vmatpush1.bf16.msra.mxu0 %v3426
    %3950 = vmatprep.subr.bf16.mxu0 %v3433
    %3951 = vmatpush1.bf16.msra.mxu0 %v3432
    %3952 = vmatprep.subr.bf16.mxu0 %v3478
    %3953 = vmatpush1.bf16.msra.mxu0 %v3475
    %3954 = vmatprep.subr.bf16.mxu0 0
    %3955 = vmatpush1.bf16.msra.mxu0 0
    %3956 = vmatprep.subr.bf16.mxu0 0
    %3957 = vmatpush1.bf16.msra.mxu0 0
    %3958 = vmatprep.subr.bf16.mxu0 0
    %3959 = vmatpush1.bf16.msra.mxu0 0
    %3960 = vmatprep.subr.bf16.mxu0 0
    %3961 = vmatpush1.bf16.msra.mxu0 0
    %3962 = vmatprep.subr.bf16.mxu0 0
    %3963 = vmatpush1.bf16.msra.mxu0 0
    %3964 = vmatprep.subr.bf16.mxu0 0
    %3965 = vmatpush1.bf16.msra.mxu0 0
    %3966 = vmatprep.subr.bf16.mxu0 0
    %3967 = vmatpush1.bf16.msra.mxu0 0
    %3968 = vmatprep.subr.bf16.mxu0 0
    %3969 = vmatpush1.bf16.msra.mxu0 0
    %3970 = vmatprep.subr.bf16.mxu0 0
    %3971 = vmatpush1.bf16.msra.mxu0 0
    %3972 = vmatprep.subr.bf16.mxu0 0
    %3973 = vmatpush1.bf16.msra.mxu0 0
    %3974 = vmatprep.mubr.bf16.mxu0 0
    %3975 = vmatmul.mubr.bf16.gmra.mrb[0].mxu0 %v3042
    %v3976 = vpop.f32.mrb[0].mxu0
    %v3977 = vadd.f32 0.0, %v3976
    %v3978 = vpop.f32.mrb[0].mxu0
    %v3979 = vadd.f32 0.0, %v3978
    %v3980 = vpop.f32.mrb[0].mxu0
    %v3981 = vadd.f32 0.0, %v3980
    %v3982 = vpop.f32.mrb[0].mxu0
    %v3983 = vadd.f32 0.0, %v3982
    %3984 = vmatprep.mubr.bf16.mxu0 0
    %3985 = vmatmul.mubr.bf16.gmra.mrb[0].mxu0 %v3045
    %v3986 = vpop.f32.mrb[0].mxu0
    %v3987 = vadd.f32 0.0, %v3986
    %v3988 = vpop.f32.mrb[0].mxu0
    %v3989 = vadd.f32 0.0, %v3988
    %v3990 = vpop.f32.mrb[0].mxu0
    %v3991 = vadd.f32 0.0, %v3990
    %v3992 = vpop.f32.mrb[0].mxu0
    %v3993 = vadd.f32 0.0, %v3992
    %3994 = vmatprep.mubr.bf16.mxu0 0
    %3995 = vmatmul.mubr.bf16.gmra.mrb[0].mxu0 %v3048
    %v3996 = vpop.f32.mrb[0].mxu0
    %v3997 = vadd.f32 0.0, %v3996
    %v3998 = vpop.f32.mrb[0].mxu0
    %v3999 = vadd.f32 0.0, %v3998
    %v4000 = vpop.f32.mrb[0].mxu0
    %v4001 = vadd.f32 0.0, %v4000
    %v4002 = vpop.f32.mrb[0].mxu0
    %v4003 = vadd.f32 0.0, %v4002
    %4004 = vdwg.mxu0
    %4005 = vmatprep.subr.bf16.mxu0 %v3411
    %4006 = vmatpush1.bf16.msra.mxu0 %v3410
    %4007 = vmatprep.subr.bf16.mxu0 %v3417
    %4008 = vmatpush1.bf16.msra.mxu0 %v3416
    %4009 = vmatprep.subr.bf16.mxu0 %v3423
    %4010 = vmatpush1.bf16.msra.mxu0 %v3422
    %4011 = vmatprep.subr.bf16.mxu0 %v3429
    %4012 = vmatpush1.bf16.msra.mxu0 %v3428
    %4013 = vmatprep.subr.bf16.mxu0 %v3435
    %4014 = vmatpush1.bf16.msra.mxu0 %v3434
    %4015 = vmatprep.subr.bf16.mxu0 %v3484
    %4016 = vmatpush1.bf16.msra.mxu0 %v3481
    %4017 = vmatprep.subr.bf16.mxu0 0
    %4018 = vmatpush1.bf16.msra.mxu0 0
    %4019 = vmatprep.subr.bf16.mxu0 0
    %4020 = vmatpush1.bf16.msra.mxu0 0
    %4021 = vmatprep.subr.bf16.mxu0 0
    %4022 = vmatpush1.bf16.msra.mxu0 0
    %4023 = vmatprep.subr.bf16.mxu0 0
    %4024 = vmatpush1.bf16.msra.mxu0 0
    %4025 = vmatprep.subr.bf16.mxu0 0
    %4026 = vmatpush1.bf16.msra.mxu0 0
    %4027 = vmatprep.subr.bf16.mxu0 0
    %4028 = vmatpush1.bf16.msra.mxu0 0
    %4029 = vmatprep.subr.bf16.mxu0 0
    %4030 = vmatpush1.bf16.msra.mxu0 0
    %4031 = vmatprep.subr.bf16.mxu0 0
    %4032 = vmatpush1.bf16.msra.mxu0 0
    %4033 = vmatprep.subr.bf16.mxu0 0
    %4034 = vmatpush1.bf16.msra.mxu0 0
    %4035 = vmatprep.subr.bf16.mxu0 0
    %4036 = vmatpush1.bf16.msra.mxu0 0
    %4037 = vmatprep.mubr.bf16.mxu0 0
    %4038 = vmatmul.mubr.bf16.gmra.mrb[0].mxu0 %v3042
    %v4039 = vpop.f32.mrb[0].mxu0
    %v4040 = vadd.f32 0.0, %v4039
    %v4041 = vpop.f32.mrb[0].mxu0
    %v4042 = vadd.f32 0.0, %v4041
    %v4043 = vpop.f32.mrb[0].mxu0
    %v4044 = vadd.f32 0.0, %v4043
    %v4045 = vpop.f32.mrb[0].mxu0
    %v4046 = vadd.f32 0.0, %v4045
    %4047 = vmatprep.mubr.bf16.mxu0 0
    %4048 = vmatmul.mubr.bf16.gmra.mrb[0].mxu0 %v3045
    %v4049 = vpop.f32.mrb[0].mxu0
    %v4050 = vadd.f32 0.0, %v4049
    %v4051 = vpop.f32.mrb[0].mxu0
    %v4052 = vadd.f32 0.0, %v4051
    %v4053 = vpop.f32.mrb[0].mxu0
    %v4054 = vadd.f32 0.0, %v4053
    %v4055 = vpop.f32.mrb[0].mxu0
    %v4056 = vadd.f32 0.0, %v4055
    %4057 = vmatprep.mubr.bf16.mxu0 0
    %4058 = vmatmul.mubr.bf16.gmra.mrb[0].mxu0 %v3048
    %v4059 = vpop.f32.mrb[0].mxu0
    %v4060 = vadd.f32 0.0, %v4059
    %v4061 = vpop.f32.mrb[0].mxu0
    %v4062 = vadd.f32 0.0, %v4061
    %v4063 = vpop.f32.mrb[0].mxu0
    %v4064 = vadd.f32 0.0, %v4063
    %v4065 = vpop.f32.mrb[0].mxu0
    %v4066 = vadd.f32 0.0, %v4065
    %4067 = vdwg.mxu0
    %4068 = vmatprep.subr.bf16.mxu0 %v3413
    %4069 = vmatpush1.bf16.msra.mxu0 %v3412
    %4070 = vmatprep.subr.bf16.mxu0 %v3419
    %4071 = vmatpush1.bf16.msra.mxu0 %v3418
    %4072 = vmatprep.subr.bf16.mxu0 %v3425
    %4073 = vmatpush1.bf16.msra.mxu0 %v3424
    %4074 = vmatprep.subr.bf16.mxu0 %v3431
    %4075 = vmatpush1.bf16.msra.mxu0 %v3430
    %4076 = vmatprep.subr.bf16.mxu0 %v3437
    %4077 = vmatpush1.bf16.msra.mxu0 %v3436
    %4078 = vmatprep.subr.bf16.mxu0 %v3490
    %4079 = vmatpush1.bf16.msra.mxu0 %v3487
    %4080 = vmatprep.subr.bf16.mxu0 0
    %4081 = vmatpush1.bf16.msra.mxu0 0
    %4082 = vmatprep.subr.bf16.mxu0 0
    %4083 = vmatpush1.bf16.msra.mxu0 0
    %4084 = vmatprep.subr.bf16.mxu0 0
    %4085 = vmatpush1.bf16.msra.mxu0 0
    %4086 = vmatprep.subr.bf16.mxu0 0
    %4087 = vmatpush1.bf16.msra.mxu0 0
    %4088 = vmatprep.subr.bf16.mxu0 0
    %4089 = vmatpush1.bf16.msra.mxu0 0
    %4090 = vmatprep.subr.bf16.mxu0 0
    %4091 = vmatpush1.bf16.msra.mxu0 0
    %4092 = vmatprep.subr.bf16.mxu0 0
    %4093 = vmatpush1.bf16.msra.mxu0 0
    %4094 = vmatprep.subr.bf16.mxu0 0
    %4095 = vmatpush1.bf16.msra.mxu0 0
    %4096 = vmatprep.subr.bf16.mxu0 0
    %4097 = vmatpush1.bf16.msra.mxu0 0
    %4098 = vmatprep.subr.bf16.mxu0 0
    %4099 = vmatpush1.bf16.msra.mxu0 0
    %4100 = vmatprep.mubr.bf16.mxu0 0
    %4101 = vmatmul.mubr.bf16.gmra.mrb[0].mxu0 %v3042
    %v4102 = vpop.f32.mrb[0].mxu0
    %v4103 = vadd.f32 0.0, %v4102
    %v4104 = vpop.f32.mrb[0].mxu0
    %v4105 = vadd.f32 0.0, %v4104
    %v4106 = vpop.f32.mrb[0].mxu0
    %v4107 = vadd.f32 0.0, %v4106
    %v4108 = vpop.f32.mrb[0].mxu0
    %v4109 = vadd.f32 0.0, %v4108
    %4110 = vmatprep.mubr.bf16.mxu0 0
    %4111 = vmatmul.mubr.bf16.gmra.mrb[0].mxu0 %v3045
    %v4112 = vpop.f32.mrb[0].mxu0
    %v4113 = vadd.f32 0.0, %v4112
    %v4114 = vpop.f32.mrb[0].mxu0
    %v4115 = vadd.f32 0.0, %v4114
    %v4116 = vpop.f32.mrb[0].mxu0
    %v4117 = vadd.f32 0.0, %v4116
    %v4118 = vpop.f32.mrb[0].mxu0
    %v4119 = vadd.f32 0.0, %v4118
    %4120 = vmatprep.mubr.bf16.mxu0 0
    %4121 = vmatmul.mubr.bf16.gmra.mrb[0].mxu0 %v3048
    %v4122 = vpop.f32.mrb[0].mxu0
    %v4123 = vadd.f32 0.0, %v4122
    %v4124 = vpop.f32.mrb[0].mxu0
    %v4125 = vadd.f32 0.0, %v4124
    %v4126 = vpop.f32.mrb[0].mxu0
    %v4127 = vadd.f32 0.0, %v4126
    %v4128 = vpop.f32.mrb[0].mxu0
    %v4129 = vadd.f32 0.0, %v4128
    %4130 = vdwg.mxu0
    %v4131 = vadd.f32 %v2996, %v3977
    %v4132 = vadd.f32 %v2997, %v3979
    %v4133 = vadd.f32 %v2998, %v4040
    %v4134 = vadd.f32 %v2999, %v4042
    %v4135 = vadd.f32 %v3000, %v4103
    %v4136 = vadd.f32 %v3001, %v4105
    %v4137 = vadd.f32 %v3002, %v3981
    %v4138 = vadd.f32 %v3003, %v3983
    %v4139 = vadd.f32 %v3004, %v4044
    %v4140 = vadd.f32 %v3005, %v4046
    %v4141 = vadd.f32 %v3006, %v4107
    %v4142 = vadd.f32 %v3007, %v4109
    %v4143 = vadd.f32 %v3008, %v3987
    %v4144 = vadd.f32 %v3009, %v3989
    %v4145 = vadd.f32 %v3010, %v4050
    %v4146 = vadd.f32 %v3011, %v4052
    %v4147 = vadd.f32 %v3012, %v4113
    %v4148 = vadd.f32 %v3013, %v4115
    %v4149 = vadd.f32 %v3014, %v3991
    %v4150 = vadd.f32 %v3015, %v3993
    %v4151 = vadd.f32 %v3016, %v4054
    %v4152 = vadd.f32 %v3017, %v4056
    %v4153 = vadd.f32 %v3018, %v4117
    %v4154 = vadd.f32 %v3019, %v4119
    %v4155 = vadd.f32 %v3020, %v3997
    %v4156 = vadd.f32 %v3021, %v3999
    %v4157 = vadd.f32 %v3022, %v4060
    %v4158 = vadd.f32 %v3023, %v4062
    %v4159 = vadd.f32 %v3024, %v4123
    %v4160 = vadd.f32 %v3025, %v4125
    %v4161 = vadd.f32 %v3026, %v4001
    %v4162 = vadd.f32 %v3027, %v4003
    %v4163 = vadd.f32 %v3028, %v4064
    %v4164 = vadd.f32 %v3029, %v4066
    %v4165 = vadd.f32 %v3030, %v4127
    %v4166 = vadd.f32 %v3031, %v4129
    %v4167 = vld [vmem:[%s0 + $0x78] sm:$0xff]
    %v4168 = vld [vmem:[%s0 + $0x80] sm:$0xff]
    %v4169 = vld [vmem:[%s0 + $0x88] sm:$0xff]
    %v4170 = vld [vmem:[%s0 + $0x90] sm:$0xff]
    %v4171 = vld [vmem:[%s0 + $0x98] sm:$0xff]
    %v4172 = vld [vmem:[%s0 + $0xa0] sm:$0xff]
    %v4173 = vpack.c.bf16 %v4168, %v4167
    %v4174 = vpack.c.bf16 %v4170, %v4169
    %v4175 = vpack.c.bf16 %v4172, %v4171
    %v4177 = vsel %vm371, %v4173, 0
    %v4180 = vsel %vm371, %v4174, 0
    %v4183 = vsel %vm371, %v4175, 0
    %4185 = vmatprep.subr.bf16.mxu0 %v3409
    %4186 = vmatpush1.bf16.msra.mxu0 %v3408
    %4187 = vmatprep.subr.bf16.mxu0 %v3415
    %4188 = vmatpush1.bf16.msra.mxu0 %v3414
    %4189 = vmatprep.subr.bf16.mxu0 %v3421
    %4190 = vmatpush1.bf16.msra.mxu0 %v3420
    %4191 = vmatprep.subr.bf16.mxu0 %v3427
    %4192 = vmatpush1.bf16.msra.mxu0 %v3426
    %4193 = vmatprep.subr.bf16.mxu0 %v3433
    %4194 = vmatpush1.bf16.msra.mxu0 %v3432
    %4195 = vmatprep.subr.bf16.mxu0 %v3478
    %4196 = vmatpush1.bf16.msra.mxu0 %v3475
    %4197 = vmatprep.subr.bf16.mxu0 0
    %4198 = vmatpush1.bf16.msra.mxu0 0
    %4199 = vmatprep.subr.bf16.mxu0 0
    %4200 = vmatpush1.bf16.msra.mxu0 0
    %4201 = vmatprep.subr.bf16.mxu0 0
    %4202 = vmatpush1.bf16.msra.mxu0 0
    %4203 = vmatprep.subr.bf16.mxu0 0
    %4204 = vmatpush1.bf16.msra.mxu0 0
    %4205 = vmatprep.subr.bf16.mxu0 0
    %4206 = vmatpush1.bf16.msra.mxu0 0
    %4207 = vmatprep.subr.bf16.mxu0 0
    %4208 = vmatpush1.bf16.msra.mxu0 0
    %4209 = vmatprep.subr.bf16.mxu0 0
    %4210 = vmatpush1.bf16.msra.mxu0 0
    %4211 = vmatprep.subr.bf16.mxu0 0
    %4212 = vmatpush1.bf16.msra.mxu0 0
    %4213 = vmatprep.subr.bf16.mxu0 0
    %4214 = vmatpush1.bf16.msra.mxu0 0
    %4215 = vmatprep.subr.bf16.mxu0 0
    %4216 = vmatpush1.bf16.msra.mxu0 0
    %4217 = vmatprep.mubr.bf16.mxu0 0
    %4218 = vmatmul.mubr.bf16.gmra.mrb[0].mxu0 %v4177
    %v4219 = vpop.f32.mrb[0].mxu0
    %v4220 = vadd.f32 0.0, %v4219
    %v4221 = vpop.f32.mrb[0].mxu0
    %v4222 = vadd.f32 0.0, %v4221
    %v4223 = vpop.f32.mrb[0].mxu0
    %v4224 = vadd.f32 0.0, %v4223
    %v4225 = vpop.f32.mrb[0].mxu0
    %v4226 = vadd.f32 0.0, %v4225
    %4227 = vmatprep.mubr.bf16.mxu0 0
    %4228 = vmatmul.mubr.bf16.gmra.mrb[0].mxu0 %v4180
    %v4229 = vpop.f32.mrb[0].mxu0
    %v4230 = vadd.f32 0.0, %v4229
    %v4231 = vpop.f32.mrb[0].mxu0
    %v4232 = vadd.f32 0.0, %v4231
    %v4233 = vpop.f32.mrb[0].mxu0
    %v4234 = vadd.f32 0.0, %v4233
    %v4235 = vpop.f32.mrb[0].mxu0
    %v4236 = vadd.f32 0.0, %v4235
    %4237 = vmatprep.mubr.bf16.mxu0 0
    %4238 = vmatmul.mubr.bf16.gmra.mrb[0].mxu0 %v4183
    %v4239 = vpop.f32.mrb[0].mxu0
    %v4240 = vadd.f32 0.0, %v4239
    %v4241 = vpop.f32.mrb[0].mxu0
    %v4242 = vadd.f32 0.0, %v4241
    %v4243 = vpop.f32.mrb[0].mxu0
    %v4244 = vadd.f32 0.0, %v4243
    %v4245 = vpop.f32.mrb[0].mxu0
    %v4246 = vadd.f32 0.0, %v4245
    %4247 = vdwg.mxu0
    %4248 = vmatprep.subr.bf16.mxu0 %v3411
    %4249 = vmatpush1.bf16.msra.mxu0 %v3410
    %4250 = vmatprep.subr.bf16.mxu0 %v3417
    %4251 = vmatpush1.bf16.msra.mxu0 %v3416
    %4252 = vmatprep.subr.bf16.mxu0 %v3423
    %4253 = vmatpush1.bf16.msra.mxu0 %v3422
    %4254 = vmatprep.subr.bf16.mxu0 %v3429
    %4255 = vmatpush1.bf16.msra.mxu0 %v3428
    %4256 = vmatprep.subr.bf16.mxu0 %v3435
    %4257 = vmatpush1.bf16.msra.mxu0 %v3434
    %4258 = vmatprep.subr.bf16.mxu0 %v3484
    %4259 = vmatpush1.bf16.msra.mxu0 %v3481
    %4260 = vmatprep.subr.bf16.mxu0 0
    %4261 = vmatpush1.bf16.msra.mxu0 0
    %4262 = vmatprep.subr.bf16.mxu0 0
    %4263 = vmatpush1.bf16.msra.mxu0 0
    %4264 = vmatprep.subr.bf16.mxu0 0
    %4265 = vmatpush1.bf16.msra.mxu0 0
    %4266 = vmatprep.subr.bf16.mxu0 0
    %4267 = vmatpush1.bf16.msra.mxu0 0
    %4268 = vmatprep.subr.bf16.mxu0 0
    %4269 = vmatpush1.bf16.msra.mxu0 0
    %4270 = vmatprep.subr.bf16.mxu0 0
    %4271 = vmatpush1.bf16.msra.mxu0 0
    %4272 = vmatprep.subr.bf16.mxu0 0
    %4273 = vmatpush1.bf16.msra.mxu0 0
    %4274 = vmatprep.subr.bf16.mxu0 0
    %4275 = vmatpush1.bf16.msra.mxu0 0
    %4276 = vmatprep.subr.bf16.mxu0 0
    %4277 = vmatpush1.bf16.msra.mxu0 0
    %4278 = vmatprep.subr.bf16.mxu0 0
    %4279 = vmatpush1.bf16.msra.mxu0 0
    %4280 = vmatprep.mubr.bf16.mxu0 0
    %4281 = vmatmul.mubr.bf16.gmra.mrb[0].mxu0 %v4177
    %v4282 = vpop.f32.mrb[0].mxu0
    %v4283 = vadd.f32 0.0, %v4282
    %v4284 = vpop.f32.mrb[0].mxu0
    %v4285 = vadd.f32 0.0, %v4284
    %v4286 = vpop.f32.mrb[0].mxu0
    %v4287 = vadd.f32 0.0, %v4286
    %v4288 = vpop.f32.mrb[0].mxu0
    %v4289 = vadd.f32 0.0, %v4288
    %4290 = vmatprep.mubr.bf16.mxu0 0
    %4291 = vmatmul.mubr.bf16.gmra.mrb[0].mxu0 %v4180
    %v4292 = vpop.f32.mrb[0].mxu0
    %v4293 = vadd.f32 0.0, %v4292
    %v4294 = vpop.f32.mrb[0].mxu0
    %v4295 = vadd.f32 0.0, %v4294
    %v4296 = vpop.f32.mrb[0].mxu0
    %v4297 = vadd.f32 0.0, %v4296
    %v4298 = vpop.f32.mrb[0].mxu0
    %v4299 = vadd.f32 0.0, %v4298
    %4300 = vmatprep.mubr.bf16.mxu0 0
    %4301 = vmatmul.mubr.bf16.gmra.mrb[0].mxu0 %v4183
    %v4302 = vpop.f32.mrb[0].mxu0
    %v4303 = vadd.f32 0.0, %v4302
    %v4304 = vpop.f32.mrb[0].mxu0
    %v4305 = vadd.f32 0.0, %v4304
    %v4306 = vpop.f32.mrb[0].mxu0
    %v4307 = vadd.f32 0.0, %v4306
    %v4308 = vpop.f32.mrb[0].mxu0
    %v4309 = vadd.f32 0.0, %v4308
    %4310 = vdwg.mxu0
    %4311 = vmatprep.subr.bf16.mxu0 %v3413
    %4312 = vmatpush1.bf16.msra.mxu0 %v3412
    %4313 = vmatprep.subr.bf16.mxu0 %v3419
    %4314 = vmatpush1.bf16.msra.mxu0 %v3418
    %4315 = vmatprep.subr.bf16.mxu0 %v3425
    %4316 = vmatpush1.bf16.msra.mxu0 %v3424
    %4317 = vmatprep.subr.bf16.mxu0 %v3431
    %4318 = vmatpush1.bf16.msra.mxu0 %v3430
    %4319 = vmatprep.subr.bf16.mxu0 %v3437
    %4320 = vmatpush1.bf16.msra.mxu0 %v3436
    %4321 = vmatprep.subr.bf16.mxu0 %v3490
    %4322 = vmatpush1.bf16.msra.mxu0 %v3487
    %4323 = vmatprep.subr.bf16.mxu0 0
    %4324 = vmatpush1.bf16.msra.mxu0 0
    %4325 = vmatprep.subr.bf16.mxu0 0
    %4326 = vmatpush1.bf16.msra.mxu0 0
    %4327 = vmatprep.subr.bf16.mxu0 0
    %4328 = vmatpush1.bf16.msra.mxu0 0
    %4329 = vmatprep.subr.bf16.mxu0 0
    %4330 = vmatpush1.bf16.msra.mxu0 0
    %4331 = vmatprep.subr.bf16.mxu0 0
    %4332 = vmatpush1.bf16.msra.mxu0 0
    %4333 = vmatprep.subr.bf16.mxu0 0
    %4334 = vmatpush1.bf16.msra.mxu0 0
    %4335 = vmatprep.subr.bf16.mxu0 0
    %4336 = vmatpush1.bf16.msra.mxu0 0
    %4337 = vmatprep.subr.bf16.mxu0 0
    %4338 = vmatpush1.bf16.msra.mxu0 0
    %4339 = vmatprep.subr.bf16.mxu0 0
    %4340 = vmatpush1.bf16.msra.mxu0 0
    %4341 = vmatprep.subr.bf16.mxu0 0
    %4342 = vmatpush1.bf16.msra.mxu0 0
    %4343 = vmatprep.mubr.bf16.mxu0 0
    %4344 = vmatmul.mubr.bf16.gmra.mrb[0].mxu0 %v4177
    %v4345 = vpop.f32.mrb[0].mxu0
    %v4346 = vadd.f32 0.0, %v4345
    %v4347 = vpop.f32.mrb[0].mxu0
    %v4348 = vadd.f32 0.0, %v4347
    %v4349 = vpop.f32.mrb[0].mxu0
    %v4350 = vadd.f32 0.0, %v4349
    %v4351 = vpop.f32.mrb[0].mxu0
    %v4352 = vadd.f32 0.0, %v4351
    %4353 = vmatprep.mubr.bf16.mxu0 0
    %4354 = vmatmul.mubr.bf16.gmra.mrb[0].mxu0 %v4180
    %v4355 = vpop.f32.mrb[0].mxu0
    %v4356 = vadd.f32 0.0, %v4355
    %v4357 = vpop.f32.mrb[0].mxu0
    %v4358 = vadd.f32 0.0, %v4357
    %v4359 = vpop.f32.mrb[0].mxu0
    %v4360 = vadd.f32 0.0, %v4359
    %v4361 = vpop.f32.mrb[0].mxu0
    %v4362 = vadd.f32 0.0, %v4361
    %4363 = vmatprep.mubr.bf16.mxu0 0
    %4364 = vmatmul.mubr.bf16.gmra.mrb[0].mxu0 %v4183
    %v4365 = vpop.f32.mrb[0].mxu0
    %v4366 = vadd.f32 0.0, %v4365
    %v4367 = vpop.f32.mrb[0].mxu0
    %v4368 = vadd.f32 0.0, %v4367
    %v4369 = vpop.f32.mrb[0].mxu0
    %v4370 = vadd.f32 0.0, %v4369
    %v4371 = vpop.f32.mrb[0].mxu0
    %v4372 = vadd.f32 0.0, %v4371
    %4373 = vdwg.mxu0
    %v4374 = vadd.f32 %v3239, %v4220
    %v4375 = vadd.f32 %v3240, %v4222
    %v4376 = vadd.f32 %v3241, %v4283
    %v4377 = vadd.f32 %v3242, %v4285
    %v4378 = vadd.f32 %v3243, %v4346
    %v4379 = vadd.f32 %v3244, %v4348
    %v4380 = vadd.f32 %v3245, %v4224
    %v4381 = vadd.f32 %v3246, %v4226
    %v4382 = vadd.f32 %v3247, %v4287
    %v4383 = vadd.f32 %v3248, %v4289
    %v4384 = vadd.f32 %v3249, %v4350
    %v4385 = vadd.f32 %v3250, %v4352
    %v4386 = vadd.f32 %v3251, %v4230
    %v4387 = vadd.f32 %v3252, %v4232
    %v4388 = vadd.f32 %v3253, %v4293
    %v4389 = vadd.f32 %v3254, %v4295
    %v4390 = vadd.f32 %v3255, %v4356
    %v4391 = vadd.f32 %v3256, %v4358
    %v4392 = vadd.f32 %v3257, %v4234
    %v4393 = vadd.f32 %v3258, %v4236
    %v4394 = vadd.f32 %v3259, %v4297
    %v4395 = vadd.f32 %v3260, %v4299
    %v4396 = vadd.f32 %v3261, %v4360
    %v4397 = vadd.f32 %v3262, %v4362
    %v4398 = vadd.f32 %v3263, %v4240
    %v4399 = vadd.f32 %v3264, %v4242
    %v4400 = vadd.f32 %v3265, %v4303
    %v4401 = vadd.f32 %v3266, %v4305
    %v4402 = vadd.f32 %v3267, %v4366
    %v4403 = vadd.f32 %v3268, %v4368
    %v4404 = vadd.f32 %v3269, %v4244
    %v4405 = vadd.f32 %v3270, %v4246
    %v4406 = vadd.f32 %v3271, %v4307
    %v4407 = vadd.f32 %v3272, %v4309
    %v4408 = vadd.f32 %v3273, %v4370
    %v4409 = vadd.f32 %v3274, %v4372
    %s4410 = scalar_lea.vmem [#allocation2], 1056
    %v4411 = vld [vmem:[%s4410] sm:$0xff]
    %v4412 = vld [vmem:[%s4410 + $0x8] sm:$0xff]
    %v4413 = vld [vmem:[%s4410 + $0x10] sm:$0xff]
    %v4414 = vld [vmem:[%s4410 + $0x18] sm:$0xff]
    %v4415 = vld [vmem:[%s4410 + $0x20] sm:$0xff]
    %v4416 = vld [vmem:[%s4410 + $0x28] sm:$0xff]
    %v4417 = vld [vmem:[%s4410 + $0x30] sm:$0xff]
    %v4418 = vld [vmem:[%s4410 + $0x38] sm:$0xff]
    %v4419 = vld [vmem:[%s4410 + $0x40] sm:$0xff]
    %v4420 = vld [vmem:[%s4410 + $0x48] sm:$0xff]
    %v4421 = vld [vmem:[%s4410 + $0x50] sm:$0xff]
    %v4422 = vld [vmem:[%s4410 + $0x58] sm:$0xff]
    %v4423 = vld [vmem:[%s4410 + $0x60] sm:$0xff]
    %v4424 = vld [vmem:[%s4410 + $0x68] sm:$0xff]
    %v4425 = vld [vmem:[%s4410 + $0x70] sm:$0xff]
    %v4426 = vld [vmem:[%s4410 + $0x78] sm:$0xff]
    %v4427 = vld [vmem:[%s4410 + $0x80] sm:$0xff]
    %v4428 = vld [vmem:[%s4410 + $0x88] sm:$0xff]
    %v4429 = vld [vmem:[%s4410 + $0x90] sm:$0xff]
    %v4430 = vld [vmem:[%s4410 + $0x98] sm:$0xff]
    %v4431 = vld [vmem:[%s4410 + $0xa0] sm:$0xff]
    %v4432 = vld [vmem:[%s4410 + $0xa8] sm:$0xff]
    %v4433 = vld [vmem:[%s4410 + $0xb0] sm:$0xff]
    %v4434 = vld [vmem:[%s4410 + $0xb8] sm:$0xff]
    %v4435 = vld [vmem:[%s4410 + $0xc0] sm:$0xff]
    %v4436 = vld [vmem:[%s4410 + $0xc8] sm:$0xff]
    %v4437 = vld [vmem:[%s4410 + $0xd0] sm:$0xff]
    %v4438 = vld [vmem:[%s4410 + $0xd8] sm:$0xff]
    %v4439 = vld [vmem:[%s4410 + $0xe0] sm:$0xff]
    %v4440 = vld [vmem:[%s4410 + $0xe8] sm:$0xff]
    %v4441 = vld [vmem:[%s4410 + $0xf0] sm:$0x33]
    %v4442 = vld [vmem:[%s4410 + $0xf8] sm:$0x33]
    %v4443 = vld [vmem:[%s4410 + $0x100] sm:$0x33]
    %v4477 = vunpack.c.l.b16 %v4411
    %v4478 = vunpack.c.h.b16 %v4411
    %v4479 = vunpack.c.l.b16 %v4412
    %v4480 = vunpack.c.h.b16 %v4412
    %v4481 = vunpack.c.l.b16 %v4413
    %v4482 = vunpack.c.h.b16 %v4413
    %v4483 = vunpack.c.l.b16 %v4414
    %v4484 = vunpack.c.h.b16 %v4414
    %v4485 = vunpack.c.l.b16 %v4415
    %v4486 = vunpack.c.h.b16 %v4415
    %v4487 = vunpack.c.l.b16 %v4416
    %v4488 = vunpack.c.h.b16 %v4416
    %v4489 = vunpack.c.l.b16 %v4417
    %v4490 = vunpack.c.h.b16 %v4417
    %v4491 = vunpack.c.l.b16 %v4418
    %v4492 = vunpack.c.h.b16 %v4418
    %v4493 = vunpack.c.l.b16 %v4419
    %v4494 = vunpack.c.h.b16 %v4419
    %v4495 = vunpack.c.l.b16 %v4420
    %v4496 = vunpack.c.h.b16 %v4420
    %v4497 = vunpack.c.l.b16 %v4421
    %v4498 = vunpack.c.h.b16 %v4421
    %v4499 = vunpack.c.l.b16 %v4422
    %v4500 = vunpack.c.h.b16 %v4422
    %v4501 = vunpack.c.l.b16 %v4423
    %v4502 = vunpack.c.h.b16 %v4423
    %v4503 = vunpack.c.l.b16 %v4424
    %v4504 = vunpack.c.h.b16 %v4424
    %v4505 = vunpack.c.l.b16 %v4425
    %v4506 = vunpack.c.h.b16 %v4425
    %v4507 = vunpack.c.l.b16 %v4426
    %v4508 = vunpack.c.h.b16 %v4426
    %v4509 = vunpack.c.l.b16 %v4427
    %v4510 = vunpack.c.h.b16 %v4427
    %v4511 = vunpack.c.l.b16 %v4428
    %v4512 = vunpack.c.h.b16 %v4428
    %v4513 = vunpack.c.l.b16 %v4429
    %v4514 = vunpack.c.h.b16 %v4429
    %v4515 = vunpack.c.l.b16 %v4430
    %v4516 = vunpack.c.h.b16 %v4430
    %v4517 = vunpack.c.l.b16 %v4431
    %v4518 = vunpack.c.h.b16 %v4431
    %v4519 = vunpack.c.l.b16 %v4432
    %v4520 = vunpack.c.h.b16 %v4432
    %v4521 = vunpack.c.l.b16 %v4433
    %v4522 = vunpack.c.h.b16 %v4433
    %v4523 = vunpack.c.l.b16 %v4434
    %v4524 = vunpack.c.h.b16 %v4434
    %v4525 = vunpack.c.l.b16 %v4435
    %v4526 = vunpack.c.h.b16 %v4435
    %v4527 = vunpack.c.l.b16 %v4436
    %v4528 = vunpack.c.h.b16 %v4436
    %v4529 = vunpack.c.l.b16 %v4437
    %v4530 = vunpack.c.h.b16 %v4437
    %v4531 = vunpack.c.l.b16 %v4438
    %v4532 = vunpack.c.h.b16 %v4438
    %v4533 = vunpack.c.l.b16 %v4439
    %v4534 = vunpack.c.h.b16 %v4439
    %v4535 = vunpack.c.l.b16 %v4440
    %v4536 = vunpack.c.h.b16 %v4440
    %v4537 = vunpack.c.l.b16 %v4441
    %v4538 = vunpack.c.h.b16 %v4441
    %v4539 = vunpack.c.l.b16 %v4442
    %v4540 = vunpack.c.h.b16 %v4442
    %v4541 = vunpack.c.l.b16 %v4443
    %v4542 = vunpack.c.h.b16 %v4443
    %v4543 = vpack.c.b16 %v4483, %v4477
    %v4544 = vpack.c.b16 %v4484, %v4478
    %v4545 = vpack.c.b16 %v4485, %v4479
    %v4546 = vpack.c.b16 %v4486, %v4480
    %v4547 = vpack.c.b16 %v4487, %v4481
    %v4548 = vpack.c.b16 %v4488, %v4482
    %v4549 = vpack.c.b16 %v4495, %v4489
    %v4550 = vpack.c.b16 %v4496, %v4490
    %v4551 = vpack.c.b16 %v4497, %v4491
    %v4552 = vpack.c.b16 %v4498, %v4492
    %v4553 = vpack.c.b16 %v4499, %v4493
    %v4554 = vpack.c.b16 %v4500, %v4494
    %v4555 = vpack.c.b16 %v4507, %v4501
    %v4556 = vpack.c.b16 %v4508, %v4502
    %v4557 = vpack.c.b16 %v4509, %v4503
    %v4558 = vpack.c.b16 %v4510, %v4504
    %v4559 = vpack.c.b16 %v4511, %v4505
    %v4560 = vpack.c.b16 %v4512, %v4506
    %v4561 = vpack.c.b16 %v4519, %v4513
    %v4562 = vpack.c.b16 %v4520, %v4514
    %v4563 = vpack.c.b16 %v4521, %v4515
    %v4564 = vpack.c.b16 %v4522, %v4516
    %v4565 = vpack.c.b16 %v4523, %v4517
    %v4566 = vpack.c.b16 %v4524, %v4518
    %v4567 = vpack.c.b16 %v4531, %v4525
    %v4568 = vpack.c.b16 %v4532, %v4526
    %v4569 = vpack.c.b16 %v4533, %v4527
    %v4570 = vpack.c.b16 %v4534, %v4528
    %v4571 = vpack.c.b16 %v4535, %v4529
    %v4572 = vpack.c.b16 %v4536, %v4530
    %v4573 = vpack.c.b16 %v4537, %v4537
    %v4574 = vpack.c.b16 %v4538, %v4538
    %v4575 = vpack.c.b16 %v4539, %v4539
    %v4576 = vpack.c.b16 %v4540, %v4540
    %v4577 = vpack.c.b16 %v4541, %v4541
    %v4578 = vpack.c.b16 %v4542, %v4542
    %v4610 = vsel %vm381, %v4573, 0
    %v4613 = vsel %vm381, %v4574, 0
    %v4616 = vsel %vm381, %v4575, 0
    %v4619 = vsel %vm381, %v4576, 0
    %v4622 = vsel %vm381, %v4577, 0
    %v4625 = vsel %vm381, %v4578, 0
    %4627 = vmatprep.subr.bf16.mxu0 %v4544
    %4628 = vmatpush1.bf16.msra.mxu0 %v4543
    %4629 = vmatprep.subr.bf16.mxu0 %v4550
    %4630 = vmatpush1.bf16.msra.mxu0 %v4549
    %4631 = vmatprep.subr.bf16.mxu0 %v4556
    %4632 = vmatpush1.bf16.msra.mxu0 %v4555
    %4633 = vmatprep.subr.bf16.mxu0 %v4562
    %4634 = vmatpush1.bf16.msra.mxu0 %v4561
    %4635 = vmatprep.subr.bf16.mxu0 %v4568
    %4636 = vmatpush1.bf16.msra.mxu0 %v4567
    %4637 = vmatprep.subr.bf16.mxu0 %v4613
    %4638 = vmatpush1.bf16.msra.mxu0 %v4610
    %4639 = vmatprep.subr.bf16.mxu0 0
    %4640 = vmatpush1.bf16.msra.mxu0 0
    %4641 = vmatprep.subr.bf16.mxu0 0
    %4642 = vmatpush1.bf16.msra.mxu0 0
    %4643 = vmatprep.subr.bf16.mxu0 0
    %4644 = vmatpush1.bf16.msra.mxu0 0
    %4645 = vmatprep.subr.bf16.mxu0 0
    %4646 = vmatpush1.bf16.msra.mxu0 0
    %4647 = vmatprep.subr.bf16.mxu0 0
    %4648 = vmatpush1.bf16.msra.mxu0 0
    %4649 = vmatprep.subr.bf16.mxu0 0
    %4650 = vmatpush1.bf16.msra.mxu0 0
    %4651 = vmatprep.subr.bf16.mxu0 0
    %4652 = vmatpush1.bf16.msra.mxu0 0
    %4653 = vmatprep.subr.bf16.mxu0 0
    %4654 = vmatpush1.bf16.msra.mxu0 0
    %4655 = vmatprep.subr.bf16.mxu0 0
    %4656 = vmatpush1.bf16.msra.mxu0 0
    %4657 = vmatprep.subr.bf16.mxu0 0
    %4658 = vmatpush1.bf16.msra.mxu0 0
    %4659 = vmatprep.mubr.bf16.mxu0 0
    %4660 = vmatmul.mubr.bf16.gmra.mrb[0].mxu0 %v1754
    %v4661 = vpop.f32.mrb[0].mxu0
    %v4662 = vadd.f32 0.0, %v4661
    %v4663 = vpop.f32.mrb[0].mxu0
    %v4664 = vadd.f32 0.0, %v4663
    %v4665 = vpop.f32.mrb[0].mxu0
    %v4666 = vadd.f32 0.0, %v4665
    %v4667 = vpop.f32.mrb[0].mxu0
    %v4668 = vadd.f32 0.0, %v4667
    %4669 = vmatprep.mubr.bf16.mxu0 0
    %4670 = vmatmul.mubr.bf16.gmra.mrb[0].mxu0 %v1757
    %v4671 = vpop.f32.mrb[0].mxu0
    %v4672 = vadd.f32 0.0, %v4671
    %v4673 = vpop.f32.mrb[0].mxu0
    %v4674 = vadd.f32 0.0, %v4673
    %v4675 = vpop.f32.mrb[0].mxu0
    %v4676 = vadd.f32 0.0, %v4675
    %v4677 = vpop.f32.mrb[0].mxu0
    %v4678 = vadd.f32 0.0, %v4677
    %4679 = vmatprep.mubr.bf16.mxu0 0
    %4680 = vmatmul.mubr.bf16.gmra.mrb[0].mxu0 %v1760
    %v4681 = vpop.f32.mrb[0].mxu0
    %v4682 = vadd.f32 0.0, %v4681
    %v4683 = vpop.f32.mrb[0].mxu0
    %v4684 = vadd.f32 0.0, %v4683
    %v4685 = vpop.f32.mrb[0].mxu0
    %v4686 = vadd.f32 0.0, %v4685
    %v4687 = vpop.f32.mrb[0].mxu0
    %v4688 = vadd.f32 0.0, %v4687
    %4689 = vdwg.mxu0
    %4690 = vmatprep.subr.bf16.mxu0 %v4546
    %4691 = vmatpush1.bf16.msra.mxu0 %v4545
    %4692 = vmatprep.subr.bf16.mxu0 %v4552
    %4693 = vmatpush1.bf16.msra.mxu0 %v4551
    %4694 = vmatprep.subr.bf16.mxu0 %v4558
    %4695 = vmatpush1.bf16.msra.mxu0 %v4557
    %4696 = vmatprep.subr.bf16.mxu0 %v4564
    %4697 = vmatpush1.bf16.msra.mxu0 %v4563
    %4698 = vmatprep.subr.bf16.mxu0 %v4570
    %4699 = vmatpush1.bf16.msra.mxu0 %v4569
    %4700 = vmatprep.subr.bf16.mxu0 %v4619
    %4701 = vmatpush1.bf16.msra.mxu0 %v4616
    %4702 = vmatprep.subr.bf16.mxu0 0
    %4703 = vmatpush1.bf16.msra.mxu0 0
    %4704 = vmatprep.subr.bf16.mxu0 0
    %4705 = vmatpush1.bf16.msra.mxu0 0
    %4706 = vmatprep.subr.bf16.mxu0 0
    %4707 = vmatpush1.bf16.msra.mxu0 0
    %4708 = vmatprep.subr.bf16.mxu0 0
    %4709 = vmatpush1.bf16.msra.mxu0 0
    %4710 = vmatprep.subr.bf16.mxu0 0
    %4711 = vmatpush1.bf16.msra.mxu0 0
    %4712 = vmatprep.subr.bf16.mxu0 0
    %4713 = vmatpush1.bf16.msra.mxu0 0
    %4714 = vmatprep.subr.bf16.mxu0 0
    %4715 = vmatpush1.bf16.msra.mxu0 0
    %4716 = vmatprep.subr.bf16.mxu0 0
    %4717 = vmatpush1.bf16.msra.mxu0 0
    %4718 = vmatprep.subr.bf16.mxu0 0
    %4719 = vmatpush1.bf16.msra.mxu0 0
    %4720 = vmatprep.subr.bf16.mxu0 0
    %4721 = vmatpush1.bf16.msra.mxu0 0
    %4722 = vmatprep.mubr.bf16.mxu0 0
    %4723 = vmatmul.mubr.bf16.gmra.mrb[0].mxu0 %v1754
    %v4724 = vpop.f32.mrb[0].mxu0
    %v4725 = vadd.f32 0.0, %v4724
    %v4726 = vpop.f32.mrb[0].mxu0
    %v4727 = vadd.f32 0.0, %v4726
    %v4728 = vpop.f32.mrb[0].mxu0
    %v4729 = vadd.f32 0.0, %v4728
    %v4730 = vpop.f32.mrb[0].mxu0
    %v4731 = vadd.f32 0.0, %v4730
    %4732 = vmatprep.mubr.bf16.mxu0 0
    %4733 = vmatmul.mubr.bf16.gmra.mrb[0].mxu0 %v1757
    %v4734 = vpop.f32.mrb[0].mxu0
    %v4735 = vadd.f32 0.0, %v4734
    %v4736 = vpop.f32.mrb[0].mxu0
    %v4737 = vadd.f32 0.0, %v4736
    %v4738 = vpop.f32.mrb[0].mxu0
    %v4739 = vadd.f32 0.0, %v4738
    %v4740 = vpop.f32.mrb[0].mxu0
    %v4741 = vadd.f32 0.0, %v4740
    %4742 = vmatprep.mubr.bf16.mxu0 0
    %4743 = vmatmul.mubr.bf16.gmra.mrb[0].mxu0 %v1760
    %v4744 = vpop.f32.mrb[0].mxu0
    %v4745 = vadd.f32 0.0, %v4744
    %v4746 = vpop.f32.mrb[0].mxu0
    %v4747 = vadd.f32 0.0, %v4746
    %v4748 = vpop.f32.mrb[0].mxu0
    %v4749 = vadd.f32 0.0, %v4748
    %v4750 = vpop.f32.mrb[0].mxu0
    %v4751 = vadd.f32 0.0, %v4750
    %4752 = vdwg.mxu0
    %4753 = vmatprep.subr.bf16.mxu0 %v4548
    %4754 = vmatpush1.bf16.msra.mxu0 %v4547
    %4755 = vmatprep.subr.bf16.mxu0 %v4554
    %4756 = vmatpush1.bf16.msra.mxu0 %v4553
    %4757 = vmatprep.subr.bf16.mxu0 %v4560
    %4758 = vmatpush1.bf16.msra.mxu0 %v4559
    %4759 = vmatprep.subr.bf16.mxu0 %v4566
    %4760 = vmatpush1.bf16.msra.mxu0 %v4565
    %4761 = vmatprep.subr.bf16.mxu0 %v4572
    %4762 = vmatpush1.bf16.msra.mxu0 %v4571
    %4763 = vmatprep.subr.bf16.mxu0 %v4625
    %4764 = vmatpush1.bf16.msra.mxu0 %v4622
    %4765 = vmatprep.subr.bf16.mxu0 0
    %4766 = vmatpush1.bf16.msra.mxu0 0
    %4767 = vmatprep.subr.bf16.mxu0 0
    %4768 = vmatpush1.bf16.msra.mxu0 0
    %4769 = vmatprep.subr.bf16.mxu0 0
    %4770 = vmatpush1.bf16.msra.mxu0 0
    %4771 = vmatprep.subr.bf16.mxu0 0
    %4772 = vmatpush1.bf16.msra.mxu0 0
    %4773 = vmatprep.subr.bf16.mxu0 0
    %4774 = vmatpush1.bf16.msra.mxu0 0
    %4775 = vmatprep.subr.bf16.mxu0 0
    %4776 = vmatpush1.bf16.msra.mxu0 0
    %4777 = vmatprep.subr.bf16.mxu0 0
    %4778 = vmatpush1.bf16.msra.mxu0 0
    %4779 = vmatprep.subr.bf16.mxu0 0
    %4780 = vmatpush1.bf16.msra.mxu0 0
    %4781 = vmatprep.subr.bf16.mxu0 0
    %4782 = vmatpush1.bf16.msra.mxu0 0
    %4783 = vmatprep.subr.bf16.mxu0 0
    %4784 = vmatpush1.bf16.msra.mxu0 0
    %4785 = vmatprep.mubr.bf16.mxu0 0
    %4786 = vmatmul.mubr.bf16.gmra.mrb[0].mxu0 %v1754
    %v4787 = vpop.f32.mrb[0].mxu0
    %v4788 = vadd.f32 0.0, %v4787
    %v4789 = vpop.f32.mrb[0].mxu0
    %v4790 = vadd.f32 0.0, %v4789
    %v4791 = vpop.f32.mrb[0].mxu0
    %v4792 = vadd.f32 0.0, %v4791
    %v4793 = vpop.f32.mrb[0].mxu0
    %v4794 = vadd.f32 0.0, %v4793
    %4795 = vmatprep.mubr.bf16.mxu0 0
    %4796 = vmatmul.mubr.bf16.gmra.mrb[0].mxu0 %v1757
    %v4797 = vpop.f32.mrb[0].mxu0
    %v4798 = vadd.f32 0.0, %v4797
    %v4799 = vpop.f32.mrb[0].mxu0
    %v4800 = vadd.f32 0.0, %v4799
    %v4801 = vpop.f32.mrb[0].mxu0
    %v4802 = vadd.f32 0.0, %v4801
    %v4803 = vpop.f32.mrb[0].mxu0
    %v4804 = vadd.f32 0.0, %v4803
    %4805 = vmatprep.mubr.bf16.mxu0 0
    %4806 = vmatmul.mubr.bf16.gmra.mrb[0].mxu0 %v1760
    %v4807 = vpop.f32.mrb[0].mxu0
    %v4808 = vadd.f32 0.0, %v4807
    %v4809 = vpop.f32.mrb[0].mxu0
    %v4810 = vadd.f32 0.0, %v4809
    %v4811 = vpop.f32.mrb[0].mxu0
    %v4812 = vadd.f32 0.0, %v4811
    %v4813 = vpop.f32.mrb[0].mxu0
    %v4814 = vadd.f32 0.0, %v4813
    %4815 = vdwg.mxu0
    %v4816 = vadd.f32 %v3681, %v4662
    %v4817 = vadd.f32 %v3682, %v4664
    %v4818 = vadd.f32 %v3683, %v4725
    %v4819 = vadd.f32 %v3684, %v4727
    %v4820 = vadd.f32 %v3685, %v4788
    %v4821 = vadd.f32 %v3686, %v4790
    %v4822 = vadd.f32 %v3687, %v4666
    %v4823 = vadd.f32 %v3688, %v4668
    %v4824 = vadd.f32 %v3689, %v4729
    %v4825 = vadd.f32 %v3690, %v4731
    %v4826 = vadd.f32 %v3691, %v4792
    %v4827 = vadd.f32 %v3692, %v4794
    %v4828 = vadd.f32 %v3693, %v4672
    %v4829 = vadd.f32 %v3694, %v4674
    %v4830 = vadd.f32 %v3695, %v4735
    %v4831 = vadd.f32 %v3696, %v4737
    %v4832 = vadd.f32 %v3697, %v4798
    %v4833 = vadd.f32 %v3698, %v4800
    %v4834 = vadd.f32 %v3699, %v4676
    %v4835 = vadd.f32 %v3700, %v4678
    %v4836 = vadd.f32 %v3701, %v4739
    %v4837 = vadd.f32 %v3702, %v4741
    %v4838 = vadd.f32 %v3703, %v4802
    %v4839 = vadd.f32 %v3704, %v4804
    %v4840 = vadd.f32 %v3705, %v4682
    %v4841 = vadd.f32 %v3706, %v4684
    %v4842 = vadd.f32 %v3707, %v4745
    %v4843 = vadd.f32 %v3708, %v4747
    %v4844 = vadd.f32 %v3709, %v4808
    %v4845 = vadd.f32 %v3710, %v4810
    %v4846 = vadd.f32 %v3711, %v4686
    %v4847 = vadd.f32 %v3712, %v4688
    %v4848 = vadd.f32 %v3713, %v4749
    %v4849 = vadd.f32 %v3714, %v4751
    %v4850 = vadd.f32 %v3715, %v4812
    %v4851 = vadd.f32 %v3716, %v4814
    %4852 = vmatprep.subr.bf16.mxu0 %v4544
    %4853 = vmatpush1.bf16.msra.mxu0 %v4543
    %4854 = vmatprep.subr.bf16.mxu0 %v4550
    %4855 = vmatpush1.bf16.msra.mxu0 %v4549
    %4856 = vmatprep.subr.bf16.mxu0 %v4556
    %4857 = vmatpush1.bf16.msra.mxu0 %v4555
    %4858 = vmatprep.subr.bf16.mxu0 %v4562
    %4859 = vmatpush1.bf16.msra.mxu0 %v4561
    %4860 = vmatprep.subr.bf16.mxu0 %v4568
    %4861 = vmatpush1.bf16.msra.mxu0 %v4567
    %4862 = vmatprep.subr.bf16.mxu0 %v4613
    %4863 = vmatpush1.bf16.msra.mxu0 %v4610
    %4864 = vmatprep.subr.bf16.mxu0 0
    %4865 = vmatpush1.bf16.msra.mxu0 0
    %4866 = vmatprep.subr.bf16.mxu0 0
    %4867 = vmatpush1.bf16.msra.mxu0 0
    %4868 = vmatprep.subr.bf16.mxu0 0
    %4869 = vmatpush1.bf16.msra.mxu0 0
    %4870 = vmatprep.subr.bf16.mxu0 0
    %4871 = vmatpush1.bf16.msra.mxu0 0
    %4872 = vmatprep.subr.bf16.mxu0 0
    %4873 = vmatpush1.bf16.msra.mxu0 0
    %4874 = vmatprep.subr.bf16.mxu0 0
    %4875 = vmatpush1.bf16.msra.mxu0 0
    %4876 = vmatprep.subr.bf16.mxu0 0
    %4877 = vmatpush1.bf16.msra.mxu0 0
    %4878 = vmatprep.subr.bf16.mxu0 0
    %4879 = vmatpush1.bf16.msra.mxu0 0
    %4880 = vmatprep.subr.bf16.mxu0 0
    %4881 = vmatpush1.bf16.msra.mxu0 0
    %4882 = vmatprep.subr.bf16.mxu0 0
    %4883 = vmatpush1.bf16.msra.mxu0 0
    %4884 = vmatprep.mubr.bf16.mxu0 0
    %4885 = vmatmul.mubr.bf16.gmra.mrb[0].mxu0 %v3042
    %v4886 = vpop.f32.mrb[0].mxu0
    %v4887 = vadd.f32 0.0, %v4886
    %v4888 = vpop.f32.mrb[0].mxu0
    %v4889 = vadd.f32 0.0, %v4888
    %v4890 = vpop.f32.mrb[0].mxu0
    %v4891 = vadd.f32 0.0, %v4890
    %v4892 = vpop.f32.mrb[0].mxu0
    %v4893 = vadd.f32 0.0, %v4892
    %4894 = vmatprep.mubr.bf16.mxu0 0
    %4895 = vmatmul.mubr.bf16.gmra.mrb[0].mxu0 %v3045
    %v4896 = vpop.f32.mrb[0].mxu0
    %v4897 = vadd.f32 0.0, %v4896
    %v4898 = vpop.f32.mrb[0].mxu0
    %v4899 = vadd.f32 0.0, %v4898
    %v4900 = vpop.f32.mrb[0].mxu0
    %v4901 = vadd.f32 0.0, %v4900
    %v4902 = vpop.f32.mrb[0].mxu0
    %v4903 = vadd.f32 0.0, %v4902
    %4904 = vmatprep.mubr.bf16.mxu0 0
    %4905 = vmatmul.mubr.bf16.gmra.mrb[0].mxu0 %v3048
    %v4906 = vpop.f32.mrb[0].mxu0
    %v4907 = vadd.f32 0.0, %v4906
    %v4908 = vpop.f32.mrb[0].mxu0
    %v4909 = vadd.f32 0.0, %v4908
    %v4910 = vpop.f32.mrb[0].mxu0
    %v4911 = vadd.f32 0.0, %v4910
    %v4912 = vpop.f32.mrb[0].mxu0
    %v4913 = vadd.f32 0.0, %v4912
    %4914 = vdwg.mxu0
    %4915 = vmatprep.subr.bf16.mxu0 %v4546
    %4916 = vmatpush1.bf16.msra.mxu0 %v4545
    %4917 = vmatprep.subr.bf16.mxu0 %v4552
    %4918 = vmatpush1.bf16.msra.mxu0 %v4551
    %4919 = vmatprep.subr.bf16.mxu0 %v4558
    %4920 = vmatpush1.bf16.msra.mxu0 %v4557
    %4921 = vmatprep.subr.bf16.mxu0 %v4564
    %4922 = vmatpush1.bf16.msra.mxu0 %v4563
    %4923 = vmatprep.subr.bf16.mxu0 %v4570
    %4924 = vmatpush1.bf16.msra.mxu0 %v4569
    %4925 = vmatprep.subr.bf16.mxu0 %v4619
    %4926 = vmatpush1.bf16.msra.mxu0 %v4616
    %4927 = vmatprep.subr.bf16.mxu0 0
    %4928 = vmatpush1.bf16.msra.mxu0 0
    %4929 = vmatprep.subr.bf16.mxu0 0
    %4930 = vmatpush1.bf16.msra.mxu0 0
    %4931 = vmatprep.subr.bf16.mxu0 0
    %4932 = vmatpush1.bf16.msra.mxu0 0
    %4933 = vmatprep.subr.bf16.mxu0 0
    %4934 = vmatpush1.bf16.msra.mxu0 0
    %4935 = vmatprep.subr.bf16.mxu0 0
    %4936 = vmatpush1.bf16.msra.mxu0 0
    %4937 = vmatprep.subr.bf16.mxu0 0
    %4938 = vmatpush1.bf16.msra.mxu0 0
    %4939 = vmatprep.subr.bf16.mxu0 0
    %4940 = vmatpush1.bf16.msra.mxu0 0
    %4941 = vmatprep.subr.bf16.mxu0 0
    %4942 = vmatpush1.bf16.msra.mxu0 0
    %4943 = vmatprep.subr.bf16.mxu0 0
    %4944 = vmatpush1.bf16.msra.mxu0 0
    %4945 = vmatprep.subr.bf16.mxu0 0
    %4946 = vmatpush1.bf16.msra.mxu0 0
    %4947 = vmatprep.mubr.bf16.mxu0 0
    %4948 = vmatmul.mubr.bf16.gmra.mrb[0].mxu0 %v3042
    %v4949 = vpop.f32.mrb[0].mxu0
    %v4950 = vadd.f32 0.0, %v4949
    %v4951 = vpop.f32.mrb[0].mxu0
    %v4952 = vadd.f32 0.0, %v4951
    %v4953 = vpop.f32.mrb[0].mxu0
    %v4954 = vadd.f32 0.0, %v4953
    %v4955 = vpop.f32.mrb[0].mxu0
    %v4956 = vadd.f32 0.0, %v4955
    %4957 = vmatprep.mubr.bf16.mxu0 0
    %4958 = vmatmul.mubr.bf16.gmra.mrb[0].mxu0 %v3045
    %v4959 = vpop.f32.mrb[0].mxu0
    %v4960 = vadd.f32 0.0, %v4959
    %v4961 = vpop.f32.mrb[0].mxu0
    %v4962 = vadd.f32 0.0, %v4961
    %v4963 = vpop.f32.mrb[0].mxu0
    %v4964 = vadd.f32 0.0, %v4963
    %v4965 = vpop.f32.mrb[0].mxu0
    %v4966 = vadd.f32 0.0, %v4965
    %4967 = vmatprep.mubr.bf16.mxu0 0
    %4968 = vmatmul.mubr.bf16.gmra.mrb[0].mxu0 %v3048
    %v4969 = vpop.f32.mrb[0].mxu0
    %v4970 = vadd.f32 0.0, %v4969
    %v4971 = vpop.f32.mrb[0].mxu0
    %v4972 = vadd.f32 0.0, %v4971
    %v4973 = vpop.f32.mrb[0].mxu0
    %v4974 = vadd.f32 0.0, %v4973
    %v4975 = vpop.f32.mrb[0].mxu0
    %v4976 = vadd.f32 0.0, %v4975
    %4977 = vdwg.mxu0
    %4978 = vmatprep.subr.bf16.mxu0 %v4548
    %4979 = vmatpush1.bf16.msra.mxu0 %v4547
    %4980 = vmatprep.subr.bf16.mxu0 %v4554
    %4981 = vmatpush1.bf16.msra.mxu0 %v4553
    %4982 = vmatprep.subr.bf16.mxu0 %v4560
    %4983 = vmatpush1.bf16.msra.mxu0 %v4559
    %4984 = vmatprep.subr.bf16.mxu0 %v4566
    %4985 = vmatpush1.bf16.msra.mxu0 %v4565
    %4986 = vmatprep.subr.bf16.mxu0 %v4572
    %4987 = vmatpush1.bf16.msra.mxu0 %v4571
    %4988 = vmatprep.subr.bf16.mxu0 %v4625
    %4989 = vmatpush1.bf16.msra.mxu0 %v4622
    %4990 = vmatprep.subr.bf16.mxu0 0
    %4991 = vmatpush1.bf16.msra.mxu0 0
    %4992 = vmatprep.subr.bf16.mxu0 0
    %4993 = vmatpush1.bf16.msra.mxu0 0
    %4994 = vmatprep.subr.bf16.mxu0 0
    %4995 = vmatpush1.bf16.msra.mxu0 0
    %4996 = vmatprep.subr.bf16.mxu0 0
    %4997 = vmatpush1.bf16.msra.mxu0 0
    %4998 = vmatprep.subr.bf16.mxu0 0
    %4999 = vmatpush1.bf16.msra.mxu0 0
    %5000 = vmatprep.subr.bf16.mxu0 0
    %5001 = vmatpush1.bf16.msra.mxu0 0
    %5002 = vmatprep.subr.bf16.mxu0 0
    %5003 = vmatpush1.bf16.msra.mxu0 0
    %5004 = vmatprep.subr.bf16.mxu0 0
    %5005 = vmatpush1.bf16.msra.mxu0 0
    %5006 = vmatprep.subr.bf16.mxu0 0
    %5007 = vmatpush1.bf16.msra.mxu0 0
    %5008 = vmatprep.subr.bf16.mxu0 0
    %5009 = vmatpush1.bf16.msra.mxu0 0
    %5010 = vmatprep.mubr.bf16.mxu0 0
    %5011 = vmatmul.mubr.bf16.gmra.mrb[0].mxu0 %v3042
    %v5012 = vpop.f32.mrb[0].mxu0
    %v5013 = vadd.f32 0.0, %v5012
    %v5014 = vpop.f32.mrb[0].mxu0
    %v5015 = vadd.f32 0.0, %v5014
    %v5016 = vpop.f32.mrb[0].mxu0
    %v5017 = vadd.f32 0.0, %v5016
    %v5018 = vpop.f32.mrb[0].mxu0
    %v5019 = vadd.f32 0.0, %v5018
    %5020 = vmatprep.mubr.bf16.mxu0 0
    %5021 = vmatmul.mubr.bf16.gmra.mrb[0].mxu0 %v3045
    %v5022 = vpop.f32.mrb[0].mxu0
    %v5023 = vadd.f32 0.0, %v5022
    %v5024 = vpop.f32.mrb[0].mxu0
    %v5025 = vadd.f32 0.0, %v5024
    %v5026 = vpop.f32.mrb[0].mxu0
    %v5027 = vadd.f32 0.0, %v5026
    %v5028 = vpop.f32.mrb[0].mxu0
    %v5029 = vadd.f32 0.0, %v5028
    %5030 = vmatprep.mubr.bf16.mxu0 0
    %5031 = vmatmul.mubr.bf16.gmra.mrb[0].mxu0 %v3048
    %v5032 = vpop.f32.mrb[0].mxu0
    %v5033 = vadd.f32 0.0, %v5032
    %v5034 = vpop.f32.mrb[0].mxu0
    %v5035 = vadd.f32 0.0, %v5034
    %v5036 = vpop.f32.mrb[0].mxu0
    %v5037 = vadd.f32 0.0, %v5036
    %v5038 = vpop.f32.mrb[0].mxu0
    %v5039 = vadd.f32 0.0, %v5038
    %5040 = vdwg.mxu0
    %v5041 = vadd.f32 %v3906, %v4887
    %v5042 = vadd.f32 %v3907, %v4889
    %v5043 = vadd.f32 %v3908, %v4950
    %v5044 = vadd.f32 %v3909, %v4952
    %v5045 = vadd.f32 %v3910, %v5013
    %v5046 = vadd.f32 %v3911, %v5015
    %v5047 = vadd.f32 %v3912, %v4891
    %v5048 = vadd.f32 %v3913, %v4893
    %v5049 = vadd.f32 %v3914, %v4954
    %v5050 = vadd.f32 %v3915, %v4956
    %v5051 = vadd.f32 %v3916, %v5017
    %v5052 = vadd.f32 %v3917, %v5019
    %v5053 = vadd.f32 %v3918, %v4897
    %v5054 = vadd.f32 %v3919, %v4899
    %v5055 = vadd.f32 %v3920, %v4960
    %v5056 = vadd.f32 %v3921, %v4962
    %v5057 = vadd.f32 %v3922, %v5023
    %v5058 = vadd.f32 %v3923, %v5025
    %v5059 = vadd.f32 %v3924, %v4901
    %v5060 = vadd.f32 %v3925, %v4903
    %v5061 = vadd.f32 %v3926, %v4964
    %v5062 = vadd.f32 %v3927, %v4966
    %v5063 = vadd.f32 %v3928, %v5027
    %v5064 = vadd.f32 %v3929, %v5029
    %v5065 = vadd.f32 %v3930, %v4907
    %v5066 = vadd.f32 %v3931, %v4909
    %v5067 = vadd.f32 %v3932, %v4970
    %v5068 = vadd.f32 %v3933, %v4972
    %v5069 = vadd.f32 %v3934, %v5033
    %v5070 = vadd.f32 %v3935, %v5035
    %v5071 = vadd.f32 %v3936, %v4911
    %v5072 = vadd.f32 %v3937, %v4913
    %v5073 = vadd.f32 %v3938, %v4974
    %v5074 = vadd.f32 %v3939, %v4976
    %v5075 = vadd.f32 %v3940, %v5037
    %v5076 = vadd.f32 %v3941, %v5039
    %5077 = vmatprep.subr.bf16.mxu0 %v4544
    %5078 = vmatpush1.bf16.msra.mxu0 %v4543
    %5079 = vmatprep.subr.bf16.mxu0 %v4550
    %5080 = vmatpush1.bf16.msra.mxu0 %v4549
    %5081 = vmatprep.subr.bf16.mxu0 %v4556
    %5082 = vmatpush1.bf16.msra.mxu0 %v4555
    %5083 = vmatprep.subr.bf16.mxu0 %v4562
    %5084 = vmatpush1.bf16.msra.mxu0 %v4561
    %5085 = vmatprep.subr.bf16.mxu0 %v4568
    %5086 = vmatpush1.bf16.msra.mxu0 %v4567
    %5087 = vmatprep.subr.bf16.mxu0 %v4613
    %5088 = vmatpush1.bf16.msra.mxu0 %v4610
    %5089 = vmatprep.subr.bf16.mxu0 0
    %5090 = vmatpush1.bf16.msra.mxu0 0
    %5091 = vmatprep.subr.bf16.mxu0 0
    %5092 = vmatpush1.bf16.msra.mxu0 0
    %5093 = vmatprep.subr.bf16.mxu0 0
    %5094 = vmatpush1.bf16.msra.mxu0 0
    %5095 = vmatprep.subr.bf16.mxu0 0
    %5096 = vmatpush1.bf16.msra.mxu0 0
    %5097 = vmatprep.subr.bf16.mxu0 0
    %5098 = vmatpush1.bf16.msra.mxu0 0
    %5099 = vmatprep.subr.bf16.mxu0 0
    %5100 = vmatpush1.bf16.msra.mxu0 0
    %5101 = vmatprep.subr.bf16.mxu0 0
    %5102 = vmatpush1.bf16.msra.mxu0 0
    %5103 = vmatprep.subr.bf16.mxu0 0
    %5104 = vmatpush1.bf16.msra.mxu0 0
    %5105 = vmatprep.subr.bf16.mxu0 0
    %5106 = vmatpush1.bf16.msra.mxu0 0
    %5107 = vmatprep.subr.bf16.mxu0 0
    %5108 = vmatpush1.bf16.msra.mxu0 0
    %5109 = vmatprep.mubr.bf16.mxu0 0
    %5110 = vmatmul.mubr.bf16.gmra.mrb[0].mxu0 %v4177
    %v5111 = vpop.f32.mrb[0].mxu0
    %v5112 = vadd.f32 0.0, %v5111
    %v5113 = vpop.f32.mrb[0].mxu0
    %v5114 = vadd.f32 0.0, %v5113
    %v5115 = vpop.f32.mrb[0].mxu0
    %v5116 = vadd.f32 0.0, %v5115
    %v5117 = vpop.f32.mrb[0].mxu0
    %v5118 = vadd.f32 0.0, %v5117
    %5119 = vmatprep.mubr.bf16.mxu0 0
    %5120 = vmatmul.mubr.bf16.gmra.mrb[0].mxu0 %v4180
    %v5121 = vpop.f32.mrb[0].mxu0
    %v5122 = vadd.f32 0.0, %v5121
    %v5123 = vpop.f32.mrb[0].mxu0
    %v5124 = vadd.f32 0.0, %v5123
    %v5125 = vpop.f32.mrb[0].mxu0
    %v5126 = vadd.f32 0.0, %v5125
    %v5127 = vpop.f32.mrb[0].mxu0
    %v5128 = vadd.f32 0.0, %v5127
    %5129 = vmatprep.mubr.bf16.mxu0 0
    %5130 = vmatmul.mubr.bf16.gmra.mrb[0].mxu0 %v4183
    %v5131 = vpop.f32.mrb[0].mxu0
    %v5132 = vadd.f32 0.0, %v5131
    %v5133 = vpop.f32.mrb[0].mxu0
    %v5134 = vadd.f32 0.0, %v5133
    %v5135 = vpop.f32.mrb[0].mxu0
    %v5136 = vadd.f32 0.0, %v5135
    %v5137 = vpop.f32.mrb[0].mxu0
    %v5138 = vadd.f32 0.0, %v5137
    %5139 = vdwg.mxu0
    %5140 = vmatprep.subr.bf16.mxu0 %v4546
    %5141 = vmatpush1.bf16.msra.mxu0 %v4545
    %5142 = vmatprep.subr.bf16.mxu0 %v4552
    %5143 = vmatpush1.bf16.msra.mxu0 %v4551
    %5144 = vmatprep.subr.bf16.mxu0 %v4558
    %5145 = vmatpush1.bf16.msra.mxu0 %v4557
    %5146 = vmatprep.subr.bf16.mxu0 %v4564
    %5147 = vmatpush1.bf16.msra.mxu0 %v4563
    %5148 = vmatprep.subr.bf16.mxu0 %v4570
    %5149 = vmatpush1.bf16.msra.mxu0 %v4569
    %5150 = vmatprep.subr.bf16.mxu0 %v4619
    %5151 = vmatpush1.bf16.msra.mxu0 %v4616
    %5152 = vmatprep.subr.bf16.mxu0 0
    %5153 = vmatpush1.bf16.msra.mxu0 0
    %5154 = vmatprep.subr.bf16.mxu0 0
    %5155 = vmatpush1.bf16.msra.mxu0 0
    %5156 = vmatprep.subr.bf16.mxu0 0
    %5157 = vmatpush1.bf16.msra.mxu0 0
    %5158 = vmatprep.subr.bf16.mxu0 0
    %5159 = vmatpush1.bf16.msra.mxu0 0
    %5160 = vmatprep.subr.bf16.mxu0 0
    %5161 = vmatpush1.bf16.msra.mxu0 0
    %5162 = vmatprep.subr.bf16.mxu0 0
    %5163 = vmatpush1.bf16.msra.mxu0 0
    %5164 = vmatprep.subr.bf16.mxu0 0
    %5165 = vmatpush1.bf16.msra.mxu0 0
    %5166 = vmatprep.subr.bf16.mxu0 0
    %5167 = vmatpush1.bf16.msra.mxu0 0
    %5168 = vmatprep.subr.bf16.mxu0 0
    %5169 = vmatpush1.bf16.msra.mxu0 0
    %5170 = vmatprep.subr.bf16.mxu0 0
    %5171 = vmatpush1.bf16.msra.mxu0 0
    %5172 = vmatprep.mubr.bf16.mxu0 0
    %5173 = vmatmul.mubr.bf16.gmra.mrb[0].mxu0 %v4177
    %v5174 = vpop.f32.mrb[0].mxu0
    %v5175 = vadd.f32 0.0, %v5174
    %v5176 = vpop.f32.mrb[0].mxu0
    %v5177 = vadd.f32 0.0, %v5176
    %v5178 = vpop.f32.mrb[0].mxu0
    %v5179 = vadd.f32 0.0, %v5178
    %v5180 = vpop.f32.mrb[0].mxu0
    %v5181 = vadd.f32 0.0, %v5180
    %5182 = vmatprep.mubr.bf16.mxu0 0
    %5183 = vmatmul.mubr.bf16.gmra.mrb[0].mxu0 %v4180
    %v5184 = vpop.f32.mrb[0].mxu0
    %v5185 = vadd.f32 0.0, %v5184
    %v5186 = vpop.f32.mrb[0].mxu0
    %v5187 = vadd.f32 0.0, %v5186
    %v5188 = vpop.f32.mrb[0].mxu0
    %v5189 = vadd.f32 0.0, %v5188
    %v5190 = vpop.f32.mrb[0].mxu0
    %v5191 = vadd.f32 0.0, %v5190
    %5192 = vmatprep.mubr.bf16.mxu0 0
    %5193 = vmatmul.mubr.bf16.gmra.mrb[0].mxu0 %v4183
    %v5194 = vpop.f32.mrb[0].mxu0
    %v5195 = vadd.f32 0.0, %v5194
    %v5196 = vpop.f32.mrb[0].mxu0
    %v5197 = vadd.f32 0.0, %v5196
    %v5198 = vpop.f32.mrb[0].mxu0
    %v5199 = vadd.f32 0.0, %v5198
    %v5200 = vpop.f32.mrb[0].mxu0
    %v5201 = vadd.f32 0.0, %v5200
    %5202 = vdwg.mxu0
    %5203 = vmatprep.subr.bf16.mxu0 %v4548
    %5204 = vmatpush1.bf16.msra.mxu0 %v4547
    %5205 = vmatprep.subr.bf16.mxu0 %v4554
    %5206 = vmatpush1.bf16.msra.mxu0 %v4553
    %5207 = vmatprep.subr.bf16.mxu0 %v4560
    %5208 = vmatpush1.bf16.msra.mxu0 %v4559
    %5209 = vmatprep.subr.bf16.mxu0 %v4566
    %5210 = vmatpush1.bf16.msra.mxu0 %v4565
    %5211 = vmatprep.subr.bf16.mxu0 %v4572
    %5212 = vmatpush1.bf16.msra.mxu0 %v4571
    %5213 = vmatprep.subr.bf16.mxu0 %v4625
    %5214 = vmatpush1.bf16.msra.mxu0 %v4622
    %5215 = vmatprep.subr.bf16.mxu0 0
    %5216 = vmatpush1.bf16.msra.mxu0 0
    %5217 = vmatprep.subr.bf16.mxu0 0
    %5218 = vmatpush1.bf16.msra.mxu0 0
    %5219 = vmatprep.subr.bf16.mxu0 0
    %5220 = vmatpush1.bf16.msra.mxu0 0
    %5221 = vmatprep.subr.bf16.mxu0 0
    %5222 = vmatpush1.bf16.msra.mxu0 0
    %5223 = vmatprep.subr.bf16.mxu0 0
    %5224 = vmatpush1.bf16.msra.mxu0 0
    %5225 = vmatprep.subr.bf16.mxu0 0
    %5226 = vmatpush1.bf16.msra.mxu0 0
    %5227 = vmatprep.subr.bf16.mxu0 0
    %5228 = vmatpush1.bf16.msra.mxu0 0
    %5229 = vmatprep.subr.bf16.mxu0 0
    %5230 = vmatpush1.bf16.msra.mxu0 0
    %5231 = vmatprep.subr.bf16.mxu0 0
    %5232 = vmatpush1.bf16.msra.mxu0 0
    %5233 = vmatprep.subr.bf16.mxu0 0
    %5234 = vmatpush1.bf16.msra.mxu0 0
    %5235 = vmatprep.mubr.bf16.mxu0 0
    %5236 = vmatmul.mubr.bf16.gmra.mrb[0].mxu0 %v4177
    %v5237 = vpop.f32.mrb[0].mxu0
    %v5238 = vadd.f32 0.0, %v5237
    %v5239 = vpop.f32.mrb[0].mxu0
    %v5240 = vadd.f32 0.0, %v5239
    %v5241 = vpop.f32.mrb[0].mxu0
    %v5242 = vadd.f32 0.0, %v5241
    %v5243 = vpop.f32.mrb[0].mxu0
    %v5244 = vadd.f32 0.0, %v5243
    %5245 = vmatprep.mubr.bf16.mxu0 0
    %5246 = vmatmul.mubr.bf16.gmra.mrb[0].mxu0 %v4180
    %v5247 = vpop.f32.mrb[0].mxu0
    %v5248 = vadd.f32 0.0, %v5247
    %v5249 = vpop.f32.mrb[0].mxu0
    %v5250 = vadd.f32 0.0, %v5249
    %v5251 = vpop.f32.mrb[0].mxu0
    %v5252 = vadd.f32 0.0, %v5251
    %v5253 = vpop.f32.mrb[0].mxu0
    %v5254 = vadd.f32 0.0, %v5253
    %5255 = vmatprep.mubr.bf16.mxu0 0
    %5256 = vmatmul.mubr.bf16.gmra.mrb[0].mxu0 %v4183
    %v5257 = vpop.f32.mrb[0].mxu0
    %v5258 = vadd.f32 0.0, %v5257
    %v5259 = vpop.f32.mrb[0].mxu0
    %v5260 = vadd.f32 0.0, %v5259
    %v5261 = vpop.f32.mrb[0].mxu0
    %v5262 = vadd.f32 0.0, %v5261
    %v5263 = vpop.f32.mrb[0].mxu0
    %v5264 = vadd.f32 0.0, %v5263
    %5265 = vdwg.mxu0
    %v5266 = vadd.f32 %v4131, %v5112
    %v5267 = vadd.f32 %v4132, %v5114
    %v5268 = vadd.f32 %v4133, %v5175
    %v5269 = vadd.f32 %v4134, %v5177
    %v5270 = vadd.f32 %v4135, %v5238
    %v5271 = vadd.f32 %v4136, %v5240
    %v5272 = vadd.f32 %v4137, %v5116
    %v5273 = vadd.f32 %v4138, %v5118
    %v5274 = vadd.f32 %v4139, %v5179
    %v5275 = vadd.f32 %v4140, %v5181
    %v5276 = vadd.f32 %v4141, %v5242
    %v5277 = vadd.f32 %v4142, %v5244
    %v5278 = vadd.f32 %v4143, %v5122
    %v5279 = vadd.f32 %v4144, %v5124
    %v5280 = vadd.f32 %v4145, %v5185
    %v5281 = vadd.f32 %v4146, %v5187
    %v5282 = vadd.f32 %v4147, %v5248
    %v5283 = vadd.f32 %v4148, %v5250
    %v5284 = vadd.f32 %v4149, %v5126
    %v5285 = vadd.f32 %v4150, %v5128
    %v5286 = vadd.f32 %v4151, %v5189
    %v5287 = vadd.f32 %v4152, %v5191
    %v5288 = vadd.f32 %v4153, %v5252
    %v5289 = vadd.f32 %v4154, %v5254
    %v5290 = vadd.f32 %v4155, %v5132
    %v5291 = vadd.f32 %v4156, %v5134
    %v5292 = vadd.f32 %v4157, %v5195
    %v5293 = vadd.f32 %v4158, %v5197
    %v5294 = vadd.f32 %v4159, %v5258
    %v5295 = vadd.f32 %v4160, %v5260
    %v5296 = vadd.f32 %v4161, %v5136
    %v5297 = vadd.f32 %v4162, %v5138
    %v5298 = vadd.f32 %v4163, %v5199
    %v5299 = vadd.f32 %v4164, %v5201
    %v5300 = vadd.f32 %v4165, %v5262
    %v5301 = vadd.f32 %v4166, %v5264
    %v5302 = vld [vmem:[%s0 + $0xb0] sm:$0xff]
    %v5303 = vld [vmem:[%s0 + $0xb8] sm:$0xff]
    %v5304 = vld [vmem:[%s0 + $0xc0] sm:$0xff]
    %v5305 = vld [vmem:[%s0 + $0xc8] sm:$0xff]
    %v5306 = vld [vmem:[%s0 + $0xd0] sm:$0xff]
    %v5307 = vld [vmem:[%s0 + $0xd8] sm:$0xff]
    %v5308 = vpack.c.bf16 %v5303, %v5302
    %v5309 = vpack.c.bf16 %v5305, %v5304
    %v5310 = vpack.c.bf16 %v5307, %v5306
    %v5312 = vsel %vm371, %v5308, 0
    %v5315 = vsel %vm371, %v5309, 0
    %v5318 = vsel %vm371, %v5310, 0
    %5320 = vmatprep.subr.bf16.mxu0 %v4544
    %5321 = vmatpush1.bf16.msra.mxu0 %v4543
    %5322 = vmatprep.subr.bf16.mxu0 %v4550
    %5323 = vmatpush1.bf16.msra.mxu0 %v4549
    %5324 = vmatprep.subr.bf16.mxu0 %v4556
    %5325 = vmatpush1.bf16.msra.mxu0 %v4555
    %5326 = vmatprep.subr.bf16.mxu0 %v4562
    %5327 = vmatpush1.bf16.msra.mxu0 %v4561
    %5328 = vmatprep.subr.bf16.mxu0 %v4568
    %5329 = vmatpush1.bf16.msra.mxu0 %v4567
    %5330 = vmatprep.subr.bf16.mxu0 %v4613
    %5331 = vmatpush1.bf16.msra.mxu0 %v4610
    %5332 = vmatprep.subr.bf16.mxu0 0
    %5333 = vmatpush1.bf16.msra.mxu0 0
    %5334 = vmatprep.subr.bf16.mxu0 0
    %5335 = vmatpush1.bf16.msra.mxu0 0
    %5336 = vmatprep.subr.bf16.mxu0 0
    %5337 = vmatpush1.bf16.msra.mxu0 0
    %5338 = vmatprep.subr.bf16.mxu0 0
    %5339 = vmatpush1.bf16.msra.mxu0 0
    %5340 = vmatprep.subr.bf16.mxu0 0
    %5341 = vmatpush1.bf16.msra.mxu0 0
    %5342 = vmatprep.subr.bf16.mxu0 0
    %5343 = vmatpush1.bf16.msra.mxu0 0
    %5344 = vmatprep.subr.bf16.mxu0 0
    %5345 = vmatpush1.bf16.msra.mxu0 0
    %5346 = vmatprep.subr.bf16.mxu0 0
    %5347 = vmatpush1.bf16.msra.mxu0 0
    %5348 = vmatprep.subr.bf16.mxu0 0
    %5349 = vmatpush1.bf16.msra.mxu0 0
    %5350 = vmatprep.subr.bf16.mxu0 0
    %5351 = vmatpush1.bf16.msra.mxu0 0
    %5352 = vmatprep.mubr.bf16.mxu0 0
    %5353 = vmatmul.mubr.bf16.gmra.mrb[0].mxu0 %v5312
    %v5354 = vpop.f32.mrb[0].mxu0
    %v5355 = vadd.f32 0.0, %v5354
    %v5356 = vpop.f32.mrb[0].mxu0
    %v5357 = vadd.f32 0.0, %v5356
    %v5358 = vpop.f32.mrb[0].mxu0
    %v5359 = vadd.f32 0.0, %v5358
    %v5360 = vpop.f32.mrb[0].mxu0
    %v5361 = vadd.f32 0.0, %v5360
    %5362 = vmatprep.mubr.bf16.mxu0 0
    %5363 = vmatmul.mubr.bf16.gmra.mrb[0].mxu0 %v5315
    %v5364 = vpop.f32.mrb[0].mxu0
    %v5365 = vadd.f32 0.0, %v5364
    %v5366 = vpop.f32.mrb[0].mxu0
    %v5367 = vadd.f32 0.0, %v5366
    %v5368 = vpop.f32.mrb[0].mxu0
    %v5369 = vadd.f32 0.0, %v5368
    %v5370 = vpop.f32.mrb[0].mxu0
    %v5371 = vadd.f32 0.0, %v5370
    %5372 = vmatprep.mubr.bf16.mxu0 0
    %5373 = vmatmul.mubr.bf16.gmra.mrb[0].mxu0 %v5318
    %v5374 = vpop.f32.mrb[0].mxu0
    %v5375 = vadd.f32 0.0, %v5374
    %v5376 = vpop.f32.mrb[0].mxu0
    %v5377 = vadd.f32 0.0, %v5376
    %v5378 = vpop.f32.mrb[0].mxu0
    %v5379 = vadd.f32 0.0, %v5378
    %v5380 = vpop.f32.mrb[0].mxu0
    %v5381 = vadd.f32 0.0, %v5380
    %5382 = vdwg.mxu0
    %5383 = vmatprep.subr.bf16.mxu0 %v4546
    %5384 = vmatpush1.bf16.msra.mxu0 %v4545
    %5385 = vmatprep.subr.bf16.mxu0 %v4552
    %5386 = vmatpush1.bf16.msra.mxu0 %v4551
    %5387 = vmatprep.subr.bf16.mxu0 %v4558
    %5388 = vmatpush1.bf16.msra.mxu0 %v4557
    %5389 = vmatprep.subr.bf16.mxu0 %v4564
    %5390 = vmatpush1.bf16.msra.mxu0 %v4563
    %5391 = vmatprep.subr.bf16.mxu0 %v4570
    %5392 = vmatpush1.bf16.msra.mxu0 %v4569
    %5393 = vmatprep.subr.bf16.mxu0 %v4619
    %5394 = vmatpush1.bf16.msra.mxu0 %v4616
    %5395 = vmatprep.subr.bf16.mxu0 0
    %5396 = vmatpush1.bf16.msra.mxu0 0
    %5397 = vmatprep.subr.bf16.mxu0 0
    %5398 = vmatpush1.bf16.msra.mxu0 0
    %5399 = vmatprep.subr.bf16.mxu0 0
    %5400 = vmatpush1.bf16.msra.mxu0 0
    %5401 = vmatprep.subr.bf16.mxu0 0
    %5402 = vmatpush1.bf16.msra.mxu0 0
    %5403 = vmatprep.subr.bf16.mxu0 0
    %5404 = vmatpush1.bf16.msra.mxu0 0
    %5405 = vmatprep.subr.bf16.mxu0 0
    %5406 = vmatpush1.bf16.msra.mxu0 0
    %5407 = vmatprep.subr.bf16.mxu0 0
    %5408 = vmatpush1.bf16.msra.mxu0 0
    %5409 = vmatprep.subr.bf16.mxu0 0
    %5410 = vmatpush1.bf16.msra.mxu0 0
    %5411 = vmatprep.subr.bf16.mxu0 0
    %5412 = vmatpush1.bf16.msra.mxu0 0
    %5413 = vmatprep.subr.bf16.mxu0 0
    %5414 = vmatpush1.bf16.msra.mxu0 0
    %5415 = vmatprep.mubr.bf16.mxu0 0
    %5416 = vmatmul.mubr.bf16.gmra.mrb[0].mxu0 %v5312
    %v5417 = vpop.f32.mrb[0].mxu0
    %v5418 = vadd.f32 0.0, %v5417
    %v5419 = vpop.f32.mrb[0].mxu0
    %v5420 = vadd.f32 0.0, %v5419
    %v5421 = vpop.f32.mrb[0].mxu0
    %v5422 = vadd.f32 0.0, %v5421
    %v5423 = vpop.f32.mrb[0].mxu0
    %v5424 = vadd.f32 0.0, %v5423
    %5425 = vmatprep.mubr.bf16.mxu0 0
    %5426 = vmatmul.mubr.bf16.gmra.mrb[0].mxu0 %v5315
    %v5427 = vpop.f32.mrb[0].mxu0
    %v5428 = vadd.f32 0.0, %v5427
    %v5429 = vpop.f32.mrb[0].mxu0
    %v5430 = vadd.f32 0.0, %v5429
    %v5431 = vpop.f32.mrb[0].mxu0
    %v5432 = vadd.f32 0.0, %v5431
    %v5433 = vpop.f32.mrb[0].mxu0
    %v5434 = vadd.f32 0.0, %v5433
    %5435 = vmatprep.mubr.bf16.mxu0 0
    %5436 = vmatmul.mubr.bf16.gmra.mrb[0].mxu0 %v5318
    %v5437 = vpop.f32.mrb[0].mxu0
    %v5438 = vadd.f32 0.0, %v5437
    %v5439 = vpop.f32.mrb[0].mxu0
    %v5440 = vadd.f32 0.0, %v5439
    %v5441 = vpop.f32.mrb[0].mxu0
    %v5442 = vadd.f32 0.0, %v5441
    %v5443 = vpop.f32.mrb[0].mxu0
    %v5444 = vadd.f32 0.0, %v5443
    %5445 = vdwg.mxu0
    %5446 = vmatprep.subr.bf16.mxu0 %v4548
    %5447 = vmatpush1.bf16.msra.mxu0 %v4547
    %5448 = vmatprep.subr.bf16.mxu0 %v4554
    %5449 = vmatpush1.bf16.msra.mxu0 %v4553
    %5450 = vmatprep.subr.bf16.mxu0 %v4560
    %5451 = vmatpush1.bf16.msra.mxu0 %v4559
    %5452 = vmatprep.subr.bf16.mxu0 %v4566
    %5453 = vmatpush1.bf16.msra.mxu0 %v4565
    %5454 = vmatprep.subr.bf16.mxu0 %v4572
    %5455 = vmatpush1.bf16.msra.mxu0 %v4571
    %5456 = vmatprep.subr.bf16.mxu0 %v4625
    %5457 = vmatpush1.bf16.msra.mxu0 %v4622
    %5458 = vmatprep.subr.bf16.mxu0 0
    %5459 = vmatpush1.bf16.msra.mxu0 0
    %5460 = vmatprep.subr.bf16.mxu0 0
    %5461 = vmatpush1.bf16.msra.mxu0 0
    %5462 = vmatprep.subr.bf16.mxu0 0
    %5463 = vmatpush1.bf16.msra.mxu0 0
    %5464 = vmatprep.subr.bf16.mxu0 0
    %5465 = vmatpush1.bf16.msra.mxu0 0
    %5466 = vmatprep.subr.bf16.mxu0 0
    %5467 = vmatpush1.bf16.msra.mxu0 0
    %5468 = vmatprep.subr.bf16.mxu0 0
    %5469 = vmatpush1.bf16.msra.mxu0 0
    %5470 = vmatprep.subr.bf16.mxu0 0
    %5471 = vmatpush1.bf16.msra.mxu0 0
    %5472 = vmatprep.subr.bf16.mxu0 0
    %5473 = vmatpush1.bf16.msra.mxu0 0
    %5474 = vmatprep.subr.bf16.mxu0 0
    %5475 = vmatpush1.bf16.msra.mxu0 0
    %5476 = vmatprep.subr.bf16.mxu0 0
    %5477 = vmatpush1.bf16.msra.mxu0 0
    %5478 = vmatprep.mubr.bf16.mxu0 0
    %5479 = vmatmul.mubr.bf16.gmra.mrb[0].mxu0 %v5312
    %v5480 = vpop.f32.mrb[0].mxu0
    %v5481 = vadd.f32 0.0, %v5480
    %v5482 = vpop.f32.mrb[0].mxu0
    %v5483 = vadd.f32 0.0, %v5482
    %v5484 = vpop.f32.mrb[0].mxu0
    %v5485 = vadd.f32 0.0, %v5484
    %v5486 = vpop.f32.mrb[0].mxu0
    %v5487 = vadd.f32 0.0, %v5486
    %5488 = vmatprep.mubr.bf16.mxu0 0
    %5489 = vmatmul.mubr.bf16.gmra.mrb[0].mxu0 %v5315
    %v5490 = vpop.f32.mrb[0].mxu0
    %v5491 = vadd.f32 0.0, %v5490
    %v5492 = vpop.f32.mrb[0].mxu0
    %v5493 = vadd.f32 0.0, %v5492
    %v5494 = vpop.f32.mrb[0].mxu0
    %v5495 = vadd.f32 0.0, %v5494
    %v5496 = vpop.f32.mrb[0].mxu0
    %v5497 = vadd.f32 0.0, %v5496
    %5498 = vmatprep.mubr.bf16.mxu0 0
    %5499 = vmatmul.mubr.bf16.gmra.mrb[0].mxu0 %v5318
    %v5500 = vpop.f32.mrb[0].mxu0
    %v5501 = vadd.f32 0.0, %v5500
    %v5502 = vpop.f32.mrb[0].mxu0
    %v5503 = vadd.f32 0.0, %v5502
    %v5504 = vpop.f32.mrb[0].mxu0
    %v5505 = vadd.f32 0.0, %v5504
    %v5506 = vpop.f32.mrb[0].mxu0
    %v5507 = vadd.f32 0.0, %v5506
    %5508 = vdwg.mxu0
    %v5509 = vadd.f32 %v4374, %v5355
    %v5510 = vadd.f32 %v4375, %v5357
    %v5511 = vadd.f32 %v4376, %v5418
    %v5512 = vadd.f32 %v4377, %v5420
    %v5513 = vadd.f32 %v4378, %v5481
    %v5514 = vadd.f32 %v4379, %v5483
    %v5515 = vadd.f32 %v4380, %v5359
    %v5516 = vadd.f32 %v4381, %v5361
    %v5517 = vadd.f32 %v4382, %v5422
    %v5518 = vadd.f32 %v4383, %v5424
    %v5519 = vadd.f32 %v4384, %v5485
    %v5520 = vadd.f32 %v4385, %v5487
    %v5521 = vadd.f32 %v4386, %v5365
    %v5522 = vadd.f32 %v4387, %v5367
    %v5523 = vadd.f32 %v4388, %v5428
    %v5524 = vadd.f32 %v4389, %v5430
    %v5525 = vadd.f32 %v4390, %v5491
    %v5526 = vadd.f32 %v4391, %v5493
    %v5527 = vadd.f32 %v4392, %v5369
    %v5528 = vadd.f32 %v4393, %v5371
    %v5529 = vadd.f32 %v4394, %v5432
    %v5530 = vadd.f32 %v4395, %v5434
    %v5531 = vadd.f32 %v4396, %v5495
    %v5532 = vadd.f32 %v4397, %v5497
    %v5533 = vadd.f32 %v4398, %v5375
    %v5534 = vadd.f32 %v4399, %v5377
    %v5535 = vadd.f32 %v4400, %v5438
    %v5536 = vadd.f32 %v4401, %v5440
    %v5537 = vadd.f32 %v4402, %v5501
    %v5538 = vadd.f32 %v4403, %v5503
    %v5539 = vadd.f32 %v4404, %v5379
    %v5540 = vadd.f32 %v4405, %v5381
    %v5541 = vadd.f32 %v4406, %v5442
    %v5542 = vadd.f32 %v4407, %v5444
    %v5543 = vadd.f32 %v4408, %v5505
    %v5544 = vadd.f32 %v4409, %v5507
    %v5545 = vld [vmem:[#allocation4] sm:$0x3f]
    %v5547 = vlaneseq
    %v5548 = vshrl.u32 %v5547, 7
    %v5549 = vsub.s32 0, %v5548
    %v5550 = vrot.slane %v5545, %v5549
    %v5551 = vlaneseq
    %v5552 = vshrl.u32 %v5551, 7
    %v5553 = vsub.s32 1, %v5552
    %v5554 = vrot.slane %v5545, %v5553
    %v5555 = vlaneseq
    %v5556 = vshrl.u32 %v5555, 7
    %v5557 = vsub.s32 2, %v5556
    %v5558 = vrot.slane %v5545, %v5557
    %v5559 = vlaneseq
    %v5560 = vshrl.u32 %v5559, 7
    %v5561 = vsub.s32 3, %v5560
    %v5562 = vrot.slane %v5545, %v5561
    %v5563 = vlaneseq
    %v5564 = vshrl.u32 %v5563, 7
    %v5565 = vsub.s32 4, %v5564
    %v5566 = vrot.slane %v5545, %v5565
    %v5567 = vlaneseq
    %v5568 = vshrl.u32 %v5567, 7
    %v5569 = vsub.s32 5, %v5568
    %v5570 = vrot.slane %v5545, %v5569
    %v5577 = vadd.f32 %v4816, %v5550
    %v5578 = vadd.f32 %v4817, %v5554
    %v5579 = vadd.f32 %v4818, %v5558
    %v5580 = vadd.f32 %v4819, %v5562
    %v5581 = vadd.f32 %v4820, %v5566
    %v5582 = vadd.f32 %v4821, %v5570
    %v5583 = vadd.f32 %v4822, %v5550
    %v5584 = vadd.f32 %v4823, %v5554
    %v5585 = vadd.f32 %v4824, %v5558
    %v5586 = vadd.f32 %v4825, %v5562
    %v5587 = vadd.f32 %v4826, %v5566
    %v5588 = vadd.f32 %v4827, %v5570
    %v5589 = vadd.f32 %v4828, %v5550
    %v5590 = vadd.f32 %v4829, %v5554
    %v5591 = vadd.f32 %v4830, %v5558
    %v5592 = vadd.f32 %v4831, %v5562
    %v5593 = vadd.f32 %v4832, %v5566
    %v5594 = vadd.f32 %v4833, %v5570
    %v5595 = vadd.f32 %v4834, %v5550
    %v5596 = vadd.f32 %v4835, %v5554
    %v5597 = vadd.f32 %v4836, %v5558
    %v5598 = vadd.f32 %v4837, %v5562
    %v5599 = vadd.f32 %v4838, %v5566
    %v5600 = vadd.f32 %v4839, %v5570
    %v5601 = vadd.f32 %v4840, %v5550
    %v5602 = vadd.f32 %v4841, %v5554
    %v5603 = vadd.f32 %v4842, %v5558
    %v5604 = vadd.f32 %v4843, %v5562
    %v5605 = vadd.f32 %v4844, %v5566
    %v5606 = vadd.f32 %v4845, %v5570
    %v5607 = vadd.f32 %v4846, %v5550
    %v5608 = vadd.f32 %v4847, %v5554
    %v5609 = vadd.f32 %v4848, %v5558
    %v5610 = vadd.f32 %v4849, %v5562
    %v5611 = vadd.f32 %v4850, %v5566
    %v5612 = vadd.f32 %v4851, %v5570
    %v5613 = vadd.f32 %v5041, %v5550
    %v5614 = vadd.f32 %v5042, %v5554
    %v5615 = vadd.f32 %v5043, %v5558
    %v5616 = vadd.f32 %v5044, %v5562
    %v5617 = vadd.f32 %v5045, %v5566
    %v5618 = vadd.f32 %v5046, %v5570
    %v5619 = vadd.f32 %v5047, %v5550
    %v5620 = vadd.f32 %v5048, %v5554
    %v5621 = vadd.f32 %v5049, %v5558
    %v5622 = vadd.f32 %v5050, %v5562
    %v5623 = vadd.f32 %v5051, %v5566
    %v5624 = vadd.f32 %v5052, %v5570
    %v5625 = vadd.f32 %v5053, %v5550
    %v5626 = vadd.f32 %v5054, %v5554
    %v5627 = vadd.f32 %v5055, %v5558
    %v5628 = vadd.f32 %v5056, %v5562
    %v5629 = vadd.f32 %v5057, %v5566
    %v5630 = vadd.f32 %v5058, %v5570
    %v5631 = vadd.f32 %v5059, %v5550
    %v5632 = vadd.f32 %v5060, %v5554
    %v5633 = vadd.f32 %v5061, %v5558
    %v5634 = vadd.f32 %v5062, %v5562
    %v5635 = vadd.f32 %v5063, %v5566
    %v5636 = vadd.f32 %v5064, %v5570
    %v5637 = vadd.f32 %v5065, %v5550
    %v5638 = vadd.f32 %v5066, %v5554
    %v5639 = vadd.f32 %v5067, %v5558
    %v5640 = vadd.f32 %v5068, %v5562
    %v5641 = vadd.f32 %v5069, %v5566
    %v5642 = vadd.f32 %v5070, %v5570
    %v5643 = vadd.f32 %v5071, %v5550
    %v5644 = vadd.f32 %v5072, %v5554
    %v5645 = vadd.f32 %v5073, %v5558
    %v5646 = vadd.f32 %v5074, %v5562
    %v5647 = vadd.f32 %v5075, %v5566
    %v5648 = vadd.f32 %v5076, %v5570
    %v5649 = vadd.f32 %v5266, %v5550
    %v5650 = vadd.f32 %v5267, %v5554
    %v5651 = vadd.f32 %v5268, %v5558
    %v5652 = vadd.f32 %v5269, %v5562
    %v5653 = vadd.f32 %v5270, %v5566
    %v5654 = vadd.f32 %v5271, %v5570
    %v5655 = vadd.f32 %v5272, %v5550
    %v5656 = vadd.f32 %v5273, %v5554
    %v5657 = vadd.f32 %v5274, %v5558
    %v5658 = vadd.f32 %v5275, %v5562
    %v5659 = vadd.f32 %v5276, %v5566
    %v5660 = vadd.f32 %v5277, %v5570
    %v5661 = vadd.f32 %v5278, %v5550
    %v5662 = vadd.f32 %v5279, %v5554
    %v5663 = vadd.f32 %v5280, %v5558
    %v5664 = vadd.f32 %v5281, %v5562
    %v5665 = vadd.f32 %v5282, %v5566
    %v5666 = vadd.f32 %v5283, %v5570
    %v5667 = vadd.f32 %v5284, %v5550
    %v5668 = vadd.f32 %v5285, %v5554
    %v5669 = vadd.f32 %v5286, %v5558
    %v5670 = vadd.f32 %v5287, %v5562
    %v5671 = vadd.f32 %v5288, %v5566
    %v5672 = vadd.f32 %v5289, %v5570
    %v5673 = vadd.f32 %v5290, %v5550
    %v5674 = vadd.f32 %v5291, %v5554
    %v5675 = vadd.f32 %v5292, %v5558
    %v5676 = vadd.f32 %v5293, %v5562
    %v5677 = vadd.f32 %v5294, %v5566
    %v5678 = vadd.f32 %v5295, %v5570
    %v5679 = vadd.f32 %v5296, %v5550
    %v5680 = vadd.f32 %v5297, %v5554
    %v5681 = vadd.f32 %v5298, %v5558
    %v5682 = vadd.f32 %v5299, %v5562
    %v5683 = vadd.f32 %v5300, %v5566
    %v5684 = vadd.f32 %v5301, %v5570
    %v5685 = vadd.f32 %v5509, %v5550
    %v5686 = vadd.f32 %v5510, %v5554
    %v5687 = vadd.f32 %v5511, %v5558
    %v5688 = vadd.f32 %v5512, %v5562
    %v5689 = vadd.f32 %v5513, %v5566
    %v5690 = vadd.f32 %v5514, %v5570
    %v5691 = vadd.f32 %v5515, %v5550
    %v5692 = vadd.f32 %v5516, %v5554
    %v5693 = vadd.f32 %v5517, %v5558
    %v5694 = vadd.f32 %v5518, %v5562
    %v5695 = vadd.f32 %v5519, %v5566
    %v5696 = vadd.f32 %v5520, %v5570
    %v5697 = vadd.f32 %v5521, %v5550
    %v5698 = vadd.f32 %v5522, %v5554
    %v5699 = vadd.f32 %v5523, %v5558
    %v5700 = vadd.f32 %v5524, %v5562
    %v5701 = vadd.f32 %v5525, %v5566
    %v5702 = vadd.f32 %v5526, %v5570
    %v5703 = vadd.f32 %v5527, %v5550
    %v5704 = vadd.f32 %v5528, %v5554
    %v5705 = vadd.f32 %v5529, %v5558
    %v5706 = vadd.f32 %v5530, %v5562
    %v5707 = vadd.f32 %v5531, %v5566
    %v5708 = vadd.f32 %v5532, %v5570
    %v5709 = vadd.f32 %v5533, %v5550
    %v5710 = vadd.f32 %v5534, %v5554
    %v5711 = vadd.f32 %v5535, %v5558
    %v5712 = vadd.f32 %v5536, %v5562
    %v5713 = vadd.f32 %v5537, %v5566
    %v5714 = vadd.f32 %v5538, %v5570
    %v5715 = vadd.f32 %v5539, %v5550
    %v5716 = vadd.f32 %v5540, %v5554
    %v5717 = vadd.f32 %v5541, %v5558
    %v5718 = vadd.f32 %v5542, %v5562
    %v5719 = vadd.f32 %v5543, %v5566
    %v5720 = vadd.f32 %v5544, %v5570
    %v5721 = vmax.f32 %v5577, %v5613
    %v5722 = vmax.f32 %v5578, %v5614
    %v5723 = vmax.f32 %v5579, %v5615
    %v5724 = vmax.f32 %v5580, %v5616
    %v5725 = vmax.f32 %v5581, %v5617
    %v5726 = vmax.f32 %v5582, %v5618
    %v5727 = vmax.f32 %v5583, %v5619
    %v5728 = vmax.f32 %v5584, %v5620
    %v5729 = vmax.f32 %v5585, %v5621
    %v5730 = vmax.f32 %v5586, %v5622
    %v5731 = vmax.f32 %v5587, %v5623
    %v5732 = vmax.f32 %v5588, %v5624
    %v5733 = vmax.f32 %v5589, %v5625
    %v5734 = vmax.f32 %v5590, %v5626
    %v5735 = vmax.f32 %v5591, %v5627
    %v5736 = vmax.f32 %v5592, %v5628
    %v5737 = vmax.f32 %v5593, %v5629
    %v5738 = vmax.f32 %v5594, %v5630
    %v5739 = vmax.f32 %v5595, %v5631
    %v5740 = vmax.f32 %v5596, %v5632
    %v5741 = vmax.f32 %v5597, %v5633
    %v5742 = vmax.f32 %v5598, %v5634
    %v5743 = vmax.f32 %v5599, %v5635
    %v5744 = vmax.f32 %v5600, %v5636
    %v5745 = vmax.f32 %v5601, %v5637
    %v5746 = vmax.f32 %v5602, %v5638
    %v5747 = vmax.f32 %v5603, %v5639
    %v5748 = vmax.f32 %v5604, %v5640
    %v5749 = vmax.f32 %v5605, %v5641
    %v5750 = vmax.f32 %v5606, %v5642
    %v5751 = vmax.f32 %v5607, %v5643
    %v5752 = vmax.f32 %v5608, %v5644
    %v5753 = vmax.f32 %v5609, %v5645
    %v5754 = vmax.f32 %v5610, %v5646
    %v5755 = vmax.f32 %v5611, %v5647
    %v5756 = vmax.f32 %v5612, %v5648
    %v5757 = vmax.f32 %v5649, %v5685
    %v5758 = vmax.f32 %v5650, %v5686
    %v5759 = vmax.f32 %v5651, %v5687
    %v5760 = vmax.f32 %v5652, %v5688
    %v5761 = vmax.f32 %v5653, %v5689
    %v5762 = vmax.f32 %v5654, %v5690
    %v5763 = vmax.f32 %v5655, %v5691
    %v5764 = vmax.f32 %v5656, %v5692
    %v5765 = vmax.f32 %v5657, %v5693
    %v5766 = vmax.f32 %v5658, %v5694
    %v5767 = vmax.f32 %v5659, %v5695
    %v5768 = vmax.f32 %v5660, %v5696
    %v5769 = vmax.f32 %v5661, %v5697
    %v5770 = vmax.f32 %v5662, %v5698
    %v5771 = vmax.f32 %v5663, %v5699
    %v5772 = vmax.f32 %v5664, %v5700
    %v5773 = vmax.f32 %v5665, %v5701
    %v5774 = vmax.f32 %v5666, %v5702
    %v5775 = vmax.f32 %v5667, %v5703
    %v5776 = vmax.f32 %v5668, %v5704
    %v5777 = vmax.f32 %v5669, %v5705
    %v5778 = vmax.f32 %v5670, %v5706
    %v5779 = vmax.f32 %v5671, %v5707
    %v5780 = vmax.f32 %v5672, %v5708
    %v5781 = vmax.f32 %v5673, %v5709
    %v5782 = vmax.f32 %v5674, %v5710
    %v5783 = vmax.f32 %v5675, %v5711
    %v5784 = vmax.f32 %v5676, %v5712
    %v5785 = vmax.f32 %v5677, %v5713
    %v5786 = vmax.f32 %v5678, %v5714
    %v5787 = vmax.f32 %v5679, %v5715
    %v5788 = vmax.f32 %v5680, %v5716
    %v5789 = vmax.f32 %v5681, %v5717
    %v5790 = vmax.f32 %v5682, %v5718
    %v5791 = vmax.f32 %v5683, %v5719
    %v5792 = vmax.f32 %v5684, %v5720
    %v5793 = vmax.f32 %v5721, %v5724
    %v5794 = vmax.f32 %v5722, %v5725
    %v5795 = vmax.f32 %v5723, %v5726
    %v5796 = vmax.f32 %v5727, %v5730
    %v5797 = vmax.f32 %v5728, %v5731
    %v5798 = vmax.f32 %v5729, %v5732
    %v5799 = vmax.f32 %v5733, %v5736
    %v5800 = vmax.f32 %v5734, %v5737
    %v5801 = vmax.f32 %v5735, %v5738
    %v5802 = vmax.f32 %v5739, %v5742
    %v5803 = vmax.f32 %v5740, %v5743
    %v5804 = vmax.f32 %v5741, %v5744
    %v5805 = vmax.f32 %v5745, %v5748
    %v5806 = vmax.f32 %v5746, %v5749
    %v5807 = vmax.f32 %v5747, %v5750
    %v5808 = vmax.f32 %v5751, %v5754
    %v5809 = vmax.f32 %v5752, %v5755
    %v5810 = vmax.f32 %v5753, %v5756
    %v5811 = vmax.f32 %v5793, 0.0
    %v5812 = vmax.f32 %v5794, 0.0
    %v5813 = vmax.f32 %v5795, 0.0
    %v5814 = vmax.f32 %v5796, 0.0
    %v5815 = vmax.f32 %v5797, 0.0
    %v5816 = vmax.f32 %v5798, 0.0
    %v5817 = vmax.f32 %v5799, 0.0
    %v5818 = vmax.f32 %v5800, 0.0
    %v5819 = vmax.f32 %v5801, 0.0
    %v5820 = vmax.f32 %v5802, 0.0
    %v5821 = vmax.f32 %v5803, 0.0
    %v5822 = vmax.f32 %v5804, 0.0
    %v5823 = vmax.f32 %v5805, 0.0
    %v5824 = vmax.f32 %v5806, 0.0
    %v5825 = vmax.f32 %v5807, 0.0
    %v5826 = vmax.f32 %v5808, 0.0
    %v5827 = vmax.f32 %v5809, 0.0
    %v5828 = vmax.f32 %v5810, 0.0
    %v5829 = vmax.f32 %v5757, %v5760
    %v5830 = vmax.f32 %v5758, %v5761
    %v5831 = vmax.f32 %v5759, %v5762
    %v5832 = vmax.f32 %v5763, %v5766
    %v5833 = vmax.f32 %v5764, %v5767
    %v5834 = vmax.f32 %v5765, %v5768
    %v5835 = vmax.f32 %v5769, %v5772
    %v5836 = vmax.f32 %v5770, %v5773
    %v5837 = vmax.f32 %v5771, %v5774
    %v5838 = vmax.f32 %v5775, %v5778
    %v5839 = vmax.f32 %v5776, %v5779
    %v5840 = vmax.f32 %v5777, %v5780
    %v5841 = vmax.f32 %v5781, %v5784
    %v5842 = vmax.f32 %v5782, %v5785
    %v5843 = vmax.f32 %v5783, %v5786
    %v5844 = vmax.f32 %v5787, %v5790
    %v5845 = vmax.f32 %v5788, %v5791
    %v5846 = vmax.f32 %v5789, %v5792
    %v5847 = vmax.f32 %v5829, 0.0
    %v5848 = vmax.f32 %v5830, 0.0
    %v5849 = vmax.f32 %v5831, 0.0
    %v5850 = vmax.f32 %v5832, 0.0
    %v5851 = vmax.f32 %v5833, 0.0
    %v5852 = vmax.f32 %v5834, 0.0
    %v5853 = vmax.f32 %v5835, 0.0
    %v5854 = vmax.f32 %v5836, 0.0
    %v5855 = vmax.f32 %v5837, 0.0
    %v5856 = vmax.f32 %v5838, 0.0
    %v5857 = vmax.f32 %v5839, 0.0
    %v5858 = vmax.f32 %v5840, 0.0
    %v5859 = vmax.f32 %v5841, 0.0
    %v5860 = vmax.f32 %v5842, 0.0
    %v5861 = vmax.f32 %v5843, 0.0
    %v5862 = vmax.f32 %v5844, 0.0
    %v5863 = vmax.f32 %v5845, 0.0
    %v5864 = vmax.f32 %v5846, 0.0
    %v5865 = vld [vmem:[#allocation6] sm:$0xff]
    %v5866 = vld [vmem:[#allocation6 + $0x8] sm:$0xff]
    %v5867 = vld [vmem:[#allocation6 + $0x10] sm:$0xff]
    %v5868 = vld [vmem:[#allocation6 + $0x18] sm:$0xff]
    %v5869 = vld [vmem:[#allocation6 + $0x20] sm:$0xff]
    %v5870 = vld [vmem:[#allocation6 + $0x28] sm:$0xff]
    %v5871 = vld [vmem:[#allocation6 + $0x30] sm:$0xff]
    %v5872 = vld [vmem:[#allocation6 + $0x38] sm:$0xff]
    %v5873 = vld [vmem:[#allocation6 + $0x40] sm:$0xff]
    %v5874 = vld [vmem:[#allocation6 + $0x48] sm:$0xff]
    %v5875 = vld [vmem:[#allocation6 + $0x50] sm:$0xff]
    %v5876 = vld [vmem:[#allocation6 + $0x58] sm:$0xff]
    %v5877 = vld [vmem:[#allocation6 + $0x60] sm:$0xff]
    %v5878 = vld [vmem:[#allocation6 + $0x68] sm:$0xff]
    %v5879 = vld [vmem:[#allocation6 + $0x70] sm:$0xff]
    %v5880 = vld [vmem:[#allocation6 + $0x78] sm:$0xff]
    %v5881 = vld [vmem:[#allocation6 + $0x80] sm:$0xff]
    %v5882 = vld [vmem:[#allocation6 + $0x88] sm:$0xff]
    %v5883 = vld [vmem:[#allocation6 + $0x90] sm:$0xff]
    %v5884 = vld [vmem:[#allocation6 + $0x98] sm:$0xff]
    %v5885 = vld [vmem:[#allocation6 + $0xa0] sm:$0xff]
    %v5886 = vld [vmem:[#allocation6 + $0xa8] sm:$0xff]
    %v5887 = vld [vmem:[#allocation6 + $0xb0] sm:$0xff]
    %v5888 = vld [vmem:[#allocation6 + $0xb8] sm:$0xff]
    %v5889 = vld [vmem:[#allocation6 + $0xc0] sm:$0xff]
    %v5890 = vld [vmem:[#allocation6 + $0xc8] sm:$0xff]
    %v5891 = vld [vmem:[#allocation6 + $0xd0] sm:$0xff]
    %v5892 = vld [vmem:[#allocation6 + $0xd8] sm:$0xff]
    %v5893 = vld [vmem:[#allocation6 + $0xe0] sm:$0xff]
    %v5894 = vld [vmem:[#allocation6 + $0xe8] sm:$0xff]
    %v5895 = vld [vmem:[#allocation6 + $0xf0] sm:$0xff]
    %v5896 = vld [vmem:[#allocation6 + $0xf8] sm:$0xff]
    %v5897 = vld [vmem:[#allocation6 + $0x100] sm:$0xff]
    %v5898 = vld [vmem:[#allocation6 + $0x108] sm:$0xff]
    %v5899 = vld [vmem:[#allocation6 + $0x110] sm:$0xff]
    %v5900 = vld [vmem:[#allocation6 + $0x118] sm:$0xff]
    %v5901 = vld [vmem:[#allocation6 + $0x120] sm:$0xff]
    %v5902 = vld [vmem:[#allocation6 + $0x128] sm:$0xff]
    %v5903 = vld [vmem:[#allocation6 + $0x130] sm:$0xff]
    %v5904 = vld [vmem:[#allocation6 + $0x138] sm:$0xff]
    %v5905 = vld [vmem:[#allocation6 + $0x140] sm:$0xff]
    %v5906 = vld [vmem:[#allocation6 + $0x148] sm:$0xff]
    %v5907 = vld [vmem:[#allocation6 + $0x150] sm:$0xff]
    %v5908 = vld [vmem:[#allocation6 + $0x158] sm:$0xff]
    %v5909 = vld [vmem:[#allocation6 + $0x160] sm:$0xff]
    %v5910 = vld [vmem:[#allocation6 + $0x168] sm:$0xff]
    %v5911 = vld [vmem:[#allocation6 + $0x170] sm:$0xff]
    %v5912 = vld [vmem:[#allocation6 + $0x178] sm:$0xff]
    %v5913 = vld [vmem:[#allocation6 + $0x180] sm:$0xff]
    %v5914 = vld [vmem:[#allocation6 + $0x188] sm:$0xff]
    %v5915 = vld [vmem:[#allocation6 + $0x190] sm:$0xff]
    %v5916 = vld [vmem:[#allocation6 + $0x198] sm:$0xff]
    %v5917 = vld [vmem:[#allocation6 + $0x1a0] sm:$0xff]
    %v5918 = vld [vmem:[#allocation6 + $0x1a8] sm:$0xff]
    %v5919 = vld [vmem:[#allocation6 + $0x1b0] sm:$0xff]
    %v5920 = vld [vmem:[#allocation6 + $0x1b8] sm:$0xff]
    %v5921 = vld [vmem:[#allocation6 + $0x1c0] sm:$0xff]
    %v5922 = vld [vmem:[#allocation6 + $0x1c8] sm:$0xff]
    %v5923 = vld [vmem:[#allocation6 + $0x1d0] sm:$0xff]
    %v5924 = vld [vmem:[#allocation6 + $0x1d8] sm:$0xff]
    %v5925 = vld [vmem:[#allocation6 + $0x1e0] sm:$0xff]
    %v5926 = vld [vmem:[#allocation6 + $0x1e8] sm:$0xff]
    %v5927 = vld [vmem:[#allocation6 + $0x1f0] sm:$0xff]
    %v5928 = vld [vmem:[#allocation6 + $0x1f8] sm:$0xff]
    %v5929 = vld [vmem:[#allocation6 + $0x200] sm:$0xff]
    %v5930 = vld [vmem:[#allocation6 + $0x208] sm:$0xff]
    %v5931 = vld [vmem:[#allocation6 + $0x210] sm:$0xff]
    %v5932 = vld [vmem:[#allocation6 + $0x218] sm:$0xff]
    %v5933 = vld [vmem:[#allocation6 + $0x220] sm:$0xff]
    %v5934 = vld [vmem:[#allocation6 + $0x228] sm:$0xff]
    %v5935 = vld [vmem:[#allocation6 + $0x230] sm:$0xff]
    %v5936 = vld [vmem:[#allocation6 + $0x238] sm:$0xff]
    %v5937 = vld [vmem:[#allocation6 + $0x240] sm:$0xff]
    %v5938 = vld [vmem:[#allocation6 + $0x248] sm:$0xff]
    %v5939 = vld [vmem:[#allocation6 + $0x250] sm:$0xff]
    %v5940 = vld [vmem:[#allocation6 + $0x258] sm:$0xff]
    %v5941 = vld [vmem:[#allocation6 + $0x260] sm:$0xff]
    %v5942 = vld [vmem:[#allocation6 + $0x268] sm:$0xff]
    %v5943 = vld [vmem:[#allocation6 + $0x270] sm:$0xff]
    %v5944 = vld [vmem:[#allocation6 + $0x278] sm:$0xff]
    %v5945 = vld [vmem:[#allocation6 + $0x280] sm:$0xff]
    %v5946 = vld [vmem:[#allocation6 + $0x288] sm:$0xff]
    %v5947 = vld [vmem:[#allocation6 + $0x290] sm:$0xff]
    %v5948 = vld [vmem:[#allocation6 + $0x298] sm:$0xff]
    %v5949 = vld [vmem:[#allocation6 + $0x2a0] sm:$0xff]
    %v5950 = vld [vmem:[#allocation6 + $0x2a8] sm:$0xff]
    %v5951 = vld [vmem:[#allocation6 + $0x2b0] sm:$0xff]
    %v5952 = vld [vmem:[#allocation6 + $0x2b8] sm:$0xff]
    %v5953 = vld [vmem:[#allocation6 + $0x2c0] sm:$0xff]
    %v5954 = vld [vmem:[#allocation6 + $0x2c8] sm:$0xff]
    %v5955 = vld [vmem:[#allocation6 + $0x2d0] sm:$0xff]
    %v5956 = vld [vmem:[#allocation6 + $0x2d8] sm:$0xff]
    %v5957 = vld [vmem:[#allocation6 + $0x2e0] sm:$0xff]
    %v5958 = vld [vmem:[#allocation6 + $0x2e8] sm:$0xff]
    %v5959 = vld [vmem:[#allocation6 + $0x2f0] sm:$0xff]
    %v5960 = vld [vmem:[#allocation6 + $0x2f8] sm:$0xff]
    %v5961 = vpack.c.bf16 %v5814, %v5811
    %v5962 = vpack.c.bf16 %v5815, %v5812
    %v5963 = vpack.c.bf16 %v5816, %v5813
    %v5964 = vpack.c.bf16 %v5820, %v5817
    %v5965 = vpack.c.bf16 %v5821, %v5818
    %v5966 = vpack.c.bf16 %v5822, %v5819
    %v5967 = vpack.c.bf16 %v5850, %v5847
    %v5968 = vpack.c.bf16 %v5851, %v5848
    %v5969 = vpack.c.bf16 %v5852, %v5849
    %v5970 = vpack.c.bf16 %v5856, %v5853
    %v5971 = vpack.c.bf16 %v5857, %v5854
    %v5972 = vpack.c.bf16 %v5858, %v5855
    %s5973 = scalar_lea.vmem [#allocation6], 768
    %v5974 = vld [vmem:[%s5973] sm:$0xff]
    %v5975 = vld [vmem:[%s5973 + $0x8] sm:$0xff]
    %v5976 = vld [vmem:[%s5973 + $0x10] sm:$0xff]
    %v5977 = vld [vmem:[%s5973 + $0x18] sm:$0xff]
    %v5978 = vld [vmem:[%s5973 + $0x20] sm:$0xff]
    %v5979 = vld [vmem:[%s5973 + $0x28] sm:$0xff]
    %v5980 = vld [vmem:[%s5973 + $0x30] sm:$0xff]
    %v5981 = vld [vmem:[%s5973 + $0x38] sm:$0xff]
    %v5982 = vld [vmem:[%s5973 + $0x40] sm:$0xff]
    %v5983 = vld [vmem:[%s5973 + $0x48] sm:$0xff]
    %v5984 = vld [vmem:[%s5973 + $0x50] sm:$0xff]
    %v5985 = vld [vmem:[%s5973 + $0x58] sm:$0xff]
    %v5986 = vld [vmem:[%s5973 + $0x60] sm:$0xff]
    %v5987 = vld [vmem:[%s5973 + $0x68] sm:$0xff]
    %v5988 = vld [vmem:[%s5973 + $0x70] sm:$0xff]
    %v5989 = vld [vmem:[%s5973 + $0x78] sm:$0xff]
    %v5990 = vld [vmem:[%s5973 + $0x80] sm:$0xff]
    %v5991 = vld [vmem:[%s5973 + $0x88] sm:$0xff]
    %v5992 = vld [vmem:[%s5973 + $0x90] sm:$0xff]
    %v5993 = vld [vmem:[%s5973 + $0x98] sm:$0xff]
    %v5994 = vld [vmem:[%s5973 + $0xa0] sm:$0xff]
    %v5995 = vld [vmem:[%s5973 + $0xa8] sm:$0xff]
    %v5996 = vld [vmem:[%s5973 + $0xb0] sm:$0xff]
    %v5997 = vld [vmem:[%s5973 + $0xb8] sm:$0xff]
    %v5998 = vld [vmem:[%s5973 + $0xc0] sm:$0xff]
    %v5999 = vld [vmem:[%s5973 + $0xc8] sm:$0xff]
    %v6000 = vld [vmem:[%s5973 + $0xd0] sm:$0xff]
    %v6001 = vld [vmem:[%s5973 + $0xd8] sm:$0xff]
    %v6002 = vld [vmem:[%s5973 + $0xe0] sm:$0xff]
    %v6003 = vld [vmem:[%s5973 + $0xe8] sm:$0xff]
    %v6004 = vld [vmem:[%s5973 + $0xf0] sm:$0xff]
    %v6005 = vld [vmem:[%s5973 + $0xf8] sm:$0xff]
    %v6006 = vld [vmem:[%s5973 + $0x100] sm:$0xff]
    %v6007 = vld [vmem:[%s5973 + $0x108] sm:$0xff]
    %v6008 = vld [vmem:[%s5973 + $0x110] sm:$0xff]
    %v6009 = vld [vmem:[%s5973 + $0x118] sm:$0xff]
    %v6010 = vld [vmem:[%s5973 + $0x120] sm:$0xff]
    %v6011 = vld [vmem:[%s5973 + $0x128] sm:$0xff]
    %v6012 = vld [vmem:[%s5973 + $0x130] sm:$0xff]
    %v6013 = vld [vmem:[%s5973 + $0x138] sm:$0xff]
    %v6014 = vld [vmem:[%s5973 + $0x140] sm:$0xff]
    %v6015 = vld [vmem:[%s5973 + $0x148] sm:$0xff]
    %v6016 = vld [vmem:[%s5973 + $0x150] sm:$0xff]
    %v6017 = vld [vmem:[%s5973 + $0x158] sm:$0xff]
    %v6018 = vld [vmem:[%s5973 + $0x160] sm:$0xff]
    %v6019 = vld [vmem:[%s5973 + $0x168] sm:$0xff]
    %v6020 = vld [vmem:[%s5973 + $0x170] sm:$0xff]
    %v6021 = vld [vmem:[%s5973 + $0x178] sm:$0xff]
    %v6022 = vld [vmem:[%s5973 + $0x180] sm:$0xff]
    %v6023 = vld [vmem:[%s5973 + $0x188] sm:$0xff]
    %v6024 = vld [vmem:[%s5973 + $0x190] sm:$0xff]
    %v6025 = vld [vmem:[%s5973 + $0x198] sm:$0xff]
    %v6026 = vld [vmem:[%s5973 + $0x1a0] sm:$0xff]
    %v6027 = vld [vmem:[%s5973 + $0x1a8] sm:$0xff]
    %v6028 = vld [vmem:[%s5973 + $0x1b0] sm:$0xff]
    %v6029 = vld [vmem:[%s5973 + $0x1b8] sm:$0xff]
    %v6030 = vld [vmem:[%s5973 + $0x1c0] sm:$0xff]
    %v6031 = vld [vmem:[%s5973 + $0x1c8] sm:$0xff]
    %v6032 = vld [vmem:[%s5973 + $0x1d0] sm:$0xff]
    %v6033 = vld [vmem:[%s5973 + $0x1d8] sm:$0xff]
    %v6034 = vld [vmem:[%s5973 + $0x1e0] sm:$0xff]
    %v6035 = vld [vmem:[%s5973 + $0x1e8] sm:$0xff]
    %v6036 = vld [vmem:[%s5973 + $0x1f0] sm:$0xff]
    %v6037 = vld [vmem:[%s5973 + $0x1f8] sm:$0xff]
    %v6038 = vld [vmem:[%s5973 + $0x200] sm:$0xff]
    %v6039 = vld [vmem:[%s5973 + $0x208] sm:$0xff]
    %v6040 = vld [vmem:[%s5973 + $0x210] sm:$0xff]
    %v6041 = vld [vmem:[%s5973 + $0x218] sm:$0xff]
    %v6042 = vld [vmem:[%s5973 + $0x220] sm:$0xff]
    %v6043 = vld [vmem:[%s5973 + $0x228] sm:$0xff]
    %v6044 = vld [vmem:[%s5973 + $0x230] sm:$0xff]
    %v6045 = vld [vmem:[%s5973 + $0x238] sm:$0xff]
    %v6046 = vld [vmem:[%s5973 + $0x240] sm:$0xff]
    %v6047 = vld [vmem:[%s5973 + $0x248] sm:$0xff]
    %v6048 = vld [vmem:[%s5973 + $0x250] sm:$0xff]
    %v6049 = vld [vmem:[%s5973 + $0x258] sm:$0xff]
    %v6050 = vld [vmem:[%s5973 + $0x260] sm:$0xff]
    %v6051 = vld [vmem:[%s5973 + $0x268] sm:$0xff]
    %v6052 = vld [vmem:[%s5973 + $0x270] sm:$0xff]
    %v6053 = vld [vmem:[%s5973 + $0x278] sm:$0xff]
    %v6054 = vld [vmem:[%s5973 + $0x280] sm:$0xff]
    %v6055 = vld [vmem:[%s5973 + $0x288] sm:$0xff]
    %v6056 = vld [vmem:[%s5973 + $0x290] sm:$0xff]
    %v6057 = vld [vmem:[%s5973 + $0x298] sm:$0xff]
    %v6058 = vld [vmem:[%s5973 + $0x2a0] sm:$0xff]
    %v6059 = vld [vmem:[%s5973 + $0x2a8] sm:$0xff]
    %v6060 = vld [vmem:[%s5973 + $0x2b0] sm:$0xff]
    %v6061 = vld [vmem:[%s5973 + $0x2b8] sm:$0xff]
    %v6062 = vld [vmem:[%s5973 + $0x2c0] sm:$0xff]
    %v6063 = vld [vmem:[%s5973 + $0x2c8] sm:$0xff]
    %v6064 = vld [vmem:[%s5973 + $0x2d0] sm:$0xff]
    %v6065 = vld [vmem:[%s5973 + $0x2d8] sm:$0xff]
    %v6066 = vld [vmem:[%s5973 + $0x2e0] sm:$0xff]
    %v6067 = vld [vmem:[%s5973 + $0x2e8] sm:$0xff]
    %v6068 = vld [vmem:[%s5973 + $0x2f0] sm:$0xff]
    %v6069 = vld [vmem:[%s5973 + $0x2f8] sm:$0xff]
    %v6166 = vunpack.c.l.b16 %v5974
    %v6167 = vunpack.c.h.b16 %v5974
    %v6168 = vunpack.c.l.b16 %v5975
    %v6169 = vunpack.c.h.b16 %v5975
    %v6170 = vunpack.c.l.b16 %v5976
    %v6171 = vunpack.c.h.b16 %v5976
    %v6172 = vunpack.c.l.b16 %v5977
    %v6173 = vunpack.c.h.b16 %v5977
    %v6174 = vunpack.c.l.b16 %v5978
    %v6175 = vunpack.c.h.b16 %v5978
    %v6176 = vunpack.c.l.b16 %v5979
    %v6177 = vunpack.c.h.b16 %v5979
    %v6178 = vunpack.c.l.b16 %v5980
    %v6179 = vunpack.c.h.b16 %v5980
    %v6180 = vunpack.c.l.b16 %v5981
    %v6181 = vunpack.c.h.b16 %v5981
    %v6182 = vunpack.c.l.b16 %v5982
    %v6183 = vunpack.c.h.b16 %v5982
    %v6184 = vunpack.c.l.b16 %v5983
    %v6185 = vunpack.c.h.b16 %v5983
    %v6186 = vunpack.c.l.b16 %v5984
    %v6187 = vunpack.c.h.b16 %v5984
    %v6188 = vunpack.c.l.b16 %v5985
    %v6189 = vunpack.c.h.b16 %v5985
    %v6190 = vunpack.c.l.b16 %v5986
    %v6191 = vunpack.c.h.b16 %v5986
    %v6192 = vunpack.c.l.b16 %v5987
    %v6193 = vunpack.c.h.b16 %v5987
    %v6194 = vunpack.c.l.b16 %v5988
    %v6195 = vunpack.c.h.b16 %v5988
    %v6196 = vunpack.c.l.b16 %v5989
    %v6197 = vunpack.c.h.b16 %v5989
    %v6198 = vunpack.c.l.b16 %v5990
    %v6199 = vunpack.c.h.b16 %v5990
    %v6200 = vunpack.c.l.b16 %v5991
    %v6201 = vunpack.c.h.b16 %v5991
    %v6202 = vunpack.c.l.b16 %v5992
    %v6203 = vunpack.c.h.b16 %v5992
    %v6204 = vunpack.c.l.b16 %v5993
    %v6205 = vunpack.c.h.b16 %v5993
    %v6206 = vunpack.c.l.b16 %v5994
    %v6207 = vunpack.c.h.b16 %v5994
    %v6208 = vunpack.c.l.b16 %v5995
    %v6209 = vunpack.c.h.b16 %v5995
    %v6210 = vunpack.c.l.b16 %v5996
    %v6211 = vunpack.c.h.b16 %v5996
    %v6212 = vunpack.c.l.b16 %v5997
    %v6213 = vunpack.c.h.b16 %v5997
    %v6214 = vunpack.c.l.b16 %v5998
    %v6215 = vunpack.c.h.b16 %v5998
    %v6216 = vunpack.c.l.b16 %v5999
    %v6217 = vunpack.c.h.b16 %v5999
    %v6218 = vunpack.c.l.b16 %v6000
    %v6219 = vunpack.c.h.b16 %v6000
    %v6220 = vunpack.c.l.b16 %v6001
    %v6221 = vunpack.c.h.b16 %v6001
    %v6222 = vunpack.c.l.b16 %v6002
    %v6223 = vunpack.c.h.b16 %v6002
    %v6224 = vunpack.c.l.b16 %v6003
    %v6225 = vunpack.c.h.b16 %v6003
    %v6226 = vunpack.c.l.b16 %v6004
    %v6227 = vunpack.c.h.b16 %v6004
    %v6228 = vunpack.c.l.b16 %v6005
    %v6229 = vunpack.c.h.b16 %v6005
    %v6230 = vunpack.c.l.b16 %v6006
    %v6231 = vunpack.c.h.b16 %v6006
    %v6232 = vunpack.c.l.b16 %v6007
    %v6233 = vunpack.c.h.b16 %v6007
    %v6234 = vunpack.c.l.b16 %v6008
    %v6235 = vunpack.c.h.b16 %v6008
    %v6236 = vunpack.c.l.b16 %v6009
    %v6237 = vunpack.c.h.b16 %v6009
    %v6238 = vunpack.c.l.b16 %v6010
    %v6239 = vunpack.c.h.b16 %v6010
    %v6240 = vunpack.c.l.b16 %v6011
    %v6241 = vunpack.c.h.b16 %v6011
    %v6242 = vunpack.c.l.b16 %v6012
    %v6243 = vunpack.c.h.b16 %v6012
    %v6244 = vunpack.c.l.b16 %v6013
    %v6245 = vunpack.c.h.b16 %v6013
    %v6246 = vunpack.c.l.b16 %v6014
    %v6247 = vunpack.c.h.b16 %v6014
    %v6248 = vunpack.c.l.b16 %v6015
    %v6249 = vunpack.c.h.b16 %v6015
    %v6250 = vunpack.c.l.b16 %v6016
    %v6251 = vunpack.c.h.b16 %v6016
    %v6252 = vunpack.c.l.b16 %v6017
    %v6253 = vunpack.c.h.b16 %v6017
    %v6254 = vunpack.c.l.b16 %v6018
    %v6255 = vunpack.c.h.b16 %v6018
    %v6256 = vunpack.c.l.b16 %v6019
    %v6257 = vunpack.c.h.b16 %v6019
    %v6258 = vunpack.c.l.b16 %v6020
    %v6259 = vunpack.c.h.b16 %v6020
    %v6260 = vunpack.c.l.b16 %v6021
    %v6261 = vunpack.c.h.b16 %v6021
    %v6262 = vunpack.c.l.b16 %v6022
    %v6263 = vunpack.c.h.b16 %v6022
    %v6264 = vunpack.c.l.b16 %v6023
    %v6265 = vunpack.c.h.b16 %v6023
    %v6266 = vunpack.c.l.b16 %v6024
    %v6267 = vunpack.c.h.b16 %v6024
    %v6268 = vunpack.c.l.b16 %v6025
    %v6269 = vunpack.c.h.b16 %v6025
    %v6270 = vunpack.c.l.b16 %v6026
    %v6271 = vunpack.c.h.b16 %v6026
    %v6272 = vunpack.c.l.b16 %v6027
    %v6273 = vunpack.c.h.b16 %v6027
    %v6274 = vunpack.c.l.b16 %v6028
    %v6275 = vunpack.c.h.b16 %v6028
    %v6276 = vunpack.c.l.b16 %v6029
    %v6277 = vunpack.c.h.b16 %v6029
    %v6278 = vunpack.c.l.b16 %v6030
    %v6279 = vunpack.c.h.b16 %v6030
    %v6280 = vunpack.c.l.b16 %v6031
    %v6281 = vunpack.c.h.b16 %v6031
    %v6282 = vunpack.c.l.b16 %v6032
    %v6283 = vunpack.c.h.b16 %v6032
    %v6284 = vunpack.c.l.b16 %v6033
    %v6285 = vunpack.c.h.b16 %v6033
    %v6286 = vunpack.c.l.b16 %v6034
    %v6287 = vunpack.c.h.b16 %v6034
    %v6288 = vunpack.c.l.b16 %v6035
    %v6289 = vunpack.c.h.b16 %v6035
    %v6290 = vunpack.c.l.b16 %v6036
    %v6291 = vunpack.c.h.b16 %v6036
    %v6292 = vunpack.c.l.b16 %v6037
    %v6293 = vunpack.c.h.b16 %v6037
    %v6294 = vunpack.c.l.b16 %v6038
    %v6295 = vunpack.c.h.b16 %v6038
    %v6296 = vunpack.c.l.b16 %v6039
    %v6297 = vunpack.c.h.b16 %v6039
    %v6298 = vunpack.c.l.b16 %v6040
    %v6299 = vunpack.c.h.b16 %v6040
    %v6300 = vunpack.c.l.b16 %v6041
    %v6301 = vunpack.c.h.b16 %v6041
    %v6302 = vunpack.c.l.b16 %v6042
    %v6303 = vunpack.c.h.b16 %v6042
    %v6304 = vunpack.c.l.b16 %v6043
    %v6305 = vunpack.c.h.b16 %v6043
    %v6306 = vunpack.c.l.b16 %v6044
    %v6307 = vunpack.c.h.b16 %v6044
    %v6308 = vunpack.c.l.b16 %v6045
    %v6309 = vunpack.c.h.b16 %v6045
    %v6310 = vunpack.c.l.b16 %v6046
    %v6311 = vunpack.c.h.b16 %v6046
    %v6312 = vunpack.c.l.b16 %v6047
    %v6313 = vunpack.c.h.b16 %v6047
    %v6314 = vunpack.c.l.b16 %v6048
    %v6315 = vunpack.c.h.b16 %v6048
    %v6316 = vunpack.c.l.b16 %v6049
    %v6317 = vunpack.c.h.b16 %v6049
    %v6318 = vunpack.c.l.b16 %v6050
    %v6319 = vunpack.c.h.b16 %v6050
    %v6320 = vunpack.c.l.b16 %v6051
    %v6321 = vunpack.c.h.b16 %v6051
    %v6322 = vunpack.c.l.b16 %v6052
    %v6323 = vunpack.c.h.b16 %v6052
    %v6324 = vunpack.c.l.b16 %v6053
    %v6325 = vunpack.c.h.b16 %v6053
    %v6326 = vunpack.c.l.b16 %v6054
    %v6327 = vunpack.c.h.b16 %v6054
    %v6328 = vunpack.c.l.b16 %v6055
    %v6329 = vunpack.c.h.b16 %v6055
    %v6330 = vunpack.c.l.b16 %v6056
    %v6331 = vunpack.c.h.b16 %v6056
    %v6332 = vunpack.c.l.b16 %v6057
    %v6333 = vunpack.c.h.b16 %v6057
    %v6334 = vunpack.c.l.b16 %v6058
    %v6335 = vunpack.c.h.b16 %v6058
    %v6336 = vunpack.c.l.b16 %v6059
    %v6337 = vunpack.c.h.b16 %v6059
    %v6338 = vunpack.c.l.b16 %v6060
    %v6339 = vunpack.c.h.b16 %v6060
    %v6340 = vunpack.c.l.b16 %v6061
    %v6341 = vunpack.c.h.b16 %v6061
    %v6342 = vunpack.c.l.b16 %v6062
    %v6343 = vunpack.c.h.b16 %v6062
    %v6344 = vunpack.c.l.b16 %v6063
    %v6345 = vunpack.c.h.b16 %v6063
    %v6346 = vunpack.c.l.b16 %v6064
    %v6347 = vunpack.c.h.b16 %v6064
    %v6348 = vunpack.c.l.b16 %v6065
    %v6349 = vunpack.c.h.b16 %v6065
    %v6350 = vunpack.c.l.b16 %v6066
    %v6351 = vunpack.c.h.b16 %v6066
    %v6352 = vunpack.c.l.b16 %v6067
    %v6353 = vunpack.c.h.b16 %v6067
    %v6354 = vunpack.c.l.b16 %v6068
    %v6355 = vunpack.c.h.b16 %v6068
    %v6356 = vunpack.c.l.b16 %v6069
    %v6357 = vunpack.c.h.b16 %v6069
    %v6358 = vpack.c.b16 %v6170, %v6166
    %v6359 = vpack.c.b16 %v6171, %v6167
    %v6360 = vpack.c.b16 %v6172, %v6168
    %v6361 = vpack.c.b16 %v6173, %v6169
    %v6362 = vpack.c.b16 %v6178, %v6174
    %v6363 = vpack.c.b16 %v6179, %v6175
    %v6364 = vpack.c.b16 %v6180, %v6176
    %v6365 = vpack.c.b16 %v6181, %v6177
    %v6366 = vpack.c.b16 %v6186, %v6182
    %v6367 = vpack.c.b16 %v6187, %v6183
    %v6368 = vpack.c.b16 %v6188, %v6184
    %v6369 = vpack.c.b16 %v6189, %v6185
    %v6370 = vpack.c.b16 %v6194, %v6190
    %v6371 = vpack.c.b16 %v6195, %v6191
    %v6372 = vpack.c.b16 %v6196, %v6192
    %v6373 = vpack.c.b16 %v6197, %v6193
    %v6374 = vpack.c.b16 %v6202, %v6198
    %v6375 = vpack.c.b16 %v6203, %v6199
    %v6376 = vpack.c.b16 %v6204, %v6200
    %v6377 = vpack.c.b16 %v6205, %v6201
    %v6378 = vpack.c.b16 %v6210, %v6206
    %v6379 = vpack.c.b16 %v6211, %v6207
    %v6380 = vpack.c.b16 %v6212, %v6208
    %v6381 = vpack.c.b16 %v6213, %v6209
    %v6382 = vpack.c.b16 %v6218, %v6214
    %v6383 = vpack.c.b16 %v6219, %v6215
    %v6384 = vpack.c.b16 %v6220, %v6216
    %v6385 = vpack.c.b16 %v6221, %v6217
    %v6386 = vpack.c.b16 %v6226, %v6222
    %v6387 = vpack.c.b16 %v6227, %v6223
    %v6388 = vpack.c.b16 %v6228, %v6224
    %v6389 = vpack.c.b16 %v6229, %v6225
    %v6390 = vpack.c.b16 %v6234, %v6230
    %v6391 = vpack.c.b16 %v6235, %v6231
    %v6392 = vpack.c.b16 %v6236, %v6232
    %v6393 = vpack.c.b16 %v6237, %v6233
    %v6394 = vpack.c.b16 %v6242, %v6238
    %v6395 = vpack.c.b16 %v6243, %v6239
    %v6396 = vpack.c.b16 %v6244, %v6240
    %v6397 = vpack.c.b16 %v6245, %v6241
    %v6398 = vpack.c.b16 %v6250, %v6246
    %v6399 = vpack.c.b16 %v6251, %v6247
    %v6400 = vpack.c.b16 %v6252, %v6248
    %v6401 = vpack.c.b16 %v6253, %v6249
    %v6402 = vpack.c.b16 %v6258, %v6254
    %v6403 = vpack.c.b16 %v6259, %v6255
    %v6404 = vpack.c.b16 %v6260, %v6256
    %v6405 = vpack.c.b16 %v6261, %v6257
    %v6406 = vpack.c.b16 %v6266, %v6262
    %v6407 = vpack.c.b16 %v6267, %v6263
    %v6408 = vpack.c.b16 %v6268, %v6264
    %v6409 = vpack.c.b16 %v6269, %v6265
    %v6410 = vpack.c.b16 %v6274, %v6270
    %v6411 = vpack.c.b16 %v6275, %v6271
    %v6412 = vpack.c.b16 %v6276, %v6272
    %v6413 = vpack.c.b16 %v6277, %v6273
    %v6414 = vpack.c.b16 %v6282, %v6278
    %v6415 = vpack.c.b16 %v6283, %v6279
    %v6416 = vpack.c.b16 %v6284, %v6280
    %v6417 = vpack.c.b16 %v6285, %v6281
    %v6418 = vpack.c.b16 %v6290, %v6286
    %v6419 = vpack.c.b16 %v6291, %v6287
    %v6420 = vpack.c.b16 %v6292, %v6288
    %v6421 = vpack.c.b16 %v6293, %v6289
    %v6422 = vpack.c.b16 %v6298, %v6294
    %v6423 = vpack.c.b16 %v6299, %v6295
    %v6424 = vpack.c.b16 %v6300, %v6296
    %v6425 = vpack.c.b16 %v6301, %v6297
    %v6426 = vpack.c.b16 %v6306, %v6302
    %v6427 = vpack.c.b16 %v6307, %v6303
    %v6428 = vpack.c.b16 %v6308, %v6304
    %v6429 = vpack.c.b16 %v6309, %v6305
    %v6430 = vpack.c.b16 %v6314, %v6310
    %v6431 = vpack.c.b16 %v6315, %v6311
    %v6432 = vpack.c.b16 %v6316, %v6312
    %v6433 = vpack.c.b16 %v6317, %v6313
    %v6434 = vpack.c.b16 %v6322, %v6318
    %v6435 = vpack.c.b16 %v6323, %v6319
    %v6436 = vpack.c.b16 %v6324, %v6320
    %v6437 = vpack.c.b16 %v6325, %v6321
    %v6438 = vpack.c.b16 %v6330, %v6326
    %v6439 = vpack.c.b16 %v6331, %v6327
    %v6440 = vpack.c.b16 %v6332, %v6328
    %v6441 = vpack.c.b16 %v6333, %v6329
    %v6442 = vpack.c.b16 %v6338, %v6334
    %v6443 = vpack.c.b16 %v6339, %v6335
    %v6444 = vpack.c.b16 %v6340, %v6336
    %v6445 = vpack.c.b16 %v6341, %v6337
    %v6446 = vpack.c.b16 %v6346, %v6342
    %v6447 = vpack.c.b16 %v6347, %v6343
    %v6448 = vpack.c.b16 %v6348, %v6344
    %v6449 = vpack.c.b16 %v6349, %v6345
    %v6450 = vpack.c.b16 %v6354, %v6350
    %v6451 = vpack.c.b16 %v6355, %v6351
    %v6452 = vpack.c.b16 %v6356, %v6352
    %v6453 = vpack.c.b16 %v6357, %v6353
    %6550 = vmatprep.subr.bf16.mxu0 %v6359
    %6551 = vmatpush1.bf16.msra.mxu0 %v6358
    %6552 = vmatprep.subr.bf16.mxu0 %v6363
    %6553 = vmatpush1.bf16.msra.mxu0 %v6362
    %6554 = vmatprep.subr.bf16.mxu0 %v6367
    %6555 = vmatpush1.bf16.msra.mxu0 %v6366
    %6556 = vmatprep.subr.bf16.mxu0 %v6371
    %6557 = vmatpush1.bf16.msra.mxu0 %v6370
    %6558 = vmatprep.subr.bf16.mxu0 %v6375
    %6559 = vmatpush1.bf16.msra.mxu0 %v6374
    %6560 = vmatprep.subr.bf16.mxu0 %v6379
    %6561 = vmatpush1.bf16.msra.mxu0 %v6378
    %6562 = vmatprep.subr.bf16.mxu0 %v6383
    %6563 = vmatpush1.bf16.msra.mxu0 %v6382
    %6564 = vmatprep.subr.bf16.mxu0 %v6387
    %6565 = vmatpush1.bf16.msra.mxu0 %v6386
    %6566 = vmatprep.subr.bf16.mxu0 %v6391
    %6567 = vmatpush1.bf16.msra.mxu0 %v6390
    %6568 = vmatprep.subr.bf16.mxu0 %v6395
    %6569 = vmatpush1.bf16.msra.mxu0 %v6394
    %6570 = vmatprep.subr.bf16.mxu0 %v6399
    %6571 = vmatpush1.bf16.msra.mxu0 %v6398
    %6572 = vmatprep.subr.bf16.mxu0 %v6403
    %6573 = vmatpush1.bf16.msra.mxu0 %v6402
    %6574 = vmatprep.subr.bf16.mxu0 %v6407
    %6575 = vmatpush1.bf16.msra.mxu0 %v6406
    %6576 = vmatprep.subr.bf16.mxu0 %v6411
    %6577 = vmatpush1.bf16.msra.mxu0 %v6410
    %6578 = vmatprep.subr.bf16.mxu0 %v6415
    %6579 = vmatpush1.bf16.msra.mxu0 %v6414
    %6580 = vmatprep.subr.bf16.mxu0 %v6419
    %6581 = vmatpush1.bf16.msra.mxu0 %v6418
    %6582 = vmatprep.mubr.bf16.mxu0 %v5968
    %6583 = vmatmul.mubr.bf16.gmra.mrb[0].mxu0 %v5967
    %v6584 = vpop.f32.mrb[0].mxu0
    %v6585 = vadd.f32 0.0, %v6584
    %v6586 = vpop.f32.mrb[0].mxu0
    %v6587 = vadd.f32 0.0, %v6586
    %v6588 = vpop.f32.mrb[0].mxu0
    %v6589 = vadd.f32 0.0, %v6588
    %v6590 = vpop.f32.mrb[0].mxu0
    %v6591 = vadd.f32 0.0, %v6590
    %6592 = vmatprep.mubr.bf16.mxu0 %v5971
    %6593 = vmatmul.mubr.bf16.gmra.mrb[0].mxu0 %v5970
    %v6594 = vpop.f32.mrb[0].mxu0
    %v6595 = vadd.f32 0.0, %v6594
    %v6596 = vpop.f32.mrb[0].mxu0
    %v6597 = vadd.f32 0.0, %v6596
    %v6598 = vpop.f32.mrb[0].mxu0
    %v6599 = vadd.f32 0.0, %v6598
    %v6600 = vpop.f32.mrb[0].mxu0
    %v6601 = vadd.f32 0.0, %v6600
    %6602 = vdwg.mxu0
    %6603 = vmatprep.subr.bf16.mxu0 %v6423
    %6604 = vmatpush1.bf16.msra.mxu0 %v6422
    %6605 = vmatprep.subr.bf16.mxu0 %v6427
    %6606 = vmatpush1.bf16.msra.mxu0 %v6426
    %6607 = vmatprep.subr.bf16.mxu0 %v6431
    %6608 = vmatpush1.bf16.msra.mxu0 %v6430
    %6609 = vmatprep.subr.bf16.mxu0 %v6435
    %6610 = vmatpush1.bf16.msra.mxu0 %v6434
    %6611 = vmatprep.subr.bf16.mxu0 %v6439
    %6612 = vmatpush1.bf16.msra.mxu0 %v6438
    %6613 = vmatprep.subr.bf16.mxu0 %v6443
    %6614 = vmatpush1.bf16.msra.mxu0 %v6442
    %6615 = vmatprep.subr.bf16.mxu0 %v6447
    %6616 = vmatpush1.bf16.msra.mxu0 %v6446
    %6617 = vmatprep.subr.bf16.mxu0 %v6451
    %6618 = vmatpush1.bf16.msra.mxu0 %v6450
    %6619 = vmatprep.subr.bf16.mxu0 0
    %6620 = vmatpush1.bf16.msra.mxu0 0
    %6621 = vmatprep.subr.bf16.mxu0 0
    %6622 = vmatpush1.bf16.msra.mxu0 0
    %6623 = vmatprep.subr.bf16.mxu0 0
    %6624 = vmatpush1.bf16.msra.mxu0 0
    %6625 = vmatprep.subr.bf16.mxu0 0
    %6626 = vmatpush1.bf16.msra.mxu0 0
    %6627 = vmatprep.subr.bf16.mxu0 0
    %6628 = vmatpush1.bf16.msra.mxu0 0
    %6629 = vmatprep.subr.bf16.mxu0 0
    %6630 = vmatpush1.bf16.msra.mxu0 0
    %6631 = vmatprep.subr.bf16.mxu0 0
    %6632 = vmatpush1.bf16.msra.mxu0 0
    %6633 = vmatprep.subr.bf16.mxu0 0
    %6634 = vmatpush1.bf16.msra.mxu0 0
    %6635 = vmatprep.mubr.bf16.mxu0 0
    %6636 = vmatmul.mubr.bf16.gmra.mrb[0].mxu0 %v5969
    %v6637 = vpop.f32.mrb[0].mxu0
    %v6638 = vadd.f32 %v6585, %v6637
    %v6639 = vpop.f32.mrb[0].mxu0
    %v6640 = vadd.f32 %v6587, %v6639
    %v6641 = vpop.f32.mrb[0].mxu0
    %v6642 = vadd.f32 %v6589, %v6641
    %v6643 = vpop.f32.mrb[0].mxu0
    %v6644 = vadd.f32 %v6591, %v6643
    %6645 = vmatprep.mubr.bf16.mxu0 0
    %6646 = vmatmul.mubr.bf16.gmra.mrb[0].mxu0 %v5972
    %v6647 = vpop.f32.mrb[0].mxu0
    %v6648 = vadd.f32 %v6595, %v6647
    %v6649 = vpop.f32.mrb[0].mxu0
    %v6650 = vadd.f32 %v6597, %v6649
    %v6651 = vpop.f32.mrb[0].mxu0
    %v6652 = vadd.f32 %v6599, %v6651
    %v6653 = vpop.f32.mrb[0].mxu0
    %v6654 = vadd.f32 %v6601, %v6653
    %6655 = vdwg.mxu0
    %6656 = vmatprep.subr.bf16.mxu0 %v6361
    %6657 = vmatpush1.bf16.msra.mxu0 %v6360
    %6658 = vmatprep.subr.bf16.mxu0 %v6365
    %6659 = vmatpush1.bf16.msra.mxu0 %v6364
    %6660 = vmatprep.subr.bf16.mxu0 %v6369
    %6661 = vmatpush1.bf16.msra.mxu0 %v6368
    %6662 = vmatprep.subr.bf16.mxu0 %v6373
    %6663 = vmatpush1.bf16.msra.mxu0 %v6372
    %6664 = vmatprep.subr.bf16.mxu0 %v6377
    %6665 = vmatpush1.bf16.msra.mxu0 %v6376
    %6666 = vmatprep.subr.bf16.mxu0 %v6381
    %6667 = vmatpush1.bf16.msra.mxu0 %v6380
    %6668 = vmatprep.subr.bf16.mxu0 %v6385
    %6669 = vmatpush1.bf16.msra.mxu0 %v6384
    %6670 = vmatprep.subr.bf16.mxu0 %v6389
    %6671 = vmatpush1.bf16.msra.mxu0 %v6388
    %6672 = vmatprep.subr.bf16.mxu0 %v6393
    %6673 = vmatpush1.bf16.msra.mxu0 %v6392
    %6674 = vmatprep.subr.bf16.mxu0 %v6397
    %6675 = vmatpush1.bf16.msra.mxu0 %v6396
    %6676 = vmatprep.subr.bf16.mxu0 %v6401
    %6677 = vmatpush1.bf16.msra.mxu0 %v6400
    %6678 = vmatprep.subr.bf16.mxu0 %v6405
    %6679 = vmatpush1.bf16.msra.mxu0 %v6404
    %6680 = vmatprep.subr.bf16.mxu0 %v6409
    %6681 = vmatpush1.bf16.msra.mxu0 %v6408
    %6682 = vmatprep.subr.bf16.mxu0 %v6413
    %6683 = vmatpush1.bf16.msra.mxu0 %v6412
    %6684 = vmatprep.subr.bf16.mxu0 %v6417
    %6685 = vmatpush1.bf16.msra.mxu0 %v6416
    %6686 = vmatprep.subr.bf16.mxu0 %v6421
    %6687 = vmatpush1.bf16.msra.mxu0 %v6420
    %6688 = vmatprep.mubr.bf16.mxu0 %v5968
    %6689 = vmatmul.mubr.bf16.gmra.mrb[0].mxu0 %v5967
    %v6690 = vpop.f32.mrb[0].mxu0
    %v6691 = vadd.f32 0.0, %v6690
    %v6692 = vpop.f32.mrb[0].mxu0
    %v6693 = vadd.f32 0.0, %v6692
    %v6694 = vpop.f32.mrb[0].mxu0
    %v6695 = vadd.f32 0.0, %v6694
    %v6696 = vpop.f32.mrb[0].mxu0
    %v6697 = vadd.f32 0.0, %v6696
    %6698 = vmatprep.mubr.bf16.mxu0 %v5971
    %6699 = vmatmul.mubr.bf16.gmra.mrb[0].mxu0 %v5970
    %v6700 = vpop.f32.mrb[0].mxu0
    %v6701 = vadd.f32 0.0, %v6700
    %v6702 = vpop.f32.mrb[0].mxu0
    %v6703 = vadd.f32 0.0, %v6702
    %v6704 = vpop.f32.mrb[0].mxu0
    %v6705 = vadd.f32 0.0, %v6704
    %v6706 = vpop.f32.mrb[0].mxu0
    %v6707 = vadd.f32 0.0, %v6706
    %6708 = vdwg.mxu0
    %6709 = vmatprep.subr.bf16.mxu0 %v6425
    %6710 = vmatpush1.bf16.msra.mxu0 %v6424
    %6711 = vmatprep.subr.bf16.mxu0 %v6429
    %6712 = vmatpush1.bf16.msra.mxu0 %v6428
    %6713 = vmatprep.subr.bf16.mxu0 %v6433
    %6714 = vmatpush1.bf16.msra.mxu0 %v6432
    %6715 = vmatprep.subr.bf16.mxu0 %v6437
    %6716 = vmatpush1.bf16.msra.mxu0 %v6436
    %6717 = vmatprep.subr.bf16.mxu0 %v6441
    %6718 = vmatpush1.bf16.msra.mxu0 %v6440
    %6719 = vmatprep.subr.bf16.mxu0 %v6445
    %6720 = vmatpush1.bf16.msra.mxu0 %v6444
    %6721 = vmatprep.subr.bf16.mxu0 %v6449
    %6722 = vmatpush1.bf16.msra.mxu0 %v6448
    %6723 = vmatprep.subr.bf16.mxu0 %v6453
    %6724 = vmatpush1.bf16.msra.mxu0 %v6452
    %6725 = vmatprep.subr.bf16.mxu0 0
    %6726 = vmatpush1.bf16.msra.mxu0 0
    %6727 = vmatprep.subr.bf16.mxu0 0
    %6728 = vmatpush1.bf16.msra.mxu0 0
    %6729 = vmatprep.subr.bf16.mxu0 0
    %6730 = vmatpush1.bf16.msra.mxu0 0
    %6731 = vmatprep.subr.bf16.mxu0 0
    %6732 = vmatpush1.bf16.msra.mxu0 0
    %6733 = vmatprep.subr.bf16.mxu0 0
    %6734 = vmatpush1.bf16.msra.mxu0 0
    %6735 = vmatprep.subr.bf16.mxu0 0
    %6736 = vmatpush1.bf16.msra.mxu0 0
    %6737 = vmatprep.subr.bf16.mxu0 0
    %6738 = vmatpush1.bf16.msra.mxu0 0
    %6739 = vmatprep.subr.bf16.mxu0 0
    %6740 = vmatpush1.bf16.msra.mxu0 0
    %6741 = vmatprep.mubr.bf16.mxu0 0
    %6742 = vmatmul.mubr.bf16.gmra.mrb[0].mxu0 %v5969
    %v6743 = vpop.f32.mrb[0].mxu0
    %v6744 = vadd.f32 %v6691, %v6743
    %v6745 = vpop.f32.mrb[0].mxu0
    %v6746 = vadd.f32 %v6693, %v6745
    %v6747 = vpop.f32.mrb[0].mxu0
    %v6748 = vadd.f32 %v6695, %v6747
    %v6749 = vpop.f32.mrb[0].mxu0
    %v6750 = vadd.f32 %v6697, %v6749
    %6751 = vmatprep.mubr.bf16.mxu0 0
    %6752 = vmatmul.mubr.bf16.gmra.mrb[0].mxu0 %v5972
    %v6753 = vpop.f32.mrb[0].mxu0
    %v6754 = vadd.f32 %v6701, %v6753
    %v6755 = vpop.f32.mrb[0].mxu0
    %v6756 = vadd.f32 %v6703, %v6755
    %v6757 = vpop.f32.mrb[0].mxu0
    %v6758 = vadd.f32 %v6705, %v6757
    %v6759 = vpop.f32.mrb[0].mxu0
    %v6760 = vadd.f32 %v6707, %v6759
    %6761 = vdwg.mxu0
    %v6858 = vunpack.c.l.b16 %v5865
    %v6859 = vunpack.c.h.b16 %v5865
    %v6860 = vunpack.c.l.b16 %v5866
    %v6861 = vunpack.c.h.b16 %v5866
    %v6862 = vunpack.c.l.b16 %v5867
    %v6863 = vunpack.c.h.b16 %v5867
    %v6864 = vunpack.c.l.b16 %v5868
    %v6865 = vunpack.c.h.b16 %v5868
    %v6866 = vunpack.c.l.b16 %v5869
    %v6867 = vunpack.c.h.b16 %v5869
    %v6868 = vunpack.c.l.b16 %v5870
    %v6869 = vunpack.c.h.b16 %v5870
    %v6870 = vunpack.c.l.b16 %v5871
    %v6871 = vunpack.c.h.b16 %v5871
    %v6872 = vunpack.c.l.b16 %v5872
    %v6873 = vunpack.c.h.b16 %v5872
    %v6874 = vunpack.c.l.b16 %v5873
    %v6875 = vunpack.c.h.b16 %v5873
    %v6876 = vunpack.c.l.b16 %v5874
    %v6877 = vunpack.c.h.b16 %v5874
    %v6878 = vunpack.c.l.b16 %v5875
    %v6879 = vunpack.c.h.b16 %v5875
    %v6880 = vunpack.c.l.b16 %v5876
    %v6881 = vunpack.c.h.b16 %v5876
    %v6882 = vunpack.c.l.b16 %v5877
    %v6883 = vunpack.c.h.b16 %v5877
    %v6884 = vunpack.c.l.b16 %v5878
    %v6885 = vunpack.c.h.b16 %v5878
    %v6886 = vunpack.c.l.b16 %v5879
    %v6887 = vunpack.c.h.b16 %v5879
    %v6888 = vunpack.c.l.b16 %v5880
    %v6889 = vunpack.c.h.b16 %v5880
    %v6890 = vunpack.c.l.b16 %v5881
    %v6891 = vunpack.c.h.b16 %v5881
    %v6892 = vunpack.c.l.b16 %v5882
    %v6893 = vunpack.c.h.b16 %v5882
    %v6894 = vunpack.c.l.b16 %v5883
    %v6895 = vunpack.c.h.b16 %v5883
    %v6896 = vunpack.c.l.b16 %v5884
    %v6897 = vunpack.c.h.b16 %v5884
    %v6898 = vunpack.c.l.b16 %v5885
    %v6899 = vunpack.c.h.b16 %v5885
    %v6900 = vunpack.c.l.b16 %v5886
    %v6901 = vunpack.c.h.b16 %v5886
    %v6902 = vunpack.c.l.b16 %v5887
    %v6903 = vunpack.c.h.b16 %v5887
    %v6904 = vunpack.c.l.b16 %v5888
    %v6905 = vunpack.c.h.b16 %v5888
    %v6906 = vunpack.c.l.b16 %v5889
    %v6907 = vunpack.c.h.b16 %v5889
    %v6908 = vunpack.c.l.b16 %v5890
    %v6909 = vunpack.c.h.b16 %v5890
    %v6910 = vunpack.c.l.b16 %v5891
    %v6911 = vunpack.c.h.b16 %v5891
    %v6912 = vunpack.c.l.b16 %v5892
    %v6913 = vunpack.c.h.b16 %v5892
    %v6914 = vunpack.c.l.b16 %v5893
    %v6915 = vunpack.c.h.b16 %v5893
    %v6916 = vunpack.c.l.b16 %v5894
    %v6917 = vunpack.c.h.b16 %v5894
    %v6918 = vunpack.c.l.b16 %v5895
    %v6919 = vunpack.c.h.b16 %v5895
    %v6920 = vunpack.c.l.b16 %v5896
    %v6921 = vunpack.c.h.b16 %v5896
    %v6922 = vunpack.c.l.b16 %v5897
    %v6923 = vunpack.c.h.b16 %v5897
    %v6924 = vunpack.c.l.b16 %v5898
    %v6925 = vunpack.c.h.b16 %v5898
    %v6926 = vunpack.c.l.b16 %v5899
    %v6927 = vunpack.c.h.b16 %v5899
    %v6928 = vunpack.c.l.b16 %v5900
    %v6929 = vunpack.c.h.b16 %v5900
    %v6930 = vunpack.c.l.b16 %v5901
    %v6931 = vunpack.c.h.b16 %v5901
    %v6932 = vunpack.c.l.b16 %v5902
    %v6933 = vunpack.c.h.b16 %v5902
    %v6934 = vunpack.c.l.b16 %v5903
    %v6935 = vunpack.c.h.b16 %v5903
    %v6936 = vunpack.c.l.b16 %v5904
    %v6937 = vunpack.c.h.b16 %v5904
    %v6938 = vunpack.c.l.b16 %v5905
    %v6939 = vunpack.c.h.b16 %v5905
    %v6940 = vunpack.c.l.b16 %v5906
    %v6941 = vunpack.c.h.b16 %v5906
    %v6942 = vunpack.c.l.b16 %v5907
    %v6943 = vunpack.c.h.b16 %v5907
    %v6944 = vunpack.c.l.b16 %v5908
    %v6945 = vunpack.c.h.b16 %v5908
    %v6946 = vunpack.c.l.b16 %v5909
    %v6947 = vunpack.c.h.b16 %v5909
    %v6948 = vunpack.c.l.b16 %v5910
    %v6949 = vunpack.c.h.b16 %v5910
    %v6950 = vunpack.c.l.b16 %v5911
    %v6951 = vunpack.c.h.b16 %v5911
    %v6952 = vunpack.c.l.b16 %v5912
    %v6953 = vunpack.c.h.b16 %v5912
    %v6954 = vunpack.c.l.b16 %v5913
    %v6955 = vunpack.c.h.b16 %v5913
    %v6956 = vunpack.c.l.b16 %v5914
    %v6957 = vunpack.c.h.b16 %v5914
    %v6958 = vunpack.c.l.b16 %v5915
    %v6959 = vunpack.c.h.b16 %v5915
    %v6960 = vunpack.c.l.b16 %v5916
    %v6961 = vunpack.c.h.b16 %v5916
    %v6962 = vunpack.c.l.b16 %v5917
    %v6963 = vunpack.c.h.b16 %v5917
    %v6964 = vunpack.c.l.b16 %v5918
    %v6965 = vunpack.c.h.b16 %v5918
    %v6966 = vunpack.c.l.b16 %v5919
    %v6967 = vunpack.c.h.b16 %v5919
    %v6968 = vunpack.c.l.b16 %v5920
    %v6969 = vunpack.c.h.b16 %v5920
    %v6970 = vunpack.c.l.b16 %v5921
    %v6971 = vunpack.c.h.b16 %v5921
    %v6972 = vunpack.c.l.b16 %v5922
    %v6973 = vunpack.c.h.b16 %v5922
    %v6974 = vunpack.c.l.b16 %v5923
    %v6975 = vunpack.c.h.b16 %v5923
    %v6976 = vunpack.c.l.b16 %v5924
    %v6977 = vunpack.c.h.b16 %v5924
    %v6978 = vunpack.c.l.b16 %v5925
    %v6979 = vunpack.c.h.b16 %v5925
    %v6980 = vunpack.c.l.b16 %v5926
    %v6981 = vunpack.c.h.b16 %v5926
    %v6982 = vunpack.c.l.b16 %v5927
    %v6983 = vunpack.c.h.b16 %v5927
    %v6984 = vunpack.c.l.b16 %v5928
    %v6985 = vunpack.c.h.b16 %v5928
    %v6986 = vunpack.c.l.b16 %v5929
    %v6987 = vunpack.c.h.b16 %v5929
    %v6988 = vunpack.c.l.b16 %v5930
    %v6989 = vunpack.c.h.b16 %v5930
    %v6990 = vunpack.c.l.b16 %v5931
    %v6991 = vunpack.c.h.b16 %v5931
    %v6992 = vunpack.c.l.b16 %v5932
    %v6993 = vunpack.c.h.b16 %v5932
    %v6994 = vunpack.c.l.b16 %v5933
    %v6995 = vunpack.c.h.b16 %v5933
    %v6996 = vunpack.c.l.b16 %v5934
    %v6997 = vunpack.c.h.b16 %v5934
    %v6998 = vunpack.c.l.b16 %v5935
    %v6999 = vunpack.c.h.b16 %v5935
    %v7000 = vunpack.c.l.b16 %v5936
    %v7001 = vunpack.c.h.b16 %v5936
    %v7002 = vunpack.c.l.b16 %v5937
    %v7003 = vunpack.c.h.b16 %v5937
    %v7004 = vunpack.c.l.b16 %v5938
    %v7005 = vunpack.c.h.b16 %v5938
    %v7006 = vunpack.c.l.b16 %v5939
    %v7007 = vunpack.c.h.b16 %v5939
    %v7008 = vunpack.c.l.b16 %v5940
    %v7009 = vunpack.c.h.b16 %v5940
    %v7010 = vunpack.c.l.b16 %v5941
    %v7011 = vunpack.c.h.b16 %v5941
    %v7012 = vunpack.c.l.b16 %v5942
    %v7013 = vunpack.c.h.b16 %v5942
    %v7014 = vunpack.c.l.b16 %v5943
    %v7015 = vunpack.c.h.b16 %v5943
    %v7016 = vunpack.c.l.b16 %v5944
    %v7017 = vunpack.c.h.b16 %v5944
    %v7018 = vunpack.c.l.b16 %v5945
    %v7019 = vunpack.c.h.b16 %v5945
    %v7020 = vunpack.c.l.b16 %v5946
    %v7021 = vunpack.c.h.b16 %v5946
    %v7022 = vunpack.c.l.b16 %v5947
    %v7023 = vunpack.c.h.b16 %v5947
    %v7024 = vunpack.c.l.b16 %v5948
    %v7025 = vunpack.c.h.b16 %v5948
    %v7026 = vunpack.c.l.b16 %v5949
    %v7027 = vunpack.c.h.b16 %v5949
    %v7028 = vunpack.c.l.b16 %v5950
    %v7029 = vunpack.c.h.b16 %v5950
    %v7030 = vunpack.c.l.b16 %v5951
    %v7031 = vunpack.c.h.b16 %v5951
    %v7032 = vunpack.c.l.b16 %v5952
    %v7033 = vunpack.c.h.b16 %v5952
    %v7034 = vunpack.c.l.b16 %v5953
    %v7035 = vunpack.c.h.b16 %v5953
    %v7036 = vunpack.c.l.b16 %v5954
    %v7037 = vunpack.c.h.b16 %v5954
    %v7038 = vunpack.c.l.b16 %v5955
    %v7039 = vunpack.c.h.b16 %v5955
    %v7040 = vunpack.c.l.b16 %v5956
    %v7041 = vunpack.c.h.b16 %v5956
    %v7042 = vunpack.c.l.b16 %v5957
    %v7043 = vunpack.c.h.b16 %v5957
    %v7044 = vunpack.c.l.b16 %v5958
    %v7045 = vunpack.c.h.b16 %v5958
    %v7046 = vunpack.c.l.b16 %v5959
    %v7047 = vunpack.c.h.b16 %v5959
    %v7048 = vunpack.c.l.b16 %v5960
    %v7049 = vunpack.c.h.b16 %v5960
    %v7050 = vpack.c.b16 %v6862, %v6858
    %v7051 = vpack.c.b16 %v6863, %v6859
    %v7052 = vpack.c.b16 %v6864, %v6860
    %v7053 = vpack.c.b16 %v6865, %v6861
    %v7054 = vpack.c.b16 %v6870, %v6866
    %v7055 = vpack.c.b16 %v6871, %v6867
    %v7056 = vpack.c.b16 %v6872, %v6868
    %v7057 = vpack.c.b16 %v6873, %v6869
    %v7058 = vpack.c.b16 %v6878, %v6874
    %v7059 = vpack.c.b16 %v6879, %v6875
    %v7060 = vpack.c.b16 %v6880, %v6876
    %v7061 = vpack.c.b16 %v6881, %v6877
    %v7062 = vpack.c.b16 %v6886, %v6882
    %v7063 = vpack.c.b16 %v6887, %v6883
    %v7064 = vpack.c.b16 %v6888, %v6884
    %v7065 = vpack.c.b16 %v6889, %v6885
    %v7066 = vpack.c.b16 %v6894, %v6890
    %v7067 = vpack.c.b16 %v6895, %v6891
    %v7068 = vpack.c.b16 %v6896, %v6892
    %v7069 = vpack.c.b16 %v6897, %v6893
    %v7070 = vpack.c.b16 %v6902, %v6898
    %v7071 = vpack.c.b16 %v6903, %v6899
    %v7072 = vpack.c.b16 %v6904, %v6900
    %v7073 = vpack.c.b16 %v6905, %v6901
    %v7074 = vpack.c.b16 %v6910, %v6906
    %v7075 = vpack.c.b16 %v6911, %v6907
    %v7076 = vpack.c.b16 %v6912, %v6908
    %v7077 = vpack.c.b16 %v6913, %v6909
    %v7078 = vpack.c.b16 %v6918, %v6914
    %v7079 = vpack.c.b16 %v6919, %v6915
    %v7080 = vpack.c.b16 %v6920, %v6916
    %v7081 = vpack.c.b16 %v6921, %v6917
    %v7082 = vpack.c.b16 %v6926, %v6922
    %v7083 = vpack.c.b16 %v6927, %v6923
    %v7084 = vpack.c.b16 %v6928, %v6924
    %v7085 = vpack.c.b16 %v6929, %v6925
    %v7086 = vpack.c.b16 %v6934, %v6930
    %v7087 = vpack.c.b16 %v6935, %v6931
    %v7088 = vpack.c.b16 %v6936, %v6932
    %v7089 = vpack.c.b16 %v6937, %v6933
    %v7090 = vpack.c.b16 %v6942, %v6938
    %v7091 = vpack.c.b16 %v6943, %v6939
    %v7092 = vpack.c.b16 %v6944, %v6940
    %v7093 = vpack.c.b16 %v6945, %v6941
    %v7094 = vpack.c.b16 %v6950, %v6946
    %v7095 = vpack.c.b16 %v6951, %v6947
    %v7096 = vpack.c.b16 %v6952, %v6948
    %v7097 = vpack.c.b16 %v6953, %v6949
    %v7098 = vpack.c.b16 %v6958, %v6954
    %v7099 = vpack.c.b16 %v6959, %v6955
    %v7100 = vpack.c.b16 %v6960, %v6956
    %v7101 = vpack.c.b16 %v6961, %v6957
    %v7102 = vpack.c.b16 %v6966, %v6962
    %v7103 = vpack.c.b16 %v6967, %v6963
    %v7104 = vpack.c.b16 %v6968, %v6964
    %v7105 = vpack.c.b16 %v6969, %v6965
    %v7106 = vpack.c.b16 %v6974, %v6970
    %v7107 = vpack.c.b16 %v6975, %v6971
    %v7108 = vpack.c.b16 %v6976, %v6972
    %v7109 = vpack.c.b16 %v6977, %v6973
    %v7110 = vpack.c.b16 %v6982, %v6978
    %v7111 = vpack.c.b16 %v6983, %v6979
    %v7112 = vpack.c.b16 %v6984, %v6980
    %v7113 = vpack.c.b16 %v6985, %v6981
    %v7114 = vpack.c.b16 %v6990, %v6986
    %v7115 = vpack.c.b16 %v6991, %v6987
    %v7116 = vpack.c.b16 %v6992, %v6988
    %v7117 = vpack.c.b16 %v6993, %v6989
    %v7118 = vpack.c.b16 %v6998, %v6994
    %v7119 = vpack.c.b16 %v6999, %v6995
    %v7120 = vpack.c.b16 %v7000, %v6996
    %v7121 = vpack.c.b16 %v7001, %v6997
    %v7122 = vpack.c.b16 %v7006, %v7002
    %v7123 = vpack.c.b16 %v7007, %v7003
    %v7124 = vpack.c.b16 %v7008, %v7004
    %v7125 = vpack.c.b16 %v7009, %v7005
    %v7126 = vpack.c.b16 %v7014, %v7010
    %v7127 = vpack.c.b16 %v7015, %v7011
    %v7128 = vpack.c.b16 %v7016, %v7012
    %v7129 = vpack.c.b16 %v7017, %v7013
    %v7130 = vpack.c.b16 %v7022, %v7018
    %v7131 = vpack.c.b16 %v7023, %v7019
    %v7132 = vpack.c.b16 %v7024, %v7020
    %v7133 = vpack.c.b16 %v7025, %v7021
    %v7134 = vpack.c.b16 %v7030, %v7026
    %v7135 = vpack.c.b16 %v7031, %v7027
    %v7136 = vpack.c.b16 %v7032, %v7028
    %v7137 = vpack.c.b16 %v7033, %v7029
    %v7138 = vpack.c.b16 %v7038, %v7034
    %v7139 = vpack.c.b16 %v7039, %v7035
    %v7140 = vpack.c.b16 %v7040, %v7036
    %v7141 = vpack.c.b16 %v7041, %v7037
    %v7142 = vpack.c.b16 %v7046, %v7042
    %v7143 = vpack.c.b16 %v7047, %v7043
    %v7144 = vpack.c.b16 %v7048, %v7044
    %v7145 = vpack.c.b16 %v7049, %v7045
    %7242 = vmatprep.subr.bf16.mxu0 %v7051
    %7243 = vmatpush1.bf16.msra.mxu0 %v7050
    %7244 = vmatprep.subr.bf16.mxu0 %v7055
    %7245 = vmatpush1.bf16.msra.mxu0 %v7054
    %7246 = vmatprep.subr.bf16.mxu0 %v7059
    %7247 = vmatpush1.bf16.msra.mxu0 %v7058
    %7248 = vmatprep.subr.bf16.mxu0 %v7063
    %7249 = vmatpush1.bf16.msra.mxu0 %v7062
    %7250 = vmatprep.subr.bf16.mxu0 %v7067
    %7251 = vmatpush1.bf16.msra.mxu0 %v7066
    %7252 = vmatprep.subr.bf16.mxu0 %v7071
    %7253 = vmatpush1.bf16.msra.mxu0 %v7070
    %7254 = vmatprep.subr.bf16.mxu0 %v7075
    %7255 = vmatpush1.bf16.msra.mxu0 %v7074
    %7256 = vmatprep.subr.bf16.mxu0 %v7079
    %7257 = vmatpush1.bf16.msra.mxu0 %v7078
    %7258 = vmatprep.subr.bf16.mxu0 %v7083
    %7259 = vmatpush1.bf16.msra.mxu0 %v7082
    %7260 = vmatprep.subr.bf16.mxu0 %v7087
    %7261 = vmatpush1.bf16.msra.mxu0 %v7086
    %7262 = vmatprep.subr.bf16.mxu0 %v7091
    %7263 = vmatpush1.bf16.msra.mxu0 %v7090
    %7264 = vmatprep.subr.bf16.mxu0 %v7095
    %7265 = vmatpush1.bf16.msra.mxu0 %v7094
    %7266 = vmatprep.subr.bf16.mxu0 %v7099
    %7267 = vmatpush1.bf16.msra.mxu0 %v7098
    %7268 = vmatprep.subr.bf16.mxu0 %v7103
    %7269 = vmatpush1.bf16.msra.mxu0 %v7102
    %7270 = vmatprep.subr.bf16.mxu0 %v7107
    %7271 = vmatpush1.bf16.msra.mxu0 %v7106
    %7272 = vmatprep.subr.bf16.mxu0 %v7111
    %7273 = vmatpush1.bf16.msra.mxu0 %v7110
    %7274 = vmatprep.mubr.bf16.mxu0 %v5962
    %7275 = vmatmul.mubr.bf16.gmra.mrb[0].mxu0 %v5961
    %v7276 = vpop.f32.mrb[0].mxu0
    %v7277 = vadd.f32 %v6638, %v7276
    %v7278 = vpop.f32.mrb[0].mxu0
    %v7279 = vadd.f32 %v6640, %v7278
    %v7280 = vpop.f32.mrb[0].mxu0
    %v7281 = vadd.f32 %v6642, %v7280
    %v7282 = vpop.f32.mrb[0].mxu0
    %v7283 = vadd.f32 %v6644, %v7282
    %7284 = vmatprep.mubr.bf16.mxu0 %v5965
    %7285 = vmatmul.mubr.bf16.gmra.mrb[0].mxu0 %v5964
    %v7286 = vpop.f32.mrb[0].mxu0
    %v7287 = vadd.f32 %v6648, %v7286
    %v7288 = vpop.f32.mrb[0].mxu0
    %v7289 = vadd.f32 %v6650, %v7288
    %v7290 = vpop.f32.mrb[0].mxu0
    %v7291 = vadd.f32 %v6652, %v7290
    %v7292 = vpop.f32.mrb[0].mxu0
    %v7293 = vadd.f32 %v6654, %v7292
    %7294 = vdwg.mxu0
    %7295 = vmatprep.subr.bf16.mxu0 %v7115
    %7296 = vmatpush1.bf16.msra.mxu0 %v7114
    %7297 = vmatprep.subr.bf16.mxu0 %v7119
    %7298 = vmatpush1.bf16.msra.mxu0 %v7118
    %7299 = vmatprep.subr.bf16.mxu0 %v7123
    %7300 = vmatpush1.bf16.msra.mxu0 %v7122
    %7301 = vmatprep.subr.bf16.mxu0 %v7127
    %7302 = vmatpush1.bf16.msra.mxu0 %v7126
    %7303 = vmatprep.subr.bf16.mxu0 %v7131
    %7304 = vmatpush1.bf16.msra.mxu0 %v7130
    %7305 = vmatprep.subr.bf16.mxu0 %v7135
    %7306 = vmatpush1.bf16.msra.mxu0 %v7134
    %7307 = vmatprep.subr.bf16.mxu0 %v7139
    %7308 = vmatpush1.bf16.msra.mxu0 %v7138
    %7309 = vmatprep.subr.bf16.mxu0 %v7143
    %7310 = vmatpush1.bf16.msra.mxu0 %v7142
    %7311 = vmatprep.subr.bf16.mxu0 0
    %7312 = vmatpush1.bf16.msra.mxu0 0
    %7313 = vmatprep.subr.bf16.mxu0 0
    %7314 = vmatpush1.bf16.msra.mxu0 0
    %7315 = vmatprep.subr.bf16.mxu0 0
    %7316 = vmatpush1.bf16.msra.mxu0 0
    %7317 = vmatprep.subr.bf16.mxu0 0
    %7318 = vmatpush1.bf16.msra.mxu0 0
    %7319 = vmatprep.subr.bf16.mxu0 0
    %7320 = vmatpush1.bf16.msra.mxu0 0
    %7321 = vmatprep.subr.bf16.mxu0 0
    %7322 = vmatpush1.bf16.msra.mxu0 0
    %7323 = vmatprep.subr.bf16.mxu0 0
    %7324 = vmatpush1.bf16.msra.mxu0 0
    %7325 = vmatprep.subr.bf16.mxu0 0
    %7326 = vmatpush1.bf16.msra.mxu0 0
    %7327 = vmatprep.mubr.bf16.mxu0 0
    %7328 = vmatmul.mubr.bf16.gmra.mrb[0].mxu0 %v5963
    %v7329 = vpop.f32.mrb[0].mxu0
    %v7330 = vadd.f32 %v7277, %v7329
    %v7331 = vpop.f32.mrb[0].mxu0
    %v7332 = vadd.f32 %v7279, %v7331
    %v7333 = vpop.f32.mrb[0].mxu0
    %v7334 = vadd.f32 %v7281, %v7333
    %v7335 = vpop.f32.mrb[0].mxu0
    %v7336 = vadd.f32 %v7283, %v7335
    %7337 = vmatprep.mubr.bf16.mxu0 0
    %7338 = vmatmul.mubr.bf16.gmra.mrb[0].mxu0 %v5966
    %v7339 = vpop.f32.mrb[0].mxu0
    %v7340 = vadd.f32 %v7287, %v7339
    %v7341 = vpop.f32.mrb[0].mxu0
    %v7342 = vadd.f32 %v7289, %v7341
    %v7343 = vpop.f32.mrb[0].mxu0
    %v7344 = vadd.f32 %v7291, %v7343
    %v7345 = vpop.f32.mrb[0].mxu0
    %v7346 = vadd.f32 %v7293, %v7345
    %7347 = vdwg.mxu0
    %7348 = vmatprep.subr.bf16.mxu0 %v7053
    %7349 = vmatpush1.bf16.msra.mxu0 %v7052
    %7350 = vmatprep.subr.bf16.mxu0 %v7057
    %7351 = vmatpush1.bf16.msra.mxu0 %v7056
    %7352 = vmatprep.subr.bf16.mxu0 %v7061
    %7353 = vmatpush1.bf16.msra.mxu0 %v7060
    %7354 = vmatprep.subr.bf16.mxu0 %v7065
    %7355 = vmatpush1.bf16.msra.mxu0 %v7064
    %7356 = vmatprep.subr.bf16.mxu0 %v7069
    %7357 = vmatpush1.bf16.msra.mxu0 %v7068
    %7358 = vmatprep.subr.bf16.mxu0 %v7073
    %7359 = vmatpush1.bf16.msra.mxu0 %v7072
    %7360 = vmatprep.subr.bf16.mxu0 %v7077
    %7361 = vmatpush1.bf16.msra.mxu0 %v7076
    %7362 = vmatprep.subr.bf16.mxu0 %v7081
    %7363 = vmatpush1.bf16.msra.mxu0 %v7080
    %7364 = vmatprep.subr.bf16.mxu0 %v7085
    %7365 = vmatpush1.bf16.msra.mxu0 %v7084
    %7366 = vmatprep.subr.bf16.mxu0 %v7089
    %7367 = vmatpush1.bf16.msra.mxu0 %v7088
    %7368 = vmatprep.subr.bf16.mxu0 %v7093
    %7369 = vmatpush1.bf16.msra.mxu0 %v7092
    %7370 = vmatprep.subr.bf16.mxu0 %v7097
    %7371 = vmatpush1.bf16.msra.mxu0 %v7096
    %7372 = vmatprep.subr.bf16.mxu0 %v7101
    %7373 = vmatpush1.bf16.msra.mxu0 %v7100
    %7374 = vmatprep.subr.bf16.mxu0 %v7105
    %7375 = vmatpush1.bf16.msra.mxu0 %v7104
    %7376 = vmatprep.subr.bf16.mxu0 %v7109
    %7377 = vmatpush1.bf16.msra.mxu0 %v7108
    %7378 = vmatprep.subr.bf16.mxu0 %v7113
    %7379 = vmatpush1.bf16.msra.mxu0 %v7112
    %7380 = vmatprep.mubr.bf16.mxu0 %v5962
    %7381 = vmatmul.mubr.bf16.gmra.mrb[0].mxu0 %v5961
    %v7382 = vpop.f32.mrb[0].mxu0
    %v7383 = vadd.f32 %v6744, %v7382
    %v7384 = vpop.f32.mrb[0].mxu0
    %v7385 = vadd.f32 %v6746, %v7384
    %v7386 = vpop.f32.mrb[0].mxu0
    %v7387 = vadd.f32 %v6748, %v7386
    %v7388 = vpop.f32.mrb[0].mxu0
    %v7389 = vadd.f32 %v6750, %v7388
    %7390 = vmatprep.mubr.bf16.mxu0 %v5965
    %7391 = vmatmul.mubr.bf16.gmra.mrb[0].mxu0 %v5964
    %v7392 = vpop.f32.mrb[0].mxu0
    %v7393 = vadd.f32 %v6754, %v7392
    %v7394 = vpop.f32.mrb[0].mxu0
    %v7395 = vadd.f32 %v6756, %v7394
    %v7396 = vpop.f32.mrb[0].mxu0
    %v7397 = vadd.f32 %v6758, %v7396
    %v7398 = vpop.f32.mrb[0].mxu0
    %v7399 = vadd.f32 %v6760, %v7398
    %7400 = vdwg.mxu0
    %7401 = vmatprep.subr.bf16.mxu0 %v7117
    %7402 = vmatpush1.bf16.msra.mxu0 %v7116
    %7403 = vmatprep.subr.bf16.mxu0 %v7121
    %7404 = vmatpush1.bf16.msra.mxu0 %v7120
    %7405 = vmatprep.subr.bf16.mxu0 %v7125
    %7406 = vmatpush1.bf16.msra.mxu0 %v7124
    %7407 = vmatprep.subr.bf16.mxu0 %v7129
    %7408 = vmatpush1.bf16.msra.mxu0 %v7128
    %7409 = vmatprep.subr.bf16.mxu0 %v7133
    %7410 = vmatpush1.bf16.msra.mxu0 %v7132
    %7411 = vmatprep.subr.bf16.mxu0 %v7137
    %7412 = vmatpush1.bf16.msra.mxu0 %v7136
    %7413 = vmatprep.subr.bf16.mxu0 %v7141
    %7414 = vmatpush1.bf16.msra.mxu0 %v7140
    %7415 = vmatprep.subr.bf16.mxu0 %v7145
    %7416 = vmatpush1.bf16.msra.mxu0 %v7144
    %7417 = vmatprep.subr.bf16.mxu0 0
    %7418 = vmatpush1.bf16.msra.mxu0 0
    %7419 = vmatprep.subr.bf16.mxu0 0
    %7420 = vmatpush1.bf16.msra.mxu0 0
    %7421 = vmatprep.subr.bf16.mxu0 0
    %7422 = vmatpush1.bf16.msra.mxu0 0
    %7423 = vmatprep.subr.bf16.mxu0 0
    %7424 = vmatpush1.bf16.msra.mxu0 0
    %7425 = vmatprep.subr.bf16.mxu0 0
    %7426 = vmatpush1.bf16.msra.mxu0 0
    %7427 = vmatprep.subr.bf16.mxu0 0
    %7428 = vmatpush1.bf16.msra.mxu0 0
    %7429 = vmatprep.subr.bf16.mxu0 0
    %7430 = vmatpush1.bf16.msra.mxu0 0
    %7431 = vmatprep.subr.bf16.mxu0 0
    %7432 = vmatpush1.bf16.msra.mxu0 0
    %7433 = vmatprep.mubr.bf16.mxu0 0
    %7434 = vmatmul.mubr.bf16.gmra.mrb[0].mxu0 %v5963
    %v7435 = vpop.f32.mrb[0].mxu0
    %v7436 = vadd.f32 %v7383, %v7435
    %v7437 = vpop.f32.mrb[0].mxu0
    %v7438 = vadd.f32 %v7385, %v7437
    %v7439 = vpop.f32.mrb[0].mxu0
    %v7440 = vadd.f32 %v7387, %v7439
    %v7441 = vpop.f32.mrb[0].mxu0
    %v7442 = vadd.f32 %v7389, %v7441
    %7443 = vmatprep.mubr.bf16.mxu0 0
    %7444 = vmatmul.mubr.bf16.gmra.mrb[0].mxu0 %v5966
    %v7445 = vpop.f32.mrb[0].mxu0
    %v7446 = vadd.f32 %v7393, %v7445
    %v7447 = vpop.f32.mrb[0].mxu0
    %v7448 = vadd.f32 %v7395, %v7447
    %v7449 = vpop.f32.mrb[0].mxu0
    %v7450 = vadd.f32 %v7397, %v7449
    %v7451 = vpop.f32.mrb[0].mxu0
    %v7452 = vadd.f32 %v7399, %v7451
    %7453 = vdwg.mxu0
    %v7454 = vpack.c.bf16 %v5817, %v5814
    %v7455 = vpack.c.bf16 %v5818, %v5815
    %v7456 = vpack.c.bf16 %v5819, %v5816
    %v7457 = vpack.c.bf16 %v5823, %v5820
    %v7458 = vpack.c.bf16 %v5824, %v5821
    %v7459 = vpack.c.bf16 %v5825, %v5822
    %7460 = vmatprep.subr.bf16.mxu0 %v6359
    %7461 = vmatpush1.bf16.msra.mxu0 %v6358
    %7462 = vmatprep.subr.bf16.mxu0 %v6363
    %7463 = vmatpush1.bf16.msra.mxu0 %v6362
    %7464 = vmatprep.subr.bf16.mxu0 %v6367
    %7465 = vmatpush1.bf16.msra.mxu0 %v6366
    %7466 = vmatprep.subr.bf16.mxu0 %v6371
    %7467 = vmatpush1.bf16.msra.mxu0 %v6370
    %7468 = vmatprep.subr.bf16.mxu0 %v6375
    %7469 = vmatpush1.bf16.msra.mxu0 %v6374
    %7470 = vmatprep.subr.bf16.mxu0 %v6379
    %7471 = vmatpush1.bf16.msra.mxu0 %v6378
    %7472 = vmatprep.subr.bf16.mxu0 %v6383
    %7473 = vmatpush1.bf16.msra.mxu0 %v6382
    %7474 = vmatprep.subr.bf16.mxu0 %v6387
    %7475 = vmatpush1.bf16.msra.mxu0 %v6386
    %7476 = vmatprep.subr.bf16.mxu0 %v6391
    %7477 = vmatpush1.bf16.msra.mxu0 %v6390
    %7478 = vmatprep.subr.bf16.mxu0 %v6395
    %7479 = vmatpush1.bf16.msra.mxu0 %v6394
    %7480 = vmatprep.subr.bf16.mxu0 %v6399
    %7481 = vmatpush1.bf16.msra.mxu0 %v6398
    %7482 = vmatprep.subr.bf16.mxu0 %v6403
    %7483 = vmatpush1.bf16.msra.mxu0 %v6402
    %7484 = vmatprep.subr.bf16.mxu0 %v6407
    %7485 = vmatpush1.bf16.msra.mxu0 %v6406
    %7486 = vmatprep.subr.bf16.mxu0 %v6411
    %7487 = vmatpush1.bf16.msra.mxu0 %v6410
    %7488 = vmatprep.subr.bf16.mxu0 %v6415
    %7489 = vmatpush1.bf16.msra.mxu0 %v6414
    %7490 = vmatprep.subr.bf16.mxu0 %v6419
    %7491 = vmatpush1.bf16.msra.mxu0 %v6418
    %7492 = vmatprep.mubr.bf16.mxu0 %v7455
    %7493 = vmatmul.mubr.bf16.gmra.mrb[0].mxu0 %v7454
    %v7494 = vpop.f32.mrb[0].mxu0
    %v7495 = vadd.f32 0.0, %v7494
    %v7496 = vpop.f32.mrb[0].mxu0
    %v7497 = vadd.f32 0.0, %v7496
    %v7498 = vpop.f32.mrb[0].mxu0
    %v7499 = vadd.f32 0.0, %v7498
    %v7500 = vpop.f32.mrb[0].mxu0
    %v7501 = vadd.f32 0.0, %v7500
    %7502 = vmatprep.mubr.bf16.mxu0 %v7458
    %7503 = vmatmul.mubr.bf16.gmra.mrb[0].mxu0 %v7457
    %v7504 = vpop.f32.mrb[0].mxu0
    %v7505 = vadd.f32 0.0, %v7504
    %v7506 = vpop.f32.mrb[0].mxu0
    %v7507 = vadd.f32 0.0, %v7506
    %v7508 = vpop.f32.mrb[0].mxu0
    %v7509 = vadd.f32 0.0, %v7508
    %v7510 = vpop.f32.mrb[0].mxu0
    %v7511 = vadd.f32 0.0, %v7510
    %7512 = vdwg.mxu0
    %7513 = vmatprep.subr.bf16.mxu0 %v6423
    %7514 = vmatpush1.bf16.msra.mxu0 %v6422
    %7515 = vmatprep.subr.bf16.mxu0 %v6427
    %7516 = vmatpush1.bf16.msra.mxu0 %v6426
    %7517 = vmatprep.subr.bf16.mxu0 %v6431
    %7518 = vmatpush1.bf16.msra.mxu0 %v6430
    %7519 = vmatprep.subr.bf16.mxu0 %v6435
    %7520 = vmatpush1.bf16.msra.mxu0 %v6434
    %7521 = vmatprep.subr.bf16.mxu0 %v6439
    %7522 = vmatpush1.bf16.msra.mxu0 %v6438
    %7523 = vmatprep.subr.bf16.mxu0 %v6443
    %7524 = vmatpush1.bf16.msra.mxu0 %v6442
    %7525 = vmatprep.subr.bf16.mxu0 %v6447
    %7526 = vmatpush1.bf16.msra.mxu0 %v6446
    %7527 = vmatprep.subr.bf16.mxu0 %v6451
    %7528 = vmatpush1.bf16.msra.mxu0 %v6450
    %7529 = vmatprep.subr.bf16.mxu0 0
    %7530 = vmatpush1.bf16.msra.mxu0 0
    %7531 = vmatprep.subr.bf16.mxu0 0
    %7532 = vmatpush1.bf16.msra.mxu0 0
    %7533 = vmatprep.subr.bf16.mxu0 0
    %7534 = vmatpush1.bf16.msra.mxu0 0
    %7535 = vmatprep.subr.bf16.mxu0 0
    %7536 = vmatpush1.bf16.msra.mxu0 0
    %7537 = vmatprep.subr.bf16.mxu0 0
    %7538 = vmatpush1.bf16.msra.mxu0 0
    %7539 = vmatprep.subr.bf16.mxu0 0
    %7540 = vmatpush1.bf16.msra.mxu0 0
    %7541 = vmatprep.subr.bf16.mxu0 0
    %7542 = vmatpush1.bf16.msra.mxu0 0
    %7543 = vmatprep.subr.bf16.mxu0 0
    %7544 = vmatpush1.bf16.msra.mxu0 0
    %7545 = vmatprep.mubr.bf16.mxu0 0
    %7546 = vmatmul.mubr.bf16.gmra.mrb[0].mxu0 %v7456
    %v7547 = vpop.f32.mrb[0].mxu0
    %v7548 = vadd.f32 %v7495, %v7547
    %v7549 = vpop.f32.mrb[0].mxu0
    %v7550 = vadd.f32 %v7497, %v7549
    %v7551 = vpop.f32.mrb[0].mxu0
    %v7552 = vadd.f32 %v7499, %v7551
    %v7553 = vpop.f32.mrb[0].mxu0
    %v7554 = vadd.f32 %v7501, %v7553
    %7555 = vmatprep.mubr.bf16.mxu0 0
    %7556 = vmatmul.mubr.bf16.gmra.mrb[0].mxu0 %v7459
    %v7557 = vpop.f32.mrb[0].mxu0
    %v7558 = vadd.f32 %v7505, %v7557
    %v7559 = vpop.f32.mrb[0].mxu0
    %v7560 = vadd.f32 %v7507, %v7559
    %v7561 = vpop.f32.mrb[0].mxu0
    %v7562 = vadd.f32 %v7509, %v7561
    %v7563 = vpop.f32.mrb[0].mxu0
    %v7564 = vadd.f32 %v7511, %v7563
    %7565 = vdwg.mxu0
    %7566 = vmatprep.subr.bf16.mxu0 %v6361
    %7567 = vmatpush1.bf16.msra.mxu0 %v6360
    %7568 = vmatprep.subr.bf16.mxu0 %v6365
    %7569 = vmatpush1.bf16.msra.mxu0 %v6364
    %7570 = vmatprep.subr.bf16.mxu0 %v6369
    %7571 = vmatpush1.bf16.msra.mxu0 %v6368
    %7572 = vmatprep.subr.bf16.mxu0 %v6373
    %7573 = vmatpush1.bf16.msra.mxu0 %v6372
    %7574 = vmatprep.subr.bf16.mxu0 %v6377
    %7575 = vmatpush1.bf16.msra.mxu0 %v6376
    %7576 = vmatprep.subr.bf16.mxu0 %v6381
    %7577 = vmatpush1.bf16.msra.mxu0 %v6380
    %7578 = vmatprep.subr.bf16.mxu0 %v6385
    %7579 = vmatpush1.bf16.msra.mxu0 %v6384
    %7580 = vmatprep.subr.bf16.mxu0 %v6389
    %7581 = vmatpush1.bf16.msra.mxu0 %v6388
    %7582 = vmatprep.subr.bf16.mxu0 %v6393
    %7583 = vmatpush1.bf16.msra.mxu0 %v6392
    %7584 = vmatprep.subr.bf16.mxu0 %v6397
    %7585 = vmatpush1.bf16.msra.mxu0 %v6396
    %7586 = vmatprep.subr.bf16.mxu0 %v6401
    %7587 = vmatpush1.bf16.msra.mxu0 %v6400
    %7588 = vmatprep.subr.bf16.mxu0 %v6405
    %7589 = vmatpush1.bf16.msra.mxu0 %v6404
    %7590 = vmatprep.subr.bf16.mxu0 %v6409
    %7591 = vmatpush1.bf16.msra.mxu0 %v6408
    %7592 = vmatprep.subr.bf16.mxu0 %v6413
    %7593 = vmatpush1.bf16.msra.mxu0 %v6412
    %7594 = vmatprep.subr.bf16.mxu0 %v6417
    %7595 = vmatpush1.bf16.msra.mxu0 %v6416
    %7596 = vmatprep.subr.bf16.mxu0 %v6421
    %7597 = vmatpush1.bf16.msra.mxu0 %v6420
    %7598 = vmatprep.mubr.bf16.mxu0 %v7455
    %7599 = vmatmul.mubr.bf16.gmra.mrb[0].mxu0 %v7454
    %v7600 = vpop.f32.mrb[0].mxu0
    %v7601 = vadd.f32 0.0, %v7600
    %v7602 = vpop.f32.mrb[0].mxu0
    %v7603 = vadd.f32 0.0, %v7602
    %v7604 = vpop.f32.mrb[0].mxu0
    %v7605 = vadd.f32 0.0, %v7604
    %v7606 = vpop.f32.mrb[0].mxu0
    %v7607 = vadd.f32 0.0, %v7606
    %7608 = vmatprep.mubr.bf16.mxu0 %v7458
    %7609 = vmatmul.mubr.bf16.gmra.mrb[0].mxu0 %v7457
    %v7610 = vpop.f32.mrb[0].mxu0
    %v7611 = vadd.f32 0.0, %v7610
    %v7612 = vpop.f32.mrb[0].mxu0
    %v7613 = vadd.f32 0.0, %v7612
    %v7614 = vpop.f32.mrb[0].mxu0
    %v7615 = vadd.f32 0.0, %v7614
    %v7616 = vpop.f32.mrb[0].mxu0
    %v7617 = vadd.f32 0.0, %v7616
    %7618 = vdwg.mxu0
    %7619 = vmatprep.subr.bf16.mxu0 %v6425
    %7620 = vmatpush1.bf16.msra.mxu0 %v6424
    %7621 = vmatprep.subr.bf16.mxu0 %v6429
    %7622 = vmatpush1.bf16.msra.mxu0 %v6428
    %7623 = vmatprep.subr.bf16.mxu0 %v6433
    %7624 = vmatpush1.bf16.msra.mxu0 %v6432
    %7625 = vmatprep.subr.bf16.mxu0 %v6437
    %7626 = vmatpush1.bf16.msra.mxu0 %v6436
    %7627 = vmatprep.subr.bf16.mxu0 %v6441
    %7628 = vmatpush1.bf16.msra.mxu0 %v6440
    %7629 = vmatprep.subr.bf16.mxu0 %v6445
    %7630 = vmatpush1.bf16.msra.mxu0 %v6444
    %7631 = vmatprep.subr.bf16.mxu0 %v6449
    %7632 = vmatpush1.bf16.msra.mxu0 %v6448
    %7633 = vmatprep.subr.bf16.mxu0 %v6453
    %7634 = vmatpush1.bf16.msra.mxu0 %v6452
    %7635 = vmatprep.subr.bf16.mxu0 0
    %7636 = vmatpush1.bf16.msra.mxu0 0
    %7637 = vmatprep.subr.bf16.mxu0 0
    %7638 = vmatpush1.bf16.msra.mxu0 0
    %7639 = vmatprep.subr.bf16.mxu0 0
    %7640 = vmatpush1.bf16.msra.mxu0 0
    %7641 = vmatprep.subr.bf16.mxu0 0
    %7642 = vmatpush1.bf16.msra.mxu0 0
    %7643 = vmatprep.subr.bf16.mxu0 0
    %7644 = vmatpush1.bf16.msra.mxu0 0
    %7645 = vmatprep.subr.bf16.mxu0 0
    %7646 = vmatpush1.bf16.msra.mxu0 0
    %7647 = vmatprep.subr.bf16.mxu0 0
    %7648 = vmatpush1.bf16.msra.mxu0 0
    %7649 = vmatprep.subr.bf16.mxu0 0
    %7650 = vmatpush1.bf16.msra.mxu0 0
    %7651 = vmatprep.mubr.bf16.mxu0 0
    %7652 = vmatmul.mubr.bf16.gmra.mrb[0].mxu0 %v7456
    %v7653 = vpop.f32.mrb[0].mxu0
    %v7654 = vadd.f32 %v7601, %v7653
    %v7655 = vpop.f32.mrb[0].mxu0
    %v7656 = vadd.f32 %v7603, %v7655
    %v7657 = vpop.f32.mrb[0].mxu0
    %v7658 = vadd.f32 %v7605, %v7657
    %v7659 = vpop.f32.mrb[0].mxu0
    %v7660 = vadd.f32 %v7607, %v7659
    %7661 = vmatprep.mubr.bf16.mxu0 0
    %7662 = vmatmul.mubr.bf16.gmra.mrb[0].mxu0 %v7459
    %v7663 = vpop.f32.mrb[0].mxu0
    %v7664 = vadd.f32 %v7611, %v7663
    %v7665 = vpop.f32.mrb[0].mxu0
    %v7666 = vadd.f32 %v7613, %v7665
    %v7667 = vpop.f32.mrb[0].mxu0
    %v7668 = vadd.f32 %v7615, %v7667
    %v7669 = vpop.f32.mrb[0].mxu0
    %v7670 = vadd.f32 %v7617, %v7669
    %7671 = vdwg.mxu0
    %7672 = vmatprep.subr.bf16.mxu0 %v7051
    %7673 = vmatpush1.bf16.msra.mxu0 %v7050
    %7674 = vmatprep.subr.bf16.mxu0 %v7055
    %7675 = vmatpush1.bf16.msra.mxu0 %v7054
    %7676 = vmatprep.subr.bf16.mxu0 %v7059
    %7677 = vmatpush1.bf16.msra.mxu0 %v7058
    %7678 = vmatprep.subr.bf16.mxu0 %v7063
    %7679 = vmatpush1.bf16.msra.mxu0 %v7062
    %7680 = vmatprep.subr.bf16.mxu0 %v7067
    %7681 = vmatpush1.bf16.msra.mxu0 %v7066
    %7682 = vmatprep.subr.bf16.mxu0 %v7071
    %7683 = vmatpush1.bf16.msra.mxu0 %v7070
    %7684 = vmatprep.subr.bf16.mxu0 %v7075
    %7685 = vmatpush1.bf16.msra.mxu0 %v7074
    %7686 = vmatprep.subr.bf16.mxu0 %v7079
    %7687 = vmatpush1.bf16.msra.mxu0 %v7078
    %7688 = vmatprep.subr.bf16.mxu0 %v7083
    %7689 = vmatpush1.bf16.msra.mxu0 %v7082
    %7690 = vmatprep.subr.bf16.mxu0 %v7087
    %7691 = vmatpush1.bf16.msra.mxu0 %v7086
    %7692 = vmatprep.subr.bf16.mxu0 %v7091
    %7693 = vmatpush1.bf16.msra.mxu0 %v7090
    %7694 = vmatprep.subr.bf16.mxu0 %v7095
    %7695 = vmatpush1.bf16.msra.mxu0 %v7094
    %7696 = vmatprep.subr.bf16.mxu0 %v7099
    %7697 = vmatpush1.bf16.msra.mxu0 %v7098
    %7698 = vmatprep.subr.bf16.mxu0 %v7103
    %7699 = vmatpush1.bf16.msra.mxu0 %v7102
    %7700 = vmatprep.subr.bf16.mxu0 %v7107
    %7701 = vmatpush1.bf16.msra.mxu0 %v7106
    %7702 = vmatprep.subr.bf16.mxu0 %v7111
    %7703 = vmatpush1.bf16.msra.mxu0 %v7110
    %7704 = vmatprep.mubr.bf16.mxu0 %v5968
    %7705 = vmatmul.mubr.bf16.gmra.mrb[0].mxu0 %v5967
    %v7706 = vpop.f32.mrb[0].mxu0
    %v7707 = vadd.f32 %v7548, %v7706
    %v7708 = vpop.f32.mrb[0].mxu0
    %v7709 = vadd.f32 %v7550, %v7708
    %v7710 = vpop.f32.mrb[0].mxu0
    %v7711 = vadd.f32 %v7552, %v7710
    %v7712 = vpop.f32.mrb[0].mxu0
    %v7713 = vadd.f32 %v7554, %v7712
    %7714 = vmatprep.mubr.bf16.mxu0 %v5971
    %7715 = vmatmul.mubr.bf16.gmra.mrb[0].mxu0 %v5970
    %v7716 = vpop.f32.mrb[0].mxu0
    %v7717 = vadd.f32 %v7558, %v7716
    %v7718 = vpop.f32.mrb[0].mxu0
    %v7719 = vadd.f32 %v7560, %v7718
    %v7720 = vpop.f32.mrb[0].mxu0
    %v7721 = vadd.f32 %v7562, %v7720
    %v7722 = vpop.f32.mrb[0].mxu0
    %v7723 = vadd.f32 %v7564, %v7722
    %7724 = vdwg.mxu0
    %7725 = vmatprep.subr.bf16.mxu0 %v7115
    %7726 = vmatpush1.bf16.msra.mxu0 %v7114
    %7727 = vmatprep.subr.bf16.mxu0 %v7119
    %7728 = vmatpush1.bf16.msra.mxu0 %v7118
    %7729 = vmatprep.subr.bf16.mxu0 %v7123
    %7730 = vmatpush1.bf16.msra.mxu0 %v7122
    %7731 = vmatprep.subr.bf16.mxu0 %v7127
    %7732 = vmatpush1.bf16.msra.mxu0 %v7126
    %7733 = vmatprep.subr.bf16.mxu0 %v7131
    %7734 = vmatpush1.bf16.msra.mxu0 %v7130
    %7735 = vmatprep.subr.bf16.mxu0 %v7135
    %7736 = vmatpush1.bf16.msra.mxu0 %v7134
    %7737 = vmatprep.subr.bf16.mxu0 %v7139
    %7738 = vmatpush1.bf16.msra.mxu0 %v7138
    %7739 = vmatprep.subr.bf16.mxu0 %v7143
    %7740 = vmatpush1.bf16.msra.mxu0 %v7142
    %7741 = vmatprep.subr.bf16.mxu0 0
    %7742 = vmatpush1.bf16.msra.mxu0 0
    %7743 = vmatprep.subr.bf16.mxu0 0
    %7744 = vmatpush1.bf16.msra.mxu0 0
    %7745 = vmatprep.subr.bf16.mxu0 0
    %7746 = vmatpush1.bf16.msra.mxu0 0
    %7747 = vmatprep.subr.bf16.mxu0 0
    %7748 = vmatpush1.bf16.msra.mxu0 0
    %7749 = vmatprep.subr.bf16.mxu0 0
    %7750 = vmatpush1.bf16.msra.mxu0 0
    %7751 = vmatprep.subr.bf16.mxu0 0
    %7752 = vmatpush1.bf16.msra.mxu0 0
    %7753 = vmatprep.subr.bf16.mxu0 0
    %7754 = vmatpush1.bf16.msra.mxu0 0
    %7755 = vmatprep.subr.bf16.mxu0 0
    %7756 = vmatpush1.bf16.msra.mxu0 0
    %7757 = vmatprep.mubr.bf16.mxu0 0
    %7758 = vmatmul.mubr.bf16.gmra.mrb[0].mxu0 %v5969
    %v7759 = vpop.f32.mrb[0].mxu0
    %v7760 = vadd.f32 %v7707, %v7759
    %v7761 = vpop.f32.mrb[0].mxu0
    %v7762 = vadd.f32 %v7709, %v7761
    %v7763 = vpop.f32.mrb[0].mxu0
    %v7764 = vadd.f32 %v7711, %v7763
    %v7765 = vpop.f32.mrb[0].mxu0
    %v7766 = vadd.f32 %v7713, %v7765
    %7767 = vmatprep.mubr.bf16.mxu0 0
    %7768 = vmatmul.mubr.bf16.gmra.mrb[0].mxu0 %v5972
    %v7769 = vpop.f32.mrb[0].mxu0
    %v7770 = vadd.f32 %v7717, %v7769
    %v7771 = vpop.f32.mrb[0].mxu0
    %v7772 = vadd.f32 %v7719, %v7771
    %v7773 = vpop.f32.mrb[0].mxu0
    %v7774 = vadd.f32 %v7721, %v7773
    %v7775 = vpop.f32.mrb[0].mxu0
    %v7776 = vadd.f32 %v7723, %v7775
    %7777 = vdwg.mxu0
    %7778 = vmatprep.subr.bf16.mxu0 %v7053
    %7779 = vmatpush1.bf16.msra.mxu0 %v7052
    %7780 = vmatprep.subr.bf16.mxu0 %v7057
    %7781 = vmatpush1.bf16.msra.mxu0 %v7056
    %7782 = vmatprep.subr.bf16.mxu0 %v7061
    %7783 = vmatpush1.bf16.msra.mxu0 %v7060
    %7784 = vmatprep.subr.bf16.mxu0 %v7065
    %7785 = vmatpush1.bf16.msra.mxu0 %v7064
    %7786 = vmatprep.subr.bf16.mxu0 %v7069
    %7787 = vmatpush1.bf16.msra.mxu0 %v7068
    %7788 = vmatprep.subr.bf16.mxu0 %v7073
    %7789 = vmatpush1.bf16.msra.mxu0 %v7072
    %7790 = vmatprep.subr.bf16.mxu0 %v7077
    %7791 = vmatpush1.bf16.msra.mxu0 %v7076
    %7792 = vmatprep.subr.bf16.mxu0 %v7081
    %7793 = vmatpush1.bf16.msra.mxu0 %v7080
    %7794 = vmatprep.subr.bf16.mxu0 %v7085
    %7795 = vmatpush1.bf16.msra.mxu0 %v7084
    %7796 = vmatprep.subr.bf16.mxu0 %v7089
    %7797 = vmatpush1.bf16.msra.mxu0 %v7088
    %7798 = vmatprep.subr.bf16.mxu0 %v7093
    %7799 = vmatpush1.bf16.msra.mxu0 %v7092
    %7800 = vmatprep.subr.bf16.mxu0 %v7097
    %7801 = vmatpush1.bf16.msra.mxu0 %v7096
    %7802 = vmatprep.subr.bf16.mxu0 %v7101
    %7803 = vmatpush1.bf16.msra.mxu0 %v7100
    %7804 = vmatprep.subr.bf16.mxu0 %v7105
    %7805 = vmatpush1.bf16.msra.mxu0 %v7104
    %7806 = vmatprep.subr.bf16.mxu0 %v7109
    %7807 = vmatpush1.bf16.msra.mxu0 %v7108
    %7808 = vmatprep.subr.bf16.mxu0 %v7113
    %7809 = vmatpush1.bf16.msra.mxu0 %v7112
    %7810 = vmatprep.mubr.bf16.mxu0 %v5968
    %7811 = vmatmul.mubr.bf16.gmra.mrb[0].mxu0 %v5967
    %v7812 = vpop.f32.mrb[0].mxu0
    %v7813 = vadd.f32 %v7654, %v7812
    %v7814 = vpop.f32.mrb[0].mxu0
    %v7815 = vadd.f32 %v7656, %v7814
    %v7816 = vpop.f32.mrb[0].mxu0
    %v7817 = vadd.f32 %v7658, %v7816
    %v7818 = vpop.f32.mrb[0].mxu0
    %v7819 = vadd.f32 %v7660, %v7818
    %7820 = vmatprep.mubr.bf16.mxu0 %v5971
    %7821 = vmatmul.mubr.bf16.gmra.mrb[0].mxu0 %v5970
    %v7822 = vpop.f32.mrb[0].mxu0
    %v7823 = vadd.f32 %v7664, %v7822
    %v7824 = vpop.f32.mrb[0].mxu0
    %v7825 = vadd.f32 %v7666, %v7824
    %v7826 = vpop.f32.mrb[0].mxu0
    %v7827 = vadd.f32 %v7668, %v7826
    %v7828 = vpop.f32.mrb[0].mxu0
    %v7829 = vadd.f32 %v7670, %v7828
    %7830 = vdwg.mxu0
    %7831 = vmatprep.subr.bf16.mxu0 %v7117
    %7832 = vmatpush1.bf16.msra.mxu0 %v7116
    %7833 = vmatprep.subr.bf16.mxu0 %v7121
    %7834 = vmatpush1.bf16.msra.mxu0 %v7120
    %7835 = vmatprep.subr.bf16.mxu0 %v7125
    %7836 = vmatpush1.bf16.msra.mxu0 %v7124
    %7837 = vmatprep.subr.bf16.mxu0 %v7129
    %7838 = vmatpush1.bf16.msra.mxu0 %v7128
    %7839 = vmatprep.subr.bf16.mxu0 %v7133
    %7840 = vmatpush1.bf16.msra.mxu0 %v7132
    %7841 = vmatprep.subr.bf16.mxu0 %v7137
    %7842 = vmatpush1.bf16.msra.mxu0 %v7136
    %7843 = vmatprep.subr.bf16.mxu0 %v7141
    %7844 = vmatpush1.bf16.msra.mxu0 %v7140
    %7845 = vmatprep.subr.bf16.mxu0 %v7145
    %7846 = vmatpush1.bf16.msra.mxu0 %v7144
    %7847 = vmatprep.subr.bf16.mxu0 0
    %7848 = vmatpush1.bf16.msra.mxu0 0
    %7849 = vmatprep.subr.bf16.mxu0 0
    %7850 = vmatpush1.bf16.msra.mxu0 0
    %7851 = vmatprep.subr.bf16.mxu0 0
    %7852 = vmatpush1.bf16.msra.mxu0 0
    %7853 = vmatprep.subr.bf16.mxu0 0
    %7854 = vmatpush1.bf16.msra.mxu0 0
    %7855 = vmatprep.subr.bf16.mxu0 0
    %7856 = vmatpush1.bf16.msra.mxu0 0
    %7857 = vmatprep.subr.bf16.mxu0 0
    %7858 = vmatpush1.bf16.msra.mxu0 0
    %7859 = vmatprep.subr.bf16.mxu0 0
    %7860 = vmatpush1.bf16.msra.mxu0 0
    %7861 = vmatprep.subr.bf16.mxu0 0
    %7862 = vmatpush1.bf16.msra.mxu0 0
    %7863 = vmatprep.mubr.bf16.mxu0 0
    %7864 = vmatmul.mubr.bf16.gmra.mrb[0].mxu0 %v5969
    %v7865 = vpop.f32.mrb[0].mxu0
    %v7866 = vadd.f32 %v7813, %v7865
    %v7867 = vpop.f32.mrb[0].mxu0
    %v7868 = vadd.f32 %v7815, %v7867
    %v7869 = vpop.f32.mrb[0].mxu0
    %v7870 = vadd.f32 %v7817, %v7869
    %v7871 = vpop.f32.mrb[0].mxu0
    %v7872 = vadd.f32 %v7819, %v7871
    %7873 = vmatprep.mubr.bf16.mxu0 0
    %7874 = vmatmul.mubr.bf16.gmra.mrb[0].mxu0 %v5972
    %v7875 = vpop.f32.mrb[0].mxu0
    %v7876 = vadd.f32 %v7823, %v7875
    %v7877 = vpop.f32.mrb[0].mxu0
    %v7878 = vadd.f32 %v7825, %v7877
    %v7879 = vpop.f32.mrb[0].mxu0
    %v7880 = vadd.f32 %v7827, %v7879
    %v7881 = vpop.f32.mrb[0].mxu0
    %v7882 = vadd.f32 %v7829, %v7881
    %7883 = vdwg.mxu0
    %s7884 = scalar_lea.vmem [#allocation6], 1536
    %v7885 = vld [vmem:[%s7884] sm:$0xff]
    %v7886 = vld [vmem:[%s7884 + $0x8] sm:$0xff]
    %v7887 = vld [vmem:[%s7884 + $0x10] sm:$0xff]
    %v7888 = vld [vmem:[%s7884 + $0x18] sm:$0xff]
    %v7889 = vld [vmem:[%s7884 + $0x20] sm:$0xff]
    %v7890 = vld [vmem:[%s7884 + $0x28] sm:$0xff]
    %v7891 = vld [vmem:[%s7884 + $0x30] sm:$0xff]
    %v7892 = vld [vmem:[%s7884 + $0x38] sm:$0xff]
    %v7893 = vld [vmem:[%s7884 + $0x40] sm:$0xff]
    %v7894 = vld [vmem:[%s7884 + $0x48] sm:$0xff]
    %v7895 = vld [vmem:[%s7884 + $0x50] sm:$0xff]
    %v7896 = vld [vmem:[%s7884 + $0x58] sm:$0xff]
    %v7897 = vld [vmem:[%s7884 + $0x60] sm:$0xff]
    %v7898 = vld [vmem:[%s7884 + $0x68] sm:$0xff]
    %v7899 = vld [vmem:[%s7884 + $0x70] sm:$0xff]
    %v7900 = vld [vmem:[%s7884 + $0x78] sm:$0xff]
    %v7901 = vld [vmem:[%s7884 + $0x80] sm:$0xff]
    %v7902 = vld [vmem:[%s7884 + $0x88] sm:$0xff]
    %v7903 = vld [vmem:[%s7884 + $0x90] sm:$0xff]
    %v7904 = vld [vmem:[%s7884 + $0x98] sm:$0xff]
    %v7905 = vld [vmem:[%s7884 + $0xa0] sm:$0xff]
    %v7906 = vld [vmem:[%s7884 + $0xa8] sm:$0xff]
    %v7907 = vld [vmem:[%s7884 + $0xb0] sm:$0xff]
    %v7908 = vld [vmem:[%s7884 + $0xb8] sm:$0xff]
    %v7909 = vld [vmem:[%s7884 + $0xc0] sm:$0xff]
    %v7910 = vld [vmem:[%s7884 + $0xc8] sm:$0xff]
    %v7911 = vld [vmem:[%s7884 + $0xd0] sm:$0xff]
    %v7912 = vld [vmem:[%s7884 + $0xd8] sm:$0xff]
    %v7913 = vld [vmem:[%s7884 + $0xe0] sm:$0xff]
    %v7914 = vld [vmem:[%s7884 + $0xe8] sm:$0xff]
    %v7915 = vld [vmem:[%s7884 + $0xf0] sm:$0xff]
    %v7916 = vld [vmem:[%s7884 + $0xf8] sm:$0xff]
    %v7917 = vld [vmem:[%s7884 + $0x100] sm:$0xff]
    %v7918 = vld [vmem:[%s7884 + $0x108] sm:$0xff]
    %v7919 = vld [vmem:[%s7884 + $0x110] sm:$0xff]
    %v7920 = vld [vmem:[%s7884 + $0x118] sm:$0xff]
    %v7921 = vld [vmem:[%s7884 + $0x120] sm:$0xff]
    %v7922 = vld [vmem:[%s7884 + $0x128] sm:$0xff]
    %v7923 = vld [vmem:[%s7884 + $0x130] sm:$0xff]
    %v7924 = vld [vmem:[%s7884 + $0x138] sm:$0xff]
    %v7925 = vld [vmem:[%s7884 + $0x140] sm:$0xff]
    %v7926 = vld [vmem:[%s7884 + $0x148] sm:$0xff]
    %v7927 = vld [vmem:[%s7884 + $0x150] sm:$0xff]
    %v7928 = vld [vmem:[%s7884 + $0x158] sm:$0xff]
    %v7929 = vld [vmem:[%s7884 + $0x160] sm:$0xff]
    %v7930 = vld [vmem:[%s7884 + $0x168] sm:$0xff]
    %v7931 = vld [vmem:[%s7884 + $0x170] sm:$0xff]
    %v7932 = vld [vmem:[%s7884 + $0x178] sm:$0xff]
    %v7933 = vld [vmem:[%s7884 + $0x180] sm:$0xff]
    %v7934 = vld [vmem:[%s7884 + $0x188] sm:$0xff]
    %v7935 = vld [vmem:[%s7884 + $0x190] sm:$0xff]
    %v7936 = vld [vmem:[%s7884 + $0x198] sm:$0xff]
    %v7937 = vld [vmem:[%s7884 + $0x1a0] sm:$0xff]
    %v7938 = vld [vmem:[%s7884 + $0x1a8] sm:$0xff]
    %v7939 = vld [vmem:[%s7884 + $0x1b0] sm:$0xff]
    %v7940 = vld [vmem:[%s7884 + $0x1b8] sm:$0xff]
    %v7941 = vld [vmem:[%s7884 + $0x1c0] sm:$0xff]
    %v7942 = vld [vmem:[%s7884 + $0x1c8] sm:$0xff]
    %v7943 = vld [vmem:[%s7884 + $0x1d0] sm:$0xff]
    %v7944 = vld [vmem:[%s7884 + $0x1d8] sm:$0xff]
    %v7945 = vld [vmem:[%s7884 + $0x1e0] sm:$0xff]
    %v7946 = vld [vmem:[%s7884 + $0x1e8] sm:$0xff]
    %v7947 = vld [vmem:[%s7884 + $0x1f0] sm:$0xff]
    %v7948 = vld [vmem:[%s7884 + $0x1f8] sm:$0xff]
    %v7949 = vld [vmem:[%s7884 + $0x200] sm:$0xff]
    %v7950 = vld [vmem:[%s7884 + $0x208] sm:$0xff]
    %v7951 = vld [vmem:[%s7884 + $0x210] sm:$0xff]
    %v7952 = vld [vmem:[%s7884 + $0x218] sm:$0xff]
    %v7953 = vld [vmem:[%s7884 + $0x220] sm:$0xff]
    %v7954 = vld [vmem:[%s7884 + $0x228] sm:$0xff]
    %v7955 = vld [vmem:[%s7884 + $0x230] sm:$0xff]
    %v7956 = vld [vmem:[%s7884 + $0x238] sm:$0xff]
    %v7957 = vld [vmem:[%s7884 + $0x240] sm:$0xff]
    %v7958 = vld [vmem:[%s7884 + $0x248] sm:$0xff]
    %v7959 = vld [vmem:[%s7884 + $0x250] sm:$0xff]
    %v7960 = vld [vmem:[%s7884 + $0x258] sm:$0xff]
    %v7961 = vld [vmem:[%s7884 + $0x260] sm:$0xff]
    %v7962 = vld [vmem:[%s7884 + $0x268] sm:$0xff]
    %v7963 = vld [vmem:[%s7884 + $0x270] sm:$0xff]
    %v7964 = vld [vmem:[%s7884 + $0x278] sm:$0xff]
    %v7965 = vld [vmem:[%s7884 + $0x280] sm:$0xff]
    %v7966 = vld [vmem:[%s7884 + $0x288] sm:$0xff]
    %v7967 = vld [vmem:[%s7884 + $0x290] sm:$0xff]
    %v7968 = vld [vmem:[%s7884 + $0x298] sm:$0xff]
    %v7969 = vld [vmem:[%s7884 + $0x2a0] sm:$0xff]
    %v7970 = vld [vmem:[%s7884 + $0x2a8] sm:$0xff]
    %v7971 = vld [vmem:[%s7884 + $0x2b0] sm:$0xff]
    %v7972 = vld [vmem:[%s7884 + $0x2b8] sm:$0xff]
    %v7973 = vld [vmem:[%s7884 + $0x2c0] sm:$0xff]
    %v7974 = vld [vmem:[%s7884 + $0x2c8] sm:$0xff]
    %v7975 = vld [vmem:[%s7884 + $0x2d0] sm:$0xff]
    %v7976 = vld [vmem:[%s7884 + $0x2d8] sm:$0xff]
    %v7977 = vld [vmem:[%s7884 + $0x2e0] sm:$0xff]
    %v7978 = vld [vmem:[%s7884 + $0x2e8] sm:$0xff]
    %v7979 = vld [vmem:[%s7884 + $0x2f0] sm:$0xff]
    %v7980 = vld [vmem:[%s7884 + $0x2f8] sm:$0xff]
    %v8077 = vunpack.c.l.b16 %v7885
    %v8078 = vunpack.c.h.b16 %v7885
    %v8079 = vunpack.c.l.b16 %v7886
    %v8080 = vunpack.c.h.b16 %v7886
    %v8081 = vunpack.c.l.b16 %v7887
    %v8082 = vunpack.c.h.b16 %v7887
    %v8083 = vunpack.c.l.b16 %v7888
    %v8084 = vunpack.c.h.b16 %v7888
    %v8085 = vunpack.c.l.b16 %v7889
    %v8086 = vunpack.c.h.b16 %v7889
    %v8087 = vunpack.c.l.b16 %v7890
    %v8088 = vunpack.c.h.b16 %v7890
    %v8089 = vunpack.c.l.b16 %v7891
    %v8090 = vunpack.c.h.b16 %v7891
    %v8091 = vunpack.c.l.b16 %v7892
    %v8092 = vunpack.c.h.b16 %v7892
    %v8093 = vunpack.c.l.b16 %v7893
    %v8094 = vunpack.c.h.b16 %v7893
    %v8095 = vunpack.c.l.b16 %v7894
    %v8096 = vunpack.c.h.b16 %v7894
    %v8097 = vunpack.c.l.b16 %v7895
    %v8098 = vunpack.c.h.b16 %v7895
    %v8099 = vunpack.c.l.b16 %v7896
    %v8100 = vunpack.c.h.b16 %v7896
    %v8101 = vunpack.c.l.b16 %v7897
    %v8102 = vunpack.c.h.b16 %v7897
    %v8103 = vunpack.c.l.b16 %v7898
    %v8104 = vunpack.c.h.b16 %v7898
    %v8105 = vunpack.c.l.b16 %v7899
    %v8106 = vunpack.c.h.b16 %v7899
    %v8107 = vunpack.c.l.b16 %v7900
    %v8108 = vunpack.c.h.b16 %v7900
    %v8109 = vunpack.c.l.b16 %v7901
    %v8110 = vunpack.c.h.b16 %v7901
    %v8111 = vunpack.c.l.b16 %v7902
    %v8112 = vunpack.c.h.b16 %v7902
    %v8113 = vunpack.c.l.b16 %v7903
    %v8114 = vunpack.c.h.b16 %v7903
    %v8115 = vunpack.c.l.b16 %v7904
    %v8116 = vunpack.c.h.b16 %v7904
    %v8117 = vunpack.c.l.b16 %v7905
    %v8118 = vunpack.c.h.b16 %v7905
    %v8119 = vunpack.c.l.b16 %v7906
    %v8120 = vunpack.c.h.b16 %v7906
    %v8121 = vunpack.c.l.b16 %v7907
    %v8122 = vunpack.c.h.b16 %v7907
    %v8123 = vunpack.c.l.b16 %v7908
    %v8124 = vunpack.c.h.b16 %v7908
    %v8125 = vunpack.c.l.b16 %v7909
    %v8126 = vunpack.c.h.b16 %v7909
    %v8127 = vunpack.c.l.b16 %v7910
    %v8128 = vunpack.c.h.b16 %v7910
    %v8129 = vunpack.c.l.b16 %v7911
    %v8130 = vunpack.c.h.b16 %v7911
    %v8131 = vunpack.c.l.b16 %v7912
    %v8132 = vunpack.c.h.b16 %v7912
    %v8133 = vunpack.c.l.b16 %v7913
    %v8134 = vunpack.c.h.b16 %v7913
    %v8135 = vunpack.c.l.b16 %v7914
    %v8136 = vunpack.c.h.b16 %v7914
    %v8137 = vunpack.c.l.b16 %v7915
    %v8138 = vunpack.c.h.b16 %v7915
    %v8139 = vunpack.c.l.b16 %v7916
    %v8140 = vunpack.c.h.b16 %v7916
    %v8141 = vunpack.c.l.b16 %v7917
    %v8142 = vunpack.c.h.b16 %v7917
    %v8143 = vunpack.c.l.b16 %v7918
    %v8144 = vunpack.c.h.b16 %v7918
    %v8145 = vunpack.c.l.b16 %v7919
    %v8146 = vunpack.c.h.b16 %v7919
    %v8147 = vunpack.c.l.b16 %v7920
    %v8148 = vunpack.c.h.b16 %v7920
    %v8149 = vunpack.c.l.b16 %v7921
    %v8150 = vunpack.c.h.b16 %v7921
    %v8151 = vunpack.c.l.b16 %v7922
    %v8152 = vunpack.c.h.b16 %v7922
    %v8153 = vunpack.c.l.b16 %v7923
    %v8154 = vunpack.c.h.b16 %v7923
    %v8155 = vunpack.c.l.b16 %v7924
    %v8156 = vunpack.c.h.b16 %v7924
    %v8157 = vunpack.c.l.b16 %v7925
    %v8158 = vunpack.c.h.b16 %v7925
    %v8159 = vunpack.c.l.b16 %v7926
    %v8160 = vunpack.c.h.b16 %v7926
    %v8161 = vunpack.c.l.b16 %v7927
    %v8162 = vunpack.c.h.b16 %v7927
    %v8163 = vunpack.c.l.b16 %v7928
    %v8164 = vunpack.c.h.b16 %v7928
    %v8165 = vunpack.c.l.b16 %v7929
    %v8166 = vunpack.c.h.b16 %v7929
    %v8167 = vunpack.c.l.b16 %v7930
    %v8168 = vunpack.c.h.b16 %v7930
    %v8169 = vunpack.c.l.b16 %v7931
    %v8170 = vunpack.c.h.b16 %v7931
    %v8171 = vunpack.c.l.b16 %v7932
    %v8172 = vunpack.c.h.b16 %v7932
    %v8173 = vunpack.c.l.b16 %v7933
    %v8174 = vunpack.c.h.b16 %v7933
    %v8175 = vunpack.c.l.b16 %v7934
    %v8176 = vunpack.c.h.b16 %v7934
    %v8177 = vunpack.c.l.b16 %v7935
    %v8178 = vunpack.c.h.b16 %v7935
    %v8179 = vunpack.c.l.b16 %v7936
    %v8180 = vunpack.c.h.b16 %v7936
    %v8181 = vunpack.c.l.b16 %v7937
    %v8182 = vunpack.c.h.b16 %v7937
    %v8183 = vunpack.c.l.b16 %v7938
    %v8184 = vunpack.c.h.b16 %v7938
    %v8185 = vunpack.c.l.b16 %v7939
    %v8186 = vunpack.c.h.b16 %v7939
    %v8187 = vunpack.c.l.b16 %v7940
    %v8188 = vunpack.c.h.b16 %v7940
    %v8189 = vunpack.c.l.b16 %v7941
    %v8190 = vunpack.c.h.b16 %v7941
    %v8191 = vunpack.c.l.b16 %v7942
    %v8192 = vunpack.c.h.b16 %v7942
    %v8193 = vunpack.c.l.b16 %v7943
    %v8194 = vunpack.c.h.b16 %v7943
    %v8195 = vunpack.c.l.b16 %v7944
    %v8196 = vunpack.c.h.b16 %v7944
    %v8197 = vunpack.c.l.b16 %v7945
    %v8198 = vunpack.c.h.b16 %v7945
    %v8199 = vunpack.c.l.b16 %v7946
    %v8200 = vunpack.c.h.b16 %v7946
    %v8201 = vunpack.c.l.b16 %v7947
    %v8202 = vunpack.c.h.b16 %v7947
    %v8203 = vunpack.c.l.b16 %v7948
    %v8204 = vunpack.c.h.b16 %v7948
    %v8205 = vunpack.c.l.b16 %v7949
    %v8206 = vunpack.c.h.b16 %v7949
    %v8207 = vunpack.c.l.b16 %v7950
    %v8208 = vunpack.c.h.b16 %v7950
    %v8209 = vunpack.c.l.b16 %v7951
    %v8210 = vunpack.c.h.b16 %v7951
    %v8211 = vunpack.c.l.b16 %v7952
    %v8212 = vunpack.c.h.b16 %v7952
    %v8213 = vunpack.c.l.b16 %v7953
    %v8214 = vunpack.c.h.b16 %v7953
    %v8215 = vunpack.c.l.b16 %v7954
    %v8216 = vunpack.c.h.b16 %v7954
    %v8217 = vunpack.c.l.b16 %v7955
    %v8218 = vunpack.c.h.b16 %v7955
    %v8219 = vunpack.c.l.b16 %v7956
    %v8220 = vunpack.c.h.b16 %v7956
    %v8221 = vunpack.c.l.b16 %v7957
    %v8222 = vunpack.c.h.b16 %v7957
    %v8223 = vunpack.c.l.b16 %v7958
    %v8224 = vunpack.c.h.b16 %v7958
    %v8225 = vunpack.c.l.b16 %v7959
    %v8226 = vunpack.c.h.b16 %v7959
    %v8227 = vunpack.c.l.b16 %v7960
    %v8228 = vunpack.c.h.b16 %v7960
    %v8229 = vunpack.c.l.b16 %v7961
    %v8230 = vunpack.c.h.b16 %v7961
    %v8231 = vunpack.c.l.b16 %v7962
    %v8232 = vunpack.c.h.b16 %v7962
    %v8233 = vunpack.c.l.b16 %v7963
    %v8234 = vunpack.c.h.b16 %v7963
    %v8235 = vunpack.c.l.b16 %v7964
    %v8236 = vunpack.c.h.b16 %v7964
    %v8237 = vunpack.c.l.b16 %v7965
    %v8238 = vunpack.c.h.b16 %v7965
    %v8239 = vunpack.c.l.b16 %v7966
    %v8240 = vunpack.c.h.b16 %v7966
    %v8241 = vunpack.c.l.b16 %v7967
    %v8242 = vunpack.c.h.b16 %v7967
    %v8243 = vunpack.c.l.b16 %v7968
    %v8244 = vunpack.c.h.b16 %v7968
    %v8245 = vunpack.c.l.b16 %v7969
    %v8246 = vunpack.c.h.b16 %v7969
    %v8247 = vunpack.c.l.b16 %v7970
    %v8248 = vunpack.c.h.b16 %v7970
    %v8249 = vunpack.c.l.b16 %v7971
    %v8250 = vunpack.c.h.b16 %v7971
    %v8251 = vunpack.c.l.b16 %v7972
    %v8252 = vunpack.c.h.b16 %v7972
    %v8253 = vunpack.c.l.b16 %v7973
    %v8254 = vunpack.c.h.b16 %v7973
    %v8255 = vunpack.c.l.b16 %v7974
    %v8256 = vunpack.c.h.b16 %v7974
    %v8257 = vunpack.c.l.b16 %v7975
    %v8258 = vunpack.c.h.b16 %v7975
    %v8259 = vunpack.c.l.b16 %v7976
    %v8260 = vunpack.c.h.b16 %v7976
    %v8261 = vunpack.c.l.b16 %v7977
    %v8262 = vunpack.c.h.b16 %v7977
    %v8263 = vunpack.c.l.b16 %v7978
    %v8264 = vunpack.c.h.b16 %v7978
    %v8265 = vunpack.c.l.b16 %v7979
    %v8266 = vunpack.c.h.b16 %v7979
    %v8267 = vunpack.c.l.b16 %v7980
    %v8268 = vunpack.c.h.b16 %v7980
    %v8269 = vpack.c.b16 %v8081, %v8077
    %v8270 = vpack.c.b16 %v8082, %v8078
    %v8271 = vpack.c.b16 %v8083, %v8079
    %v8272 = vpack.c.b16 %v8084, %v8080
    %v8273 = vpack.c.b16 %v8089, %v8085
    %v8274 = vpack.c.b16 %v8090, %v8086
    %v8275 = vpack.c.b16 %v8091, %v8087
    %v8276 = vpack.c.b16 %v8092, %v8088
    %v8277 = vpack.c.b16 %v8097, %v8093
    %v8278 = vpack.c.b16 %v8098, %v8094
    %v8279 = vpack.c.b16 %v8099, %v8095
    %v8280 = vpack.c.b16 %v8100, %v8096
    %v8281 = vpack.c.b16 %v8105, %v8101
    %v8282 = vpack.c.b16 %v8106, %v8102
    %v8283 = vpack.c.b16 %v8107, %v8103
    %v8284 = vpack.c.b16 %v8108, %v8104
    %v8285 = vpack.c.b16 %v8113, %v8109
    %v8286 = vpack.c.b16 %v8114, %v8110
    %v8287 = vpack.c.b16 %v8115, %v8111
    %v8288 = vpack.c.b16 %v8116, %v8112
    %v8289 = vpack.c.b16 %v8121, %v8117
    %v8290 = vpack.c.b16 %v8122, %v8118
    %v8291 = vpack.c.b16 %v8123, %v8119
    %v8292 = vpack.c.b16 %v8124, %v8120
    %v8293 = vpack.c.b16 %v8129, %v8125
    %v8294 = vpack.c.b16 %v8130, %v8126
    %v8295 = vpack.c.b16 %v8131, %v8127
    %v8296 = vpack.c.b16 %v8132, %v8128
    %v8297 = vpack.c.b16 %v8137, %v8133
    %v8298 = vpack.c.b16 %v8138, %v8134
    %v8299 = vpack.c.b16 %v8139, %v8135
    %v8300 = vpack.c.b16 %v8140, %v8136
    %v8301 = vpack.c.b16 %v8145, %v8141
    %v8302 = vpack.c.b16 %v8146, %v8142
    %v8303 = vpack.c.b16 %v8147, %v8143
    %v8304 = vpack.c.b16 %v8148, %v8144
    %v8305 = vpack.c.b16 %v8153, %v8149
    %v8306 = vpack.c.b16 %v8154, %v8150
    %v8307 = vpack.c.b16 %v8155, %v8151
    %v8308 = vpack.c.b16 %v8156, %v8152
    %v8309 = vpack.c.b16 %v8161, %v8157
    %v8310 = vpack.c.b16 %v8162, %v8158
    %v8311 = vpack.c.b16 %v8163, %v8159
    %v8312 = vpack.c.b16 %v8164, %v8160
    %v8313 = vpack.c.b16 %v8169, %v8165
    %v8314 = vpack.c.b16 %v8170, %v8166
    %v8315 = vpack.c.b16 %v8171, %v8167
    %v8316 = vpack.c.b16 %v8172, %v8168
    %v8317 = vpack.c.b16 %v8177, %v8173
    %v8318 = vpack.c.b16 %v8178, %v8174
    %v8319 = vpack.c.b16 %v8179, %v8175
    %v8320 = vpack.c.b16 %v8180, %v8176
    %v8321 = vpack.c.b16 %v8185, %v8181
    %v8322 = vpack.c.b16 %v8186, %v8182
    %v8323 = vpack.c.b16 %v8187, %v8183
    %v8324 = vpack.c.b16 %v8188, %v8184
    %v8325 = vpack.c.b16 %v8193, %v8189
    %v8326 = vpack.c.b16 %v8194, %v8190
    %v8327 = vpack.c.b16 %v8195, %v8191
    %v8328 = vpack.c.b16 %v8196, %v8192
    %v8329 = vpack.c.b16 %v8201, %v8197
    %v8330 = vpack.c.b16 %v8202, %v8198
    %v8331 = vpack.c.b16 %v8203, %v8199
    %v8332 = vpack.c.b16 %v8204, %v8200
    %v8333 = vpack.c.b16 %v8209, %v8205
    %v8334 = vpack.c.b16 %v8210, %v8206
    %v8335 = vpack.c.b16 %v8211, %v8207
    %v8336 = vpack.c.b16 %v8212, %v8208
    %v8337 = vpack.c.b16 %v8217, %v8213
    %v8338 = vpack.c.b16 %v8218, %v8214
    %v8339 = vpack.c.b16 %v8219, %v8215
    %v8340 = vpack.c.b16 %v8220, %v8216
    %v8341 = vpack.c.b16 %v8225, %v8221
    %v8342 = vpack.c.b16 %v8226, %v8222
    %v8343 = vpack.c.b16 %v8227, %v8223
    %v8344 = vpack.c.b16 %v8228, %v8224
    %v8345 = vpack.c.b16 %v8233, %v8229
    %v8346 = vpack.c.b16 %v8234, %v8230
    %v8347 = vpack.c.b16 %v8235, %v8231
    %v8348 = vpack.c.b16 %v8236, %v8232
    %v8349 = vpack.c.b16 %v8241, %v8237
    %v8350 = vpack.c.b16 %v8242, %v8238
    %v8351 = vpack.c.b16 %v8243, %v8239
    %v8352 = vpack.c.b16 %v8244, %v8240
    %v8353 = vpack.c.b16 %v8249, %v8245
    %v8354 = vpack.c.b16 %v8250, %v8246
    %v8355 = vpack.c.b16 %v8251, %v8247
    %v8356 = vpack.c.b16 %v8252, %v8248
    %v8357 = vpack.c.b16 %v8257, %v8253
    %v8358 = vpack.c.b16 %v8258, %v8254
    %v8359 = vpack.c.b16 %v8259, %v8255
    %v8360 = vpack.c.b16 %v8260, %v8256
    %v8361 = vpack.c.b16 %v8265, %v8261
    %v8362 = vpack.c.b16 %v8266, %v8262
    %v8363 = vpack.c.b16 %v8267, %v8263
    %v8364 = vpack.c.b16 %v8268, %v8264
    %8461 = vmatprep.subr.bf16.mxu0 %v8270
    %8462 = vmatpush1.bf16.msra.mxu0 %v8269
    %8463 = vmatprep.subr.bf16.mxu0 %v8274
    %8464 = vmatpush1.bf16.msra.mxu0 %v8273
    %8465 = vmatprep.subr.bf16.mxu0 %v8278
    %8466 = vmatpush1.bf16.msra.mxu0 %v8277
    %8467 = vmatprep.subr.bf16.mxu0 %v8282
    %8468 = vmatpush1.bf16.msra.mxu0 %v8281
    %8469 = vmatprep.subr.bf16.mxu0 %v8286
    %8470 = vmatpush1.bf16.msra.mxu0 %v8285
    %8471 = vmatprep.subr.bf16.mxu0 %v8290
    %8472 = vmatpush1.bf16.msra.mxu0 %v8289
    %8473 = vmatprep.subr.bf16.mxu0 %v8294
    %8474 = vmatpush1.bf16.msra.mxu0 %v8293
    %8475 = vmatprep.subr.bf16.mxu0 %v8298
    %8476 = vmatpush1.bf16.msra.mxu0 %v8297
    %8477 = vmatprep.subr.bf16.mxu0 %v8302
    %8478 = vmatpush1.bf16.msra.mxu0 %v8301
    %8479 = vmatprep.subr.bf16.mxu0 %v8306
    %8480 = vmatpush1.bf16.msra.mxu0 %v8305
    %8481 = vmatprep.subr.bf16.mxu0 %v8310
    %8482 = vmatpush1.bf16.msra.mxu0 %v8309
    %8483 = vmatprep.subr.bf16.mxu0 %v8314
    %8484 = vmatpush1.bf16.msra.mxu0 %v8313
    %8485 = vmatprep.subr.bf16.mxu0 %v8318
    %8486 = vmatpush1.bf16.msra.mxu0 %v8317
    %8487 = vmatprep.subr.bf16.mxu0 %v8322
    %8488 = vmatpush1.bf16.msra.mxu0 %v8321
    %8489 = vmatprep.subr.bf16.mxu0 %v8326
    %8490 = vmatpush1.bf16.msra.mxu0 %v8325
    %8491 = vmatprep.subr.bf16.mxu0 %v8330
    %8492 = vmatpush1.bf16.msra.mxu0 %v8329
    %8493 = vmatprep.mubr.bf16.mxu0 %v7455
    %8494 = vmatmul.mubr.bf16.gmra.mrb[0].mxu0 %v7454
    %v8495 = vpop.f32.mrb[0].mxu0
    %v8496 = vadd.f32 0.0, %v8495
    %v8497 = vpop.f32.mrb[0].mxu0
    %v8498 = vadd.f32 0.0, %v8497
    %v8499 = vpop.f32.mrb[0].mxu0
    %v8500 = vadd.f32 0.0, %v8499
    %v8501 = vpop.f32.mrb[0].mxu0
    %v8502 = vadd.f32 0.0, %v8501
    %8503 = vmatprep.mubr.bf16.mxu0 %v7458
    %8504 = vmatmul.mubr.bf16.gmra.mrb[0].mxu0 %v7457
    %v8505 = vpop.f32.mrb[0].mxu0
    %v8506 = vadd.f32 0.0, %v8505
    %v8507 = vpop.f32.mrb[0].mxu0
    %v8508 = vadd.f32 0.0, %v8507
    %v8509 = vpop.f32.mrb[0].mxu0
    %v8510 = vadd.f32 0.0, %v8509
    %v8511 = vpop.f32.mrb[0].mxu0
    %v8512 = vadd.f32 0.0, %v8511
    %8513 = vdwg.mxu0
    %8514 = vmatprep.subr.bf16.mxu0 %v8334
    %8515 = vmatpush1.bf16.msra.mxu0 %v8333
    %8516 = vmatprep.subr.bf16.mxu0 %v8338
    %8517 = vmatpush1.bf16.msra.mxu0 %v8337
    %8518 = vmatprep.subr.bf16.mxu0 %v8342
    %8519 = vmatpush1.bf16.msra.mxu0 %v8341
    %8520 = vmatprep.subr.bf16.mxu0 %v8346
    %8521 = vmatpush1.bf16.msra.mxu0 %v8345
    %8522 = vmatprep.subr.bf16.mxu0 %v8350
    %8523 = vmatpush1.bf16.msra.mxu0 %v8349
    %8524 = vmatprep.subr.bf16.mxu0 %v8354
    %8525 = vmatpush1.bf16.msra.mxu0 %v8353
    %8526 = vmatprep.subr.bf16.mxu0 %v8358
    %8527 = vmatpush1.bf16.msra.mxu0 %v8357
    %8528 = vmatprep.subr.bf16.mxu0 %v8362
    %8529 = vmatpush1.bf16.msra.mxu0 %v8361
    %8530 = vmatprep.subr.bf16.mxu0 0
    %8531 = vmatpush1.bf16.msra.mxu0 0
    %8532 = vmatprep.subr.bf16.mxu0 0
    %8533 = vmatpush1.bf16.msra.mxu0 0
    %8534 = vmatprep.subr.bf16.mxu0 0
    %8535 = vmatpush1.bf16.msra.mxu0 0
    %8536 = vmatprep.subr.bf16.mxu0 0
    %8537 = vmatpush1.bf16.msra.mxu0 0
    %8538 = vmatprep.subr.bf16.mxu0 0
    %8539 = vmatpush1.bf16.msra.mxu0 0
    %8540 = vmatprep.subr.bf16.mxu0 0
    %8541 = vmatpush1.bf16.msra.mxu0 0
    %8542 = vmatprep.subr.bf16.mxu0 0
    %8543 = vmatpush1.bf16.msra.mxu0 0
    %8544 = vmatprep.subr.bf16.mxu0 0
    %8545 = vmatpush1.bf16.msra.mxu0 0
    %8546 = vmatprep.mubr.bf16.mxu0 0
    %8547 = vmatmul.mubr.bf16.gmra.mrb[0].mxu0 %v7456
    %v8548 = vpop.f32.mrb[0].mxu0
    %v8549 = vadd.f32 %v8496, %v8548
    %v8550 = vpop.f32.mrb[0].mxu0
    %v8551 = vadd.f32 %v8498, %v8550
    %v8552 = vpop.f32.mrb[0].mxu0
    %v8553 = vadd.f32 %v8500, %v8552
    %v8554 = vpop.f32.mrb[0].mxu0
    %v8555 = vadd.f32 %v8502, %v8554
    %8556 = vmatprep.mubr.bf16.mxu0 0
    %8557 = vmatmul.mubr.bf16.gmra.mrb[0].mxu0 %v7459
    %v8558 = vpop.f32.mrb[0].mxu0
    %v8559 = vadd.f32 %v8506, %v8558
    %v8560 = vpop.f32.mrb[0].mxu0
    %v8561 = vadd.f32 %v8508, %v8560
    %v8562 = vpop.f32.mrb[0].mxu0
    %v8563 = vadd.f32 %v8510, %v8562
    %v8564 = vpop.f32.mrb[0].mxu0
    %v8565 = vadd.f32 %v8512, %v8564
    %8566 = vdwg.mxu0
    %8567 = vmatprep.subr.bf16.mxu0 %v8272
    %8568 = vmatpush1.bf16.msra.mxu0 %v8271
    %8569 = vmatprep.subr.bf16.mxu0 %v8276
    %8570 = vmatpush1.bf16.msra.mxu0 %v8275
    %8571 = vmatprep.subr.bf16.mxu0 %v8280
    %8572 = vmatpush1.bf16.msra.mxu0 %v8279
    %8573 = vmatprep.subr.bf16.mxu0 %v8284
    %8574 = vmatpush1.bf16.msra.mxu0 %v8283
    %8575 = vmatprep.subr.bf16.mxu0 %v8288
    %8576 = vmatpush1.bf16.msra.mxu0 %v8287
    %8577 = vmatprep.subr.bf16.mxu0 %v8292
    %8578 = vmatpush1.bf16.msra.mxu0 %v8291
    %8579 = vmatprep.subr.bf16.mxu0 %v8296
    %8580 = vmatpush1.bf16.msra.mxu0 %v8295
    %8581 = vmatprep.subr.bf16.mxu0 %v8300
    %8582 = vmatpush1.bf16.msra.mxu0 %v8299
    %8583 = vmatprep.subr.bf16.mxu0 %v8304
    %8584 = vmatpush1.bf16.msra.mxu0 %v8303
    %8585 = vmatprep.subr.bf16.mxu0 %v8308
    %8586 = vmatpush1.bf16.msra.mxu0 %v8307
    %8587 = vmatprep.subr.bf16.mxu0 %v8312
    %8588 = vmatpush1.bf16.msra.mxu0 %v8311
    %8589 = vmatprep.subr.bf16.mxu0 %v8316
    %8590 = vmatpush1.bf16.msra.mxu0 %v8315
    %8591 = vmatprep.subr.bf16.mxu0 %v8320
    %8592 = vmatpush1.bf16.msra.mxu0 %v8319
    %8593 = vmatprep.subr.bf16.mxu0 %v8324
    %8594 = vmatpush1.bf16.msra.mxu0 %v8323
    %8595 = vmatprep.subr.bf16.mxu0 %v8328
    %8596 = vmatpush1.bf16.msra.mxu0 %v8327
    %8597 = vmatprep.subr.bf16.mxu0 %v8332
    %8598 = vmatpush1.bf16.msra.mxu0 %v8331
    %8599 = vmatprep.mubr.bf16.mxu0 %v7455
    %8600 = vmatmul.mubr.bf16.gmra.mrb[0].mxu0 %v7454
    %v8601 = vpop.f32.mrb[0].mxu0
    %v8602 = vadd.f32 0.0, %v8601
    %v8603 = vpop.f32.mrb[0].mxu0
    %v8604 = vadd.f32 0.0, %v8603
    %v8605 = vpop.f32.mrb[0].mxu0
    %v8606 = vadd.f32 0.0, %v8605
    %v8607 = vpop.f32.mrb[0].mxu0
    %v8608 = vadd.f32 0.0, %v8607
    %8609 = vmatprep.mubr.bf16.mxu0 %v7458
    %8610 = vmatmul.mubr.bf16.gmra.mrb[0].mxu0 %v7457
    %v8611 = vpop.f32.mrb[0].mxu0
    %v8612 = vadd.f32 0.0, %v8611
    %v8613 = vpop.f32.mrb[0].mxu0
    %v8614 = vadd.f32 0.0, %v8613
    %v8615 = vpop.f32.mrb[0].mxu0
    %v8616 = vadd.f32 0.0, %v8615
    %v8617 = vpop.f32.mrb[0].mxu0
    %v8618 = vadd.f32 0.0, %v8617
    %8619 = vdwg.mxu0
    %8620 = vmatprep.subr.bf16.mxu0 %v8336
    %8621 = vmatpush1.bf16.msra.mxu0 %v8335
    %8622 = vmatprep.subr.bf16.mxu0 %v8340
    %8623 = vmatpush1.bf16.msra.mxu0 %v8339
    %8624 = vmatprep.subr.bf16.mxu0 %v8344
    %8625 = vmatpush1.bf16.msra.mxu0 %v8343
    %8626 = vmatprep.subr.bf16.mxu0 %v8348
    %8627 = vmatpush1.bf16.msra.mxu0 %v8347
    %8628 = vmatprep.subr.bf16.mxu0 %v8352
    %8629 = vmatpush1.bf16.msra.mxu0 %v8351
    %8630 = vmatprep.subr.bf16.mxu0 %v8356
    %8631 = vmatpush1.bf16.msra.mxu0 %v8355
    %8632 = vmatprep.subr.bf16.mxu0 %v8360
    %8633 = vmatpush1.bf16.msra.mxu0 %v8359
    %8634 = vmatprep.subr.bf16.mxu0 %v8364
    %8635 = vmatpush1.bf16.msra.mxu0 %v8363
    %8636 = vmatprep.subr.bf16.mxu0 0
    %8637 = vmatpush1.bf16.msra.mxu0 0
    %8638 = vmatprep.subr.bf16.mxu0 0
    %8639 = vmatpush1.bf16.msra.mxu0 0
    %8640 = vmatprep.subr.bf16.mxu0 0
    %8641 = vmatpush1.bf16.msra.mxu0 0
    %8642 = vmatprep.subr.bf16.mxu0 0
    %8643 = vmatpush1.bf16.msra.mxu0 0
    %8644 = vmatprep.subr.bf16.mxu0 0
    %8645 = vmatpush1.bf16.msra.mxu0 0
    %8646 = vmatprep.subr.bf16.mxu0 0
    %8647 = vmatpush1.bf16.msra.mxu0 0
    %8648 = vmatprep.subr.bf16.mxu0 0
    %8649 = vmatpush1.bf16.msra.mxu0 0
    %8650 = vmatprep.subr.bf16.mxu0 0
    %8651 = vmatpush1.bf16.msra.mxu0 0
    %8652 = vmatprep.mubr.bf16.mxu0 0
    %8653 = vmatmul.mubr.bf16.gmra.mrb[0].mxu0 %v7456
    %v8654 = vpop.f32.mrb[0].mxu0
    %v8655 = vadd.f32 %v8602, %v8654
    %v8656 = vpop.f32.mrb[0].mxu0
    %v8657 = vadd.f32 %v8604, %v8656
    %v8658 = vpop.f32.mrb[0].mxu0
    %v8659 = vadd.f32 %v8606, %v8658
    %v8660 = vpop.f32.mrb[0].mxu0
    %v8661 = vadd.f32 %v8608, %v8660
    %8662 = vmatprep.mubr.bf16.mxu0 0
    %8663 = vmatmul.mubr.bf16.gmra.mrb[0].mxu0 %v7459
    %v8664 = vpop.f32.mrb[0].mxu0
    %v8665 = vadd.f32 %v8612, %v8664
    %v8666 = vpop.f32.mrb[0].mxu0
    %v8667 = vadd.f32 %v8614, %v8666
    %v8668 = vpop.f32.mrb[0].mxu0
    %v8669 = vadd.f32 %v8616, %v8668
    %v8670 = vpop.f32.mrb[0].mxu0
    %v8671 = vadd.f32 %v8618, %v8670
    %8672 = vdwg.mxu0
    %v8673 = vadd.f32 %v7330, %v8549
    %v8674 = vadd.f32 %v7332, %v8551
    %v8675 = vadd.f32 %v7436, %v8655
    %v8676 = vadd.f32 %v7438, %v8657
    %v8677 = vadd.f32 %v7334, %v8553
    %v8678 = vadd.f32 %v7336, %v8555
    %v8679 = vadd.f32 %v7440, %v8659
    %v8680 = vadd.f32 %v7442, %v8661
    %v8681 = vadd.f32 %v7340, %v8559
    %v8682 = vadd.f32 %v7342, %v8561
    %v8683 = vadd.f32 %v7446, %v8665
    %v8684 = vadd.f32 %v7448, %v8667
    %v8685 = vadd.f32 %v7344, %v8563
    %v8686 = vadd.f32 %v7346, %v8565
    %v8687 = vadd.f32 %v7450, %v8669
    %v8688 = vadd.f32 %v7452, %v8671
    %v8689 = vpack.c.bf16 %v5853, %v5850
    %v8690 = vpack.c.bf16 %v5854, %v5851
    %v8691 = vpack.c.bf16 %v5855, %v5852
    %v8692 = vpack.c.bf16 %v5859, %v5856
    %v8693 = vpack.c.bf16 %v5860, %v5857
    %v8694 = vpack.c.bf16 %v5861, %v5858
    %8695 = vmatprep.subr.bf16.mxu0 %v8270
    %8696 = vmatpush1.bf16.msra.mxu0 %v8269
    %8697 = vmatprep.subr.bf16.mxu0 %v8274
    %8698 = vmatpush1.bf16.msra.mxu0 %v8273
    %8699 = vmatprep.subr.bf16.mxu0 %v8278
    %8700 = vmatpush1.bf16.msra.mxu0 %v8277
    %8701 = vmatprep.subr.bf16.mxu0 %v8282
    %8702 = vmatpush1.bf16.msra.mxu0 %v8281
    %8703 = vmatprep.subr.bf16.mxu0 %v8286
    %8704 = vmatpush1.bf16.msra.mxu0 %v8285
    %8705 = vmatprep.subr.bf16.mxu0 %v8290
    %8706 = vmatpush1.bf16.msra.mxu0 %v8289
    %8707 = vmatprep.subr.bf16.mxu0 %v8294
    %8708 = vmatpush1.bf16.msra.mxu0 %v8293
    %8709 = vmatprep.subr.bf16.mxu0 %v8298
    %8710 = vmatpush1.bf16.msra.mxu0 %v8297
    %8711 = vmatprep.subr.bf16.mxu0 %v8302
    %8712 = vmatpush1.bf16.msra.mxu0 %v8301
    %8713 = vmatprep.subr.bf16.mxu0 %v8306
    %8714 = vmatpush1.bf16.msra.mxu0 %v8305
    %8715 = vmatprep.subr.bf16.mxu0 %v8310
    %8716 = vmatpush1.bf16.msra.mxu0 %v8309
    %8717 = vmatprep.subr.bf16.mxu0 %v8314
    %8718 = vmatpush1.bf16.msra.mxu0 %v8313
    %8719 = vmatprep.subr.bf16.mxu0 %v8318
    %8720 = vmatpush1.bf16.msra.mxu0 %v8317
    %8721 = vmatprep.subr.bf16.mxu0 %v8322
    %8722 = vmatpush1.bf16.msra.mxu0 %v8321
    %8723 = vmatprep.subr.bf16.mxu0 %v8326
    %8724 = vmatpush1.bf16.msra.mxu0 %v8325
    %8725 = vmatprep.subr.bf16.mxu0 %v8330
    %8726 = vmatpush1.bf16.msra.mxu0 %v8329
    %8727 = vmatprep.mubr.bf16.mxu0 %v8690
    %8728 = vmatmul.mubr.bf16.gmra.mrb[0].mxu0 %v8689
    %v8729 = vpop.f32.mrb[0].mxu0
    %v8730 = vadd.f32 0.0, %v8729
    %v8731 = vpop.f32.mrb[0].mxu0
    %v8732 = vadd.f32 0.0, %v8731
    %v8733 = vpop.f32.mrb[0].mxu0
    %v8734 = vadd.f32 0.0, %v8733
    %v8735 = vpop.f32.mrb[0].mxu0
    %v8736 = vadd.f32 0.0, %v8735
    %8737 = vmatprep.mubr.bf16.mxu0 %v8693
    %8738 = vmatmul.mubr.bf16.gmra.mrb[0].mxu0 %v8692
    %v8739 = vpop.f32.mrb[0].mxu0
    %v8740 = vadd.f32 0.0, %v8739
    %v8741 = vpop.f32.mrb[0].mxu0
    %v8742 = vadd.f32 0.0, %v8741
    %v8743 = vpop.f32.mrb[0].mxu0
    %v8744 = vadd.f32 0.0, %v8743
    %v8745 = vpop.f32.mrb[0].mxu0
    %v8746 = vadd.f32 0.0, %v8745
    %8747 = vdwg.mxu0
    %8748 = vmatprep.subr.bf16.mxu0 %v8334
    %8749 = vmatpush1.bf16.msra.mxu0 %v8333
    %8750 = vmatprep.subr.bf16.mxu0 %v8338
    %8751 = vmatpush1.bf16.msra.mxu0 %v8337
    %8752 = vmatprep.subr.bf16.mxu0 %v8342
    %8753 = vmatpush1.bf16.msra.mxu0 %v8341
    %8754 = vmatprep.subr.bf16.mxu0 %v8346
    %8755 = vmatpush1.bf16.msra.mxu0 %v8345
    %8756 = vmatprep.subr.bf16.mxu0 %v8350
    %8757 = vmatpush1.bf16.msra.mxu0 %v8349
    %8758 = vmatprep.subr.bf16.mxu0 %v8354
    %8759 = vmatpush1.bf16.msra.mxu0 %v8353
    %8760 = vmatprep.subr.bf16.mxu0 %v8358
    %8761 = vmatpush1.bf16.msra.mxu0 %v8357
    %8762 = vmatprep.subr.bf16.mxu0 %v8362
    %8763 = vmatpush1.bf16.msra.mxu0 %v8361
    %8764 = vmatprep.subr.bf16.mxu0 0
    %8765 = vmatpush1.bf16.msra.mxu0 0
    %8766 = vmatprep.subr.bf16.mxu0 0
    %8767 = vmatpush1.bf16.msra.mxu0 0
    %8768 = vmatprep.subr.bf16.mxu0 0
    %8769 = vmatpush1.bf16.msra.mxu0 0
    %8770 = vmatprep.subr.bf16.mxu0 0
    %8771 = vmatpush1.bf16.msra.mxu0 0
    %8772 = vmatprep.subr.bf16.mxu0 0
    %8773 = vmatpush1.bf16.msra.mxu0 0
    %8774 = vmatprep.subr.bf16.mxu0 0
    %8775 = vmatpush1.bf16.msra.mxu0 0
    %8776 = vmatprep.subr.bf16.mxu0 0
    %8777 = vmatpush1.bf16.msra.mxu0 0
    %8778 = vmatprep.subr.bf16.mxu0 0
    %8779 = vmatpush1.bf16.msra.mxu0 0
    %8780 = vmatprep.mubr.bf16.mxu0 0
    %8781 = vmatmul.mubr.bf16.gmra.mrb[0].mxu0 %v8691
    %v8782 = vpop.f32.mrb[0].mxu0
    %v8783 = vadd.f32 %v8730, %v8782
    %v8784 = vpop.f32.mrb[0].mxu0
    %v8785 = vadd.f32 %v8732, %v8784
    %v8786 = vpop.f32.mrb[0].mxu0
    %v8787 = vadd.f32 %v8734, %v8786
    %v8788 = vpop.f32.mrb[0].mxu0
    %v8789 = vadd.f32 %v8736, %v8788
    %8790 = vmatprep.mubr.bf16.mxu0 0
    %8791 = vmatmul.mubr.bf16.gmra.mrb[0].mxu0 %v8694
    %v8792 = vpop.f32.mrb[0].mxu0
    %v8793 = vadd.f32 %v8740, %v8792
    %v8794 = vpop.f32.mrb[0].mxu0
    %v8795 = vadd.f32 %v8742, %v8794
    %v8796 = vpop.f32.mrb[0].mxu0
    %v8797 = vadd.f32 %v8744, %v8796
    %v8798 = vpop.f32.mrb[0].mxu0
    %v8799 = vadd.f32 %v8746, %v8798
    %8800 = vdwg.mxu0
    %8801 = vmatprep.subr.bf16.mxu0 %v8272
    %8802 = vmatpush1.bf16.msra.mxu0 %v8271
    %8803 = vmatprep.subr.bf16.mxu0 %v8276
    %8804 = vmatpush1.bf16.msra.mxu0 %v8275
    %8805 = vmatprep.subr.bf16.mxu0 %v8280
    %8806 = vmatpush1.bf16.msra.mxu0 %v8279
    %8807 = vmatprep.subr.bf16.mxu0 %v8284
    %8808 = vmatpush1.bf16.msra.mxu0 %v8283
    %8809 = vmatprep.subr.bf16.mxu0 %v8288
    %8810 = vmatpush1.bf16.msra.mxu0 %v8287
    %8811 = vmatprep.subr.bf16.mxu0 %v8292
    %8812 = vmatpush1.bf16.msra.mxu0 %v8291
    %8813 = vmatprep.subr.bf16.mxu0 %v8296
    %8814 = vmatpush1.bf16.msra.mxu0 %v8295
    %8815 = vmatprep.subr.bf16.mxu0 %v8300
    %8816 = vmatpush1.bf16.msra.mxu0 %v8299
    %8817 = vmatprep.subr.bf16.mxu0 %v8304
    %8818 = vmatpush1.bf16.msra.mxu0 %v8303
    %8819 = vmatprep.subr.bf16.mxu0 %v8308
    %8820 = vmatpush1.bf16.msra.mxu0 %v8307
    %8821 = vmatprep.subr.bf16.mxu0 %v8312
    %8822 = vmatpush1.bf16.msra.mxu0 %v8311
    %8823 = vmatprep.subr.bf16.mxu0 %v8316
    %8824 = vmatpush1.bf16.msra.mxu0 %v8315
    %8825 = vmatprep.subr.bf16.mxu0 %v8320
    %8826 = vmatpush1.bf16.msra.mxu0 %v8319
    %8827 = vmatprep.subr.bf16.mxu0 %v8324
    %8828 = vmatpush1.bf16.msra.mxu0 %v8323
    %8829 = vmatprep.subr.bf16.mxu0 %v8328
    %8830 = vmatpush1.bf16.msra.mxu0 %v8327
    %8831 = vmatprep.subr.bf16.mxu0 %v8332
    %8832 = vmatpush1.bf16.msra.mxu0 %v8331
    %8833 = vmatprep.mubr.bf16.mxu0 %v8690
    %8834 = vmatmul.mubr.bf16.gmra.mrb[0].mxu0 %v8689
    %v8835 = vpop.f32.mrb[0].mxu0
    %v8836 = vadd.f32 0.0, %v8835
    %v8837 = vpop.f32.mrb[0].mxu0
    %v8838 = vadd.f32 0.0, %v8837
    %v8839 = vpop.f32.mrb[0].mxu0
    %v8840 = vadd.f32 0.0, %v8839
    %v8841 = vpop.f32.mrb[0].mxu0
    %v8842 = vadd.f32 0.0, %v8841
    %8843 = vmatprep.mubr.bf16.mxu0 %v8693
    %8844 = vmatmul.mubr.bf16.gmra.mrb[0].mxu0 %v8692
    %v8845 = vpop.f32.mrb[0].mxu0
    %v8846 = vadd.f32 0.0, %v8845
    %v8847 = vpop.f32.mrb[0].mxu0
    %v8848 = vadd.f32 0.0, %v8847
    %v8849 = vpop.f32.mrb[0].mxu0
    %v8850 = vadd.f32 0.0, %v8849
    %v8851 = vpop.f32.mrb[0].mxu0
    %v8852 = vadd.f32 0.0, %v8851
    %8853 = vdwg.mxu0
    %8854 = vmatprep.subr.bf16.mxu0 %v8336
    %8855 = vmatpush1.bf16.msra.mxu0 %v8335
    %8856 = vmatprep.subr.bf16.mxu0 %v8340
    %8857 = vmatpush1.bf16.msra.mxu0 %v8339
    %8858 = vmatprep.subr.bf16.mxu0 %v8344
    %8859 = vmatpush1.bf16.msra.mxu0 %v8343
    %8860 = vmatprep.subr.bf16.mxu0 %v8348
    %8861 = vmatpush1.bf16.msra.mxu0 %v8347
    %8862 = vmatprep.subr.bf16.mxu0 %v8352
    %8863 = vmatpush1.bf16.msra.mxu0 %v8351
    %8864 = vmatprep.subr.bf16.mxu0 %v8356
    %8865 = vmatpush1.bf16.msra.mxu0 %v8355
    %8866 = vmatprep.subr.bf16.mxu0 %v8360
    %8867 = vmatpush1.bf16.msra.mxu0 %v8359
    %8868 = vmatprep.subr.bf16.mxu0 %v8364
    %8869 = vmatpush1.bf16.msra.mxu0 %v8363
    %8870 = vmatprep.subr.bf16.mxu0 0
    %8871 = vmatpush1.bf16.msra.mxu0 0
    %8872 = vmatprep.subr.bf16.mxu0 0
    %8873 = vmatpush1.bf16.msra.mxu0 0
    %8874 = vmatprep.subr.bf16.mxu0 0
    %8875 = vmatpush1.bf16.msra.mxu0 0
    %8876 = vmatprep.subr.bf16.mxu0 0
    %8877 = vmatpush1.bf16.msra.mxu0 0
    %8878 = vmatprep.subr.bf16.mxu0 0
    %8879 = vmatpush1.bf16.msra.mxu0 0
    %8880 = vmatprep.subr.bf16.mxu0 0
    %8881 = vmatpush1.bf16.msra.mxu0 0
    %8882 = vmatprep.subr.bf16.mxu0 0
    %8883 = vmatpush1.bf16.msra.mxu0 0
    %8884 = vmatprep.subr.bf16.mxu0 0
    %8885 = vmatpush1.bf16.msra.mxu0 0
    %8886 = vmatprep.mubr.bf16.mxu0 0
    %8887 = vmatmul.mubr.bf16.gmra.mrb[0].mxu0 %v8691
    %v8888 = vpop.f32.mrb[0].mxu0
    %v8889 = vadd.f32 %v8836, %v8888
    %v8890 = vpop.f32.mrb[0].mxu0
    %v8891 = vadd.f32 %v8838, %v8890
    %v8892 = vpop.f32.mrb[0].mxu0
    %v8893 = vadd.f32 %v8840, %v8892
    %v8894 = vpop.f32.mrb[0].mxu0
    %v8895 = vadd.f32 %v8842, %v8894
    %8896 = vmatprep.mubr.bf16.mxu0 0
    %8897 = vmatmul.mubr.bf16.gmra.mrb[0].mxu0 %v8694
    %v8898 = vpop.f32.mrb[0].mxu0
    %v8899 = vadd.f32 %v8846, %v8898
    %v8900 = vpop.f32.mrb[0].mxu0
    %v8901 = vadd.f32 %v8848, %v8900
    %v8902 = vpop.f32.mrb[0].mxu0
    %v8903 = vadd.f32 %v8850, %v8902
    %v8904 = vpop.f32.mrb[0].mxu0
    %v8905 = vadd.f32 %v8852, %v8904
    %8906 = vdwg.mxu0
    %v8907 = vadd.f32 %v7760, %v8783
    %v8908 = vadd.f32 %v7762, %v8785
    %v8909 = vadd.f32 %v7866, %v8889
    %v8910 = vadd.f32 %v7868, %v8891
    %v8911 = vadd.f32 %v7764, %v8787
    %v8912 = vadd.f32 %v7766, %v8789
    %v8913 = vadd.f32 %v7870, %v8893
    %v8914 = vadd.f32 %v7872, %v8895
    %v8915 = vadd.f32 %v7770, %v8793
    %v8916 = vadd.f32 %v7772, %v8795
    %v8917 = vadd.f32 %v7876, %v8899
    %v8918 = vadd.f32 %v7878, %v8901
    %v8919 = vadd.f32 %v7774, %v8797
    %v8920 = vadd.f32 %v7776, %v8799
    %v8921 = vadd.f32 %v7880, %v8903
    %v8922 = vadd.f32 %v7882, %v8905
    %s8923 = scalar_lea.vmem [#allocation6], 2304
    %v8924 = vld [vmem:[%s8923] sm:$0xff]
    %v8925 = vld [vmem:[%s8923 + $0x8] sm:$0xff]
    %v8926 = vld [vmem:[%s8923 + $0x10] sm:$0xff]
    %v8927 = vld [vmem:[%s8923 + $0x18] sm:$0xff]
    %v8928 = vld [vmem:[%s8923 + $0x20] sm:$0xff]
    %v8929 = vld [vmem:[%s8923 + $0x28] sm:$0xff]
    %v8930 = vld [vmem:[%s8923 + $0x30] sm:$0xff]
    %v8931 = vld [vmem:[%s8923 + $0x38] sm:$0xff]
    %v8932 = vld [vmem:[%s8923 + $0x40] sm:$0xff]
    %v8933 = vld [vmem:[%s8923 + $0x48] sm:$0xff]
    %v8934 = vld [vmem:[%s8923 + $0x50] sm:$0xff]
    %v8935 = vld [vmem:[%s8923 + $0x58] sm:$0xff]
    %v8936 = vld [vmem:[%s8923 + $0x60] sm:$0xff]
    %v8937 = vld [vmem:[%s8923 + $0x68] sm:$0xff]
    %v8938 = vld [vmem:[%s8923 + $0x70] sm:$0xff]
    %v8939 = vld [vmem:[%s8923 + $0x78] sm:$0xff]
    %v8940 = vld [vmem:[%s8923 + $0x80] sm:$0xff]
    %v8941 = vld [vmem:[%s8923 + $0x88] sm:$0xff]
    %v8942 = vld [vmem:[%s8923 + $0x90] sm:$0xff]
    %v8943 = vld [vmem:[%s8923 + $0x98] sm:$0xff]
    %v8944 = vld [vmem:[%s8923 + $0xa0] sm:$0xff]
    %v8945 = vld [vmem:[%s8923 + $0xa8] sm:$0xff]
    %v8946 = vld [vmem:[%s8923 + $0xb0] sm:$0xff]
    %v8947 = vld [vmem:[%s8923 + $0xb8] sm:$0xff]
    %v8948 = vld [vmem:[%s8923 + $0xc0] sm:$0xff]
    %v8949 = vld [vmem:[%s8923 + $0xc8] sm:$0xff]
    %v8950 = vld [vmem:[%s8923 + $0xd0] sm:$0xff]
    %v8951 = vld [vmem:[%s8923 + $0xd8] sm:$0xff]
    %v8952 = vld [vmem:[%s8923 + $0xe0] sm:$0xff]
    %v8953 = vld [vmem:[%s8923 + $0xe8] sm:$0xff]
    %v8954 = vld [vmem:[%s8923 + $0xf0] sm:$0xff]
    %v8955 = vld [vmem:[%s8923 + $0xf8] sm:$0xff]
    %v8956 = vld [vmem:[%s8923 + $0x100] sm:$0xff]
    %v8957 = vld [vmem:[%s8923 + $0x108] sm:$0xff]
    %v8958 = vld [vmem:[%s8923 + $0x110] sm:$0xff]
    %v8959 = vld [vmem:[%s8923 + $0x118] sm:$0xff]
    %v8960 = vld [vmem:[%s8923 + $0x120] sm:$0xff]
    %v8961 = vld [vmem:[%s8923 + $0x128] sm:$0xff]
    %v8962 = vld [vmem:[%s8923 + $0x130] sm:$0xff]
    %v8963 = vld [vmem:[%s8923 + $0x138] sm:$0xff]
    %v8964 = vld [vmem:[%s8923 + $0x140] sm:$0xff]
    %v8965 = vld [vmem:[%s8923 + $0x148] sm:$0xff]
    %v8966 = vld [vmem:[%s8923 + $0x150] sm:$0xff]
    %v8967 = vld [vmem:[%s8923 + $0x158] sm:$0xff]
    %v8968 = vld [vmem:[%s8923 + $0x160] sm:$0xff]
    %v8969 = vld [vmem:[%s8923 + $0x168] sm:$0xff]
    %v8970 = vld [vmem:[%s8923 + $0x170] sm:$0xff]
    %v8971 = vld [vmem:[%s8923 + $0x178] sm:$0xff]
    %v8972 = vld [vmem:[%s8923 + $0x180] sm:$0xff]
    %v8973 = vld [vmem:[%s8923 + $0x188] sm:$0xff]
    %v8974 = vld [vmem:[%s8923 + $0x190] sm:$0xff]
    %v8975 = vld [vmem:[%s8923 + $0x198] sm:$0xff]
    %v8976 = vld [vmem:[%s8923 + $0x1a0] sm:$0xff]
    %v8977 = vld [vmem:[%s8923 + $0x1a8] sm:$0xff]
    %v8978 = vld [vmem:[%s8923 + $0x1b0] sm:$0xff]
    %v8979 = vld [vmem:[%s8923 + $0x1b8] sm:$0xff]
    %v8980 = vld [vmem:[%s8923 + $0x1c0] sm:$0xff]
    %v8981 = vld [vmem:[%s8923 + $0x1c8] sm:$0xff]
    %v8982 = vld [vmem:[%s8923 + $0x1d0] sm:$0xff]
    %v8983 = vld [vmem:[%s8923 + $0x1d8] sm:$0xff]
    %v8984 = vld [vmem:[%s8923 + $0x1e0] sm:$0xff]
    %v8985 = vld [vmem:[%s8923 + $0x1e8] sm:$0xff]
    %v8986 = vld [vmem:[%s8923 + $0x1f0] sm:$0xff]
    %v8987 = vld [vmem:[%s8923 + $0x1f8] sm:$0xff]
    %v8988 = vld [vmem:[%s8923 + $0x200] sm:$0xff]
    %v8989 = vld [vmem:[%s8923 + $0x208] sm:$0xff]
    %v8990 = vld [vmem:[%s8923 + $0x210] sm:$0xff]
    %v8991 = vld [vmem:[%s8923 + $0x218] sm:$0xff]
    %v8992 = vld [vmem:[%s8923 + $0x220] sm:$0xff]
    %v8993 = vld [vmem:[%s8923 + $0x228] sm:$0xff]
    %v8994 = vld [vmem:[%s8923 + $0x230] sm:$0xff]
    %v8995 = vld [vmem:[%s8923 + $0x238] sm:$0xff]
    %v8996 = vld [vmem:[%s8923 + $0x240] sm:$0xff]
    %v8997 = vld [vmem:[%s8923 + $0x248] sm:$0xff]
    %v8998 = vld [vmem:[%s8923 + $0x250] sm:$0xff]
    %v8999 = vld [vmem:[%s8923 + $0x258] sm:$0xff]
    %v9000 = vld [vmem:[%s8923 + $0x260] sm:$0xff]
    %v9001 = vld [vmem:[%s8923 + $0x268] sm:$0xff]
    %v9002 = vld [vmem:[%s8923 + $0x270] sm:$0xff]
    %v9003 = vld [vmem:[%s8923 + $0x278] sm:$0xff]
    %v9004 = vld [vmem:[%s8923 + $0x280] sm:$0xff]
    %v9005 = vld [vmem:[%s8923 + $0x288] sm:$0xff]
    %v9006 = vld [vmem:[%s8923 + $0x290] sm:$0xff]
    %v9007 = vld [vmem:[%s8923 + $0x298] sm:$0xff]
    %v9008 = vld [vmem:[%s8923 + $0x2a0] sm:$0xff]
    %v9009 = vld [vmem:[%s8923 + $0x2a8] sm:$0xff]
    %v9010 = vld [vmem:[%s8923 + $0x2b0] sm:$0xff]
    %v9011 = vld [vmem:[%s8923 + $0x2b8] sm:$0xff]
    %v9012 = vld [vmem:[%s8923 + $0x2c0] sm:$0xff]
    %v9013 = vld [vmem:[%s8923 + $0x2c8] sm:$0xff]
    %v9014 = vld [vmem:[%s8923 + $0x2d0] sm:$0xff]
    %v9015 = vld [vmem:[%s8923 + $0x2d8] sm:$0xff]
    %v9016 = vld [vmem:[%s8923 + $0x2e0] sm:$0xff]
    %v9017 = vld [vmem:[%s8923 + $0x2e8] sm:$0xff]
    %v9018 = vld [vmem:[%s8923 + $0x2f0] sm:$0xff]
    %v9019 = vld [vmem:[%s8923 + $0x2f8] sm:$0xff]
    %v9116 = vunpack.c.l.b16 %v8924
    %v9117 = vunpack.c.h.b16 %v8924
    %v9118 = vunpack.c.l.b16 %v8925
    %v9119 = vunpack.c.h.b16 %v8925
    %v9120 = vunpack.c.l.b16 %v8926
    %v9121 = vunpack.c.h.b16 %v8926
    %v9122 = vunpack.c.l.b16 %v8927
    %v9123 = vunpack.c.h.b16 %v8927
    %v9124 = vunpack.c.l.b16 %v8928
    %v9125 = vunpack.c.h.b16 %v8928
    %v9126 = vunpack.c.l.b16 %v8929
    %v9127 = vunpack.c.h.b16 %v8929
    %v9128 = vunpack.c.l.b16 %v8930
    %v9129 = vunpack.c.h.b16 %v8930
    %v9130 = vunpack.c.l.b16 %v8931
    %v9131 = vunpack.c.h.b16 %v8931
    %v9132 = vunpack.c.l.b16 %v8932
    %v9133 = vunpack.c.h.b16 %v8932
    %v9134 = vunpack.c.l.b16 %v8933
    %v9135 = vunpack.c.h.b16 %v8933
    %v9136 = vunpack.c.l.b16 %v8934
    %v9137 = vunpack.c.h.b16 %v8934
    %v9138 = vunpack.c.l.b16 %v8935
    %v9139 = vunpack.c.h.b16 %v8935
    %v9140 = vunpack.c.l.b16 %v8936
    %v9141 = vunpack.c.h.b16 %v8936
    %v9142 = vunpack.c.l.b16 %v8937
    %v9143 = vunpack.c.h.b16 %v8937
    %v9144 = vunpack.c.l.b16 %v8938
    %v9145 = vunpack.c.h.b16 %v8938
    %v9146 = vunpack.c.l.b16 %v8939
    %v9147 = vunpack.c.h.b16 %v8939
    %v9148 = vunpack.c.l.b16 %v8940
    %v9149 = vunpack.c.h.b16 %v8940
    %v9150 = vunpack.c.l.b16 %v8941
    %v9151 = vunpack.c.h.b16 %v8941
    %v9152 = vunpack.c.l.b16 %v8942
    %v9153 = vunpack.c.h.b16 %v8942
    %v9154 = vunpack.c.l.b16 %v8943
    %v9155 = vunpack.c.h.b16 %v8943
    %v9156 = vunpack.c.l.b16 %v8944
    %v9157 = vunpack.c.h.b16 %v8944
    %v9158 = vunpack.c.l.b16 %v8945
    %v9159 = vunpack.c.h.b16 %v8945
    %v9160 = vunpack.c.l.b16 %v8946
    %v9161 = vunpack.c.h.b16 %v8946
    %v9162 = vunpack.c.l.b16 %v8947
    %v9163 = vunpack.c.h.b16 %v8947
    %v9164 = vunpack.c.l.b16 %v8948
    %v9165 = vunpack.c.h.b16 %v8948
    %v9166 = vunpack.c.l.b16 %v8949
    %v9167 = vunpack.c.h.b16 %v8949
    %v9168 = vunpack.c.l.b16 %v8950
    %v9169 = vunpack.c.h.b16 %v8950
    %v9170 = vunpack.c.l.b16 %v8951
    %v9171 = vunpack.c.h.b16 %v8951
    %v9172 = vunpack.c.l.b16 %v8952
    %v9173 = vunpack.c.h.b16 %v8952
    %v9174 = vunpack.c.l.b16 %v8953
    %v9175 = vunpack.c.h.b16 %v8953
    %v9176 = vunpack.c.l.b16 %v8954
    %v9177 = vunpack.c.h.b16 %v8954
    %v9178 = vunpack.c.l.b16 %v8955
    %v9179 = vunpack.c.h.b16 %v8955
    %v9180 = vunpack.c.l.b16 %v8956
    %v9181 = vunpack.c.h.b16 %v8956
    %v9182 = vunpack.c.l.b16 %v8957
    %v9183 = vunpack.c.h.b16 %v8957
    %v9184 = vunpack.c.l.b16 %v8958
    %v9185 = vunpack.c.h.b16 %v8958
    %v9186 = vunpack.c.l.b16 %v8959
    %v9187 = vunpack.c.h.b16 %v8959
    %v9188 = vunpack.c.l.b16 %v8960
    %v9189 = vunpack.c.h.b16 %v8960
    %v9190 = vunpack.c.l.b16 %v8961
    %v9191 = vunpack.c.h.b16 %v8961
    %v9192 = vunpack.c.l.b16 %v8962
    %v9193 = vunpack.c.h.b16 %v8962
    %v9194 = vunpack.c.l.b16 %v8963
    %v9195 = vunpack.c.h.b16 %v8963
    %v9196 = vunpack.c.l.b16 %v8964
    %v9197 = vunpack.c.h.b16 %v8964
    %v9198 = vunpack.c.l.b16 %v8965
    %v9199 = vunpack.c.h.b16 %v8965
    %v9200 = vunpack.c.l.b16 %v8966
    %v9201 = vunpack.c.h.b16 %v8966
    %v9202 = vunpack.c.l.b16 %v8967
    %v9203 = vunpack.c.h.b16 %v8967
    %v9204 = vunpack.c.l.b16 %v8968
    %v9205 = vunpack.c.h.b16 %v8968
    %v9206 = vunpack.c.l.b16 %v8969
    %v9207 = vunpack.c.h.b16 %v8969
    %v9208 = vunpack.c.l.b16 %v8970
    %v9209 = vunpack.c.h.b16 %v8970
    %v9210 = vunpack.c.l.b16 %v8971
    %v9211 = vunpack.c.h.b16 %v8971
    %v9212 = vunpack.c.l.b16 %v8972
    %v9213 = vunpack.c.h.b16 %v8972
    %v9214 = vunpack.c.l.b16 %v8973
    %v9215 = vunpack.c.h.b16 %v8973
    %v9216 = vunpack.c.l.b16 %v8974
    %v9217 = vunpack.c.h.b16 %v8974
    %v9218 = vunpack.c.l.b16 %v8975
    %v9219 = vunpack.c.h.b16 %v8975
    %v9220 = vunpack.c.l.b16 %v8976
    %v9221 = vunpack.c.h.b16 %v8976
    %v9222 = vunpack.c.l.b16 %v8977
    %v9223 = vunpack.c.h.b16 %v8977
    %v9224 = vunpack.c.l.b16 %v8978
    %v9225 = vunpack.c.h.b16 %v8978
    %v9226 = vunpack.c.l.b16 %v8979
    %v9227 = vunpack.c.h.b16 %v8979
    %v9228 = vunpack.c.l.b16 %v8980
    %v9229 = vunpack.c.h.b16 %v8980
    %v9230 = vunpack.c.l.b16 %v8981
    %v9231 = vunpack.c.h.b16 %v8981
    %v9232 = vunpack.c.l.b16 %v8982
    %v9233 = vunpack.c.h.b16 %v8982
    %v9234 = vunpack.c.l.b16 %v8983
    %v9235 = vunpack.c.h.b16 %v8983
    %v9236 = vunpack.c.l.b16 %v8984
    %v9237 = vunpack.c.h.b16 %v8984
    %v9238 = vunpack.c.l.b16 %v8985
    %v9239 = vunpack.c.h.b16 %v8985
    %v9240 = vunpack.c.l.b16 %v8986
    %v9241 = vunpack.c.h.b16 %v8986
    %v9242 = vunpack.c.l.b16 %v8987
    %v9243 = vunpack.c.h.b16 %v8987
    %v9244 = vunpack.c.l.b16 %v8988
    %v9245 = vunpack.c.h.b16 %v8988
    %v9246 = vunpack.c.l.b16 %v8989
    %v9247 = vunpack.c.h.b16 %v8989
    %v9248 = vunpack.c.l.b16 %v8990
    %v9249 = vunpack.c.h.b16 %v8990
    %v9250 = vunpack.c.l.b16 %v8991
    %v9251 = vunpack.c.h.b16 %v8991
    %v9252 = vunpack.c.l.b16 %v8992
    %v9253 = vunpack.c.h.b16 %v8992
    %v9254 = vunpack.c.l.b16 %v8993
    %v9255 = vunpack.c.h.b16 %v8993
    %v9256 = vunpack.c.l.b16 %v8994
    %v9257 = vunpack.c.h.b16 %v8994
    %v9258 = vunpack.c.l.b16 %v8995
    %v9259 = vunpack.c.h.b16 %v8995
    %v9260 = vunpack.c.l.b16 %v8996
    %v9261 = vunpack.c.h.b16 %v8996
    %v9262 = vunpack.c.l.b16 %v8997
    %v9263 = vunpack.c.h.b16 %v8997
    %v9264 = vunpack.c.l.b16 %v8998
    %v9265 = vunpack.c.h.b16 %v8998
    %v9266 = vunpack.c.l.b16 %v8999
    %v9267 = vunpack.c.h.b16 %v8999
    %v9268 = vunpack.c.l.b16 %v9000
    %v9269 = vunpack.c.h.b16 %v9000
    %v9270 = vunpack.c.l.b16 %v9001
    %v9271 = vunpack.c.h.b16 %v9001
    %v9272 = vunpack.c.l.b16 %v9002
    %v9273 = vunpack.c.h.b16 %v9002
    %v9274 = vunpack.c.l.b16 %v9003
    %v9275 = vunpack.c.h.b16 %v9003
    %v9276 = vunpack.c.l.b16 %v9004
    %v9277 = vunpack.c.h.b16 %v9004
    %v9278 = vunpack.c.l.b16 %v9005
    %v9279 = vunpack.c.h.b16 %v9005
    %v9280 = vunpack.c.l.b16 %v9006
    %v9281 = vunpack.c.h.b16 %v9006
    %v9282 = vunpack.c.l.b16 %v9007
    %v9283 = vunpack.c.h.b16 %v9007
    %v9284 = vunpack.c.l.b16 %v9008
    %v9285 = vunpack.c.h.b16 %v9008
    %v9286 = vunpack.c.l.b16 %v9009
    %v9287 = vunpack.c.h.b16 %v9009
    %v9288 = vunpack.c.l.b16 %v9010
    %v9289 = vunpack.c.h.b16 %v9010
    %v9290 = vunpack.c.l.b16 %v9011
    %v9291 = vunpack.c.h.b16 %v9011
    %v9292 = vunpack.c.l.b16 %v9012
    %v9293 = vunpack.c.h.b16 %v9012
    %v9294 = vunpack.c.l.b16 %v9013
    %v9295 = vunpack.c.h.b16 %v9013
    %v9296 = vunpack.c.l.b16 %v9014
    %v9297 = vunpack.c.h.b16 %v9014
    %v9298 = vunpack.c.l.b16 %v9015
    %v9299 = vunpack.c.h.b16 %v9015
    %v9300 = vunpack.c.l.b16 %v9016
    %v9301 = vunpack.c.h.b16 %v9016
    %v9302 = vunpack.c.l.b16 %v9017
    %v9303 = vunpack.c.h.b16 %v9017
    %v9304 = vunpack.c.l.b16 %v9018
    %v9305 = vunpack.c.h.b16 %v9018
    %v9306 = vunpack.c.l.b16 %v9019
    %v9307 = vunpack.c.h.b16 %v9019
    %v9308 = vpack.c.b16 %v9120, %v9116
    %v9309 = vpack.c.b16 %v9121, %v9117
    %v9310 = vpack.c.b16 %v9122, %v9118
    %v9311 = vpack.c.b16 %v9123, %v9119
    %v9312 = vpack.c.b16 %v9128, %v9124
    %v9313 = vpack.c.b16 %v9129, %v9125
    %v9314 = vpack.c.b16 %v9130, %v9126
    %v9315 = vpack.c.b16 %v9131, %v9127
    %v9316 = vpack.c.b16 %v9136, %v9132
    %v9317 = vpack.c.b16 %v9137, %v9133
    %v9318 = vpack.c.b16 %v9138, %v9134
    %v9319 = vpack.c.b16 %v9139, %v9135
    %v9320 = vpack.c.b16 %v9144, %v9140
    %v9321 = vpack.c.b16 %v9145, %v9141
    %v9322 = vpack.c.b16 %v9146, %v9142
    %v9323 = vpack.c.b16 %v9147, %v9143
    %v9324 = vpack.c.b16 %v9152, %v9148
    %v9325 = vpack.c.b16 %v9153, %v9149
    %v9326 = vpack.c.b16 %v9154, %v9150
    %v9327 = vpack.c.b16 %v9155, %v9151
    %v9328 = vpack.c.b16 %v9160, %v9156
    %v9329 = vpack.c.b16 %v9161, %v9157
    %v9330 = vpack.c.b16 %v9162, %v9158
    %v9331 = vpack.c.b16 %v9163, %v9159
    %v9332 = vpack.c.b16 %v9168, %v9164
    %v9333 = vpack.c.b16 %v9169, %v9165
    %v9334 = vpack.c.b16 %v9170, %v9166
    %v9335 = vpack.c.b16 %v9171, %v9167
    %v9336 = vpack.c.b16 %v9176, %v9172
    %v9337 = vpack.c.b16 %v9177, %v9173
    %v9338 = vpack.c.b16 %v9178, %v9174
    %v9339 = vpack.c.b16 %v9179, %v9175
    %v9340 = vpack.c.b16 %v9184, %v9180
    %v9341 = vpack.c.b16 %v9185, %v9181
    %v9342 = vpack.c.b16 %v9186, %v9182
    %v9343 = vpack.c.b16 %v9187, %v9183
    %v9344 = vpack.c.b16 %v9192, %v9188
    %v9345 = vpack.c.b16 %v9193, %v9189
    %v9346 = vpack.c.b16 %v9194, %v9190
    %v9347 = vpack.c.b16 %v9195, %v9191
    %v9348 = vpack.c.b16 %v9200, %v9196
    %v9349 = vpack.c.b16 %v9201, %v9197
    %v9350 = vpack.c.b16 %v9202, %v9198
    %v9351 = vpack.c.b16 %v9203, %v9199
    %v9352 = vpack.c.b16 %v9208, %v9204
    %v9353 = vpack.c.b16 %v9209, %v9205
    %v9354 = vpack.c.b16 %v9210, %v9206
    %v9355 = vpack.c.b16 %v9211, %v9207
    %v9356 = vpack.c.b16 %v9216, %v9212
    %v9357 = vpack.c.b16 %v9217, %v9213
    %v9358 = vpack.c.b16 %v9218, %v9214
    %v9359 = vpack.c.b16 %v9219, %v9215
    %v9360 = vpack.c.b16 %v9224, %v9220
    %v9361 = vpack.c.b16 %v9225, %v9221
    %v9362 = vpack.c.b16 %v9226, %v9222
    %v9363 = vpack.c.b16 %v9227, %v9223
    %v9364 = vpack.c.b16 %v9232, %v9228
    %v9365 = vpack.c.b16 %v9233, %v9229
    %v9366 = vpack.c.b16 %v9234, %v9230
    %v9367 = vpack.c.b16 %v9235, %v9231
    %v9368 = vpack.c.b16 %v9240, %v9236
    %v9369 = vpack.c.b16 %v9241, %v9237
    %v9370 = vpack.c.b16 %v9242, %v9238
    %v9371 = vpack.c.b16 %v9243, %v9239
    %v9372 = vpack.c.b16 %v9248, %v9244
    %v9373 = vpack.c.b16 %v9249, %v9245
    %v9374 = vpack.c.b16 %v9250, %v9246
    %v9375 = vpack.c.b16 %v9251, %v9247
    %v9376 = vpack.c.b16 %v9256, %v9252
    %v9377 = vpack.c.b16 %v9257, %v9253
    %v9378 = vpack.c.b16 %v9258, %v9254
    %v9379 = vpack.c.b16 %v9259, %v9255
    %v9380 = vpack.c.b16 %v9264, %v9260
    %v9381 = vpack.c.b16 %v9265, %v9261
    %v9382 = vpack.c.b16 %v9266, %v9262
    %v9383 = vpack.c.b16 %v9267, %v9263
    %v9384 = vpack.c.b16 %v9272, %v9268
    %v9385 = vpack.c.b16 %v9273, %v9269
    %v9386 = vpack.c.b16 %v9274, %v9270
    %v9387 = vpack.c.b16 %v9275, %v9271
    %v9388 = vpack.c.b16 %v9280, %v9276
    %v9389 = vpack.c.b16 %v9281, %v9277
    %v9390 = vpack.c.b16 %v9282, %v9278
    %v9391 = vpack.c.b16 %v9283, %v9279
    %v9392 = vpack.c.b16 %v9288, %v9284
    %v9393 = vpack.c.b16 %v9289, %v9285
    %v9394 = vpack.c.b16 %v9290, %v9286
    %v9395 = vpack.c.b16 %v9291, %v9287
    %v9396 = vpack.c.b16 %v9296, %v9292
    %v9397 = vpack.c.b16 %v9297, %v9293
    %v9398 = vpack.c.b16 %v9298, %v9294
    %v9399 = vpack.c.b16 %v9299, %v9295
    %v9400 = vpack.c.b16 %v9304, %v9300
    %v9401 = vpack.c.b16 %v9305, %v9301
    %v9402 = vpack.c.b16 %v9306, %v9302
    %v9403 = vpack.c.b16 %v9307, %v9303
    %9500 = vmatprep.subr.bf16.mxu0 %v9309
    %9501 = vmatpush1.bf16.msra.mxu0 %v9308
    %9502 = vmatprep.subr.bf16.mxu0 %v9313
    %9503 = vmatpush1.bf16.msra.mxu0 %v9312
    %9504 = vmatprep.subr.bf16.mxu0 %v9317
    %9505 = vmatpush1.bf16.msra.mxu0 %v9316
    %9506 = vmatprep.subr.bf16.mxu0 %v9321
    %9507 = vmatpush1.bf16.msra.mxu0 %v9320
    %9508 = vmatprep.subr.bf16.mxu0 %v9325
    %9509 = vmatpush1.bf16.msra.mxu0 %v9324
    %9510 = vmatprep.subr.bf16.mxu0 %v9329
    %9511 = vmatpush1.bf16.msra.mxu0 %v9328
    %9512 = vmatprep.subr.bf16.mxu0 %v9333
    %9513 = vmatpush1.bf16.msra.mxu0 %v9332
    %9514 = vmatprep.subr.bf16.mxu0 %v9337
    %9515 = vmatpush1.bf16.msra.mxu0 %v9336
    %9516 = vmatprep.subr.bf16.mxu0 %v9341
    %9517 = vmatpush1.bf16.msra.mxu0 %v9340
    %9518 = vmatprep.subr.bf16.mxu0 %v9345
    %9519 = vmatpush1.bf16.msra.mxu0 %v9344
    %9520 = vmatprep.subr.bf16.mxu0 %v9349
    %9521 = vmatpush1.bf16.msra.mxu0 %v9348
    %9522 = vmatprep.subr.bf16.mxu0 %v9353
    %9523 = vmatpush1.bf16.msra.mxu0 %v9352
    %9524 = vmatprep.subr.bf16.mxu0 %v9357
    %9525 = vmatpush1.bf16.msra.mxu0 %v9356
    %9526 = vmatprep.subr.bf16.mxu0 %v9361
    %9527 = vmatpush1.bf16.msra.mxu0 %v9360
    %9528 = vmatprep.subr.bf16.mxu0 %v9365
    %9529 = vmatpush1.bf16.msra.mxu0 %v9364
    %9530 = vmatprep.subr.bf16.mxu0 %v9369
    %9531 = vmatpush1.bf16.msra.mxu0 %v9368
    %9532 = vmatprep.mubr.bf16.mxu0 %v8690
    %9533 = vmatmul.mubr.bf16.gmra.mrb[0].mxu0 %v8689
    %v9534 = vpop.f32.mrb[0].mxu0
    %v9535 = vadd.f32 0.0, %v9534
    %v9536 = vpop.f32.mrb[0].mxu0
    %v9537 = vadd.f32 0.0, %v9536
    %v9538 = vpop.f32.mrb[0].mxu0
    %v9539 = vadd.f32 0.0, %v9538
    %v9540 = vpop.f32.mrb[0].mxu0
    %v9541 = vadd.f32 0.0, %v9540
    %9542 = vmatprep.mubr.bf16.mxu0 %v8693
    %9543 = vmatmul.mubr.bf16.gmra.mrb[0].mxu0 %v8692
    %v9544 = vpop.f32.mrb[0].mxu0
    %v9545 = vadd.f32 0.0, %v9544
    %v9546 = vpop.f32.mrb[0].mxu0
    %v9547 = vadd.f32 0.0, %v9546
    %v9548 = vpop.f32.mrb[0].mxu0
    %v9549 = vadd.f32 0.0, %v9548
    %v9550 = vpop.f32.mrb[0].mxu0
    %v9551 = vadd.f32 0.0, %v9550
    %9552 = vdwg.mxu0
    %9553 = vmatprep.subr.bf16.mxu0 %v9373
    %9554 = vmatpush1.bf16.msra.mxu0 %v9372
    %9555 = vmatprep.subr.bf16.mxu0 %v9377
    %9556 = vmatpush1.bf16.msra.mxu0 %v9376
    %9557 = vmatprep.subr.bf16.mxu0 %v9381
    %9558 = vmatpush1.bf16.msra.mxu0 %v9380
    %9559 = vmatprep.subr.bf16.mxu0 %v9385
    %9560 = vmatpush1.bf16.msra.mxu0 %v9384
    %9561 = vmatprep.subr.bf16.mxu0 %v9389
    %9562 = vmatpush1.bf16.msra.mxu0 %v9388
    %9563 = vmatprep.subr.bf16.mxu0 %v9393
    %9564 = vmatpush1.bf16.msra.mxu0 %v9392
    %9565 = vmatprep.subr.bf16.mxu0 %v9397
    %9566 = vmatpush1.bf16.msra.mxu0 %v9396
    %9567 = vmatprep.subr.bf16.mxu0 %v9401
    %9568 = vmatpush1.bf16.msra.mxu0 %v9400
    %9569 = vmatprep.subr.bf16.mxu0 0
    %9570 = vmatpush1.bf16.msra.mxu0 0
    %9571 = vmatprep.subr.bf16.mxu0 0
    %9572 = vmatpush1.bf16.msra.mxu0 0
    %9573 = vmatprep.subr.bf16.mxu0 0
    %9574 = vmatpush1.bf16.msra.mxu0 0
    %9575 = vmatprep.subr.bf16.mxu0 0
    %9576 = vmatpush1.bf16.msra.mxu0 0
    %9577 = vmatprep.subr.bf16.mxu0 0
    %9578 = vmatpush1.bf16.msra.mxu0 0
    %9579 = vmatprep.subr.bf16.mxu0 0
    %9580 = vmatpush1.bf16.msra.mxu0 0
    %9581 = vmatprep.subr.bf16.mxu0 0
    %9582 = vmatpush1.bf16.msra.mxu0 0
    %9583 = vmatprep.subr.bf16.mxu0 0
    %9584 = vmatpush1.bf16.msra.mxu0 0
    %9585 = vmatprep.mubr.bf16.mxu0 0
    %9586 = vmatmul.mubr.bf16.gmra.mrb[0].mxu0 %v8691
    %v9587 = vpop.f32.mrb[0].mxu0
    %v9588 = vadd.f32 %v9535, %v9587
    %v9589 = vpop.f32.mrb[0].mxu0
    %v9590 = vadd.f32 %v9537, %v9589
    %v9591 = vpop.f32.mrb[0].mxu0
    %v9592 = vadd.f32 %v9539, %v9591
    %v9593 = vpop.f32.mrb[0].mxu0
    %v9594 = vadd.f32 %v9541, %v9593
    %9595 = vmatprep.mubr.bf16.mxu0 0
    %9596 = vmatmul.mubr.bf16.gmra.mrb[0].mxu0 %v8694
    %v9597 = vpop.f32.mrb[0].mxu0
    %v9598 = vadd.f32 %v9545, %v9597
    %v9599 = vpop.f32.mrb[0].mxu0
    %v9600 = vadd.f32 %v9547, %v9599
    %v9601 = vpop.f32.mrb[0].mxu0
    %v9602 = vadd.f32 %v9549, %v9601
    %v9603 = vpop.f32.mrb[0].mxu0
    %v9604 = vadd.f32 %v9551, %v9603
    %9605 = vdwg.mxu0
    %9606 = vmatprep.subr.bf16.mxu0 %v9311
    %9607 = vmatpush1.bf16.msra.mxu0 %v9310
    %9608 = vmatprep.subr.bf16.mxu0 %v9315
    %9609 = vmatpush1.bf16.msra.mxu0 %v9314
    %9610 = vmatprep.subr.bf16.mxu0 %v9319
    %9611 = vmatpush1.bf16.msra.mxu0 %v9318
    %9612 = vmatprep.subr.bf16.mxu0 %v9323
    %9613 = vmatpush1.bf16.msra.mxu0 %v9322
    %9614 = vmatprep.subr.bf16.mxu0 %v9327
    %9615 = vmatpush1.bf16.msra.mxu0 %v9326
    %9616 = vmatprep.subr.bf16.mxu0 %v9331
    %9617 = vmatpush1.bf16.msra.mxu0 %v9330
    %9618 = vmatprep.subr.bf16.mxu0 %v9335
    %9619 = vmatpush1.bf16.msra.mxu0 %v9334
    %9620 = vmatprep.subr.bf16.mxu0 %v9339
    %9621 = vmatpush1.bf16.msra.mxu0 %v9338
    %9622 = vmatprep.subr.bf16.mxu0 %v9343
    %9623 = vmatpush1.bf16.msra.mxu0 %v9342
    %9624 = vmatprep.subr.bf16.mxu0 %v9347
    %9625 = vmatpush1.bf16.msra.mxu0 %v9346
    %9626 = vmatprep.subr.bf16.mxu0 %v9351
    %9627 = vmatpush1.bf16.msra.mxu0 %v9350
    %9628 = vmatprep.subr.bf16.mxu0 %v9355
    %9629 = vmatpush1.bf16.msra.mxu0 %v9354
    %9630 = vmatprep.subr.bf16.mxu0 %v9359
    %9631 = vmatpush1.bf16.msra.mxu0 %v9358
    %9632 = vmatprep.subr.bf16.mxu0 %v9363
    %9633 = vmatpush1.bf16.msra.mxu0 %v9362
    %9634 = vmatprep.subr.bf16.mxu0 %v9367
    %9635 = vmatpush1.bf16.msra.mxu0 %v9366
    %9636 = vmatprep.subr.bf16.mxu0 %v9371
    %9637 = vmatpush1.bf16.msra.mxu0 %v9370
    %9638 = vmatprep.mubr.bf16.mxu0 %v8690
    %9639 = vmatmul.mubr.bf16.gmra.mrb[0].mxu0 %v8689
    %v9640 = vpop.f32.mrb[0].mxu0
    %v9641 = vadd.f32 0.0, %v9640
    %v9642 = vpop.f32.mrb[0].mxu0
    %v9643 = vadd.f32 0.0, %v9642
    %v9644 = vpop.f32.mrb[0].mxu0
    %v9645 = vadd.f32 0.0, %v9644
    %v9646 = vpop.f32.mrb[0].mxu0
    %v9647 = vadd.f32 0.0, %v9646
    %9648 = vmatprep.mubr.bf16.mxu0 %v8693
    %9649 = vmatmul.mubr.bf16.gmra.mrb[0].mxu0 %v8692
    %v9650 = vpop.f32.mrb[0].mxu0
    %v9651 = vadd.f32 0.0, %v9650
    %v9652 = vpop.f32.mrb[0].mxu0
    %v9653 = vadd.f32 0.0, %v9652
    %v9654 = vpop.f32.mrb[0].mxu0
    %v9655 = vadd.f32 0.0, %v9654
    %v9656 = vpop.f32.mrb[0].mxu0
    %v9657 = vadd.f32 0.0, %v9656
    %9658 = vdwg.mxu0
    %9659 = vmatprep.subr.bf16.mxu0 %v9375
    %9660 = vmatpush1.bf16.msra.mxu0 %v9374
    %9661 = vmatprep.subr.bf16.mxu0 %v9379
    %9662 = vmatpush1.bf16.msra.mxu0 %v9378
    %9663 = vmatprep.subr.bf16.mxu0 %v9383
    %9664 = vmatpush1.bf16.msra.mxu0 %v9382
    %9665 = vmatprep.subr.bf16.mxu0 %v9387
    %9666 = vmatpush1.bf16.msra.mxu0 %v9386
    %9667 = vmatprep.subr.bf16.mxu0 %v9391
    %9668 = vmatpush1.bf16.msra.mxu0 %v9390
    %9669 = vmatprep.subr.bf16.mxu0 %v9395
    %9670 = vmatpush1.bf16.msra.mxu0 %v9394
    %9671 = vmatprep.subr.bf16.mxu0 %v9399
    %9672 = vmatpush1.bf16.msra.mxu0 %v9398
    %9673 = vmatprep.subr.bf16.mxu0 %v9403
    %9674 = vmatpush1.bf16.msra.mxu0 %v9402
    %9675 = vmatprep.subr.bf16.mxu0 0
    %9676 = vmatpush1.bf16.msra.mxu0 0
    %9677 = vmatprep.subr.bf16.mxu0 0
    %9678 = vmatpush1.bf16.msra.mxu0 0
    %9679 = vmatprep.subr.bf16.mxu0 0
    %9680 = vmatpush1.bf16.msra.mxu0 0
    %9681 = vmatprep.subr.bf16.mxu0 0
    %9682 = vmatpush1.bf16.msra.mxu0 0
    %9683 = vmatprep.subr.bf16.mxu0 0
    %9684 = vmatpush1.bf16.msra.mxu0 0
    %9685 = vmatprep.subr.bf16.mxu0 0
    %9686 = vmatpush1.bf16.msra.mxu0 0
    %9687 = vmatprep.subr.bf16.mxu0 0
    %9688 = vmatpush1.bf16.msra.mxu0 0
    %9689 = vmatprep.subr.bf16.mxu0 0
    %9690 = vmatpush1.bf16.msra.mxu0 0
    %9691 = vmatprep.mubr.bf16.mxu0 0
    %9692 = vmatmul.mubr.bf16.gmra.mrb[0].mxu0 %v8691
    %v9693 = vpop.f32.mrb[0].mxu0
    %v9694 = vadd.f32 %v9641, %v9693
    %v9695 = vpop.f32.mrb[0].mxu0
    %v9696 = vadd.f32 %v9643, %v9695
    %v9697 = vpop.f32.mrb[0].mxu0
    %v9698 = vadd.f32 %v9645, %v9697
    %v9699 = vpop.f32.mrb[0].mxu0
    %v9700 = vadd.f32 %v9647, %v9699
    %9701 = vmatprep.mubr.bf16.mxu0 0
    %9702 = vmatmul.mubr.bf16.gmra.mrb[0].mxu0 %v8694
    %v9703 = vpop.f32.mrb[0].mxu0
    %v9704 = vadd.f32 %v9651, %v9703
    %v9705 = vpop.f32.mrb[0].mxu0
    %v9706 = vadd.f32 %v9653, %v9705
    %v9707 = vpop.f32.mrb[0].mxu0
    %v9708 = vadd.f32 %v9655, %v9707
    %v9709 = vpop.f32.mrb[0].mxu0
    %v9710 = vadd.f32 %v9657, %v9709
    %9711 = vdwg.mxu0
    %v9712 = vadd.f32 %v8673, %v9588
    %v9713 = vadd.f32 %v8674, %v9590
    %v9714 = vadd.f32 %v8675, %v9694
    %v9715 = vadd.f32 %v8676, %v9696
    %v9716 = vadd.f32 %v8677, %v9592
    %v9717 = vadd.f32 %v8678, %v9594
    %v9718 = vadd.f32 %v8679, %v9698
    %v9719 = vadd.f32 %v8680, %v9700
    %v9720 = vadd.f32 %v8681, %v9598
    %v9721 = vadd.f32 %v8682, %v9600
    %v9722 = vadd.f32 %v8683, %v9704
    %v9723 = vadd.f32 %v8684, %v9706
    %v9724 = vadd.f32 %v8685, %v9602
    %v9725 = vadd.f32 %v8686, %v9604
    %v9726 = vadd.f32 %v8687, %v9708
    %v9727 = vadd.f32 %v8688, %v9710
    %v9728 = vpack.c.bf16 %v5826, %v5823
    %v9729 = vpack.c.bf16 %v5827, %v5824
    %v9730 = vpack.c.bf16 %v5828, %v5825
    %9731 = vmatprep.subr.bf16.mxu0 %v9309
    %9732 = vmatpush1.bf16.msra.mxu0 %v9308
    %9733 = vmatprep.subr.bf16.mxu0 %v9313
    %9734 = vmatpush1.bf16.msra.mxu0 %v9312
    %9735 = vmatprep.subr.bf16.mxu0 %v9317
    %9736 = vmatpush1.bf16.msra.mxu0 %v9316
    %9737 = vmatprep.subr.bf16.mxu0 %v9321
    %9738 = vmatpush1.bf16.msra.mxu0 %v9320
    %9739 = vmatprep.subr.bf16.mxu0 %v9325
    %9740 = vmatpush1.bf16.msra.mxu0 %v9324
    %9741 = vmatprep.subr.bf16.mxu0 %v9329
    %9742 = vmatpush1.bf16.msra.mxu0 %v9328
    %9743 = vmatprep.subr.bf16.mxu0 %v9333
    %9744 = vmatpush1.bf16.msra.mxu0 %v9332
    %9745 = vmatprep.subr.bf16.mxu0 %v9337
    %9746 = vmatpush1.bf16.msra.mxu0 %v9336
    %9747 = vmatprep.subr.bf16.mxu0 %v9341
    %9748 = vmatpush1.bf16.msra.mxu0 %v9340
    %9749 = vmatprep.subr.bf16.mxu0 %v9345
    %9750 = vmatpush1.bf16.msra.mxu0 %v9344
    %9751 = vmatprep.subr.bf16.mxu0 %v9349
    %9752 = vmatpush1.bf16.msra.mxu0 %v9348
    %9753 = vmatprep.subr.bf16.mxu0 %v9353
    %9754 = vmatpush1.bf16.msra.mxu0 %v9352
    %9755 = vmatprep.subr.bf16.mxu0 %v9357
    %9756 = vmatpush1.bf16.msra.mxu0 %v9356
    %9757 = vmatprep.subr.bf16.mxu0 %v9361
    %9758 = vmatpush1.bf16.msra.mxu0 %v9360
    %9759 = vmatprep.subr.bf16.mxu0 %v9365
    %9760 = vmatpush1.bf16.msra.mxu0 %v9364
    %9761 = vmatprep.subr.bf16.mxu0 %v9369
    %9762 = vmatpush1.bf16.msra.mxu0 %v9368
    %9763 = vmatprep.mubr.bf16.mxu0 %v5965
    %9764 = vmatmul.mubr.bf16.gmra.mrb[0].mxu0 %v5964
    %v9765 = vpop.f32.mrb[0].mxu0
    %v9766 = vadd.f32 0.0, %v9765
    %v9767 = vpop.f32.mrb[0].mxu0
    %v9768 = vadd.f32 0.0, %v9767
    %v9769 = vpop.f32.mrb[0].mxu0
    %v9770 = vadd.f32 0.0, %v9769
    %v9771 = vpop.f32.mrb[0].mxu0
    %v9772 = vadd.f32 0.0, %v9771
    %9773 = vmatprep.mubr.bf16.mxu0 %v9729
    %9774 = vmatmul.mubr.bf16.gmra.mrb[0].mxu0 %v9728
    %v9775 = vpop.f32.mrb[0].mxu0
    %v9776 = vadd.f32 0.0, %v9775
    %v9777 = vpop.f32.mrb[0].mxu0
    %v9778 = vadd.f32 0.0, %v9777
    %v9779 = vpop.f32.mrb[0].mxu0
    %v9780 = vadd.f32 0.0, %v9779
    %v9781 = vpop.f32.mrb[0].mxu0
    %v9782 = vadd.f32 0.0, %v9781
    %9783 = vdwg.mxu0
    %9784 = vmatprep.subr.bf16.mxu0 %v9373
    %9785 = vmatpush1.bf16.msra.mxu0 %v9372
    %9786 = vmatprep.subr.bf16.mxu0 %v9377
    %9787 = vmatpush1.bf16.msra.mxu0 %v9376
    %9788 = vmatprep.subr.bf16.mxu0 %v9381
    %9789 = vmatpush1.bf16.msra.mxu0 %v9380
    %9790 = vmatprep.subr.bf16.mxu0 %v9385
    %9791 = vmatpush1.bf16.msra.mxu0 %v9384
    %9792 = vmatprep.subr.bf16.mxu0 %v9389
    %9793 = vmatpush1.bf16.msra.mxu0 %v9388
    %9794 = vmatprep.subr.bf16.mxu0 %v9393
    %9795 = vmatpush1.bf16.msra.mxu0 %v9392
    %9796 = vmatprep.subr.bf16.mxu0 %v9397
    %9797 = vmatpush1.bf16.msra.mxu0 %v9396
    %9798 = vmatprep.subr.bf16.mxu0 %v9401
    %9799 = vmatpush1.bf16.msra.mxu0 %v9400
    %9800 = vmatprep.subr.bf16.mxu0 0
    %9801 = vmatpush1.bf16.msra.mxu0 0
    %9802 = vmatprep.subr.bf16.mxu0 0
    %9803 = vmatpush1.bf16.msra.mxu0 0
    %9804 = vmatprep.subr.bf16.mxu0 0
    %9805 = vmatpush1.bf16.msra.mxu0 0
    %9806 = vmatprep.subr.bf16.mxu0 0
    %9807 = vmatpush1.bf16.msra.mxu0 0
    %9808 = vmatprep.subr.bf16.mxu0 0
    %9809 = vmatpush1.bf16.msra.mxu0 0
    %9810 = vmatprep.subr.bf16.mxu0 0
    %9811 = vmatpush1.bf16.msra.mxu0 0
    %9812 = vmatprep.subr.bf16.mxu0 0
    %9813 = vmatpush1.bf16.msra.mxu0 0
    %9814 = vmatprep.subr.bf16.mxu0 0
    %9815 = vmatpush1.bf16.msra.mxu0 0
    %9816 = vmatprep.mubr.bf16.mxu0 0
    %9817 = vmatmul.mubr.bf16.gmra.mrb[0].mxu0 %v5966
    %v9818 = vpop.f32.mrb[0].mxu0
    %v9819 = vadd.f32 %v9766, %v9818
    %v9820 = vpop.f32.mrb[0].mxu0
    %v9821 = vadd.f32 %v9768, %v9820
    %v9822 = vpop.f32.mrb[0].mxu0
    %v9823 = vadd.f32 %v9770, %v9822
    %v9824 = vpop.f32.mrb[0].mxu0
    %v9825 = vadd.f32 %v9772, %v9824
    %9826 = vmatprep.mubr.bf16.mxu0 0
    %9827 = vmatmul.mubr.bf16.gmra.mrb[0].mxu0 %v9730
    %v9828 = vpop.f32.mrb[0].mxu0
    %v9829 = vadd.f32 %v9776, %v9828
    %v9830 = vpop.f32.mrb[0].mxu0
    %v9831 = vadd.f32 %v9778, %v9830
    %v9832 = vpop.f32.mrb[0].mxu0
    %v9833 = vadd.f32 %v9780, %v9832
    %v9834 = vpop.f32.mrb[0].mxu0
    %v9835 = vadd.f32 %v9782, %v9834
    %9836 = vdwg.mxu0
    %9837 = vmatprep.subr.bf16.mxu0 %v9311
    %9838 = vmatpush1.bf16.msra.mxu0 %v9310
    %9839 = vmatprep.subr.bf16.mxu0 %v9315
    %9840 = vmatpush1.bf16.msra.mxu0 %v9314
    %9841 = vmatprep.subr.bf16.mxu0 %v9319
    %9842 = vmatpush1.bf16.msra.mxu0 %v9318
    %9843 = vmatprep.subr.bf16.mxu0 %v9323
    %9844 = vmatpush1.bf16.msra.mxu0 %v9322
    %9845 = vmatprep.subr.bf16.mxu0 %v9327
    %9846 = vmatpush1.bf16.msra.mxu0 %v9326
    %9847 = vmatprep.subr.bf16.mxu0 %v9331
    %9848 = vmatpush1.bf16.msra.mxu0 %v9330
    %9849 = vmatprep.subr.bf16.mxu0 %v9335
    %9850 = vmatpush1.bf16.msra.mxu0 %v9334
    %9851 = vmatprep.subr.bf16.mxu0 %v9339
    %9852 = vmatpush1.bf16.msra.mxu0 %v9338
    %9853 = vmatprep.subr.bf16.mxu0 %v9343
    %9854 = vmatpush1.bf16.msra.mxu0 %v9342
    %9855 = vmatprep.subr.bf16.mxu0 %v9347
    %9856 = vmatpush1.bf16.msra.mxu0 %v9346
    %9857 = vmatprep.subr.bf16.mxu0 %v9351
    %9858 = vmatpush1.bf16.msra.mxu0 %v9350
    %9859 = vmatprep.subr.bf16.mxu0 %v9355
    %9860 = vmatpush1.bf16.msra.mxu0 %v9354
    %9861 = vmatprep.subr.bf16.mxu0 %v9359
    %9862 = vmatpush1.bf16.msra.mxu0 %v9358
    %9863 = vmatprep.subr.bf16.mxu0 %v9363
    %9864 = vmatpush1.bf16.msra.mxu0 %v9362
    %9865 = vmatprep.subr.bf16.mxu0 %v9367
    %9866 = vmatpush1.bf16.msra.mxu0 %v9366
    %9867 = vmatprep.subr.bf16.mxu0 %v9371
    %9868 = vmatpush1.bf16.msra.mxu0 %v9370
    %9869 = vmatprep.mubr.bf16.mxu0 %v5965
    %9870 = vmatmul.mubr.bf16.gmra.mrb[0].mxu0 %v5964
    %v9871 = vpop.f32.mrb[0].mxu0
    %v9872 = vadd.f32 0.0, %v9871
    %v9873 = vpop.f32.mrb[0].mxu0
    %v9874 = vadd.f32 0.0, %v9873
    %v9875 = vpop.f32.mrb[0].mxu0
    %v9876 = vadd.f32 0.0, %v9875
    %v9877 = vpop.f32.mrb[0].mxu0
    %v9878 = vadd.f32 0.0, %v9877
    %9879 = vmatprep.mubr.bf16.mxu0 %v9729
    %9880 = vmatmul.mubr.bf16.gmra.mrb[0].mxu0 %v9728
    %v9881 = vpop.f32.mrb[0].mxu0
    %v9882 = vadd.f32 0.0, %v9881
    %v9883 = vpop.f32.mrb[0].mxu0
    %v9884 = vadd.f32 0.0, %v9883
    %v9885 = vpop.f32.mrb[0].mxu0
    %v9886 = vadd.f32 0.0, %v9885
    %v9887 = vpop.f32.mrb[0].mxu0
    %v9888 = vadd.f32 0.0, %v9887
    %9889 = vdwg.mxu0
    %9890 = vmatprep.subr.bf16.mxu0 %v9375
    %9891 = vmatpush1.bf16.msra.mxu0 %v9374
    %9892 = vmatprep.subr.bf16.mxu0 %v9379
    %9893 = vmatpush1.bf16.msra.mxu0 %v9378
    %9894 = vmatprep.subr.bf16.mxu0 %v9383
    %9895 = vmatpush1.bf16.msra.mxu0 %v9382
    %9896 = vmatprep.subr.bf16.mxu0 %v9387
    %9897 = vmatpush1.bf16.msra.mxu0 %v9386
    %9898 = vmatprep.subr.bf16.mxu0 %v9391
    %9899 = vmatpush1.bf16.msra.mxu0 %v9390
    %9900 = vmatprep.subr.bf16.mxu0 %v9395
    %9901 = vmatpush1.bf16.msra.mxu0 %v9394
    %9902 = vmatprep.subr.bf16.mxu0 %v9399
    %9903 = vmatpush1.bf16.msra.mxu0 %v9398
    %9904 = vmatprep.subr.bf16.mxu0 %v9403
    %9905 = vmatpush1.bf16.msra.mxu0 %v9402
    %9906 = vmatprep.subr.bf16.mxu0 0
    %9907 = vmatpush1.bf16.msra.mxu0 0
    %9908 = vmatprep.subr.bf16.mxu0 0
    %9909 = vmatpush1.bf16.msra.mxu0 0
    %9910 = vmatprep.subr.bf16.mxu0 0
    %9911 = vmatpush1.bf16.msra.mxu0 0
    %9912 = vmatprep.subr.bf16.mxu0 0
    %9913 = vmatpush1.bf16.msra.mxu0 0
    %9914 = vmatprep.subr.bf16.mxu0 0
    %9915 = vmatpush1.bf16.msra.mxu0 0
    %9916 = vmatprep.subr.bf16.mxu0 0
    %9917 = vmatpush1.bf16.msra.mxu0 0
    %9918 = vmatprep.subr.bf16.mxu0 0
    %9919 = vmatpush1.bf16.msra.mxu0 0
    %9920 = vmatprep.subr.bf16.mxu0 0
    %9921 = vmatpush1.bf16.msra.mxu0 0
    %9922 = vmatprep.mubr.bf16.mxu0 0
    %9923 = vmatmul.mubr.bf16.gmra.mrb[0].mxu0 %v5966
    %v9924 = vpop.f32.mrb[0].mxu0
    %v9925 = vadd.f32 %v9872, %v9924
    %v9926 = vpop.f32.mrb[0].mxu0
    %v9927 = vadd.f32 %v9874, %v9926
    %v9928 = vpop.f32.mrb[0].mxu0
    %v9929 = vadd.f32 %v9876, %v9928
    %v9930 = vpop.f32.mrb[0].mxu0
    %v9931 = vadd.f32 %v9878, %v9930
    %9932 = vmatprep.mubr.bf16.mxu0 0
    %9933 = vmatmul.mubr.bf16.gmra.mrb[0].mxu0 %v9730
    %v9934 = vpop.f32.mrb[0].mxu0
    %v9935 = vadd.f32 %v9882, %v9934
    %v9936 = vpop.f32.mrb[0].mxu0
    %v9937 = vadd.f32 %v9884, %v9936
    %v9938 = vpop.f32.mrb[0].mxu0
    %v9939 = vadd.f32 %v9886, %v9938
    %v9940 = vpop.f32.mrb[0].mxu0
    %v9941 = vadd.f32 %v9888, %v9940
    %9942 = vdwg.mxu0
    %v9943 = vadd.f32 %v8907, %v9819
    %v9944 = vadd.f32 %v8908, %v9821
    %v9945 = vadd.f32 %v8909, %v9925
    %v9946 = vadd.f32 %v8910, %v9927
    %v9947 = vadd.f32 %v8911, %v9823
    %v9948 = vadd.f32 %v8912, %v9825
    %v9949 = vadd.f32 %v8913, %v9929
    %v9950 = vadd.f32 %v8914, %v9931
    %v9951 = vadd.f32 %v8915, %v9829
    %v9952 = vadd.f32 %v8916, %v9831
    %v9953 = vadd.f32 %v8917, %v9935
    %v9954 = vadd.f32 %v8918, %v9937
    %v9955 = vadd.f32 %v8919, %v9833
    %v9956 = vadd.f32 %v8920, %v9835
    %v9957 = vadd.f32 %v8921, %v9939
    %v9958 = vadd.f32 %v8922, %v9941
    %s9959 = scalar_lea.vmem [#allocation6], 3072
    %v9960 = vld [vmem:[%s9959] sm:$0xff]
    %v9961 = vld [vmem:[%s9959 + $0x8] sm:$0xff]
    %v9962 = vld [vmem:[%s9959 + $0x10] sm:$0xff]
    %v9963 = vld [vmem:[%s9959 + $0x18] sm:$0xff]
    %v9964 = vld [vmem:[%s9959 + $0x20] sm:$0xff]
    %v9965 = vld [vmem:[%s9959 + $0x28] sm:$0xff]
    %v9966 = vld [vmem:[%s9959 + $0x30] sm:$0xff]
    %v9967 = vld [vmem:[%s9959 + $0x38] sm:$0xff]
    %v9968 = vld [vmem:[%s9959 + $0x40] sm:$0xff]
    %v9969 = vld [vmem:[%s9959 + $0x48] sm:$0xff]
    %v9970 = vld [vmem:[%s9959 + $0x50] sm:$0xff]
    %v9971 = vld [vmem:[%s9959 + $0x58] sm:$0xff]
    %v9972 = vld [vmem:[%s9959 + $0x60] sm:$0xff]
    %v9973 = vld [vmem:[%s9959 + $0x68] sm:$0xff]
    %v9974 = vld [vmem:[%s9959 + $0x70] sm:$0xff]
    %v9975 = vld [vmem:[%s9959 + $0x78] sm:$0xff]
    %v9976 = vld [vmem:[%s9959 + $0x80] sm:$0xff]
    %v9977 = vld [vmem:[%s9959 + $0x88] sm:$0xff]
    %v9978 = vld [vmem:[%s9959 + $0x90] sm:$0xff]
    %v9979 = vld [vmem:[%s9959 + $0x98] sm:$0xff]
    %v9980 = vld [vmem:[%s9959 + $0xa0] sm:$0xff]
    %v9981 = vld [vmem:[%s9959 + $0xa8] sm:$0xff]
    %v9982 = vld [vmem:[%s9959 + $0xb0] sm:$0xff]
    %v9983 = vld [vmem:[%s9959 + $0xb8] sm:$0xff]
    %v9984 = vld [vmem:[%s9959 + $0xc0] sm:$0xff]
    %v9985 = vld [vmem:[%s9959 + $0xc8] sm:$0xff]
    %v9986 = vld [vmem:[%s9959 + $0xd0] sm:$0xff]
    %v9987 = vld [vmem:[%s9959 + $0xd8] sm:$0xff]
    %v9988 = vld [vmem:[%s9959 + $0xe0] sm:$0xff]
    %v9989 = vld [vmem:[%s9959 + $0xe8] sm:$0xff]
    %v9990 = vld [vmem:[%s9959 + $0xf0] sm:$0xff]
    %v9991 = vld [vmem:[%s9959 + $0xf8] sm:$0xff]
    %v9992 = vld [vmem:[%s9959 + $0x100] sm:$0xff]
    %v9993 = vld [vmem:[%s9959 + $0x108] sm:$0xff]
    %v9994 = vld [vmem:[%s9959 + $0x110] sm:$0xff]
    %v9995 = vld [vmem:[%s9959 + $0x118] sm:$0xff]
    %v9996 = vld [vmem:[%s9959 + $0x120] sm:$0xff]
    %v9997 = vld [vmem:[%s9959 + $0x128] sm:$0xff]
    %v9998 = vld [vmem:[%s9959 + $0x130] sm:$0xff]
    %v9999 = vld [vmem:[%s9959 + $0x138] sm:$0xff]
    %v10000 = vld [vmem:[%s9959 + $0x140] sm:$0xff]
    %v10001 = vld [vmem:[%s9959 + $0x148] sm:$0xff]
    %v10002 = vld [vmem:[%s9959 + $0x150] sm:$0xff]
    %v10003 = vld [vmem:[%s9959 + $0x158] sm:$0xff]
    %v10004 = vld [vmem:[%s9959 + $0x160] sm:$0xff]
    %v10005 = vld [vmem:[%s9959 + $0x168] sm:$0xff]
    %v10006 = vld [vmem:[%s9959 + $0x170] sm:$0xff]
    %v10007 = vld [vmem:[%s9959 + $0x178] sm:$0xff]
    %v10008 = vld [vmem:[%s9959 + $0x180] sm:$0xff]
    %v10009 = vld [vmem:[%s9959 + $0x188] sm:$0xff]
    %v10010 = vld [vmem:[%s9959 + $0x190] sm:$0xff]
    %v10011 = vld [vmem:[%s9959 + $0x198] sm:$0xff]
    %v10012 = vld [vmem:[%s9959 + $0x1a0] sm:$0xff]
    %v10013 = vld [vmem:[%s9959 + $0x1a8] sm:$0xff]
    %v10014 = vld [vmem:[%s9959 + $0x1b0] sm:$0xff]
    %v10015 = vld [vmem:[%s9959 + $0x1b8] sm:$0xff]
    %v10016 = vld [vmem:[%s9959 + $0x1c0] sm:$0xff]
    %v10017 = vld [vmem:[%s9959 + $0x1c8] sm:$0xff]
    %v10018 = vld [vmem:[%s9959 + $0x1d0] sm:$0xff]
    %v10019 = vld [vmem:[%s9959 + $0x1d8] sm:$0xff]
    %v10020 = vld [vmem:[%s9959 + $0x1e0] sm:$0xff]
    %v10021 = vld [vmem:[%s9959 + $0x1e8] sm:$0xff]
    %v10022 = vld [vmem:[%s9959 + $0x1f0] sm:$0xff]
    %v10023 = vld [vmem:[%s9959 + $0x1f8] sm:$0xff]
    %v10024 = vld [vmem:[%s9959 + $0x200] sm:$0xff]
    %v10025 = vld [vmem:[%s9959 + $0x208] sm:$0xff]
    %v10026 = vld [vmem:[%s9959 + $0x210] sm:$0xff]
    %v10027 = vld [vmem:[%s9959 + $0x218] sm:$0xff]
    %v10028 = vld [vmem:[%s9959 + $0x220] sm:$0xff]
    %v10029 = vld [vmem:[%s9959 + $0x228] sm:$0xff]
    %v10030 = vld [vmem:[%s9959 + $0x230] sm:$0xff]
    %v10031 = vld [vmem:[%s9959 + $0x238] sm:$0xff]
    %v10032 = vld [vmem:[%s9959 + $0x240] sm:$0xff]
    %v10033 = vld [vmem:[%s9959 + $0x248] sm:$0xff]
    %v10034 = vld [vmem:[%s9959 + $0x250] sm:$0xff]
    %v10035 = vld [vmem:[%s9959 + $0x258] sm:$0xff]
    %v10036 = vld [vmem:[%s9959 + $0x260] sm:$0xff]
    %v10037 = vld [vmem:[%s9959 + $0x268] sm:$0xff]
    %v10038 = vld [vmem:[%s9959 + $0x270] sm:$0xff]
    %v10039 = vld [vmem:[%s9959 + $0x278] sm:$0xff]
    %v10040 = vld [vmem:[%s9959 + $0x280] sm:$0xff]
    %v10041 = vld [vmem:[%s9959 + $0x288] sm:$0xff]
    %v10042 = vld [vmem:[%s9959 + $0x290] sm:$0xff]
    %v10043 = vld [vmem:[%s9959 + $0x298] sm:$0xff]
    %v10044 = vld [vmem:[%s9959 + $0x2a0] sm:$0xff]
    %v10045 = vld [vmem:[%s9959 + $0x2a8] sm:$0xff]
    %v10046 = vld [vmem:[%s9959 + $0x2b0] sm:$0xff]
    %v10047 = vld [vmem:[%s9959 + $0x2b8] sm:$0xff]
    %v10048 = vld [vmem:[%s9959 + $0x2c0] sm:$0xff]
    %v10049 = vld [vmem:[%s9959 + $0x2c8] sm:$0xff]
    %v10050 = vld [vmem:[%s9959 + $0x2d0] sm:$0xff]
    %v10051 = vld [vmem:[%s9959 + $0x2d8] sm:$0xff]
    %v10052 = vld [vmem:[%s9959 + $0x2e0] sm:$0xff]
    %v10053 = vld [vmem:[%s9959 + $0x2e8] sm:$0xff]
    %v10054 = vld [vmem:[%s9959 + $0x2f0] sm:$0xff]
    %v10055 = vld [vmem:[%s9959 + $0x2f8] sm:$0xff]
    %v10152 = vunpack.c.l.b16 %v9960
    %v10153 = vunpack.c.h.b16 %v9960
    %v10154 = vunpack.c.l.b16 %v9961
    %v10155 = vunpack.c.h.b16 %v9961
    %v10156 = vunpack.c.l.b16 %v9962
    %v10157 = vunpack.c.h.b16 %v9962
    %v10158 = vunpack.c.l.b16 %v9963
    %v10159 = vunpack.c.h.b16 %v9963
    %v10160 = vunpack.c.l.b16 %v9964
    %v10161 = vunpack.c.h.b16 %v9964
    %v10162 = vunpack.c.l.b16 %v9965
    %v10163 = vunpack.c.h.b16 %v9965
    %v10164 = vunpack.c.l.b16 %v9966
    %v10165 = vunpack.c.h.b16 %v9966
    %v10166 = vunpack.c.l.b16 %v9967
    %v10167 = vunpack.c.h.b16 %v9967
    %v10168 = vunpack.c.l.b16 %v9968
    %v10169 = vunpack.c.h.b16 %v9968
    %v10170 = vunpack.c.l.b16 %v9969
    %v10171 = vunpack.c.h.b16 %v9969
    %v10172 = vunpack.c.l.b16 %v9970
    %v10173 = vunpack.c.h.b16 %v9970
    %v10174 = vunpack.c.l.b16 %v9971
    %v10175 = vunpack.c.h.b16 %v9971
    %v10176 = vunpack.c.l.b16 %v9972
    %v10177 = vunpack.c.h.b16 %v9972
    %v10178 = vunpack.c.l.b16 %v9973
    %v10179 = vunpack.c.h.b16 %v9973
    %v10180 = vunpack.c.l.b16 %v9974
    %v10181 = vunpack.c.h.b16 %v9974
    %v10182 = vunpack.c.l.b16 %v9975
    %v10183 = vunpack.c.h.b16 %v9975
    %v10184 = vunpack.c.l.b16 %v9976
    %v10185 = vunpack.c.h.b16 %v9976
    %v10186 = vunpack.c.l.b16 %v9977
    %v10187 = vunpack.c.h.b16 %v9977
    %v10188 = vunpack.c.l.b16 %v9978
    %v10189 = vunpack.c.h.b16 %v9978
    %v10190 = vunpack.c.l.b16 %v9979
    %v10191 = vunpack.c.h.b16 %v9979
    %v10192 = vunpack.c.l.b16 %v9980
    %v10193 = vunpack.c.h.b16 %v9980
    %v10194 = vunpack.c.l.b16 %v9981
    %v10195 = vunpack.c.h.b16 %v9981
    %v10196 = vunpack.c.l.b16 %v9982
    %v10197 = vunpack.c.h.b16 %v9982
    %v10198 = vunpack.c.l.b16 %v9983
    %v10199 = vunpack.c.h.b16 %v9983
    %v10200 = vunpack.c.l.b16 %v9984
    %v10201 = vunpack.c.h.b16 %v9984
    %v10202 = vunpack.c.l.b16 %v9985
    %v10203 = vunpack.c.h.b16 %v9985
    %v10204 = vunpack.c.l.b16 %v9986
    %v10205 = vunpack.c.h.b16 %v9986
    %v10206 = vunpack.c.l.b16 %v9987
    %v10207 = vunpack.c.h.b16 %v9987
    %v10208 = vunpack.c.l.b16 %v9988
    %v10209 = vunpack.c.h.b16 %v9988
    %v10210 = vunpack.c.l.b16 %v9989
    %v10211 = vunpack.c.h.b16 %v9989
    %v10212 = vunpack.c.l.b16 %v9990
    %v10213 = vunpack.c.h.b16 %v9990
    %v10214 = vunpack.c.l.b16 %v9991
    %v10215 = vunpack.c.h.b16 %v9991
    %v10216 = vunpack.c.l.b16 %v9992
    %v10217 = vunpack.c.h.b16 %v9992
    %v10218 = vunpack.c.l.b16 %v9993
    %v10219 = vunpack.c.h.b16 %v9993
    %v10220 = vunpack.c.l.b16 %v9994
    %v10221 = vunpack.c.h.b16 %v9994
    %v10222 = vunpack.c.l.b16 %v9995
    %v10223 = vunpack.c.h.b16 %v9995
    %v10224 = vunpack.c.l.b16 %v9996
    %v10225 = vunpack.c.h.b16 %v9996
    %v10226 = vunpack.c.l.b16 %v9997
    %v10227 = vunpack.c.h.b16 %v9997
    %v10228 = vunpack.c.l.b16 %v9998
    %v10229 = vunpack.c.h.b16 %v9998
    %v10230 = vunpack.c.l.b16 %v9999
    %v10231 = vunpack.c.h.b16 %v9999
    %v10232 = vunpack.c.l.b16 %v10000
    %v10233 = vunpack.c.h.b16 %v10000
    %v10234 = vunpack.c.l.b16 %v10001
    %v10235 = vunpack.c.h.b16 %v10001
    %v10236 = vunpack.c.l.b16 %v10002
    %v10237 = vunpack.c.h.b16 %v10002
    %v10238 = vunpack.c.l.b16 %v10003
    %v10239 = vunpack.c.h.b16 %v10003
    %v10240 = vunpack.c.l.b16 %v10004
    %v10241 = vunpack.c.h.b16 %v10004
    %v10242 = vunpack.c.l.b16 %v10005
    %v10243 = vunpack.c.h.b16 %v10005
    %v10244 = vunpack.c.l.b16 %v10006
    %v10245 = vunpack.c.h.b16 %v10006
    %v10246 = vunpack.c.l.b16 %v10007
    %v10247 = vunpack.c.h.b16 %v10007
    %v10248 = vunpack.c.l.b16 %v10008
    %v10249 = vunpack.c.h.b16 %v10008
    %v10250 = vunpack.c.l.b16 %v10009
    %v10251 = vunpack.c.h.b16 %v10009
    %v10252 = vunpack.c.l.b16 %v10010
    %v10253 = vunpack.c.h.b16 %v10010
    %v10254 = vunpack.c.l.b16 %v10011
    %v10255 = vunpack.c.h.b16 %v10011
    %v10256 = vunpack.c.l.b16 %v10012
    %v10257 = vunpack.c.h.b16 %v10012
    %v10258 = vunpack.c.l.b16 %v10013
    %v10259 = vunpack.c.h.b16 %v10013
    %v10260 = vunpack.c.l.b16 %v10014
    %v10261 = vunpack.c.h.b16 %v10014
    %v10262 = vunpack.c.l.b16 %v10015
    %v10263 = vunpack.c.h.b16 %v10015
    %v10264 = vunpack.c.l.b16 %v10016
    %v10265 = vunpack.c.h.b16 %v10016
    %v10266 = vunpack.c.l.b16 %v10017
    %v10267 = vunpack.c.h.b16 %v10017
    %v10268 = vunpack.c.l.b16 %v10018
    %v10269 = vunpack.c.h.b16 %v10018
    %v10270 = vunpack.c.l.b16 %v10019
    %v10271 = vunpack.c.h.b16 %v10019
    %v10272 = vunpack.c.l.b16 %v10020
    %v10273 = vunpack.c.h.b16 %v10020
    %v10274 = vunpack.c.l.b16 %v10021
    %v10275 = vunpack.c.h.b16 %v10021
    %v10276 = vunpack.c.l.b16 %v10022
    %v10277 = vunpack.c.h.b16 %v10022
    %v10278 = vunpack.c.l.b16 %v10023
    %v10279 = vunpack.c.h.b16 %v10023
    %v10280 = vunpack.c.l.b16 %v10024
    %v10281 = vunpack.c.h.b16 %v10024
    %v10282 = vunpack.c.l.b16 %v10025
    %v10283 = vunpack.c.h.b16 %v10025
    %v10284 = vunpack.c.l.b16 %v10026
    %v10285 = vunpack.c.h.b16 %v10026
    %v10286 = vunpack.c.l.b16 %v10027
    %v10287 = vunpack.c.h.b16 %v10027
    %v10288 = vunpack.c.l.b16 %v10028
    %v10289 = vunpack.c.h.b16 %v10028
    %v10290 = vunpack.c.l.b16 %v10029
    %v10291 = vunpack.c.h.b16 %v10029
    %v10292 = vunpack.c.l.b16 %v10030
    %v10293 = vunpack.c.h.b16 %v10030
    %v10294 = vunpack.c.l.b16 %v10031
    %v10295 = vunpack.c.h.b16 %v10031
    %v10296 = vunpack.c.l.b16 %v10032
    %v10297 = vunpack.c.h.b16 %v10032
    %v10298 = vunpack.c.l.b16 %v10033
    %v10299 = vunpack.c.h.b16 %v10033
    %v10300 = vunpack.c.l.b16 %v10034
    %v10301 = vunpack.c.h.b16 %v10034
    %v10302 = vunpack.c.l.b16 %v10035
    %v10303 = vunpack.c.h.b16 %v10035
    %v10304 = vunpack.c.l.b16 %v10036
    %v10305 = vunpack.c.h.b16 %v10036
    %v10306 = vunpack.c.l.b16 %v10037
    %v10307 = vunpack.c.h.b16 %v10037
    %v10308 = vunpack.c.l.b16 %v10038
    %v10309 = vunpack.c.h.b16 %v10038
    %v10310 = vunpack.c.l.b16 %v10039
    %v10311 = vunpack.c.h.b16 %v10039
    %v10312 = vunpack.c.l.b16 %v10040
    %v10313 = vunpack.c.h.b16 %v10040
    %v10314 = vunpack.c.l.b16 %v10041
    %v10315 = vunpack.c.h.b16 %v10041
    %v10316 = vunpack.c.l.b16 %v10042
    %v10317 = vunpack.c.h.b16 %v10042
    %v10318 = vunpack.c.l.b16 %v10043
    %v10319 = vunpack.c.h.b16 %v10043
    %v10320 = vunpack.c.l.b16 %v10044
    %v10321 = vunpack.c.h.b16 %v10044
    %v10322 = vunpack.c.l.b16 %v10045
    %v10323 = vunpack.c.h.b16 %v10045
    %v10324 = vunpack.c.l.b16 %v10046
    %v10325 = vunpack.c.h.b16 %v10046
    %v10326 = vunpack.c.l.b16 %v10047
    %v10327 = vunpack.c.h.b16 %v10047
    %v10328 = vunpack.c.l.b16 %v10048
    %v10329 = vunpack.c.h.b16 %v10048
    %v10330 = vunpack.c.l.b16 %v10049
    %v10331 = vunpack.c.h.b16 %v10049
    %v10332 = vunpack.c.l.b16 %v10050
    %v10333 = vunpack.c.h.b16 %v10050
    %v10334 = vunpack.c.l.b16 %v10051
    %v10335 = vunpack.c.h.b16 %v10051
    %v10336 = vunpack.c.l.b16 %v10052
    %v10337 = vunpack.c.h.b16 %v10052
    %v10338 = vunpack.c.l.b16 %v10053
    %v10339 = vunpack.c.h.b16 %v10053
    %v10340 = vunpack.c.l.b16 %v10054
    %v10341 = vunpack.c.h.b16 %v10054
    %v10342 = vunpack.c.l.b16 %v10055
    %v10343 = vunpack.c.h.b16 %v10055
    %v10344 = vpack.c.b16 %v10156, %v10152
    %v10345 = vpack.c.b16 %v10157, %v10153
    %v10346 = vpack.c.b16 %v10158, %v10154
    %v10347 = vpack.c.b16 %v10159, %v10155
    %v10348 = vpack.c.b16 %v10164, %v10160
    %v10349 = vpack.c.b16 %v10165, %v10161
    %v10350 = vpack.c.b16 %v10166, %v10162
    %v10351 = vpack.c.b16 %v10167, %v10163
    %v10352 = vpack.c.b16 %v10172, %v10168
    %v10353 = vpack.c.b16 %v10173, %v10169
    %v10354 = vpack.c.b16 %v10174, %v10170
    %v10355 = vpack.c.b16 %v10175, %v10171
    %v10356 = vpack.c.b16 %v10180, %v10176
    %v10357 = vpack.c.b16 %v10181, %v10177
    %v10358 = vpack.c.b16 %v10182, %v10178
    %v10359 = vpack.c.b16 %v10183, %v10179
    %v10360 = vpack.c.b16 %v10188, %v10184
    %v10361 = vpack.c.b16 %v10189, %v10185
    %v10362 = vpack.c.b16 %v10190, %v10186
    %v10363 = vpack.c.b16 %v10191, %v10187
    %v10364 = vpack.c.b16 %v10196, %v10192
    %v10365 = vpack.c.b16 %v10197, %v10193
    %v10366 = vpack.c.b16 %v10198, %v10194
    %v10367 = vpack.c.b16 %v10199, %v10195
    %v10368 = vpack.c.b16 %v10204, %v10200
    %v10369 = vpack.c.b16 %v10205, %v10201
    %v10370 = vpack.c.b16 %v10206, %v10202
    %v10371 = vpack.c.b16 %v10207, %v10203
    %v10372 = vpack.c.b16 %v10212, %v10208
    %v10373 = vpack.c.b16 %v10213, %v10209
    %v10374 = vpack.c.b16 %v10214, %v10210
    %v10375 = vpack.c.b16 %v10215, %v10211
    %v10376 = vpack.c.b16 %v10220, %v10216
    %v10377 = vpack.c.b16 %v10221, %v10217
    %v10378 = vpack.c.b16 %v10222, %v10218
    %v10379 = vpack.c.b16 %v10223, %v10219
    %v10380 = vpack.c.b16 %v10228, %v10224
    %v10381 = vpack.c.b16 %v10229, %v10225
    %v10382 = vpack.c.b16 %v10230, %v10226
    %v10383 = vpack.c.b16 %v10231, %v10227
    %v10384 = vpack.c.b16 %v10236, %v10232
    %v10385 = vpack.c.b16 %v10237, %v10233
    %v10386 = vpack.c.b16 %v10238, %v10234
    %v10387 = vpack.c.b16 %v10239, %v10235
    %v10388 = vpack.c.b16 %v10244, %v10240
    %v10389 = vpack.c.b16 %v10245, %v10241
    %v10390 = vpack.c.b16 %v10246, %v10242
    %v10391 = vpack.c.b16 %v10247, %v10243
    %v10392 = vpack.c.b16 %v10252, %v10248
    %v10393 = vpack.c.b16 %v10253, %v10249
    %v10394 = vpack.c.b16 %v10254, %v10250
    %v10395 = vpack.c.b16 %v10255, %v10251
    %v10396 = vpack.c.b16 %v10260, %v10256
    %v10397 = vpack.c.b16 %v10261, %v10257
    %v10398 = vpack.c.b16 %v10262, %v10258
    %v10399 = vpack.c.b16 %v10263, %v10259
    %v10400 = vpack.c.b16 %v10268, %v10264
    %v10401 = vpack.c.b16 %v10269, %v10265
    %v10402 = vpack.c.b16 %v10270, %v10266
    %v10403 = vpack.c.b16 %v10271, %v10267
    %v10404 = vpack.c.b16 %v10276, %v10272
    %v10405 = vpack.c.b16 %v10277, %v10273
    %v10406 = vpack.c.b16 %v10278, %v10274
    %v10407 = vpack.c.b16 %v10279, %v10275
    %v10408 = vpack.c.b16 %v10284, %v10280
    %v10409 = vpack.c.b16 %v10285, %v10281
    %v10410 = vpack.c.b16 %v10286, %v10282
    %v10411 = vpack.c.b16 %v10287, %v10283
    %v10412 = vpack.c.b16 %v10292, %v10288
    %v10413 = vpack.c.b16 %v10293, %v10289
    %v10414 = vpack.c.b16 %v10294, %v10290
    %v10415 = vpack.c.b16 %v10295, %v10291
    %v10416 = vpack.c.b16 %v10300, %v10296
    %v10417 = vpack.c.b16 %v10301, %v10297
    %v10418 = vpack.c.b16 %v10302, %v10298
    %v10419 = vpack.c.b16 %v10303, %v10299
    %v10420 = vpack.c.b16 %v10308, %v10304
    %v10421 = vpack.c.b16 %v10309, %v10305
    %v10422 = vpack.c.b16 %v10310, %v10306
    %v10423 = vpack.c.b16 %v10311, %v10307
    %v10424 = vpack.c.b16 %v10316, %v10312
    %v10425 = vpack.c.b16 %v10317, %v10313
    %v10426 = vpack.c.b16 %v10318, %v10314
    %v10427 = vpack.c.b16 %v10319, %v10315
    %v10428 = vpack.c.b16 %v10324, %v10320
    %v10429 = vpack.c.b16 %v10325, %v10321
    %v10430 = vpack.c.b16 %v10326, %v10322
    %v10431 = vpack.c.b16 %v10327, %v10323
    %v10432 = vpack.c.b16 %v10332, %v10328
    %v10433 = vpack.c.b16 %v10333, %v10329
    %v10434 = vpack.c.b16 %v10334, %v10330
    %v10435 = vpack.c.b16 %v10335, %v10331
    %v10436 = vpack.c.b16 %v10340, %v10336
    %v10437 = vpack.c.b16 %v10341, %v10337
    %v10438 = vpack.c.b16 %v10342, %v10338
    %v10439 = vpack.c.b16 %v10343, %v10339
    %10536 = vmatprep.subr.bf16.mxu0 %v10345
    %10537 = vmatpush1.bf16.msra.mxu0 %v10344
    %10538 = vmatprep.subr.bf16.mxu0 %v10349
    %10539 = vmatpush1.bf16.msra.mxu0 %v10348
    %10540 = vmatprep.subr.bf16.mxu0 %v10353
    %10541 = vmatpush1.bf16.msra.mxu0 %v10352
    %10542 = vmatprep.subr.bf16.mxu0 %v10357
    %10543 = vmatpush1.bf16.msra.mxu0 %v10356
    %10544 = vmatprep.subr.bf16.mxu0 %v10361
    %10545 = vmatpush1.bf16.msra.mxu0 %v10360
    %10546 = vmatprep.subr.bf16.mxu0 %v10365
    %10547 = vmatpush1.bf16.msra.mxu0 %v10364
    %10548 = vmatprep.subr.bf16.mxu0 %v10369
    %10549 = vmatpush1.bf16.msra.mxu0 %v10368
    %10550 = vmatprep.subr.bf16.mxu0 %v10373
    %10551 = vmatpush1.bf16.msra.mxu0 %v10372
    %10552 = vmatprep.subr.bf16.mxu0 %v10377
    %10553 = vmatpush1.bf16.msra.mxu0 %v10376
    %10554 = vmatprep.subr.bf16.mxu0 %v10381
    %10555 = vmatpush1.bf16.msra.mxu0 %v10380
    %10556 = vmatprep.subr.bf16.mxu0 %v10385
    %10557 = vmatpush1.bf16.msra.mxu0 %v10384
    %10558 = vmatprep.subr.bf16.mxu0 %v10389
    %10559 = vmatpush1.bf16.msra.mxu0 %v10388
    %10560 = vmatprep.subr.bf16.mxu0 %v10393
    %10561 = vmatpush1.bf16.msra.mxu0 %v10392
    %10562 = vmatprep.subr.bf16.mxu0 %v10397
    %10563 = vmatpush1.bf16.msra.mxu0 %v10396
    %10564 = vmatprep.subr.bf16.mxu0 %v10401
    %10565 = vmatpush1.bf16.msra.mxu0 %v10400
    %10566 = vmatprep.subr.bf16.mxu0 %v10405
    %10567 = vmatpush1.bf16.msra.mxu0 %v10404
    %10568 = vmatprep.mubr.bf16.mxu0 %v5965
    %10569 = vmatmul.mubr.bf16.gmra.mrb[0].mxu0 %v5964
    %v10570 = vpop.f32.mrb[0].mxu0
    %v10571 = vadd.f32 0.0, %v10570
    %v10572 = vpop.f32.mrb[0].mxu0
    %v10573 = vadd.f32 0.0, %v10572
    %v10574 = vpop.f32.mrb[0].mxu0
    %v10575 = vadd.f32 0.0, %v10574
    %v10576 = vpop.f32.mrb[0].mxu0
    %v10577 = vadd.f32 0.0, %v10576
    %10578 = vmatprep.mubr.bf16.mxu0 %v9729
    %10579 = vmatmul.mubr.bf16.gmra.mrb[0].mxu0 %v9728
    %v10580 = vpop.f32.mrb[0].mxu0
    %v10581 = vadd.f32 0.0, %v10580
    %v10582 = vpop.f32.mrb[0].mxu0
    %v10583 = vadd.f32 0.0, %v10582
    %v10584 = vpop.f32.mrb[0].mxu0
    %v10585 = vadd.f32 0.0, %v10584
    %v10586 = vpop.f32.mrb[0].mxu0
    %v10587 = vadd.f32 0.0, %v10586
    %10588 = vdwg.mxu0
    %10589 = vmatprep.subr.bf16.mxu0 %v10409
    %10590 = vmatpush1.bf16.msra.mxu0 %v10408
    %10591 = vmatprep.subr.bf16.mxu0 %v10413
    %10592 = vmatpush1.bf16.msra.mxu0 %v10412
    %10593 = vmatprep.subr.bf16.mxu0 %v10417
    %10594 = vmatpush1.bf16.msra.mxu0 %v10416
    %10595 = vmatprep.subr.bf16.mxu0 %v10421
    %10596 = vmatpush1.bf16.msra.mxu0 %v10420
    %10597 = vmatprep.subr.bf16.mxu0 %v10425
    %10598 = vmatpush1.bf16.msra.mxu0 %v10424
    %10599 = vmatprep.subr.bf16.mxu0 %v10429
    %10600 = vmatpush1.bf16.msra.mxu0 %v10428
    %10601 = vmatprep.subr.bf16.mxu0 %v10433
    %10602 = vmatpush1.bf16.msra.mxu0 %v10432
    %10603 = vmatprep.subr.bf16.mxu0 %v10437
    %10604 = vmatpush1.bf16.msra.mxu0 %v10436
    %10605 = vmatprep.subr.bf16.mxu0 0
    %10606 = vmatpush1.bf16.msra.mxu0 0
    %10607 = vmatprep.subr.bf16.mxu0 0
    %10608 = vmatpush1.bf16.msra.mxu0 0
    %10609 = vmatprep.subr.bf16.mxu0 0
    %10610 = vmatpush1.bf16.msra.mxu0 0
    %10611 = vmatprep.subr.bf16.mxu0 0
    %10612 = vmatpush1.bf16.msra.mxu0 0
    %10613 = vmatprep.subr.bf16.mxu0 0
    %10614 = vmatpush1.bf16.msra.mxu0 0
    %10615 = vmatprep.subr.bf16.mxu0 0
    %10616 = vmatpush1.bf16.msra.mxu0 0
    %10617 = vmatprep.subr.bf16.mxu0 0
    %10618 = vmatpush1.bf16.msra.mxu0 0
    %10619 = vmatprep.subr.bf16.mxu0 0
    %10620 = vmatpush1.bf16.msra.mxu0 0
    %10621 = vmatprep.mubr.bf16.mxu0 0
    %10622 = vmatmul.mubr.bf16.gmra.mrb[0].mxu0 %v5966
    %v10623 = vpop.f32.mrb[0].mxu0
    %v10624 = vadd.f32 %v10571, %v10623
    %v10625 = vpop.f32.mrb[0].mxu0
    %v10626 = vadd.f32 %v10573, %v10625
    %v10627 = vpop.f32.mrb[0].mxu0
    %v10628 = vadd.f32 %v10575, %v10627
    %v10629 = vpop.f32.mrb[0].mxu0
    %v10630 = vadd.f32 %v10577, %v10629
    %10631 = vmatprep.mubr.bf16.mxu0 0
    %10632 = vmatmul.mubr.bf16.gmra.mrb[0].mxu0 %v9730
    %v10633 = vpop.f32.mrb[0].mxu0
    %v10634 = vadd.f32 %v10581, %v10633
    %v10635 = vpop.f32.mrb[0].mxu0
    %v10636 = vadd.f32 %v10583, %v10635
    %v10637 = vpop.f32.mrb[0].mxu0
    %v10638 = vadd.f32 %v10585, %v10637
    %v10639 = vpop.f32.mrb[0].mxu0
    %v10640 = vadd.f32 %v10587, %v10639
    %10641 = vdwg.mxu0
    %10642 = vmatprep.subr.bf16.mxu0 %v10347
    %10643 = vmatpush1.bf16.msra.mxu0 %v10346
    %10644 = vmatprep.subr.bf16.mxu0 %v10351
    %10645 = vmatpush1.bf16.msra.mxu0 %v10350
    %10646 = vmatprep.subr.bf16.mxu0 %v10355
    %10647 = vmatpush1.bf16.msra.mxu0 %v10354
    %10648 = vmatprep.subr.bf16.mxu0 %v10359
    %10649 = vmatpush1.bf16.msra.mxu0 %v10358
    %10650 = vmatprep.subr.bf16.mxu0 %v10363
    %10651 = vmatpush1.bf16.msra.mxu0 %v10362
    %10652 = vmatprep.subr.bf16.mxu0 %v10367
    %10653 = vmatpush1.bf16.msra.mxu0 %v10366
    %10654 = vmatprep.subr.bf16.mxu0 %v10371
    %10655 = vmatpush1.bf16.msra.mxu0 %v10370
    %10656 = vmatprep.subr.bf16.mxu0 %v10375
    %10657 = vmatpush1.bf16.msra.mxu0 %v10374
    %10658 = vmatprep.subr.bf16.mxu0 %v10379
    %10659 = vmatpush1.bf16.msra.mxu0 %v10378
    %10660 = vmatprep.subr.bf16.mxu0 %v10383
    %10661 = vmatpush1.bf16.msra.mxu0 %v10382
    %10662 = vmatprep.subr.bf16.mxu0 %v10387
    %10663 = vmatpush1.bf16.msra.mxu0 %v10386
    %10664 = vmatprep.subr.bf16.mxu0 %v10391
    %10665 = vmatpush1.bf16.msra.mxu0 %v10390
    %10666 = vmatprep.subr.bf16.mxu0 %v10395
    %10667 = vmatpush1.bf16.msra.mxu0 %v10394
    %10668 = vmatprep.subr.bf16.mxu0 %v10399
    %10669 = vmatpush1.bf16.msra.mxu0 %v10398
    %10670 = vmatprep.subr.bf16.mxu0 %v10403
    %10671 = vmatpush1.bf16.msra.mxu0 %v10402
    %10672 = vmatprep.subr.bf16.mxu0 %v10407
    %10673 = vmatpush1.bf16.msra.mxu0 %v10406
    %10674 = vmatprep.mubr.bf16.mxu0 %v5965
    %10675 = vmatmul.mubr.bf16.gmra.mrb[0].mxu0 %v5964
    %v10676 = vpop.f32.mrb[0].mxu0
    %v10677 = vadd.f32 0.0, %v10676
    %v10678 = vpop.f32.mrb[0].mxu0
    %v10679 = vadd.f32 0.0, %v10678
    %v10680 = vpop.f32.mrb[0].mxu0
    %v10681 = vadd.f32 0.0, %v10680
    %v10682 = vpop.f32.mrb[0].mxu0
    %v10683 = vadd.f32 0.0, %v10682
    %10684 = vmatprep.mubr.bf16.mxu0 %v9729
    %10685 = vmatmul.mubr.bf16.gmra.mrb[0].mxu0 %v9728
    %v10686 = vpop.f32.mrb[0].mxu0
    %v10687 = vadd.f32 0.0, %v10686
    %v10688 = vpop.f32.mrb[0].mxu0
    %v10689 = vadd.f32 0.0, %v10688
    %v10690 = vpop.f32.mrb[0].mxu0
    %v10691 = vadd.f32 0.0, %v10690
    %v10692 = vpop.f32.mrb[0].mxu0
    %v10693 = vadd.f32 0.0, %v10692
    %10694 = vdwg.mxu0
    %10695 = vmatprep.subr.bf16.mxu0 %v10411
    %10696 = vmatpush1.bf16.msra.mxu0 %v10410
    %10697 = vmatprep.subr.bf16.mxu0 %v10415
    %10698 = vmatpush1.bf16.msra.mxu0 %v10414
    %10699 = vmatprep.subr.bf16.mxu0 %v10419
    %10700 = vmatpush1.bf16.msra.mxu0 %v10418
    %10701 = vmatprep.subr.bf16.mxu0 %v10423
    %10702 = vmatpush1.bf16.msra.mxu0 %v10422
    %10703 = vmatprep.subr.bf16.mxu0 %v10427
    %10704 = vmatpush1.bf16.msra.mxu0 %v10426
    %10705 = vmatprep.subr.bf16.mxu0 %v10431
    %10706 = vmatpush1.bf16.msra.mxu0 %v10430
    %10707 = vmatprep.subr.bf16.mxu0 %v10435
    %10708 = vmatpush1.bf16.msra.mxu0 %v10434
    %10709 = vmatprep.subr.bf16.mxu0 %v10439
    %10710 = vmatpush1.bf16.msra.mxu0 %v10438
    %10711 = vmatprep.subr.bf16.mxu0 0
    %10712 = vmatpush1.bf16.msra.mxu0 0
    %10713 = vmatprep.subr.bf16.mxu0 0
    %10714 = vmatpush1.bf16.msra.mxu0 0
    %10715 = vmatprep.subr.bf16.mxu0 0
    %10716 = vmatpush1.bf16.msra.mxu0 0
    %10717 = vmatprep.subr.bf16.mxu0 0
    %10718 = vmatpush1.bf16.msra.mxu0 0
    %10719 = vmatprep.subr.bf16.mxu0 0
    %10720 = vmatpush1.bf16.msra.mxu0 0
    %10721 = vmatprep.subr.bf16.mxu0 0
    %10722 = vmatpush1.bf16.msra.mxu0 0
    %10723 = vmatprep.subr.bf16.mxu0 0
    %10724 = vmatpush1.bf16.msra.mxu0 0
    %10725 = vmatprep.subr.bf16.mxu0 0
    %10726 = vmatpush1.bf16.msra.mxu0 0
    %10727 = vmatprep.mubr.bf16.mxu0 0
    %10728 = vmatmul.mubr.bf16.gmra.mrb[0].mxu0 %v5966
    %v10729 = vpop.f32.mrb[0].mxu0
    %v10730 = vadd.f32 %v10677, %v10729
    %v10731 = vpop.f32.mrb[0].mxu0
    %v10732 = vadd.f32 %v10679, %v10731
    %v10733 = vpop.f32.mrb[0].mxu0
    %v10734 = vadd.f32 %v10681, %v10733
    %v10735 = vpop.f32.mrb[0].mxu0
    %v10736 = vadd.f32 %v10683, %v10735
    %10737 = vmatprep.mubr.bf16.mxu0 0
    %10738 = vmatmul.mubr.bf16.gmra.mrb[0].mxu0 %v9730
    %v10739 = vpop.f32.mrb[0].mxu0
    %v10740 = vadd.f32 %v10687, %v10739
    %v10741 = vpop.f32.mrb[0].mxu0
    %v10742 = vadd.f32 %v10689, %v10741
    %v10743 = vpop.f32.mrb[0].mxu0
    %v10744 = vadd.f32 %v10691, %v10743
    %v10745 = vpop.f32.mrb[0].mxu0
    %v10746 = vadd.f32 %v10693, %v10745
    %10747 = vdwg.mxu0
    %v10748 = vadd.f32 %v9712, %v10624
    %v10749 = vadd.f32 %v9713, %v10626
    %v10750 = vadd.f32 %v9714, %v10730
    %v10751 = vadd.f32 %v9715, %v10732
    %v10752 = vadd.f32 %v9716, %v10628
    %v10753 = vadd.f32 %v9717, %v10630
    %v10754 = vadd.f32 %v9718, %v10734
    %v10755 = vadd.f32 %v9719, %v10736
    %v10756 = vadd.f32 %v9720, %v10634
    %v10757 = vadd.f32 %v9721, %v10636
    %v10758 = vadd.f32 %v9722, %v10740
    %v10759 = vadd.f32 %v9723, %v10742
    %v10760 = vadd.f32 %v9724, %v10638
    %v10761 = vadd.f32 %v9725, %v10640
    %v10762 = vadd.f32 %v9726, %v10744
    %v10763 = vadd.f32 %v9727, %v10746
    %v10764 = vpack.c.bf16 %v5862, %v5859
    %v10765 = vpack.c.bf16 %v5863, %v5860
    %v10766 = vpack.c.bf16 %v5864, %v5861
    %10767 = vmatprep.subr.bf16.mxu0 %v10345
    %10768 = vmatpush1.bf16.msra.mxu0 %v10344
    %10769 = vmatprep.subr.bf16.mxu0 %v10349
    %10770 = vmatpush1.bf16.msra.mxu0 %v10348
    %10771 = vmatprep.subr.bf16.mxu0 %v10353
    %10772 = vmatpush1.bf16.msra.mxu0 %v10352
    %10773 = vmatprep.subr.bf16.mxu0 %v10357
    %10774 = vmatpush1.bf16.msra.mxu0 %v10356
    %10775 = vmatprep.subr.bf16.mxu0 %v10361
    %10776 = vmatpush1.bf16.msra.mxu0 %v10360
    %10777 = vmatprep.subr.bf16.mxu0 %v10365
    %10778 = vmatpush1.bf16.msra.mxu0 %v10364
    %10779 = vmatprep.subr.bf16.mxu0 %v10369
    %10780 = vmatpush1.bf16.msra.mxu0 %v10368
    %10781 = vmatprep.subr.bf16.mxu0 %v10373
    %10782 = vmatpush1.bf16.msra.mxu0 %v10372
    %10783 = vmatprep.subr.bf16.mxu0 %v10377
    %10784 = vmatpush1.bf16.msra.mxu0 %v10376
    %10785 = vmatprep.subr.bf16.mxu0 %v10381
    %10786 = vmatpush1.bf16.msra.mxu0 %v10380
    %10787 = vmatprep.subr.bf16.mxu0 %v10385
    %10788 = vmatpush1.bf16.msra.mxu0 %v10384
    %10789 = vmatprep.subr.bf16.mxu0 %v10389
    %10790 = vmatpush1.bf16.msra.mxu0 %v10388
    %10791 = vmatprep.subr.bf16.mxu0 %v10393
    %10792 = vmatpush1.bf16.msra.mxu0 %v10392
    %10793 = vmatprep.subr.bf16.mxu0 %v10397
    %10794 = vmatpush1.bf16.msra.mxu0 %v10396
    %10795 = vmatprep.subr.bf16.mxu0 %v10401
    %10796 = vmatpush1.bf16.msra.mxu0 %v10400
    %10797 = vmatprep.subr.bf16.mxu0 %v10405
    %10798 = vmatpush1.bf16.msra.mxu0 %v10404
    %10799 = vmatprep.mubr.bf16.mxu0 %v5971
    %10800 = vmatmul.mubr.bf16.gmra.mrb[0].mxu0 %v5970
    %v10801 = vpop.f32.mrb[0].mxu0
    %v10802 = vadd.f32 0.0, %v10801
    %v10803 = vpop.f32.mrb[0].mxu0
    %v10804 = vadd.f32 0.0, %v10803
    %v10805 = vpop.f32.mrb[0].mxu0
    %v10806 = vadd.f32 0.0, %v10805
    %v10807 = vpop.f32.mrb[0].mxu0
    %v10808 = vadd.f32 0.0, %v10807
    %10809 = vmatprep.mubr.bf16.mxu0 %v10765
    %10810 = vmatmul.mubr.bf16.gmra.mrb[0].mxu0 %v10764
    %v10811 = vpop.f32.mrb[0].mxu0
    %v10812 = vadd.f32 0.0, %v10811
    %v10813 = vpop.f32.mrb[0].mxu0
    %v10814 = vadd.f32 0.0, %v10813
    %v10815 = vpop.f32.mrb[0].mxu0
    %v10816 = vadd.f32 0.0, %v10815
    %v10817 = vpop.f32.mrb[0].mxu0
    %v10818 = vadd.f32 0.0, %v10817
    %10819 = vdwg.mxu0
    %10820 = vmatprep.subr.bf16.mxu0 %v10409
    %10821 = vmatpush1.bf16.msra.mxu0 %v10408
    %10822 = vmatprep.subr.bf16.mxu0 %v10413
    %10823 = vmatpush1.bf16.msra.mxu0 %v10412
    %10824 = vmatprep.subr.bf16.mxu0 %v10417
    %10825 = vmatpush1.bf16.msra.mxu0 %v10416
    %10826 = vmatprep.subr.bf16.mxu0 %v10421
    %10827 = vmatpush1.bf16.msra.mxu0 %v10420
    %10828 = vmatprep.subr.bf16.mxu0 %v10425
    %10829 = vmatpush1.bf16.msra.mxu0 %v10424
    %10830 = vmatprep.subr.bf16.mxu0 %v10429
    %10831 = vmatpush1.bf16.msra.mxu0 %v10428
    %10832 = vmatprep.subr.bf16.mxu0 %v10433
    %10833 = vmatpush1.bf16.msra.mxu0 %v10432
    %10834 = vmatprep.subr.bf16.mxu0 %v10437
    %10835 = vmatpush1.bf16.msra.mxu0 %v10436
    %10836 = vmatprep.subr.bf16.mxu0 0
    %10837 = vmatpush1.bf16.msra.mxu0 0
    %10838 = vmatprep.subr.bf16.mxu0 0
    %10839 = vmatpush1.bf16.msra.mxu0 0
    %10840 = vmatprep.subr.bf16.mxu0 0
    %10841 = vmatpush1.bf16.msra.mxu0 0
    %10842 = vmatprep.subr.bf16.mxu0 0
    %10843 = vmatpush1.bf16.msra.mxu0 0
    %10844 = vmatprep.subr.bf16.mxu0 0
    %10845 = vmatpush1.bf16.msra.mxu0 0
    %10846 = vmatprep.subr.bf16.mxu0 0
    %10847 = vmatpush1.bf16.msra.mxu0 0
    %10848 = vmatprep.subr.bf16.mxu0 0
    %10849 = vmatpush1.bf16.msra.mxu0 0
    %10850 = vmatprep.subr.bf16.mxu0 0
    %10851 = vmatpush1.bf16.msra.mxu0 0
    %10852 = vmatprep.mubr.bf16.mxu0 0
    %10853 = vmatmul.mubr.bf16.gmra.mrb[0].mxu0 %v5972
    %v10854 = vpop.f32.mrb[0].mxu0
    %v10855 = vadd.f32 %v10802, %v10854
    %v10856 = vpop.f32.mrb[0].mxu0
    %v10857 = vadd.f32 %v10804, %v10856
    %v10858 = vpop.f32.mrb[0].mxu0
    %v10859 = vadd.f32 %v10806, %v10858
    %v10860 = vpop.f32.mrb[0].mxu0
    %v10861 = vadd.f32 %v10808, %v10860
    %10862 = vmatprep.mubr.bf16.mxu0 0
    %10863 = vmatmul.mubr.bf16.gmra.mrb[0].mxu0 %v10766
    %v10864 = vpop.f32.mrb[0].mxu0
    %v10865 = vadd.f32 %v10812, %v10864
    %v10866 = vpop.f32.mrb[0].mxu0
    %v10867 = vadd.f32 %v10814, %v10866
    %v10868 = vpop.f32.mrb[0].mxu0
    %v10869 = vadd.f32 %v10816, %v10868
    %v10870 = vpop.f32.mrb[0].mxu0
    %v10871 = vadd.f32 %v10818, %v10870
    %10872 = vdwg.mxu0
    %10873 = vmatprep.subr.bf16.mxu0 %v10347
    %10874 = vmatpush1.bf16.msra.mxu0 %v10346
    %10875 = vmatprep.subr.bf16.mxu0 %v10351
    %10876 = vmatpush1.bf16.msra.mxu0 %v10350
    %10877 = vmatprep.subr.bf16.mxu0 %v10355
    %10878 = vmatpush1.bf16.msra.mxu0 %v10354
    %10879 = vmatprep.subr.bf16.mxu0 %v10359
    %10880 = vmatpush1.bf16.msra.mxu0 %v10358
    %10881 = vmatprep.subr.bf16.mxu0 %v10363
    %10882 = vmatpush1.bf16.msra.mxu0 %v10362
    %10883 = vmatprep.subr.bf16.mxu0 %v10367
    %10884 = vmatpush1.bf16.msra.mxu0 %v10366
    %10885 = vmatprep.subr.bf16.mxu0 %v10371
    %10886 = vmatpush1.bf16.msra.mxu0 %v10370
    %10887 = vmatprep.subr.bf16.mxu0 %v10375
    %10888 = vmatpush1.bf16.msra.mxu0 %v10374
    %10889 = vmatprep.subr.bf16.mxu0 %v10379
    %10890 = vmatpush1.bf16.msra.mxu0 %v10378
    %10891 = vmatprep.subr.bf16.mxu0 %v10383
    %10892 = vmatpush1.bf16.msra.mxu0 %v10382
    %10893 = vmatprep.subr.bf16.mxu0 %v10387
    %10894 = vmatpush1.bf16.msra.mxu0 %v10386
    %10895 = vmatprep.subr.bf16.mxu0 %v10391
    %10896 = vmatpush1.bf16.msra.mxu0 %v10390
    %10897 = vmatprep.subr.bf16.mxu0 %v10395
    %10898 = vmatpush1.bf16.msra.mxu0 %v10394
    %10899 = vmatprep.subr.bf16.mxu0 %v10399
    %10900 = vmatpush1.bf16.msra.mxu0 %v10398
    %10901 = vmatprep.subr.bf16.mxu0 %v10403
    %10902 = vmatpush1.bf16.msra.mxu0 %v10402
    %10903 = vmatprep.subr.bf16.mxu0 %v10407
    %10904 = vmatpush1.bf16.msra.mxu0 %v10406
    %10905 = vmatprep.mubr.bf16.mxu0 %v5971
    %10906 = vmatmul.mubr.bf16.gmra.mrb[0].mxu0 %v5970
    %v10907 = vpop.f32.mrb[0].mxu0
    %v10908 = vadd.f32 0.0, %v10907
    %v10909 = vpop.f32.mrb[0].mxu0
    %v10910 = vadd.f32 0.0, %v10909
    %v10911 = vpop.f32.mrb[0].mxu0
    %v10912 = vadd.f32 0.0, %v10911
    %v10913 = vpop.f32.mrb[0].mxu0
    %v10914 = vadd.f32 0.0, %v10913
    %10915 = vmatprep.mubr.bf16.mxu0 %v10765
    %10916 = vmatmul.mubr.bf16.gmra.mrb[0].mxu0 %v10764
    %v10917 = vpop.f32.mrb[0].mxu0
    %v10918 = vadd.f32 0.0, %v10917
    %v10919 = vpop.f32.mrb[0].mxu0
    %v10920 = vadd.f32 0.0, %v10919
    %v10921 = vpop.f32.mrb[0].mxu0
    %v10922 = vadd.f32 0.0, %v10921
    %v10923 = vpop.f32.mrb[0].mxu0
    %v10924 = vadd.f32 0.0, %v10923
    %10925 = vdwg.mxu0
    %10926 = vmatprep.subr.bf16.mxu0 %v10411
    %10927 = vmatpush1.bf16.msra.mxu0 %v10410
    %10928 = vmatprep.subr.bf16.mxu0 %v10415
    %10929 = vmatpush1.bf16.msra.mxu0 %v10414
    %10930 = vmatprep.subr.bf16.mxu0 %v10419
    %10931 = vmatpush1.bf16.msra.mxu0 %v10418
    %10932 = vmatprep.subr.bf16.mxu0 %v10423
    %10933 = vmatpush1.bf16.msra.mxu0 %v10422
    %10934 = vmatprep.subr.bf16.mxu0 %v10427
    %10935 = vmatpush1.bf16.msra.mxu0 %v10426
    %10936 = vmatprep.subr.bf16.mxu0 %v10431
    %10937 = vmatpush1.bf16.msra.mxu0 %v10430
    %10938 = vmatprep.subr.bf16.mxu0 %v10435
    %10939 = vmatpush1.bf16.msra.mxu0 %v10434
    %10940 = vmatprep.subr.bf16.mxu0 %v10439
    %10941 = vmatpush1.bf16.msra.mxu0 %v10438
    %10942 = vmatprep.subr.bf16.mxu0 0
    %10943 = vmatpush1.bf16.msra.mxu0 0
    %10944 = vmatprep.subr.bf16.mxu0 0
    %10945 = vmatpush1.bf16.msra.mxu0 0
    %10946 = vmatprep.subr.bf16.mxu0 0
    %10947 = vmatpush1.bf16.msra.mxu0 0
    %10948 = vmatprep.subr.bf16.mxu0 0
    %10949 = vmatpush1.bf16.msra.mxu0 0
    %10950 = vmatprep.subr.bf16.mxu0 0
    %10951 = vmatpush1.bf16.msra.mxu0 0
    %10952 = vmatprep.subr.bf16.mxu0 0
    %10953 = vmatpush1.bf16.msra.mxu0 0
    %10954 = vmatprep.subr.bf16.mxu0 0
    %10955 = vmatpush1.bf16.msra.mxu0 0
    %10956 = vmatprep.subr.bf16.mxu0 0
    %10957 = vmatpush1.bf16.msra.mxu0 0
    %10958 = vmatprep.mubr.bf16.mxu0 0
    %10959 = vmatmul.mubr.bf16.gmra.mrb[0].mxu0 %v5972
    %v10960 = vpop.f32.mrb[0].mxu0
    %v10961 = vadd.f32 %v10908, %v10960
    %v10962 = vpop.f32.mrb[0].mxu0
    %v10963 = vadd.f32 %v10910, %v10962
    %v10964 = vpop.f32.mrb[0].mxu0
    %v10965 = vadd.f32 %v10912, %v10964
    %v10966 = vpop.f32.mrb[0].mxu0
    %v10967 = vadd.f32 %v10914, %v10966
    %10968 = vmatprep.mubr.bf16.mxu0 0
    %10969 = vmatmul.mubr.bf16.gmra.mrb[0].mxu0 %v10766
    %v10970 = vpop.f32.mrb[0].mxu0
    %v10971 = vadd.f32 %v10918, %v10970
    %v10972 = vpop.f32.mrb[0].mxu0
    %v10973 = vadd.f32 %v10920, %v10972
    %v10974 = vpop.f32.mrb[0].mxu0
    %v10975 = vadd.f32 %v10922, %v10974
    %v10976 = vpop.f32.mrb[0].mxu0
    %v10977 = vadd.f32 %v10924, %v10976
    %10978 = vdwg.mxu0
    %v10979 = vadd.f32 %v9943, %v10855
    %v10980 = vadd.f32 %v9944, %v10857
    %v10981 = vadd.f32 %v9945, %v10961
    %v10982 = vadd.f32 %v9946, %v10963
    %v10983 = vadd.f32 %v9947, %v10859
    %v10984 = vadd.f32 %v9948, %v10861
    %v10985 = vadd.f32 %v9949, %v10965
    %v10986 = vadd.f32 %v9950, %v10967
    %v10987 = vadd.f32 %v9951, %v10865
    %v10988 = vadd.f32 %v9952, %v10867
    %v10989 = vadd.f32 %v9953, %v10971
    %v10990 = vadd.f32 %v9954, %v10973
    %v10991 = vadd.f32 %v9955, %v10869
    %v10992 = vadd.f32 %v9956, %v10871
    %v10993 = vadd.f32 %v9957, %v10975
    %v10994 = vadd.f32 %v9958, %v10977
    %v10995 = vld [vmem:[#allocation7] sm:$0xf]
    %v10997 = vlaneseq
    %v10998 = vshrl.u32 %v10997, 7
    %v10999 = vsub.s32 0, %v10998
    %v11000 = vrot.slane %v10995, %v10999
    %v11001 = vlaneseq
    %v11002 = vshrl.u32 %v11001, 7
    %v11003 = vsub.s32 1, %v11002
    %v11004 = vrot.slane %v10995, %v11003
    %v11005 = vlaneseq
    %v11006 = vshrl.u32 %v11005, 7
    %v11007 = vsub.s32 2, %v11006
    %v11008 = vrot.slane %v10995, %v11007
    %v11009 = vlaneseq
    %v11010 = vshrl.u32 %v11009, 7
    %v11011 = vsub.s32 3, %v11010
    %v11012 = vrot.slane %v10995, %v11011
    %v11017 = vadd.f32 %v10748, %v11000
    %v11018 = vadd.f32 %v10749, %v11004
    %v11019 = vadd.f32 %v10750, %v11008
    %v11020 = vadd.f32 %v10751, %v11012
    %v11021 = vadd.f32 %v10752, %v11000
    %v11022 = vadd.f32 %v10753, %v11004
    %v11023 = vadd.f32 %v10754, %v11008
    %v11024 = vadd.f32 %v10755, %v11012
    %v11025 = vadd.f32 %v10756, %v11000
    %v11026 = vadd.f32 %v10757, %v11004
    %v11027 = vadd.f32 %v10758, %v11008
    %v11028 = vadd.f32 %v10759, %v11012
    %v11029 = vadd.f32 %v10760, %v11000
    %v11030 = vadd.f32 %v10761, %v11004
    %v11031 = vadd.f32 %v10762, %v11008
    %v11032 = vadd.f32 %v10763, %v11012
    %v11033 = vadd.f32 %v10979, %v11000
    %v11034 = vadd.f32 %v10980, %v11004
    %v11035 = vadd.f32 %v10981, %v11008
    %v11036 = vadd.f32 %v10982, %v11012
    %v11037 = vadd.f32 %v10983, %v11000
    %v11038 = vadd.f32 %v10984, %v11004
    %v11039 = vadd.f32 %v10985, %v11008
    %v11040 = vadd.f32 %v10986, %v11012
    %v11041 = vadd.f32 %v10987, %v11000
    %v11042 = vadd.f32 %v10988, %v11004
    %v11043 = vadd.f32 %v10989, %v11008
    %v11044 = vadd.f32 %v10990, %v11012
    %v11045 = vadd.f32 %v10991, %v11000
    %v11046 = vadd.f32 %v10992, %v11004
    %v11047 = vadd.f32 %v10993, %v11008
    %v11048 = vadd.f32 %v10994, %v11012
    %v11049 = vmax.f32 %v11017, %v11033
    %v11050 = vmax.f32 %v11018, %v11034
    %v11051 = vmax.f32 %v11019, %v11035
    %v11052 = vmax.f32 %v11020, %v11036
    %v11053 = vmax.f32 %v11021, %v11037
    %v11054 = vmax.f32 %v11022, %v11038
    %v11055 = vmax.f32 %v11023, %v11039
    %v11056 = vmax.f32 %v11024, %v11040
    %v11057 = vmax.f32 %v11025, %v11041
    %v11058 = vmax.f32 %v11026, %v11042
    %v11059 = vmax.f32 %v11027, %v11043
    %v11060 = vmax.f32 %v11028, %v11044
    %v11061 = vmax.f32 %v11029, %v11045
    %v11062 = vmax.f32 %v11030, %v11046
    %v11063 = vmax.f32 %v11031, %v11047
    %v11064 = vmax.f32 %v11032, %v11048
    %v11065 = vmax.f32 %v11049, %v11051
    %v11066 = vmax.f32 %v11050, %v11052
    %v11067 = vmax.f32 %v11053, %v11055
    %v11068 = vmax.f32 %v11054, %v11056
    %v11069 = vmax.f32 %v11057, %v11059
    %v11070 = vmax.f32 %v11058, %v11060
    %v11071 = vmax.f32 %v11061, %v11063
    %v11072 = vmax.f32 %v11062, %v11064
    %v11073 = vmax.f32 %v11065, 0.0
    %v11074 = vmax.f32 %v11066, 0.0
    %v11075 = vmax.f32 %v11067, 0.0
    %v11076 = vmax.f32 %v11068, 0.0
    %v11077 = vmax.f32 %v11069, 0.0
    %v11078 = vmax.f32 %v11070, 0.0
    %v11079 = vmax.f32 %v11071, 0.0
    %v11080 = vmax.f32 %v11072, 0.0
    %v11081 = vld [vmem:[#allocation10] sm:$0xf]
    %v11083 = vlaneseq
    %v11084 = vshrl.u32 %v11083, 7
    %v11085 = vsub.s32 0, %v11084
    %v11086 = vrot.slane %v11081, %v11085
    %v11087 = vlaneseq
    %v11088 = vshrl.u32 %v11087, 7
    %v11089 = vsub.s32 1, %v11088
    %v11090 = vrot.slane %v11081, %v11089
    %v11091 = vlaneseq
    %v11092 = vshrl.u32 %v11091, 7
    %v11093 = vsub.s32 2, %v11092
    %v11094 = vrot.slane %v11081, %v11093
    %v11095 = vlaneseq
    %v11096 = vshrl.u32 %v11095, 7
    %v11097 = vsub.s32 3, %v11096
    %v11098 = vrot.slane %v11081, %v11097
    %v11103 = vadd.f32 %v11086, 0.0
    %v11104 = vadd.f32 %v11090, 0.0
    %v11105 = vadd.f32 %v11094, 0.0
    %v11106 = vadd.f32 %v11098, 0.0
    %v11107 = vpack.c.bf16 %v11073, %v11073
    %v11108 = vpack.c.bf16 %v11074, %v11074
    %v11109 = vld [vmem:[#allocation9] sm:$0xff]
    %v11110 = vld [vmem:[#allocation9 + $0x8] sm:$0xff]
    %v11111 = vld [vmem:[#allocation9 + $0x10] sm:$0xff]
    %v11112 = vld [vmem:[#allocation9 + $0x18] sm:$0xff]
    %v11113 = vld [vmem:[#allocation9 + $0x20] sm:$0xff]
    %v11114 = vld [vmem:[#allocation9 + $0x28] sm:$0xff]
    %v11115 = vld [vmem:[#allocation9 + $0x30] sm:$0xff]
    %v11116 = vld [vmem:[#allocation9 + $0x38] sm:$0xff]
    %v11117 = vld [vmem:[#allocation9 + $0x40] sm:$0xff]
    %v11118 = vld [vmem:[#allocation9 + $0x48] sm:$0xff]
    %v11119 = vld [vmem:[#allocation9 + $0x50] sm:$0xff]
    %v11120 = vld [vmem:[#allocation9 + $0x58] sm:$0xff]
    %v11121 = vld [vmem:[#allocation9 + $0x60] sm:$0xff]
    %v11122 = vld [vmem:[#allocation9 + $0x68] sm:$0xff]
    %v11123 = vld [vmem:[#allocation9 + $0x70] sm:$0xff]
    %v11124 = vld [vmem:[#allocation9 + $0x78] sm:$0xff]
    %v11125 = vld [vmem:[#allocation9 + $0x80] sm:$0xff]
    %v11126 = vld [vmem:[#allocation9 + $0x88] sm:$0xff]
    %v11127 = vld [vmem:[#allocation9 + $0x90] sm:$0xff]
    %v11128 = vld [vmem:[#allocation9 + $0x98] sm:$0xff]
    %v11129 = vld [vmem:[#allocation9 + $0xa0] sm:$0xff]
    %v11130 = vld [vmem:[#allocation9 + $0xa8] sm:$0xff]
    %v11131 = vld [vmem:[#allocation9 + $0xb0] sm:$0xff]
    %v11132 = vld [vmem:[#allocation9 + $0xb8] sm:$0xff]
    %v11133 = vld [vmem:[#allocation9 + $0xc0] sm:$0xff]
    %v11134 = vld [vmem:[#allocation9 + $0xc8] sm:$0xff]
    %v11135 = vld [vmem:[#allocation9 + $0xd0] sm:$0xff]
    %v11136 = vld [vmem:[#allocation9 + $0xd8] sm:$0xff]
    %v11137 = vld [vmem:[#allocation9 + $0xe0] sm:$0xff]
    %v11138 = vld [vmem:[#allocation9 + $0xe8] sm:$0xff]
    %v11139 = vld [vmem:[#allocation9 + $0xf0] sm:$0xff]
    %v11140 = vld [vmem:[#allocation9 + $0xf8] sm:$0xff]
    %v11141 = vld [vmem:[#allocation9 + $0x100] sm:$0xff]
    %v11142 = vld [vmem:[#allocation9 + $0x108] sm:$0xff]
    %v11143 = vld [vmem:[#allocation9 + $0x110] sm:$0xff]
    %v11144 = vld [vmem:[#allocation9 + $0x118] sm:$0xff]
    %v11145 = vld [vmem:[#allocation9 + $0x120] sm:$0xff]
    %v11146 = vld [vmem:[#allocation9 + $0x128] sm:$0xff]
    %v11147 = vld [vmem:[#allocation9 + $0x130] sm:$0xff]
    %v11148 = vld [vmem:[#allocation9 + $0x138] sm:$0xff]
    %v11149 = vld [vmem:[#allocation9 + $0x140] sm:$0xff]
    %v11150 = vld [vmem:[#allocation9 + $0x148] sm:$0xff]
    %v11151 = vld [vmem:[#allocation9 + $0x150] sm:$0xff]
    %v11152 = vld [vmem:[#allocation9 + $0x158] sm:$0xff]
    %v11153 = vld [vmem:[#allocation9 + $0x160] sm:$0xff]
    %v11154 = vld [vmem:[#allocation9 + $0x168] sm:$0xff]
    %v11155 = vld [vmem:[#allocation9 + $0x170] sm:$0xff]
    %v11156 = vld [vmem:[#allocation9 + $0x178] sm:$0xff]
    %v11157 = vld [vmem:[#allocation9 + $0x180] sm:$0xff]
    %v11158 = vld [vmem:[#allocation9 + $0x188] sm:$0xff]
    %v11159 = vld [vmem:[#allocation9 + $0x190] sm:$0xff]
    %v11160 = vld [vmem:[#allocation9 + $0x198] sm:$0xff]
    %v11161 = vld [vmem:[#allocation9 + $0x1a0] sm:$0xff]
    %v11162 = vld [vmem:[#allocation9 + $0x1a8] sm:$0xff]
    %v11163 = vld [vmem:[#allocation9 + $0x1b0] sm:$0xff]
    %v11164 = vld [vmem:[#allocation9 + $0x1b8] sm:$0xff]
    %v11165 = vld [vmem:[#allocation9 + $0x1c0] sm:$0xff]
    %v11166 = vld [vmem:[#allocation9 + $0x1c8] sm:$0xff]
    %v11167 = vld [vmem:[#allocation9 + $0x1d0] sm:$0xff]
    %v11168 = vld [vmem:[#allocation9 + $0x1d8] sm:$0xff]
    %v11169 = vld [vmem:[#allocation9 + $0x1e0] sm:$0xff]
    %v11170 = vld [vmem:[#allocation9 + $0x1e8] sm:$0xff]
    %v11171 = vld [vmem:[#allocation9 + $0x1f0] sm:$0xff]
    %v11172 = vld [vmem:[#allocation9 + $0x1f8] sm:$0xff]
    %v11237 = vunpack.c.l.b16 %v11109
    %v11238 = vunpack.c.h.b16 %v11109
    %v11239 = vunpack.c.l.b16 %v11110
    %v11240 = vunpack.c.h.b16 %v11110
    %v11241 = vunpack.c.l.b16 %v11111
    %v11242 = vunpack.c.h.b16 %v11111
    %v11243 = vunpack.c.l.b16 %v11112
    %v11244 = vunpack.c.h.b16 %v11112
    %v11245 = vunpack.c.l.b16 %v11113
    %v11246 = vunpack.c.h.b16 %v11113
    %v11247 = vunpack.c.l.b16 %v11114
    %v11248 = vunpack.c.h.b16 %v11114
    %v11249 = vunpack.c.l.b16 %v11115
    %v11250 = vunpack.c.h.b16 %v11115
    %v11251 = vunpack.c.l.b16 %v11116
    %v11252 = vunpack.c.h.b16 %v11116
    %v11253 = vunpack.c.l.b16 %v11117
    %v11254 = vunpack.c.h.b16 %v11117
    %v11255 = vunpack.c.l.b16 %v11118
    %v11256 = vunpack.c.h.b16 %v11118
    %v11257 = vunpack.c.l.b16 %v11119
    %v11258 = vunpack.c.h.b16 %v11119
    %v11259 = vunpack.c.l.b16 %v11120
    %v11260 = vunpack.c.h.b16 %v11120
    %v11261 = vunpack.c.l.b16 %v11121
    %v11262 = vunpack.c.h.b16 %v11121
    %v11263 = vunpack.c.l.b16 %v11122
    %v11264 = vunpack.c.h.b16 %v11122
    %v11265 = vunpack.c.l.b16 %v11123
    %v11266 = vunpack.c.h.b16 %v11123
    %v11267 = vunpack.c.l.b16 %v11124
    %v11268 = vunpack.c.h.b16 %v11124
    %v11269 = vunpack.c.l.b16 %v11125
    %v11270 = vunpack.c.h.b16 %v11125
    %v11271 = vunpack.c.l.b16 %v11126
    %v11272 = vunpack.c.h.b16 %v11126
    %v11273 = vunpack.c.l.b16 %v11127
    %v11274 = vunpack.c.h.b16 %v11127
    %v11275 = vunpack.c.l.b16 %v11128
    %v11276 = vunpack.c.h.b16 %v11128
    %v11277 = vunpack.c.l.b16 %v11129
    %v11278 = vunpack.c.h.b16 %v11129
    %v11279 = vunpack.c.l.b16 %v11130
    %v11280 = vunpack.c.h.b16 %v11130
    %v11281 = vunpack.c.l.b16 %v11131
    %v11282 = vunpack.c.h.b16 %v11131
    %v11283 = vunpack.c.l.b16 %v11132
    %v11284 = vunpack.c.h.b16 %v11132
    %v11285 = vunpack.c.l.b16 %v11133
    %v11286 = vunpack.c.h.b16 %v11133
    %v11287 = vunpack.c.l.b16 %v11134
    %v11288 = vunpack.c.h.b16 %v11134
    %v11289 = vunpack.c.l.b16 %v11135
    %v11290 = vunpack.c.h.b16 %v11135
    %v11291 = vunpack.c.l.b16 %v11136
    %v11292 = vunpack.c.h.b16 %v11136
    %v11293 = vunpack.c.l.b16 %v11137
    %v11294 = vunpack.c.h.b16 %v11137
    %v11295 = vunpack.c.l.b16 %v11138
    %v11296 = vunpack.c.h.b16 %v11138
    %v11297 = vunpack.c.l.b16 %v11139
    %v11298 = vunpack.c.h.b16 %v11139
    %v11299 = vunpack.c.l.b16 %v11140
    %v11300 = vunpack.c.h.b16 %v11140
    %v11301 = vunpack.c.l.b16 %v11141
    %v11302 = vunpack.c.h.b16 %v11141
    %v11303 = vunpack.c.l.b16 %v11142
    %v11304 = vunpack.c.h.b16 %v11142
    %v11305 = vunpack.c.l.b16 %v11143
    %v11306 = vunpack.c.h.b16 %v11143
    %v11307 = vunpack.c.l.b16 %v11144
    %v11308 = vunpack.c.h.b16 %v11144
    %v11309 = vunpack.c.l.b16 %v11145
    %v11310 = vunpack.c.h.b16 %v11145
    %v11311 = vunpack.c.l.b16 %v11146
    %v11312 = vunpack.c.h.b16 %v11146
    %v11313 = vunpack.c.l.b16 %v11147
    %v11314 = vunpack.c.h.b16 %v11147
    %v11315 = vunpack.c.l.b16 %v11148
    %v11316 = vunpack.c.h.b16 %v11148
    %v11317 = vunpack.c.l.b16 %v11149
    %v11318 = vunpack.c.h.b16 %v11149
    %v11319 = vunpack.c.l.b16 %v11150
    %v11320 = vunpack.c.h.b16 %v11150
    %v11321 = vunpack.c.l.b16 %v11151
    %v11322 = vunpack.c.h.b16 %v11151
    %v11323 = vunpack.c.l.b16 %v11152
    %v11324 = vunpack.c.h.b16 %v11152
    %v11325 = vunpack.c.l.b16 %v11153
    %v11326 = vunpack.c.h.b16 %v11153
    %v11327 = vunpack.c.l.b16 %v11154
    %v11328 = vunpack.c.h.b16 %v11154
    %v11329 = vunpack.c.l.b16 %v11155
    %v11330 = vunpack.c.h.b16 %v11155
    %v11331 = vunpack.c.l.b16 %v11156
    %v11332 = vunpack.c.h.b16 %v11156
    %v11333 = vunpack.c.l.b16 %v11157
    %v11334 = vunpack.c.h.b16 %v11157
    %v11335 = vunpack.c.l.b16 %v11158
    %v11336 = vunpack.c.h.b16 %v11158
    %v11337 = vunpack.c.l.b16 %v11159
    %v11338 = vunpack.c.h.b16 %v11159
    %v11339 = vunpack.c.l.b16 %v11160
    %v11340 = vunpack.c.h.b16 %v11160
    %v11341 = vunpack.c.l.b16 %v11161
    %v11342 = vunpack.c.h.b16 %v11161
    %v11343 = vunpack.c.l.b16 %v11162
    %v11344 = vunpack.c.h.b16 %v11162
    %v11345 = vunpack.c.l.b16 %v11163
    %v11346 = vunpack.c.h.b16 %v11163
    %v11347 = vunpack.c.l.b16 %v11164
    %v11348 = vunpack.c.h.b16 %v11164
    %v11349 = vunpack.c.l.b16 %v11165
    %v11350 = vunpack.c.h.b16 %v11165
    %v11351 = vunpack.c.l.b16 %v11166
    %v11352 = vunpack.c.h.b16 %v11166
    %v11353 = vunpack.c.l.b16 %v11167
    %v11354 = vunpack.c.h.b16 %v11167
    %v11355 = vunpack.c.l.b16 %v11168
    %v11356 = vunpack.c.h.b16 %v11168
    %v11357 = vunpack.c.l.b16 %v11169
    %v11358 = vunpack.c.h.b16 %v11169
    %v11359 = vunpack.c.l.b16 %v11170
    %v11360 = vunpack.c.h.b16 %v11170
    %v11361 = vunpack.c.l.b16 %v11171
    %v11362 = vunpack.c.h.b16 %v11171
    %v11363 = vunpack.c.l.b16 %v11172
    %v11364 = vunpack.c.h.b16 %v11172
    %v11365 = vpack.c.b16 %v11241, %v11237
    %v11366 = vpack.c.b16 %v11242, %v11238
    %v11367 = vpack.c.b16 %v11243, %v11239
    %v11368 = vpack.c.b16 %v11244, %v11240
    %v11369 = vpack.c.b16 %v11249, %v11245
    %v11370 = vpack.c.b16 %v11250, %v11246
    %v11371 = vpack.c.b16 %v11251, %v11247
    %v11372 = vpack.c.b16 %v11252, %v11248
    %v11373 = vpack.c.b16 %v11257, %v11253
    %v11374 = vpack.c.b16 %v11258, %v11254
    %v11375 = vpack.c.b16 %v11259, %v11255
    %v11376 = vpack.c.b16 %v11260, %v11256
    %v11377 = vpack.c.b16 %v11265, %v11261
    %v11378 = vpack.c.b16 %v11266, %v11262
    %v11379 = vpack.c.b16 %v11267, %v11263
    %v11380 = vpack.c.b16 %v11268, %v11264
    %v11381 = vpack.c.b16 %v11273, %v11269
    %v11382 = vpack.c.b16 %v11274, %v11270
    %v11383 = vpack.c.b16 %v11275, %v11271
    %v11384 = vpack.c.b16 %v11276, %v11272
    %v11385 = vpack.c.b16 %v11281, %v11277
    %v11386 = vpack.c.b16 %v11282, %v11278
    %v11387 = vpack.c.b16 %v11283, %v11279
    %v11388 = vpack.c.b16 %v11284, %v11280
    %v11389 = vpack.c.b16 %v11289, %v11285
    %v11390 = vpack.c.b16 %v11290, %v11286
    %v11391 = vpack.c.b16 %v11291, %v11287
    %v11392 = vpack.c.b16 %v11292, %v11288
    %v11393 = vpack.c.b16 %v11297, %v11293
    %v11394 = vpack.c.b16 %v11298, %v11294
    %v11395 = vpack.c.b16 %v11299, %v11295
    %v11396 = vpack.c.b16 %v11300, %v11296
    %v11397 = vpack.c.b16 %v11305, %v11301
    %v11398 = vpack.c.b16 %v11306, %v11302
    %v11399 = vpack.c.b16 %v11307, %v11303
    %v11400 = vpack.c.b16 %v11308, %v11304
    %v11401 = vpack.c.b16 %v11313, %v11309
    %v11402 = vpack.c.b16 %v11314, %v11310
    %v11403 = vpack.c.b16 %v11315, %v11311
    %v11404 = vpack.c.b16 %v11316, %v11312
    %v11405 = vpack.c.b16 %v11321, %v11317
    %v11406 = vpack.c.b16 %v11322, %v11318
    %v11407 = vpack.c.b16 %v11323, %v11319
    %v11408 = vpack.c.b16 %v11324, %v11320
    %v11409 = vpack.c.b16 %v11329, %v11325
    %v11410 = vpack.c.b16 %v11330, %v11326
    %v11411 = vpack.c.b16 %v11331, %v11327
    %v11412 = vpack.c.b16 %v11332, %v11328
    %v11413 = vpack.c.b16 %v11337, %v11333
    %v11414 = vpack.c.b16 %v11338, %v11334
    %v11415 = vpack.c.b16 %v11339, %v11335
    %v11416 = vpack.c.b16 %v11340, %v11336
    %v11417 = vpack.c.b16 %v11345, %v11341
    %v11418 = vpack.c.b16 %v11346, %v11342
    %v11419 = vpack.c.b16 %v11347, %v11343
    %v11420 = vpack.c.b16 %v11348, %v11344
    %v11421 = vpack.c.b16 %v11353, %v11349
    %v11422 = vpack.c.b16 %v11354, %v11350
    %v11423 = vpack.c.b16 %v11355, %v11351
    %v11424 = vpack.c.b16 %v11356, %v11352
    %v11425 = vpack.c.b16 %v11361, %v11357
    %v11426 = vpack.c.b16 %v11362, %v11358
    %v11427 = vpack.c.b16 %v11363, %v11359
    %v11428 = vpack.c.b16 %v11364, %v11360
    %11493 = vmatprep.subr.bf16.mxu0 %v11366
    %11494 = vmatpush1.bf16.msra.mxu0 %v11365
    %11495 = vmatprep.subr.bf16.mxu0 %v11370
    %11496 = vmatpush1.bf16.msra.mxu0 %v11369
    %11497 = vmatprep.subr.bf16.mxu0 %v11374
    %11498 = vmatpush1.bf16.msra.mxu0 %v11373
    %11499 = vmatprep.subr.bf16.mxu0 %v11378
    %11500 = vmatpush1.bf16.msra.mxu0 %v11377
    %11501 = vmatprep.subr.bf16.mxu0 %v11382
    %11502 = vmatpush1.bf16.msra.mxu0 %v11381
    %11503 = vmatprep.subr.bf16.mxu0 %v11386
    %11504 = vmatpush1.bf16.msra.mxu0 %v11385
    %11505 = vmatprep.subr.bf16.mxu0 %v11390
    %11506 = vmatpush1.bf16.msra.mxu0 %v11389
    %11507 = vmatprep.subr.bf16.mxu0 %v11394
    %11508 = vmatpush1.bf16.msra.mxu0 %v11393
    %11509 = vmatprep.subr.bf16.mxu0 %v11398
    %11510 = vmatpush1.bf16.msra.mxu0 %v11397
    %11511 = vmatprep.subr.bf16.mxu0 %v11402
    %11512 = vmatpush1.bf16.msra.mxu0 %v11401
    %11513 = vmatprep.subr.bf16.mxu0 %v11406
    %11514 = vmatpush1.bf16.msra.mxu0 %v11405
    %11515 = vmatprep.subr.bf16.mxu0 %v11410
    %11516 = vmatpush1.bf16.msra.mxu0 %v11409
    %11517 = vmatprep.subr.bf16.mxu0 %v11414
    %11518 = vmatpush1.bf16.msra.mxu0 %v11413
    %11519 = vmatprep.subr.bf16.mxu0 %v11418
    %11520 = vmatpush1.bf16.msra.mxu0 %v11417
    %11521 = vmatprep.subr.bf16.mxu0 %v11422
    %11522 = vmatpush1.bf16.msra.mxu0 %v11421
    %11523 = vmatprep.subr.bf16.mxu0 %v11426
    %11524 = vmatpush1.bf16.msra.mxu0 %v11425
    %11525 = vmatprep.mubr.bf16.mxu0 %v11108
    %11526 = vmatmul.mubr.bf16.gmra.mrb[0].mxu0 %v11107
    %v11527 = vpop.f32.mrb[0].mxu0
    %v11528 = vadd.f32 0.0, %v11527
    %v11529 = vpop.f32.mrb[0].mxu0
    %v11530 = vadd.f32 0.0, %v11529
    %v11531 = vpop.f32.mrb[0].mxu0
    %v11532 = vpop.f32.mrb[0].mxu0
    %11533 = vdwg.mxu0
    %11534 = vmatprep.subr.bf16.mxu0 %v11368
    %11535 = vmatpush1.bf16.msra.mxu0 %v11367
    %11536 = vmatprep.subr.bf16.mxu0 %v11372
    %11537 = vmatpush1.bf16.msra.mxu0 %v11371
    %11538 = vmatprep.subr.bf16.mxu0 %v11376
    %11539 = vmatpush1.bf16.msra.mxu0 %v11375
    %11540 = vmatprep.subr.bf16.mxu0 %v11380
    %11541 = vmatpush1.bf16.msra.mxu0 %v11379
    %11542 = vmatprep.subr.bf16.mxu0 %v11384
    %11543 = vmatpush1.bf16.msra.mxu0 %v11383
    %11544 = vmatprep.subr.bf16.mxu0 %v11388
    %11545 = vmatpush1.bf16.msra.mxu0 %v11387
    %11546 = vmatprep.subr.bf16.mxu0 %v11392
    %11547 = vmatpush1.bf16.msra.mxu0 %v11391
    %11548 = vmatprep.subr.bf16.mxu0 %v11396
    %11549 = vmatpush1.bf16.msra.mxu0 %v11395
    %11550 = vmatprep.subr.bf16.mxu0 %v11400
    %11551 = vmatpush1.bf16.msra.mxu0 %v11399
    %11552 = vmatprep.subr.bf16.mxu0 %v11404
    %11553 = vmatpush1.bf16.msra.mxu0 %v11403
    %11554 = vmatprep.subr.bf16.mxu0 %v11408
    %11555 = vmatpush1.bf16.msra.mxu0 %v11407
    %11556 = vmatprep.subr.bf16.mxu0 %v11412
    %11557 = vmatpush1.bf16.msra.mxu0 %v11411
    %11558 = vmatprep.subr.bf16.mxu0 %v11416
    %11559 = vmatpush1.bf16.msra.mxu0 %v11415
    %11560 = vmatprep.subr.bf16.mxu0 %v11420
    %11561 = vmatpush1.bf16.msra.mxu0 %v11419
    %11562 = vmatprep.subr.bf16.mxu0 %v11424
    %11563 = vmatpush1.bf16.msra.mxu0 %v11423
    %11564 = vmatprep.subr.bf16.mxu0 %v11428
    %11565 = vmatpush1.bf16.msra.mxu0 %v11427
    %11566 = vmatprep.mubr.bf16.mxu0 %v11108
    %11567 = vmatmul.mubr.bf16.gmra.mrb[0].mxu0 %v11107
    %v11568 = vpop.f32.mrb[0].mxu0
    %v11569 = vadd.f32 0.0, %v11568
    %v11570 = vpop.f32.mrb[0].mxu0
    %v11571 = vadd.f32 0.0, %v11570
    %v11572 = vpop.f32.mrb[0].mxu0
    %v11573 = vpop.f32.mrb[0].mxu0
    %11574 = vdwg.mxu0
    %v11575 = vadd.f32 %v11103, %v11528
    %v11576 = vadd.f32 %v11104, %v11530
    %v11577 = vadd.f32 %v11105, %v11569
    %v11578 = vadd.f32 %v11106, %v11571
    %v11579 = vpack.c.bf16 %v11075, %v11075
    %v11580 = vpack.c.bf16 %v11076, %v11076
    %s11581 = scalar_lea.vmem [#allocation9], 512
    %v11582 = vld [vmem:[%s11581] sm:$0xff]
    %v11583 = vld [vmem:[%s11581 + $0x8] sm:$0xff]
    %v11584 = vld [vmem:[%s11581 + $0x10] sm:$0xff]
    %v11585 = vld [vmem:[%s11581 + $0x18] sm:$0xff]
    %v11586 = vld [vmem:[%s11581 + $0x20] sm:$0xff]
    %v11587 = vld [vmem:[%s11581 + $0x28] sm:$0xff]
    %v11588 = vld [vmem:[%s11581 + $0x30] sm:$0xff]
    %v11589 = vld [vmem:[%s11581 + $0x38] sm:$0xff]
    %v11590 = vld [vmem:[%s11581 + $0x40] sm:$0xff]
    %v11591 = vld [vmem:[%s11581 + $0x48] sm:$0xff]
    %v11592 = vld [vmem:[%s11581 + $0x50] sm:$0xff]
    %v11593 = vld [vmem:[%s11581 + $0x58] sm:$0xff]
    %v11594 = vld [vmem:[%s11581 + $0x60] sm:$0xff]
    %v11595 = vld [vmem:[%s11581 + $0x68] sm:$0xff]
    %v11596 = vld [vmem:[%s11581 + $0x70] sm:$0xff]
    %v11597 = vld [vmem:[%s11581 + $0x78] sm:$0xff]
    %v11598 = vld [vmem:[%s11581 + $0x80] sm:$0xff]
    %v11599 = vld [vmem:[%s11581 + $0x88] sm:$0xff]
    %v11600 = vld [vmem:[%s11581 + $0x90] sm:$0xff]
    %v11601 = vld [vmem:[%s11581 + $0x98] sm:$0xff]
    %v11602 = vld [vmem:[%s11581 + $0xa0] sm:$0xff]
    %v11603 = vld [vmem:[%s11581 + $0xa8] sm:$0xff]
    %v11604 = vld [vmem:[%s11581 + $0xb0] sm:$0xff]
    %v11605 = vld [vmem:[%s11581 + $0xb8] sm:$0xff]
    %v11606 = vld [vmem:[%s11581 + $0xc0] sm:$0xff]
    %v11607 = vld [vmem:[%s11581 + $0xc8] sm:$0xff]
    %v11608 = vld [vmem:[%s11581 + $0xd0] sm:$0xff]
    %v11609 = vld [vmem:[%s11581 + $0xd8] sm:$0xff]
    %v11610 = vld [vmem:[%s11581 + $0xe0] sm:$0xff]
    %v11611 = vld [vmem:[%s11581 + $0xe8] sm:$0xff]
    %v11612 = vld [vmem:[%s11581 + $0xf0] sm:$0xff]
    %v11613 = vld [vmem:[%s11581 + $0xf8] sm:$0xff]
    %v11614 = vld [vmem:[%s11581 + $0x100] sm:$0xff]
    %v11615 = vld [vmem:[%s11581 + $0x108] sm:$0xff]
    %v11616 = vld [vmem:[%s11581 + $0x110] sm:$0xff]
    %v11617 = vld [vmem:[%s11581 + $0x118] sm:$0xff]
    %v11618 = vld [vmem:[%s11581 + $0x120] sm:$0xff]
    %v11619 = vld [vmem:[%s11581 + $0x128] sm:$0xff]
    %v11620 = vld [vmem:[%s11581 + $0x130] sm:$0xff]
    %v11621 = vld [vmem:[%s11581 + $0x138] sm:$0xff]
    %v11622 = vld [vmem:[%s11581 + $0x140] sm:$0xff]
    %v11623 = vld [vmem:[%s11581 + $0x148] sm:$0xff]
    %v11624 = vld [vmem:[%s11581 + $0x150] sm:$0xff]
    %v11625 = vld [vmem:[%s11581 + $0x158] sm:$0xff]
    %v11626 = vld [vmem:[%s11581 + $0x160] sm:$0xff]
    %v11627 = vld [vmem:[%s11581 + $0x168] sm:$0xff]
    %v11628 = vld [vmem:[%s11581 + $0x170] sm:$0xff]
    %v11629 = vld [vmem:[%s11581 + $0x178] sm:$0xff]
    %v11630 = vld [vmem:[%s11581 + $0x180] sm:$0xff]
    %v11631 = vld [vmem:[%s11581 + $0x188] sm:$0xff]
    %v11632 = vld [vmem:[%s11581 + $0x190] sm:$0xff]
    %v11633 = vld [vmem:[%s11581 + $0x198] sm:$0xff]
    %v11634 = vld [vmem:[%s11581 + $0x1a0] sm:$0xff]
    %v11635 = vld [vmem:[%s11581 + $0x1a8] sm:$0xff]
    %v11636 = vld [vmem:[%s11581 + $0x1b0] sm:$0xff]
    %v11637 = vld [vmem:[%s11581 + $0x1b8] sm:$0xff]
    %v11638 = vld [vmem:[%s11581 + $0x1c0] sm:$0xff]
    %v11639 = vld [vmem:[%s11581 + $0x1c8] sm:$0xff]
    %v11640 = vld [vmem:[%s11581 + $0x1d0] sm:$0xff]
    %v11641 = vld [vmem:[%s11581 + $0x1d8] sm:$0xff]
    %v11642 = vld [vmem:[%s11581 + $0x1e0] sm:$0xff]
    %v11643 = vld [vmem:[%s11581 + $0x1e8] sm:$0xff]
    %v11644 = vld [vmem:[%s11581 + $0x1f0] sm:$0xff]
    %v11645 = vld [vmem:[%s11581 + $0x1f8] sm:$0xff]
    %v11710 = vunpack.c.l.b16 %v11582
    %v11711 = vunpack.c.h.b16 %v11582
    %v11712 = vunpack.c.l.b16 %v11583
    %v11713 = vunpack.c.h.b16 %v11583
    %v11714 = vunpack.c.l.b16 %v11584
    %v11715 = vunpack.c.h.b16 %v11584
    %v11716 = vunpack.c.l.b16 %v11585
    %v11717 = vunpack.c.h.b16 %v11585
    %v11718 = vunpack.c.l.b16 %v11586
    %v11719 = vunpack.c.h.b16 %v11586
    %v11720 = vunpack.c.l.b16 %v11587
    %v11721 = vunpack.c.h.b16 %v11587
    %v11722 = vunpack.c.l.b16 %v11588
    %v11723 = vunpack.c.h.b16 %v11588
    %v11724 = vunpack.c.l.b16 %v11589
    %v11725 = vunpack.c.h.b16 %v11589
    %v11726 = vunpack.c.l.b16 %v11590
    %v11727 = vunpack.c.h.b16 %v11590
    %v11728 = vunpack.c.l.b16 %v11591
    %v11729 = vunpack.c.h.b16 %v11591
    %v11730 = vunpack.c.l.b16 %v11592
    %v11731 = vunpack.c.h.b16 %v11592
    %v11732 = vunpack.c.l.b16 %v11593
    %v11733 = vunpack.c.h.b16 %v11593
    %v11734 = vunpack.c.l.b16 %v11594
    %v11735 = vunpack.c.h.b16 %v11594
    %v11736 = vunpack.c.l.b16 %v11595
    %v11737 = vunpack.c.h.b16 %v11595
    %v11738 = vunpack.c.l.b16 %v11596
    %v11739 = vunpack.c.h.b16 %v11596
    %v11740 = vunpack.c.l.b16 %v11597
    %v11741 = vunpack.c.h.b16 %v11597
    %v11742 = vunpack.c.l.b16 %v11598
    %v11743 = vunpack.c.h.b16 %v11598
    %v11744 = vunpack.c.l.b16 %v11599
    %v11745 = vunpack.c.h.b16 %v11599
    %v11746 = vunpack.c.l.b16 %v11600
    %v11747 = vunpack.c.h.b16 %v11600
    %v11748 = vunpack.c.l.b16 %v11601
    %v11749 = vunpack.c.h.b16 %v11601
    %v11750 = vunpack.c.l.b16 %v11602
    %v11751 = vunpack.c.h.b16 %v11602
    %v11752 = vunpack.c.l.b16 %v11603
    %v11753 = vunpack.c.h.b16 %v11603
    %v11754 = vunpack.c.l.b16 %v11604
    %v11755 = vunpack.c.h.b16 %v11604
    %v11756 = vunpack.c.l.b16 %v11605
    %v11757 = vunpack.c.h.b16 %v11605
    %v11758 = vunpack.c.l.b16 %v11606
    %v11759 = vunpack.c.h.b16 %v11606
    %v11760 = vunpack.c.l.b16 %v11607
    %v11761 = vunpack.c.h.b16 %v11607
    %v11762 = vunpack.c.l.b16 %v11608
    %v11763 = vunpack.c.h.b16 %v11608
    %v11764 = vunpack.c.l.b16 %v11609
    %v11765 = vunpack.c.h.b16 %v11609
    %v11766 = vunpack.c.l.b16 %v11610
    %v11767 = vunpack.c.h.b16 %v11610
    %v11768 = vunpack.c.l.b16 %v11611
    %v11769 = vunpack.c.h.b16 %v11611
    %v11770 = vunpack.c.l.b16 %v11612
    %v11771 = vunpack.c.h.b16 %v11612
    %v11772 = vunpack.c.l.b16 %v11613
    %v11773 = vunpack.c.h.b16 %v11613
    %v11774 = vunpack.c.l.b16 %v11614
    %v11775 = vunpack.c.h.b16 %v11614
    %v11776 = vunpack.c.l.b16 %v11615
    %v11777 = vunpack.c.h.b16 %v11615
    %v11778 = vunpack.c.l.b16 %v11616
    %v11779 = vunpack.c.h.b16 %v11616
    %v11780 = vunpack.c.l.b16 %v11617
    %v11781 = vunpack.c.h.b16 %v11617
    %v11782 = vunpack.c.l.b16 %v11618
    %v11783 = vunpack.c.h.b16 %v11618
    %v11784 = vunpack.c.l.b16 %v11619
    %v11785 = vunpack.c.h.b16 %v11619
    %v11786 = vunpack.c.l.b16 %v11620
    %v11787 = vunpack.c.h.b16 %v11620
    %v11788 = vunpack.c.l.b16 %v11621
    %v11789 = vunpack.c.h.b16 %v11621
    %v11790 = vunpack.c.l.b16 %v11622
    %v11791 = vunpack.c.h.b16 %v11622
    %v11792 = vunpack.c.l.b16 %v11623
    %v11793 = vunpack.c.h.b16 %v11623
    %v11794 = vunpack.c.l.b16 %v11624
    %v11795 = vunpack.c.h.b16 %v11624
    %v11796 = vunpack.c.l.b16 %v11625
    %v11797 = vunpack.c.h.b16 %v11625
    %v11798 = vunpack.c.l.b16 %v11626
    %v11799 = vunpack.c.h.b16 %v11626
    %v11800 = vunpack.c.l.b16 %v11627
    %v11801 = vunpack.c.h.b16 %v11627
    %v11802 = vunpack.c.l.b16 %v11628
    %v11803 = vunpack.c.h.b16 %v11628
    %v11804 = vunpack.c.l.b16 %v11629
    %v11805 = vunpack.c.h.b16 %v11629
    %v11806 = vunpack.c.l.b16 %v11630
    %v11807 = vunpack.c.h.b16 %v11630
    %v11808 = vunpack.c.l.b16 %v11631
    %v11809 = vunpack.c.h.b16 %v11631
    %v11810 = vunpack.c.l.b16 %v11632
    %v11811 = vunpack.c.h.b16 %v11632
    %v11812 = vunpack.c.l.b16 %v11633
    %v11813 = vunpack.c.h.b16 %v11633
    %v11814 = vunpack.c.l.b16 %v11634
    %v11815 = vunpack.c.h.b16 %v11634
    %v11816 = vunpack.c.l.b16 %v11635
    %v11817 = vunpack.c.h.b16 %v11635
    %v11818 = vunpack.c.l.b16 %v11636
    %v11819 = vunpack.c.h.b16 %v11636
    %v11820 = vunpack.c.l.b16 %v11637
    %v11821 = vunpack.c.h.b16 %v11637
    %v11822 = vunpack.c.l.b16 %v11638
    %v11823 = vunpack.c.h.b16 %v11638
    %v11824 = vunpack.c.l.b16 %v11639
    %v11825 = vunpack.c.h.b16 %v11639
    %v11826 = vunpack.c.l.b16 %v11640
    %v11827 = vunpack.c.h.b16 %v11640
    %v11828 = vunpack.c.l.b16 %v11641
    %v11829 = vunpack.c.h.b16 %v11641
    %v11830 = vunpack.c.l.b16 %v11642
    %v11831 = vunpack.c.h.b16 %v11642
    %v11832 = vunpack.c.l.b16 %v11643
    %v11833 = vunpack.c.h.b16 %v11643
    %v11834 = vunpack.c.l.b16 %v11644
    %v11835 = vunpack.c.h.b16 %v11644
    %v11836 = vunpack.c.l.b16 %v11645
    %v11837 = vunpack.c.h.b16 %v11645
    %v11838 = vpack.c.b16 %v11714, %v11710
    %v11839 = vpack.c.b16 %v11715, %v11711
    %v11840 = vpack.c.b16 %v11716, %v11712
    %v11841 = vpack.c.b16 %v11717, %v11713
    %v11842 = vpack.c.b16 %v11722, %v11718
    %v11843 = vpack.c.b16 %v11723, %v11719
    %v11844 = vpack.c.b16 %v11724, %v11720
    %v11845 = vpack.c.b16 %v11725, %v11721
    %v11846 = vpack.c.b16 %v11730, %v11726
    %v11847 = vpack.c.b16 %v11731, %v11727
    %v11848 = vpack.c.b16 %v11732, %v11728
    %v11849 = vpack.c.b16 %v11733, %v11729
    %v11850 = vpack.c.b16 %v11738, %v11734
    %v11851 = vpack.c.b16 %v11739, %v11735
    %v11852 = vpack.c.b16 %v11740, %v11736
    %v11853 = vpack.c.b16 %v11741, %v11737
    %v11854 = vpack.c.b16 %v11746, %v11742
    %v11855 = vpack.c.b16 %v11747, %v11743
    %v11856 = vpack.c.b16 %v11748, %v11744
    %v11857 = vpack.c.b16 %v11749, %v11745
    %v11858 = vpack.c.b16 %v11754, %v11750
    %v11859 = vpack.c.b16 %v11755, %v11751
    %v11860 = vpack.c.b16 %v11756, %v11752
    %v11861 = vpack.c.b16 %v11757, %v11753
    %v11862 = vpack.c.b16 %v11762, %v11758
    %v11863 = vpack.c.b16 %v11763, %v11759
    %v11864 = vpack.c.b16 %v11764, %v11760
    %v11865 = vpack.c.b16 %v11765, %v11761
    %v11866 = vpack.c.b16 %v11770, %v11766
    %v11867 = vpack.c.b16 %v11771, %v11767
    %v11868 = vpack.c.b16 %v11772, %v11768
    %v11869 = vpack.c.b16 %v11773, %v11769
    %v11870 = vpack.c.b16 %v11778, %v11774
    %v11871 = vpack.c.b16 %v11779, %v11775
    %v11872 = vpack.c.b16 %v11780, %v11776
    %v11873 = vpack.c.b16 %v11781, %v11777
    %v11874 = vpack.c.b16 %v11786, %v11782
    %v11875 = vpack.c.b16 %v11787, %v11783
    %v11876 = vpack.c.b16 %v11788, %v11784
    %v11877 = vpack.c.b16 %v11789, %v11785
    %v11878 = vpack.c.b16 %v11794, %v11790
    %v11879 = vpack.c.b16 %v11795, %v11791
    %v11880 = vpack.c.b16 %v11796, %v11792
    %v11881 = vpack.c.b16 %v11797, %v11793
    %v11882 = vpack.c.b16 %v11802, %v11798
    %v11883 = vpack.c.b16 %v11803, %v11799
    %v11884 = vpack.c.b16 %v11804, %v11800
    %v11885 = vpack.c.b16 %v11805, %v11801
    %v11886 = vpack.c.b16 %v11810, %v11806
    %v11887 = vpack.c.b16 %v11811, %v11807
    %v11888 = vpack.c.b16 %v11812, %v11808
    %v11889 = vpack.c.b16 %v11813, %v11809
    %v11890 = vpack.c.b16 %v11818, %v11814
    %v11891 = vpack.c.b16 %v11819, %v11815
    %v11892 = vpack.c.b16 %v11820, %v11816
    %v11893 = vpack.c.b16 %v11821, %v11817
    %v11894 = vpack.c.b16 %v11826, %v11822
    %v11895 = vpack.c.b16 %v11827, %v11823
    %v11896 = vpack.c.b16 %v11828, %v11824
    %v11897 = vpack.c.b16 %v11829, %v11825
    %v11898 = vpack.c.b16 %v11834, %v11830
    %v11899 = vpack.c.b16 %v11835, %v11831
    %v11900 = vpack.c.b16 %v11836, %v11832
    %v11901 = vpack.c.b16 %v11837, %v11833
    %11966 = vmatprep.subr.bf16.mxu0 %v11839
    %11967 = vmatpush1.bf16.msra.mxu0 %v11838
    %11968 = vmatprep.subr.bf16.mxu0 %v11843
    %11969 = vmatpush1.bf16.msra.mxu0 %v11842
    %11970 = vmatprep.subr.bf16.mxu0 %v11847
    %11971 = vmatpush1.bf16.msra.mxu0 %v11846
    %11972 = vmatprep.subr.bf16.mxu0 %v11851
    %11973 = vmatpush1.bf16.msra.mxu0 %v11850
    %11974 = vmatprep.subr.bf16.mxu0 %v11855
    %11975 = vmatpush1.bf16.msra.mxu0 %v11854
    %11976 = vmatprep.subr.bf16.mxu0 %v11859
    %11977 = vmatpush1.bf16.msra.mxu0 %v11858
    %11978 = vmatprep.subr.bf16.mxu0 %v11863
    %11979 = vmatpush1.bf16.msra.mxu0 %v11862
    %11980 = vmatprep.subr.bf16.mxu0 %v11867
    %11981 = vmatpush1.bf16.msra.mxu0 %v11866
    %11982 = vmatprep.subr.bf16.mxu0 %v11871
    %11983 = vmatpush1.bf16.msra.mxu0 %v11870
    %11984 = vmatprep.subr.bf16.mxu0 %v11875
    %11985 = vmatpush1.bf16.msra.mxu0 %v11874
    %11986 = vmatprep.subr.bf16.mxu0 %v11879
    %11987 = vmatpush1.bf16.msra.mxu0 %v11878
    %11988 = vmatprep.subr.bf16.mxu0 %v11883
    %11989 = vmatpush1.bf16.msra.mxu0 %v11882
    %11990 = vmatprep.subr.bf16.mxu0 %v11887
    %11991 = vmatpush1.bf16.msra.mxu0 %v11886
    %11992 = vmatprep.subr.bf16.mxu0 %v11891
    %11993 = vmatpush1.bf16.msra.mxu0 %v11890
    %11994 = vmatprep.subr.bf16.mxu0 %v11895
    %11995 = vmatpush1.bf16.msra.mxu0 %v11894
    %11996 = vmatprep.subr.bf16.mxu0 %v11899
    %11997 = vmatpush1.bf16.msra.mxu0 %v11898
    %11998 = vmatprep.mubr.bf16.mxu0 %v11580
    %11999 = vmatmul.mubr.bf16.gmra.mrb[0].mxu0 %v11579
    %v12000 = vpop.f32.mrb[0].mxu0
    %v12001 = vadd.f32 0.0, %v12000
    %v12002 = vpop.f32.mrb[0].mxu0
    %v12003 = vadd.f32 0.0, %v12002
    %v12004 = vpop.f32.mrb[0].mxu0
    %v12005 = vpop.f32.mrb[0].mxu0
    %12006 = vdwg.mxu0
    %12007 = vmatprep.subr.bf16.mxu0 %v11841
    %12008 = vmatpush1.bf16.msra.mxu0 %v11840
    %12009 = vmatprep.subr.bf16.mxu0 %v11845
    %12010 = vmatpush1.bf16.msra.mxu0 %v11844
    %12011 = vmatprep.subr.bf16.mxu0 %v11849
    %12012 = vmatpush1.bf16.msra.mxu0 %v11848
    %12013 = vmatprep.subr.bf16.mxu0 %v11853
    %12014 = vmatpush1.bf16.msra.mxu0 %v11852
    %12015 = vmatprep.subr.bf16.mxu0 %v11857
    %12016 = vmatpush1.bf16.msra.mxu0 %v11856
    %12017 = vmatprep.subr.bf16.mxu0 %v11861
    %12018 = vmatpush1.bf16.msra.mxu0 %v11860
    %12019 = vmatprep.subr.bf16.mxu0 %v11865
    %12020 = vmatpush1.bf16.msra.mxu0 %v11864
    %12021 = vmatprep.subr.bf16.mxu0 %v11869
    %12022 = vmatpush1.bf16.msra.mxu0 %v11868
    %12023 = vmatprep.subr.bf16.mxu0 %v11873
    %12024 = vmatpush1.bf16.msra.mxu0 %v11872
    %12025 = vmatprep.subr.bf16.mxu0 %v11877
    %12026 = vmatpush1.bf16.msra.mxu0 %v11876
    %12027 = vmatprep.subr.bf16.mxu0 %v11881
    %12028 = vmatpush1.bf16.msra.mxu0 %v11880
    %12029 = vmatprep.subr.bf16.mxu0 %v11885
    %12030 = vmatpush1.bf16.msra.mxu0 %v11884
    %12031 = vmatprep.subr.bf16.mxu0 %v11889
    %12032 = vmatpush1.bf16.msra.mxu0 %v11888
    %12033 = vmatprep.subr.bf16.mxu0 %v11893
    %12034 = vmatpush1.bf16.msra.mxu0 %v11892
    %12035 = vmatprep.subr.bf16.mxu0 %v11897
    %12036 = vmatpush1.bf16.msra.mxu0 %v11896
    %12037 = vmatprep.subr.bf16.mxu0 %v11901
    %12038 = vmatpush1.bf16.msra.mxu0 %v11900
    %12039 = vmatprep.mubr.bf16.mxu0 %v11580
    %12040 = vmatmul.mubr.bf16.gmra.mrb[0].mxu0 %v11579
    %v12041 = vpop.f32.mrb[0].mxu0
    %v12042 = vadd.f32 0.0, %v12041
    %v12043 = vpop.f32.mrb[0].mxu0
    %v12044 = vadd.f32 0.0, %v12043
    %v12045 = vpop.f32.mrb[0].mxu0
    %v12046 = vpop.f32.mrb[0].mxu0
    %12047 = vdwg.mxu0
    %v12048 = vadd.f32 %v11575, %v12001
    %v12049 = vadd.f32 %v11576, %v12003
    %v12050 = vadd.f32 %v11577, %v12042
    %v12051 = vadd.f32 %v11578, %v12044
    %v12052 = vpack.c.bf16 %v11077, %v11077
    %v12053 = vpack.c.bf16 %v11078, %v11078
    %s12054 = scalar_lea.vmem [#allocation9], 1024
    %v12055 = vld [vmem:[%s12054] sm:$0xff]
    %v12056 = vld [vmem:[%s12054 + $0x8] sm:$0xff]
    %v12057 = vld [vmem:[%s12054 + $0x10] sm:$0xff]
    %v12058 = vld [vmem:[%s12054 + $0x18] sm:$0xff]
    %v12059 = vld [vmem:[%s12054 + $0x20] sm:$0xff]
    %v12060 = vld [vmem:[%s12054 + $0x28] sm:$0xff]
    %v12061 = vld [vmem:[%s12054 + $0x30] sm:$0xff]
    %v12062 = vld [vmem:[%s12054 + $0x38] sm:$0xff]
    %v12063 = vld [vmem:[%s12054 + $0x40] sm:$0xff]
    %v12064 = vld [vmem:[%s12054 + $0x48] sm:$0xff]
    %v12065 = vld [vmem:[%s12054 + $0x50] sm:$0xff]
    %v12066 = vld [vmem:[%s12054 + $0x58] sm:$0xff]
    %v12067 = vld [vmem:[%s12054 + $0x60] sm:$0xff]
    %v12068 = vld [vmem:[%s12054 + $0x68] sm:$0xff]
    %v12069 = vld [vmem:[%s12054 + $0x70] sm:$0xff]
    %v12070 = vld [vmem:[%s12054 + $0x78] sm:$0xff]
    %v12071 = vld [vmem:[%s12054 + $0x80] sm:$0xff]
    %v12072 = vld [vmem:[%s12054 + $0x88] sm:$0xff]
    %v12073 = vld [vmem:[%s12054 + $0x90] sm:$0xff]
    %v12074 = vld [vmem:[%s12054 + $0x98] sm:$0xff]
    %v12075 = vld [vmem:[%s12054 + $0xa0] sm:$0xff]
    %v12076 = vld [vmem:[%s12054 + $0xa8] sm:$0xff]
    %v12077 = vld [vmem:[%s12054 + $0xb0] sm:$0xff]
    %v12078 = vld [vmem:[%s12054 + $0xb8] sm:$0xff]
    %v12079 = vld [vmem:[%s12054 + $0xc0] sm:$0xff]
    %v12080 = vld [vmem:[%s12054 + $0xc8] sm:$0xff]
    %v12081 = vld [vmem:[%s12054 + $0xd0] sm:$0xff]
    %v12082 = vld [vmem:[%s12054 + $0xd8] sm:$0xff]
    %v12083 = vld [vmem:[%s12054 + $0xe0] sm:$0xff]
    %v12084 = vld [vmem:[%s12054 + $0xe8] sm:$0xff]
    %v12085 = vld [vmem:[%s12054 + $0xf0] sm:$0xff]
    %v12086 = vld [vmem:[%s12054 + $0xf8] sm:$0xff]
    %v12087 = vld [vmem:[%s12054 + $0x100] sm:$0xff]
    %v12088 = vld [vmem:[%s12054 + $0x108] sm:$0xff]
    %v12089 = vld [vmem:[%s12054 + $0x110] sm:$0xff]
    %v12090 = vld [vmem:[%s12054 + $0x118] sm:$0xff]
    %v12091 = vld [vmem:[%s12054 + $0x120] sm:$0xff]
    %v12092 = vld [vmem:[%s12054 + $0x128] sm:$0xff]
    %v12093 = vld [vmem:[%s12054 + $0x130] sm:$0xff]
    %v12094 = vld [vmem:[%s12054 + $0x138] sm:$0xff]
    %v12095 = vld [vmem:[%s12054 + $0x140] sm:$0xff]
    %v12096 = vld [vmem:[%s12054 + $0x148] sm:$0xff]
    %v12097 = vld [vmem:[%s12054 + $0x150] sm:$0xff]
    %v12098 = vld [vmem:[%s12054 + $0x158] sm:$0xff]
    %v12099 = vld [vmem:[%s12054 + $0x160] sm:$0xff]
    %v12100 = vld [vmem:[%s12054 + $0x168] sm:$0xff]
    %v12101 = vld [vmem:[%s12054 + $0x170] sm:$0xff]
    %v12102 = vld [vmem:[%s12054 + $0x178] sm:$0xff]
    %v12103 = vld [vmem:[%s12054 + $0x180] sm:$0xff]
    %v12104 = vld [vmem:[%s12054 + $0x188] sm:$0xff]
    %v12105 = vld [vmem:[%s12054 + $0x190] sm:$0xff]
    %v12106 = vld [vmem:[%s12054 + $0x198] sm:$0xff]
    %v12107 = vld [vmem:[%s12054 + $0x1a0] sm:$0xff]
    %v12108 = vld [vmem:[%s12054 + $0x1a8] sm:$0xff]
    %v12109 = vld [vmem:[%s12054 + $0x1b0] sm:$0xff]
    %v12110 = vld [vmem:[%s12054 + $0x1b8] sm:$0xff]
    %v12111 = vld [vmem:[%s12054 + $0x1c0] sm:$0xff]
    %v12112 = vld [vmem:[%s12054 + $0x1c8] sm:$0xff]
    %v12113 = vld [vmem:[%s12054 + $0x1d0] sm:$0xff]
    %v12114 = vld [vmem:[%s12054 + $0x1d8] sm:$0xff]
    %v12115 = vld [vmem:[%s12054 + $0x1e0] sm:$0xff]
    %v12116 = vld [vmem:[%s12054 + $0x1e8] sm:$0xff]
    %v12117 = vld [vmem:[%s12054 + $0x1f0] sm:$0xff]
    %v12118 = vld [vmem:[%s12054 + $0x1f8] sm:$0xff]
    %v12183 = vunpack.c.l.b16 %v12055
    %v12184 = vunpack.c.h.b16 %v12055
    %v12185 = vunpack.c.l.b16 %v12056
    %v12186 = vunpack.c.h.b16 %v12056
    %v12187 = vunpack.c.l.b16 %v12057
    %v12188 = vunpack.c.h.b16 %v12057
    %v12189 = vunpack.c.l.b16 %v12058
    %v12190 = vunpack.c.h.b16 %v12058
    %v12191 = vunpack.c.l.b16 %v12059
    %v12192 = vunpack.c.h.b16 %v12059
    %v12193 = vunpack.c.l.b16 %v12060
    %v12194 = vunpack.c.h.b16 %v12060
    %v12195 = vunpack.c.l.b16 %v12061
    %v12196 = vunpack.c.h.b16 %v12061
    %v12197 = vunpack.c.l.b16 %v12062
    %v12198 = vunpack.c.h.b16 %v12062
    %v12199 = vunpack.c.l.b16 %v12063
    %v12200 = vunpack.c.h.b16 %v12063
    %v12201 = vunpack.c.l.b16 %v12064
    %v12202 = vunpack.c.h.b16 %v12064
    %v12203 = vunpack.c.l.b16 %v12065
    %v12204 = vunpack.c.h.b16 %v12065
    %v12205 = vunpack.c.l.b16 %v12066
    %v12206 = vunpack.c.h.b16 %v12066
    %v12207 = vunpack.c.l.b16 %v12067
    %v12208 = vunpack.c.h.b16 %v12067
    %v12209 = vunpack.c.l.b16 %v12068
    %v12210 = vunpack.c.h.b16 %v12068
    %v12211 = vunpack.c.l.b16 %v12069
    %v12212 = vunpack.c.h.b16 %v12069
    %v12213 = vunpack.c.l.b16 %v12070
    %v12214 = vunpack.c.h.b16 %v12070
    %v12215 = vunpack.c.l.b16 %v12071
    %v12216 = vunpack.c.h.b16 %v12071
    %v12217 = vunpack.c.l.b16 %v12072
    %v12218 = vunpack.c.h.b16 %v12072
    %v12219 = vunpack.c.l.b16 %v12073
    %v12220 = vunpack.c.h.b16 %v12073
    %v12221 = vunpack.c.l.b16 %v12074
    %v12222 = vunpack.c.h.b16 %v12074
    %v12223 = vunpack.c.l.b16 %v12075
    %v12224 = vunpack.c.h.b16 %v12075
    %v12225 = vunpack.c.l.b16 %v12076
    %v12226 = vunpack.c.h.b16 %v12076
    %v12227 = vunpack.c.l.b16 %v12077
    %v12228 = vunpack.c.h.b16 %v12077
    %v12229 = vunpack.c.l.b16 %v12078
    %v12230 = vunpack.c.h.b16 %v12078
    %v12231 = vunpack.c.l.b16 %v12079
    %v12232 = vunpack.c.h.b16 %v12079
    %v12233 = vunpack.c.l.b16 %v12080
    %v12234 = vunpack.c.h.b16 %v12080
    %v12235 = vunpack.c.l.b16 %v12081
    %v12236 = vunpack.c.h.b16 %v12081
    %v12237 = vunpack.c.l.b16 %v12082
    %v12238 = vunpack.c.h.b16 %v12082
    %v12239 = vunpack.c.l.b16 %v12083
    %v12240 = vunpack.c.h.b16 %v12083
    %v12241 = vunpack.c.l.b16 %v12084
    %v12242 = vunpack.c.h.b16 %v12084
    %v12243 = vunpack.c.l.b16 %v12085
    %v12244 = vunpack.c.h.b16 %v12085
    %v12245 = vunpack.c.l.b16 %v12086
    %v12246 = vunpack.c.h.b16 %v12086
    %v12247 = vunpack.c.l.b16 %v12087
    %v12248 = vunpack.c.h.b16 %v12087
    %v12249 = vunpack.c.l.b16 %v12088
    %v12250 = vunpack.c.h.b16 %v12088
    %v12251 = vunpack.c.l.b16 %v12089
    %v12252 = vunpack.c.h.b16 %v12089
    %v12253 = vunpack.c.l.b16 %v12090
    %v12254 = vunpack.c.h.b16 %v12090
    %v12255 = vunpack.c.l.b16 %v12091
    %v12256 = vunpack.c.h.b16 %v12091
    %v12257 = vunpack.c.l.b16 %v12092
    %v12258 = vunpack.c.h.b16 %v12092
    %v12259 = vunpack.c.l.b16 %v12093
    %v12260 = vunpack.c.h.b16 %v12093
    %v12261 = vunpack.c.l.b16 %v12094
    %v12262 = vunpack.c.h.b16 %v12094
    %v12263 = vunpack.c.l.b16 %v12095
    %v12264 = vunpack.c.h.b16 %v12095
    %v12265 = vunpack.c.l.b16 %v12096
    %v12266 = vunpack.c.h.b16 %v12096
    %v12267 = vunpack.c.l.b16 %v12097
    %v12268 = vunpack.c.h.b16 %v12097
    %v12269 = vunpack.c.l.b16 %v12098
    %v12270 = vunpack.c.h.b16 %v12098
    %v12271 = vunpack.c.l.b16 %v12099
    %v12272 = vunpack.c.h.b16 %v12099
    %v12273 = vunpack.c.l.b16 %v12100
    %v12274 = vunpack.c.h.b16 %v12100
    %v12275 = vunpack.c.l.b16 %v12101
    %v12276 = vunpack.c.h.b16 %v12101
    %v12277 = vunpack.c.l.b16 %v12102
    %v12278 = vunpack.c.h.b16 %v12102
    %v12279 = vunpack.c.l.b16 %v12103
    %v12280 = vunpack.c.h.b16 %v12103
    %v12281 = vunpack.c.l.b16 %v12104
    %v12282 = vunpack.c.h.b16 %v12104
    %v12283 = vunpack.c.l.b16 %v12105
    %v12284 = vunpack.c.h.b16 %v12105
    %v12285 = vunpack.c.l.b16 %v12106
    %v12286 = vunpack.c.h.b16 %v12106
    %v12287 = vunpack.c.l.b16 %v12107
    %v12288 = vunpack.c.h.b16 %v12107
    %v12289 = vunpack.c.l.b16 %v12108
    %v12290 = vunpack.c.h.b16 %v12108
    %v12291 = vunpack.c.l.b16 %v12109
    %v12292 = vunpack.c.h.b16 %v12109
    %v12293 = vunpack.c.l.b16 %v12110
    %v12294 = vunpack.c.h.b16 %v12110
    %v12295 = vunpack.c.l.b16 %v12111
    %v12296 = vunpack.c.h.b16 %v12111
    %v12297 = vunpack.c.l.b16 %v12112
    %v12298 = vunpack.c.h.b16 %v12112
    %v12299 = vunpack.c.l.b16 %v12113
    %v12300 = vunpack.c.h.b16 %v12113
    %v12301 = vunpack.c.l.b16 %v12114
    %v12302 = vunpack.c.h.b16 %v12114
    %v12303 = vunpack.c.l.b16 %v12115
    %v12304 = vunpack.c.h.b16 %v12115
    %v12305 = vunpack.c.l.b16 %v12116
    %v12306 = vunpack.c.h.b16 %v12116
    %v12307 = vunpack.c.l.b16 %v12117
    %v12308 = vunpack.c.h.b16 %v12117
    %v12309 = vunpack.c.l.b16 %v12118
    %v12310 = vunpack.c.h.b16 %v12118
    %v12311 = vpack.c.b16 %v12187, %v12183
    %v12312 = vpack.c.b16 %v12188, %v12184
    %v12313 = vpack.c.b16 %v12189, %v12185
    %v12314 = vpack.c.b16 %v12190, %v12186
    %v12315 = vpack.c.b16 %v12195, %v12191
    %v12316 = vpack.c.b16 %v12196, %v12192
    %v12317 = vpack.c.b16 %v12197, %v12193
    %v12318 = vpack.c.b16 %v12198, %v12194
    %v12319 = vpack.c.b16 %v12203, %v12199
    %v12320 = vpack.c.b16 %v12204, %v12200
    %v12321 = vpack.c.b16 %v12205, %v12201
    %v12322 = vpack.c.b16 %v12206, %v12202
    %v12323 = vpack.c.b16 %v12211, %v12207
    %v12324 = vpack.c.b16 %v12212, %v12208
    %v12325 = vpack.c.b16 %v12213, %v12209
    %v12326 = vpack.c.b16 %v12214, %v12210
    %v12327 = vpack.c.b16 %v12219, %v12215
    %v12328 = vpack.c.b16 %v12220, %v12216
    %v12329 = vpack.c.b16 %v12221, %v12217
    %v12330 = vpack.c.b16 %v12222, %v12218
    %v12331 = vpack.c.b16 %v12227, %v12223
    %v12332 = vpack.c.b16 %v12228, %v12224
    %v12333 = vpack.c.b16 %v12229, %v12225
    %v12334 = vpack.c.b16 %v12230, %v12226
    %v12335 = vpack.c.b16 %v12235, %v12231
    %v12336 = vpack.c.b16 %v12236, %v12232
    %v12337 = vpack.c.b16 %v12237, %v12233
    %v12338 = vpack.c.b16 %v12238, %v12234
    %v12339 = vpack.c.b16 %v12243, %v12239
    %v12340 = vpack.c.b16 %v12244, %v12240
    %v12341 = vpack.c.b16 %v12245, %v12241
    %v12342 = vpack.c.b16 %v12246, %v12242
    %v12343 = vpack.c.b16 %v12251, %v12247
    %v12344 = vpack.c.b16 %v12252, %v12248
    %v12345 = vpack.c.b16 %v12253, %v12249
    %v12346 = vpack.c.b16 %v12254, %v12250
    %v12347 = vpack.c.b16 %v12259, %v12255
    %v12348 = vpack.c.b16 %v12260, %v12256
    %v12349 = vpack.c.b16 %v12261, %v12257
    %v12350 = vpack.c.b16 %v12262, %v12258
    %v12351 = vpack.c.b16 %v12267, %v12263
    %v12352 = vpack.c.b16 %v12268, %v12264
    %v12353 = vpack.c.b16 %v12269, %v12265
    %v12354 = vpack.c.b16 %v12270, %v12266
    %v12355 = vpack.c.b16 %v12275, %v12271
    %v12356 = vpack.c.b16 %v12276, %v12272
    %v12357 = vpack.c.b16 %v12277, %v12273
    %v12358 = vpack.c.b16 %v12278, %v12274
    %v12359 = vpack.c.b16 %v12283, %v12279
    %v12360 = vpack.c.b16 %v12284, %v12280
    %v12361 = vpack.c.b16 %v12285, %v12281
    %v12362 = vpack.c.b16 %v12286, %v12282
    %v12363 = vpack.c.b16 %v12291, %v12287
    %v12364 = vpack.c.b16 %v12292, %v12288
    %v12365 = vpack.c.b16 %v12293, %v12289
    %v12366 = vpack.c.b16 %v12294, %v12290
    %v12367 = vpack.c.b16 %v12299, %v12295
    %v12368 = vpack.c.b16 %v12300, %v12296
    %v12369 = vpack.c.b16 %v12301, %v12297
    %v12370 = vpack.c.b16 %v12302, %v12298
    %v12371 = vpack.c.b16 %v12307, %v12303
    %v12372 = vpack.c.b16 %v12308, %v12304
    %v12373 = vpack.c.b16 %v12309, %v12305
    %v12374 = vpack.c.b16 %v12310, %v12306
    %12439 = vmatprep.subr.bf16.mxu0 %v12312
    %12440 = vmatpush1.bf16.msra.mxu0 %v12311
    %12441 = vmatprep.subr.bf16.mxu0 %v12316
    %12442 = vmatpush1.bf16.msra.mxu0 %v12315
    %12443 = vmatprep.subr.bf16.mxu0 %v12320
    %12444 = vmatpush1.bf16.msra.mxu0 %v12319
    %12445 = vmatprep.subr.bf16.mxu0 %v12324
    %12446 = vmatpush1.bf16.msra.mxu0 %v12323
    %12447 = vmatprep.subr.bf16.mxu0 %v12328
    %12448 = vmatpush1.bf16.msra.mxu0 %v12327
    %12449 = vmatprep.subr.bf16.mxu0 %v12332
    %12450 = vmatpush1.bf16.msra.mxu0 %v12331
    %12451 = vmatprep.subr.bf16.mxu0 %v12336
    %12452 = vmatpush1.bf16.msra.mxu0 %v12335
    %12453 = vmatprep.subr.bf16.mxu0 %v12340
    %12454 = vmatpush1.bf16.msra.mxu0 %v12339
    %12455 = vmatprep.subr.bf16.mxu0 %v12344
    %12456 = vmatpush1.bf16.msra.mxu0 %v12343
    %12457 = vmatprep.subr.bf16.mxu0 %v12348
    %12458 = vmatpush1.bf16.msra.mxu0 %v12347
    %12459 = vmatprep.subr.bf16.mxu0 %v12352
    %12460 = vmatpush1.bf16.msra.mxu0 %v12351
    %12461 = vmatprep.subr.bf16.mxu0 %v12356
    %12462 = vmatpush1.bf16.msra.mxu0 %v12355
    %12463 = vmatprep.subr.bf16.mxu0 %v12360
    %12464 = vmatpush1.bf16.msra.mxu0 %v12359
    %12465 = vmatprep.subr.bf16.mxu0 %v12364
    %12466 = vmatpush1.bf16.msra.mxu0 %v12363
    %12467 = vmatprep.subr.bf16.mxu0 %v12368
    %12468 = vmatpush1.bf16.msra.mxu0 %v12367
    %12469 = vmatprep.subr.bf16.mxu0 %v12372
    %12470 = vmatpush1.bf16.msra.mxu0 %v12371
    %12471 = vmatprep.mubr.bf16.mxu0 %v12053
    %12472 = vmatmul.mubr.bf16.gmra.mrb[0].mxu0 %v12052
    %v12473 = vpop.f32.mrb[0].mxu0
    %v12474 = vadd.f32 0.0, %v12473
    %v12475 = vpop.f32.mrb[0].mxu0
    %v12476 = vadd.f32 0.0, %v12475
    %v12477 = vpop.f32.mrb[0].mxu0
    %v12478 = vpop.f32.mrb[0].mxu0
    %12479 = vdwg.mxu0
    %12480 = vmatprep.subr.bf16.mxu0 %v12314
    %12481 = vmatpush1.bf16.msra.mxu0 %v12313
    %12482 = vmatprep.subr.bf16.mxu0 %v12318
    %12483 = vmatpush1.bf16.msra.mxu0 %v12317
    %12484 = vmatprep.subr.bf16.mxu0 %v12322
    %12485 = vmatpush1.bf16.msra.mxu0 %v12321
    %12486 = vmatprep.subr.bf16.mxu0 %v12326
    %12487 = vmatpush1.bf16.msra.mxu0 %v12325
    %12488 = vmatprep.subr.bf16.mxu0 %v12330
    %12489 = vmatpush1.bf16.msra.mxu0 %v12329
    %12490 = vmatprep.subr.bf16.mxu0 %v12334
    %12491 = vmatpush1.bf16.msra.mxu0 %v12333
    %12492 = vmatprep.subr.bf16.mxu0 %v12338
    %12493 = vmatpush1.bf16.msra.mxu0 %v12337
    %12494 = vmatprep.subr.bf16.mxu0 %v12342
    %12495 = vmatpush1.bf16.msra.mxu0 %v12341
    %12496 = vmatprep.subr.bf16.mxu0 %v12346
    %12497 = vmatpush1.bf16.msra.mxu0 %v12345
    %12498 = vmatprep.subr.bf16.mxu0 %v12350
    %12499 = vmatpush1.bf16.msra.mxu0 %v12349
    %12500 = vmatprep.subr.bf16.mxu0 %v12354
    %12501 = vmatpush1.bf16.msra.mxu0 %v12353
    %12502 = vmatprep.subr.bf16.mxu0 %v12358
    %12503 = vmatpush1.bf16.msra.mxu0 %v12357
    %12504 = vmatprep.subr.bf16.mxu0 %v12362
    %12505 = vmatpush1.bf16.msra.mxu0 %v12361
    %12506 = vmatprep.subr.bf16.mxu0 %v12366
    %12507 = vmatpush1.bf16.msra.mxu0 %v12365
    %12508 = vmatprep.subr.bf16.mxu0 %v12370
    %12509 = vmatpush1.bf16.msra.mxu0 %v12369
    %12510 = vmatprep.subr.bf16.mxu0 %v12374
    %12511 = vmatpush1.bf16.msra.mxu0 %v12373
    %12512 = vmatprep.mubr.bf16.mxu0 %v12053
    %12513 = vmatmul.mubr.bf16.gmra.mrb[0].mxu0 %v12052
    %v12514 = vpop.f32.mrb[0].mxu0
    %v12515 = vadd.f32 0.0, %v12514
    %v12516 = vpop.f32.mrb[0].mxu0
    %v12517 = vadd.f32 0.0, %v12516
    %v12518 = vpop.f32.mrb[0].mxu0
    %v12519 = vpop.f32.mrb[0].mxu0
    %12520 = vdwg.mxu0
    %v12521 = vadd.f32 %v12048, %v12474
    %v12522 = vadd.f32 %v12049, %v12476
    %v12523 = vadd.f32 %v12050, %v12515
    %v12524 = vadd.f32 %v12051, %v12517
    %v12525 = vpack.c.bf16 %v11079, %v11079
    %v12526 = vpack.c.bf16 %v11080, %v11080
    %s12527 = scalar_lea.vmem [#allocation9], 1536
    %v12528 = vld [vmem:[%s12527] sm:$0xff]
    %v12529 = vld [vmem:[%s12527 + $0x8] sm:$0xff]
    %v12530 = vld [vmem:[%s12527 + $0x10] sm:$0xff]
    %v12531 = vld [vmem:[%s12527 + $0x18] sm:$0xff]
    %v12532 = vld [vmem:[%s12527 + $0x20] sm:$0xff]
    %v12533 = vld [vmem:[%s12527 + $0x28] sm:$0xff]
    %v12534 = vld [vmem:[%s12527 + $0x30] sm:$0xff]
    %v12535 = vld [vmem:[%s12527 + $0x38] sm:$0xff]
    %v12536 = vld [vmem:[%s12527 + $0x40] sm:$0xff]
    %v12537 = vld [vmem:[%s12527 + $0x48] sm:$0xff]
    %v12538 = vld [vmem:[%s12527 + $0x50] sm:$0xff]
    %v12539 = vld [vmem:[%s12527 + $0x58] sm:$0xff]
    %v12540 = vld [vmem:[%s12527 + $0x60] sm:$0xff]
    %v12541 = vld [vmem:[%s12527 + $0x68] sm:$0xff]
    %v12542 = vld [vmem:[%s12527 + $0x70] sm:$0xff]
    %v12543 = vld [vmem:[%s12527 + $0x78] sm:$0xff]
    %v12544 = vld [vmem:[%s12527 + $0x80] sm:$0xff]
    %v12545 = vld [vmem:[%s12527 + $0x88] sm:$0xff]
    %v12546 = vld [vmem:[%s12527 + $0x90] sm:$0xff]
    %v12547 = vld [vmem:[%s12527 + $0x98] sm:$0xff]
    %v12548 = vld [vmem:[%s12527 + $0xa0] sm:$0xff]
    %v12549 = vld [vmem:[%s12527 + $0xa8] sm:$0xff]
    %v12550 = vld [vmem:[%s12527 + $0xb0] sm:$0xff]
    %v12551 = vld [vmem:[%s12527 + $0xb8] sm:$0xff]
    %v12552 = vld [vmem:[%s12527 + $0xc0] sm:$0xff]
    %v12553 = vld [vmem:[%s12527 + $0xc8] sm:$0xff]
    %v12554 = vld [vmem:[%s12527 + $0xd0] sm:$0xff]
    %v12555 = vld [vmem:[%s12527 + $0xd8] sm:$0xff]
    %v12556 = vld [vmem:[%s12527 + $0xe0] sm:$0xff]
    %v12557 = vld [vmem:[%s12527 + $0xe8] sm:$0xff]
    %v12558 = vld [vmem:[%s12527 + $0xf0] sm:$0xff]
    %v12559 = vld [vmem:[%s12527 + $0xf8] sm:$0xff]
    %v12560 = vld [vmem:[%s12527 + $0x100] sm:$0xff]
    %v12561 = vld [vmem:[%s12527 + $0x108] sm:$0xff]
    %v12562 = vld [vmem:[%s12527 + $0x110] sm:$0xff]
    %v12563 = vld [vmem:[%s12527 + $0x118] sm:$0xff]
    %v12564 = vld [vmem:[%s12527 + $0x120] sm:$0xff]
    %v12565 = vld [vmem:[%s12527 + $0x128] sm:$0xff]
    %v12566 = vld [vmem:[%s12527 + $0x130] sm:$0xff]
    %v12567 = vld [vmem:[%s12527 + $0x138] sm:$0xff]
    %v12568 = vld [vmem:[%s12527 + $0x140] sm:$0xff]
    %v12569 = vld [vmem:[%s12527 + $0x148] sm:$0xff]
    %v12570 = vld [vmem:[%s12527 + $0x150] sm:$0xff]
    %v12571 = vld [vmem:[%s12527 + $0x158] sm:$0xff]
    %v12572 = vld [vmem:[%s12527 + $0x160] sm:$0xff]
    %v12573 = vld [vmem:[%s12527 + $0x168] sm:$0xff]
    %v12574 = vld [vmem:[%s12527 + $0x170] sm:$0xff]
    %v12575 = vld [vmem:[%s12527 + $0x178] sm:$0xff]
    %v12576 = vld [vmem:[%s12527 + $0x180] sm:$0xff]
    %v12577 = vld [vmem:[%s12527 + $0x188] sm:$0xff]
    %v12578 = vld [vmem:[%s12527 + $0x190] sm:$0xff]
    %v12579 = vld [vmem:[%s12527 + $0x198] sm:$0xff]
    %v12580 = vld [vmem:[%s12527 + $0x1a0] sm:$0xff]
    %v12581 = vld [vmem:[%s12527 + $0x1a8] sm:$0xff]
    %v12582 = vld [vmem:[%s12527 + $0x1b0] sm:$0xff]
    %v12583 = vld [vmem:[%s12527 + $0x1b8] sm:$0xff]
    %v12584 = vld [vmem:[%s12527 + $0x1c0] sm:$0xff]
    %v12585 = vld [vmem:[%s12527 + $0x1c8] sm:$0xff]
    %v12586 = vld [vmem:[%s12527 + $0x1d0] sm:$0xff]
    %v12587 = vld [vmem:[%s12527 + $0x1d8] sm:$0xff]
    %v12588 = vld [vmem:[%s12527 + $0x1e0] sm:$0xff]
    %v12589 = vld [vmem:[%s12527 + $0x1e8] sm:$0xff]
    %v12590 = vld [vmem:[%s12527 + $0x1f0] sm:$0xff]
    %v12591 = vld [vmem:[%s12527 + $0x1f8] sm:$0xff]
    %v12656 = vunpack.c.l.b16 %v12528
    %v12657 = vunpack.c.h.b16 %v12528
    %v12658 = vunpack.c.l.b16 %v12529
    %v12659 = vunpack.c.h.b16 %v12529
    %v12660 = vunpack.c.l.b16 %v12530
    %v12661 = vunpack.c.h.b16 %v12530
    %v12662 = vunpack.c.l.b16 %v12531
    %v12663 = vunpack.c.h.b16 %v12531
    %v12664 = vunpack.c.l.b16 %v12532
    %v12665 = vunpack.c.h.b16 %v12532
    %v12666 = vunpack.c.l.b16 %v12533
    %v12667 = vunpack.c.h.b16 %v12533
    %v12668 = vunpack.c.l.b16 %v12534
    %v12669 = vunpack.c.h.b16 %v12534
    %v12670 = vunpack.c.l.b16 %v12535
    %v12671 = vunpack.c.h.b16 %v12535
    %v12672 = vunpack.c.l.b16 %v12536
    %v12673 = vunpack.c.h.b16 %v12536
    %v12674 = vunpack.c.l.b16 %v12537
    %v12675 = vunpack.c.h.b16 %v12537
    %v12676 = vunpack.c.l.b16 %v12538
    %v12677 = vunpack.c.h.b16 %v12538
    %v12678 = vunpack.c.l.b16 %v12539
    %v12679 = vunpack.c.h.b16 %v12539
    %v12680 = vunpack.c.l.b16 %v12540
    %v12681 = vunpack.c.h.b16 %v12540
    %v12682 = vunpack.c.l.b16 %v12541
    %v12683 = vunpack.c.h.b16 %v12541
    %v12684 = vunpack.c.l.b16 %v12542
    %v12685 = vunpack.c.h.b16 %v12542
    %v12686 = vunpack.c.l.b16 %v12543
    %v12687 = vunpack.c.h.b16 %v12543
    %v12688 = vunpack.c.l.b16 %v12544
    %v12689 = vunpack.c.h.b16 %v12544
    %v12690 = vunpack.c.l.b16 %v12545
    %v12691 = vunpack.c.h.b16 %v12545
    %v12692 = vunpack.c.l.b16 %v12546
    %v12693 = vunpack.c.h.b16 %v12546
    %v12694 = vunpack.c.l.b16 %v12547
    %v12695 = vunpack.c.h.b16 %v12547
    %v12696 = vunpack.c.l.b16 %v12548
    %v12697 = vunpack.c.h.b16 %v12548
    %v12698 = vunpack.c.l.b16 %v12549
    %v12699 = vunpack.c.h.b16 %v12549
    %v12700 = vunpack.c.l.b16 %v12550
    %v12701 = vunpack.c.h.b16 %v12550
    %v12702 = vunpack.c.l.b16 %v12551
    %v12703 = vunpack.c.h.b16 %v12551
    %v12704 = vunpack.c.l.b16 %v12552
    %v12705 = vunpack.c.h.b16 %v12552
    %v12706 = vunpack.c.l.b16 %v12553
    %v12707 = vunpack.c.h.b16 %v12553
    %v12708 = vunpack.c.l.b16 %v12554
    %v12709 = vunpack.c.h.b16 %v12554
    %v12710 = vunpack.c.l.b16 %v12555
    %v12711 = vunpack.c.h.b16 %v12555
    %v12712 = vunpack.c.l.b16 %v12556
    %v12713 = vunpack.c.h.b16 %v12556
    %v12714 = vunpack.c.l.b16 %v12557
    %v12715 = vunpack.c.h.b16 %v12557
    %v12716 = vunpack.c.l.b16 %v12558
    %v12717 = vunpack.c.h.b16 %v12558
    %v12718 = vunpack.c.l.b16 %v12559
    %v12719 = vunpack.c.h.b16 %v12559
    %v12720 = vunpack.c.l.b16 %v12560
    %v12721 = vunpack.c.h.b16 %v12560
    %v12722 = vunpack.c.l.b16 %v12561
    %v12723 = vunpack.c.h.b16 %v12561
    %v12724 = vunpack.c.l.b16 %v12562
    %v12725 = vunpack.c.h.b16 %v12562
    %v12726 = vunpack.c.l.b16 %v12563
    %v12727 = vunpack.c.h.b16 %v12563
    %v12728 = vunpack.c.l.b16 %v12564
    %v12729 = vunpack.c.h.b16 %v12564
    %v12730 = vunpack.c.l.b16 %v12565
    %v12731 = vunpack.c.h.b16 %v12565
    %v12732 = vunpack.c.l.b16 %v12566
    %v12733 = vunpack.c.h.b16 %v12566
    %v12734 = vunpack.c.l.b16 %v12567
    %v12735 = vunpack.c.h.b16 %v12567
    %v12736 = vunpack.c.l.b16 %v12568
    %v12737 = vunpack.c.h.b16 %v12568
    %v12738 = vunpack.c.l.b16 %v12569
    %v12739 = vunpack.c.h.b16 %v12569
    %v12740 = vunpack.c.l.b16 %v12570
    %v12741 = vunpack.c.h.b16 %v12570
    %v12742 = vunpack.c.l.b16 %v12571
    %v12743 = vunpack.c.h.b16 %v12571
    %v12744 = vunpack.c.l.b16 %v12572
    %v12745 = vunpack.c.h.b16 %v12572
    %v12746 = vunpack.c.l.b16 %v12573
    %v12747 = vunpack.c.h.b16 %v12573
    %v12748 = vunpack.c.l.b16 %v12574
    %v12749 = vunpack.c.h.b16 %v12574
    %v12750 = vunpack.c.l.b16 %v12575
    %v12751 = vunpack.c.h.b16 %v12575
    %v12752 = vunpack.c.l.b16 %v12576
    %v12753 = vunpack.c.h.b16 %v12576
    %v12754 = vunpack.c.l.b16 %v12577
    %v12755 = vunpack.c.h.b16 %v12577
    %v12756 = vunpack.c.l.b16 %v12578
    %v12757 = vunpack.c.h.b16 %v12578
    %v12758 = vunpack.c.l.b16 %v12579
    %v12759 = vunpack.c.h.b16 %v12579
    %v12760 = vunpack.c.l.b16 %v12580
    %v12761 = vunpack.c.h.b16 %v12580
    %v12762 = vunpack.c.l.b16 %v12581
    %v12763 = vunpack.c.h.b16 %v12581
    %v12764 = vunpack.c.l.b16 %v12582
    %v12765 = vunpack.c.h.b16 %v12582
    %v12766 = vunpack.c.l.b16 %v12583
    %v12767 = vunpack.c.h.b16 %v12583
    %v12768 = vunpack.c.l.b16 %v12584
    %v12769 = vunpack.c.h.b16 %v12584
    %v12770 = vunpack.c.l.b16 %v12585
    %v12771 = vunpack.c.h.b16 %v12585
    %v12772 = vunpack.c.l.b16 %v12586
    %v12773 = vunpack.c.h.b16 %v12586
    %v12774 = vunpack.c.l.b16 %v12587
    %v12775 = vunpack.c.h.b16 %v12587
    %v12776 = vunpack.c.l.b16 %v12588
    %v12777 = vunpack.c.h.b16 %v12588
    %v12778 = vunpack.c.l.b16 %v12589
    %v12779 = vunpack.c.h.b16 %v12589
    %v12780 = vunpack.c.l.b16 %v12590
    %v12781 = vunpack.c.h.b16 %v12590
    %v12782 = vunpack.c.l.b16 %v12591
    %v12783 = vunpack.c.h.b16 %v12591
    %v12784 = vpack.c.b16 %v12660, %v12656
    %v12785 = vpack.c.b16 %v12661, %v12657
    %v12786 = vpack.c.b16 %v12662, %v12658
    %v12787 = vpack.c.b16 %v12663, %v12659
    %v12788 = vpack.c.b16 %v12668, %v12664
    %v12789 = vpack.c.b16 %v12669, %v12665
    %v12790 = vpack.c.b16 %v12670, %v12666
    %v12791 = vpack.c.b16 %v12671, %v12667
    %v12792 = vpack.c.b16 %v12676, %v12672
    %v12793 = vpack.c.b16 %v12677, %v12673
    %v12794 = vpack.c.b16 %v12678, %v12674
    %v12795 = vpack.c.b16 %v12679, %v12675
    %v12796 = vpack.c.b16 %v12684, %v12680
    %v12797 = vpack.c.b16 %v12685, %v12681
    %v12798 = vpack.c.b16 %v12686, %v12682
    %v12799 = vpack.c.b16 %v12687, %v12683
    %v12800 = vpack.c.b16 %v12692, %v12688
    %v12801 = vpack.c.b16 %v12693, %v12689
    %v12802 = vpack.c.b16 %v12694, %v12690
    %v12803 = vpack.c.b16 %v12695, %v12691
    %v12804 = vpack.c.b16 %v12700, %v12696
    %v12805 = vpack.c.b16 %v12701, %v12697
    %v12806 = vpack.c.b16 %v12702, %v12698
    %v12807 = vpack.c.b16 %v12703, %v12699
    %v12808 = vpack.c.b16 %v12708, %v12704
    %v12809 = vpack.c.b16 %v12709, %v12705
    %v12810 = vpack.c.b16 %v12710, %v12706
    %v12811 = vpack.c.b16 %v12711, %v12707
    %v12812 = vpack.c.b16 %v12716, %v12712
    %v12813 = vpack.c.b16 %v12717, %v12713
    %v12814 = vpack.c.b16 %v12718, %v12714
    %v12815 = vpack.c.b16 %v12719, %v12715
    %v12816 = vpack.c.b16 %v12724, %v12720
    %v12817 = vpack.c.b16 %v12725, %v12721
    %v12818 = vpack.c.b16 %v12726, %v12722
    %v12819 = vpack.c.b16 %v12727, %v12723
    %v12820 = vpack.c.b16 %v12732, %v12728
    %v12821 = vpack.c.b16 %v12733, %v12729
    %v12822 = vpack.c.b16 %v12734, %v12730
    %v12823 = vpack.c.b16 %v12735, %v12731
    %v12824 = vpack.c.b16 %v12740, %v12736
    %v12825 = vpack.c.b16 %v12741, %v12737
    %v12826 = vpack.c.b16 %v12742, %v12738
    %v12827 = vpack.c.b16 %v12743, %v12739
    %v12828 = vpack.c.b16 %v12748, %v12744
    %v12829 = vpack.c.b16 %v12749, %v12745
    %v12830 = vpack.c.b16 %v12750, %v12746
    %v12831 = vpack.c.b16 %v12751, %v12747
    %v12832 = vpack.c.b16 %v12756, %v12752
    %v12833 = vpack.c.b16 %v12757, %v12753
    %v12834 = vpack.c.b16 %v12758, %v12754
    %v12835 = vpack.c.b16 %v12759, %v12755
    %v12836 = vpack.c.b16 %v12764, %v12760
    %v12837 = vpack.c.b16 %v12765, %v12761
    %v12838 = vpack.c.b16 %v12766, %v12762
    %v12839 = vpack.c.b16 %v12767, %v12763
    %v12840 = vpack.c.b16 %v12772, %v12768
    %v12841 = vpack.c.b16 %v12773, %v12769
    %v12842 = vpack.c.b16 %v12774, %v12770
    %v12843 = vpack.c.b16 %v12775, %v12771
    %v12844 = vpack.c.b16 %v12780, %v12776
    %v12845 = vpack.c.b16 %v12781, %v12777
    %v12846 = vpack.c.b16 %v12782, %v12778
    %v12847 = vpack.c.b16 %v12783, %v12779
    %12912 = vmatprep.subr.bf16.mxu0 %v12785
    %12913 = vmatpush1.bf16.msra.mxu0 %v12784
    %12914 = vmatprep.subr.bf16.mxu0 %v12789
    %12915 = vmatpush1.bf16.msra.mxu0 %v12788
    %12916 = vmatprep.subr.bf16.mxu0 %v12793
    %12917 = vmatpush1.bf16.msra.mxu0 %v12792
    %12918 = vmatprep.subr.bf16.mxu0 %v12797
    %12919 = vmatpush1.bf16.msra.mxu0 %v12796
    %12920 = vmatprep.subr.bf16.mxu0 %v12801
    %12921 = vmatpush1.bf16.msra.mxu0 %v12800
    %12922 = vmatprep.subr.bf16.mxu0 %v12805
    %12923 = vmatpush1.bf16.msra.mxu0 %v12804
    %12924 = vmatprep.subr.bf16.mxu0 %v12809
    %12925 = vmatpush1.bf16.msra.mxu0 %v12808
    %12926 = vmatprep.subr.bf16.mxu0 %v12813
    %12927 = vmatpush1.bf16.msra.mxu0 %v12812
    %12928 = vmatprep.subr.bf16.mxu0 %v12817
    %12929 = vmatpush1.bf16.msra.mxu0 %v12816
    %12930 = vmatprep.subr.bf16.mxu0 %v12821
    %12931 = vmatpush1.bf16.msra.mxu0 %v12820
    %12932 = vmatprep.subr.bf16.mxu0 %v12825
    %12933 = vmatpush1.bf16.msra.mxu0 %v12824
    %12934 = vmatprep.subr.bf16.mxu0 %v12829
    %12935 = vmatpush1.bf16.msra.mxu0 %v12828
    %12936 = vmatprep.subr.bf16.mxu0 %v12833
    %12937 = vmatpush1.bf16.msra.mxu0 %v12832
    %12938 = vmatprep.subr.bf16.mxu0 %v12837
    %12939 = vmatpush1.bf16.msra.mxu0 %v12836
    %12940 = vmatprep.subr.bf16.mxu0 %v12841
    %12941 = vmatpush1.bf16.msra.mxu0 %v12840
    %12942 = vmatprep.subr.bf16.mxu0 %v12845
    %12943 = vmatpush1.bf16.msra.mxu0 %v12844
    %12944 = vmatprep.mubr.bf16.mxu0 %v12526
    %12945 = vmatmul.mubr.bf16.gmra.mrb[0].mxu0 %v12525
    %v12946 = vpop.f32.mrb[0].mxu0
    %v12947 = vadd.f32 0.0, %v12946
    %v12948 = vpop.f32.mrb[0].mxu0
    %v12949 = vadd.f32 0.0, %v12948
    %v12950 = vpop.f32.mrb[0].mxu0
    %v12951 = vpop.f32.mrb[0].mxu0
    %12952 = vdwg.mxu0
    %12953 = vmatprep.subr.bf16.mxu0 %v12787
    %12954 = vmatpush1.bf16.msra.mxu0 %v12786
    %12955 = vmatprep.subr.bf16.mxu0 %v12791
    %12956 = vmatpush1.bf16.msra.mxu0 %v12790
    %12957 = vmatprep.subr.bf16.mxu0 %v12795
    %12958 = vmatpush1.bf16.msra.mxu0 %v12794
    %12959 = vmatprep.subr.bf16.mxu0 %v12799
    %12960 = vmatpush1.bf16.msra.mxu0 %v12798
    %12961 = vmatprep.subr.bf16.mxu0 %v12803
    %12962 = vmatpush1.bf16.msra.mxu0 %v12802
    %12963 = vmatprep.subr.bf16.mxu0 %v12807
    %12964 = vmatpush1.bf16.msra.mxu0 %v12806
    %12965 = vmatprep.subr.bf16.mxu0 %v12811
    %12966 = vmatpush1.bf16.msra.mxu0 %v12810
    %12967 = vmatprep.subr.bf16.mxu0 %v12815
    %12968 = vmatpush1.bf16.msra.mxu0 %v12814
    %12969 = vmatprep.subr.bf16.mxu0 %v12819
    %12970 = vmatpush1.bf16.msra.mxu0 %v12818
    %12971 = vmatprep.subr.bf16.mxu0 %v12823
    %12972 = vmatpush1.bf16.msra.mxu0 %v12822
    %12973 = vmatprep.subr.bf16.mxu0 %v12827
    %12974 = vmatpush1.bf16.msra.mxu0 %v12826
    %12975 = vmatprep.subr.bf16.mxu0 %v12831
    %12976 = vmatpush1.bf16.msra.mxu0 %v12830
    %12977 = vmatprep.subr.bf16.mxu0 %v12835
    %12978 = vmatpush1.bf16.msra.mxu0 %v12834
    %12979 = vmatprep.subr.bf16.mxu0 %v12839
    %12980 = vmatpush1.bf16.msra.mxu0 %v12838
    %12981 = vmatprep.subr.bf16.mxu0 %v12843
    %12982 = vmatpush1.bf16.msra.mxu0 %v12842
    %12983 = vmatprep.subr.bf16.mxu0 %v12847
    %12984 = vmatpush1.bf16.msra.mxu0 %v12846
    %12985 = vmatprep.mubr.bf16.mxu0 %v12526
    %12986 = vmatmul.mubr.bf16.gmra.mrb[0].mxu0 %v12525
    %v12987 = vpop.f32.mrb[0].mxu0
    %v12988 = vadd.f32 0.0, %v12987
    %v12989 = vpop.f32.mrb[0].mxu0
    %v12990 = vadd.f32 0.0, %v12989
    %v12991 = vpop.f32.mrb[0].mxu0
    %v12992 = vpop.f32.mrb[0].mxu0
    %12993 = vdwg.mxu0
    %v12994 = vadd.f32 %v12521, %v12947
    %v12995 = vadd.f32 %v12522, %v12949
    %v12996 = vadd.f32 %v12523, %v12988
    %v12997 = vadd.f32 %v12524, %v12990
    %12998 = vst [vmem:[%s7] sm:$0xff] %v12994
    %12999 = vst [vmem:[%s7 + $0x8] sm:$0xff] %v12995
    %13000 = vst [vmem:[%s7 + $0x10] sm:$0xff] %v12996
    %13001 = vst [vmem:[%s7 + $0x18] sm:$0xff] %v12997
    // Predicated region
    $region54: #{lenet_encoder_forward.1} parent=1 // pred_check
      _
    $region55: #{lenet_encoder_forward.1} parent=1 // pred_check_branch
      %13003 = sbr.rel (0) target = $region57
    $region56: #{lenet_encoder_forward.1} parent=1 // pred_region
      _
    $region57: #{lenet_encoder_forward.1} parent=1 // pred_fallthru
      _
    // Predicated region
    $region58: #{lenet_encoder_forward.1} parent=1 // pred_check
      _
    $region59: #{lenet_encoder_forward.1} parent=1 // pred_check_branch
      %13005 = sbr.rel (0) target = $region61
    $region60: #{lenet_encoder_forward.1} parent=1 // pred_region
      _
    $region61: #{lenet_encoder_forward.1} parent=1 // pred_fallthru
      _
    %13006 = vsyncpa [#allocation3], 1
    %13007 = vsyncpa [#allocation5], 1
    %13008 = vsyncpa [#allocation8], 1
    %13009 = vsyncpa [#allocation11], 1

</llo_original>
